<compile_context>
chip_gen: v5e
topology: v5e:2x2
jax: 0.10.0
libtpu: 0.0.40
codegen_flags: <defaults>
</compile_context>

<pallas_src>
import functools

import jax
import jax.numpy as jnp
from jax.experimental import pallas as pl
from jax.experimental.pallas import tpu as pltpu


def _cdiv(a, b):
    return -(-a // b)


def _round_up(x, m):
    return _cdiv(x, m) * m


def _split_tiles(total, tile_max, align):
    """Pick (tile, padded_total): tile is `align`-aligned (or == total) and divides padded."""
    if total <= tile_max:
        return total, total                       # full-dim block, no padding
    padded = _round_up(total, align)
    n = _cdiv(padded, tile_max)
    tile = _round_up(_cdiv(padded, n), align)
    return tile, n * tile


def _tpu_vmem_bytes():
    """Physical VMEM capacity (conservative default if the query is unavailable)."""
    try:
        info = pltpu.get_tpu_info()
        cap = int(getattr(info, "vmem_capacity_bytes", 0))
        if cap > 0:
            return cap
    except Exception:
        pass
    return 64 << 20   # v7x-sized conservative default


# ---------------------------------------------------------------------------------
# Kernels
# ---------------------------------------------------------------------------------
def _gemm_bias_lrelu_kernel(p_ref, w_ref, b_ref, o_ref, *, alpha):
    """Single-K-step fused GEMM + bias + LeakyReLU (no accumulator scratch needed)."""
    y = jnp.dot(p_ref[...], w_ref[...], preferred_element_type=jnp.float32)
    y = y + b_ref[...]
    o_ref[...] = jnp.where(y >= 0.0, y, alpha * y).astype(o_ref.dtype)


def _gemm_bias_lrelu_acc_kernel(p_ref, w_ref, b_ref, o_ref, acc_ref, *, alpha):
    """K-tiled fused GEMM: f32 VMEM accumulator, bias+LeakyReLU in the last K step.

    Grid = (m_tile [parallel], n_tile [parallel], k_tile [arbitrary, last]).
    """
    k = pl.program_id(2)

    @pl.when(k == 0)
    def _():
        acc_ref[...] = jnp.zeros_like(acc_ref)

    acc_ref[...] += jnp.dot(p_ref[...], w_ref[...],
                            preferred_element_type=jnp.float32)

    @pl.when(k == pl.num_programs(2) - 1)
    def _():
        y = acc_ref[...] + b_ref[...]
        o_ref[...] = jnp.where(y >= 0.0, y, alpha * y).astype(o_ref.dtype)


# ---------------------------------------------------------------------------------
# ConvBlock wrapper: Conv3d(k=3, pad=1, stride) + LeakyReLU(alpha)
# ---------------------------------------------------------------------------------
def conv3d_leakyrelu(x, w, b, *, stride, alpha=0.1, out_dtype=jnp.float32):
    """x: (N, D, H, W, Cin)  w: (3,3,3,Cin,Cout)  b: (Cout,) -> (N, Do, Ho, Wo, Cout)."""
    N, D, H, W, Cin = x.shape
    Cout = w.shape[-1]
    Do = (D - 1) // stride + 1      # == floor((D + 2 - 3)/stride) + 1
    Ho = (H - 1) // stride + 1
    Wo = (W - 1) // stride + 1
    M = N * Do * Ho * Wo

    # --- static tap trimming: drop taps that only ever read the zero pad halo ----
    def _axis_keep(dim, dout):
        keep = []
        for k in range(3):
            idxs = [o * stride + k for o in range(dout)]
            if all(i == 0 or i == dim + 1 for i in idxs):   # always in the halo
                continue
            keep.append(k)
        return keep

    kd_keep = _axis_keep(D, Do)
    kh_keep = _axis_keep(H, Ho)
    kw_keep = _axis_keep(W, Wo)
    n_taps = len(kd_keep) * len(kh_keep) * len(kw_keep)
    K = n_taps * Cin

    # --- lane-dense bf16 im2col slab (single fused XLA pass) ---------------------
    xb = x if x.dtype == jnp.bfloat16 else x.astype(jnp.bfloat16)
    wb = w.astype(jnp.bfloat16)
    xp = jnp.pad(xb, ((0, 0), (1, 1), (1, 1), (1, 1), (0, 0)))
    taps_p, taps_w = [], []
    for kd in kd_keep:
        for kh in kh_keep:
            for kw in kw_keep:
                taps_p.append(
                    xp[:, kd:kd + stride * (Do - 1) + 1:stride,
                           kh:kh + stride * (Ho - 1) + 1:stride,
                           kw:kw + stride * (Wo - 1) + 1:stride, :])
                taps_w.append(wb[kd, kh, kw])                 # (Cin, Cout)
    patches = jnp.concatenate(taps_p, axis=-1).reshape(M, K)  # (M, K) bf16
    wmat = jnp.concatenate(taps_w, axis=0)                    # (K, Cout) bf16

    # --- tiling ------------------------------------------------------------------
    out_bytes = jnp.dtype(out_dtype).itemsize

    if Cout <= 128:
        TN, C_pad = Cout, Cout                    # full-dim block: no store inflation
    else:
        C_pad = _round_up(Cout, 128)
        # >=2 N tiles where possible so both v7x TensorCores get work
        TN = 256 if (C_pad % 256 == 0 and C_pad > 256) else 128

    TM, M_pad = _split_tiles(M, 512, 16)          # 16-row align (bf16 sublane packing)
    if M_pad // TM == 1 and C_pad // TN == 1 and M >= 32:
        # degenerate (1,1,*) grid: split M so the second TensorCore is not idle
        half = _round_up(_cdiv(M, 2), 16)
        TM, M_pad = half, 2 * half

    vmem_cap = _tpu_vmem_bytes()
    budget = min(int(vmem_cap * 0.7), 96 << 20)   # double-buffered working-set target

    def _ws(tk):
        return (2 * TM * tk * 2 + 2 * tk * TN * 2      # bf16 inputs, double-buffered
                + 2 * TM * TN * out_bytes              # output, double-buffered
                + TM * TN * 4 + 2 * TN * 4)            # f32 accumulator + bias

    if _ws(K) <= budget:
        TK, K_pad = K, K                          # full-K: single reduction step
    else:
        TK = 128
        while TK + 128 < K and _ws(TK + 128) <= budget:
            TK += 128
        K_pad = _round_up(K, TK)

    if M_pad != M or K_pad != K:
        patches = jnp.pad(patches, ((0, M_pad - M), (0, K_pad - K)))
    if K_pad != K or C_pad != Cout:
        wmat = jnp.pad(wmat, ((0, K_pad - K), (0, C_pad - Cout)))
    bias = b.astype(jnp.float32)
    if C_pad != Cout:
        bias = jnp.pad(bias, (0, C_pad - Cout))
    bias = bias.reshape(1, C_pad)

    n_k = K_pad // TK
    vmem_limit = int(max(32 << 20, min(vmem_cap - (4 << 20), 100 << 20)))

    if n_k == 1:
        out = pl.pallas_call(
            functools.partial(_gemm_bias_lrelu_kernel, alpha=alpha),
            out_shape=jax.ShapeDtypeStruct((M_pad, C_pad), out_dtype),
            grid=(M_pad // TM, C_pad // TN),
            in_specs=[
                pl.BlockSpec((TM, K_pad), lambda i, j: (i, 0)),   # patches
                pl.BlockSpec((K_pad, TN), lambda i, j: (0, j)),   # weights
                pl.BlockSpec((1, TN), lambda i, j: (0, j)),       # bias
            ],
            out_specs=pl.BlockSpec((TM, TN), lambda i, j: (i, j)),
            compiler_params=pltpu.CompilerParams(
                dimension_semantics=("parallel", "parallel"),
                vmem_limit_bytes=vmem_limit),
        )(patches, wmat, bias)
    else:
        out = pl.pallas_call(
            functools.partial(_gemm_bias_lrelu_acc_kernel, alpha=alpha),
            out_shape=jax.ShapeDtypeStruct((M_pad, C_pad), out_dtype),
            grid=(M_pad // TM, C_pad // TN, n_k),
            in_specs=[
                pl.BlockSpec((TM, TK), lambda i, j, k: (i, k)),   # patches
                pl.BlockSpec((TK, TN), lambda i, j, k: (k, j)),   # weights
                pl.BlockSpec((1, TN), lambda i, j, k: (0, j)),    # bias
            ],
            out_specs=pl.BlockSpec((TM, TN), lambda i, j, k: (i, j)),
            scratch_shapes=[pltpu.VMEM((TM, TN), jnp.float32)],
            compiler_params=pltpu.CompilerParams(
                dimension_semantics=("parallel", "parallel", "arbitrary"),
                vmem_limit_bytes=vmem_limit),
        )(patches, wmat, bias)

    if M_pad != M or C_pad != Cout:
        out = out[:M, :Cout]
    return out.reshape(N, Do, Ho, Wo, Cout)


# ---------------------------------------------------------------------------------
# Encoder glue
# ---------------------------------------------------------------------------------
def init_encoder_params(key, in_channel=2, first_out_channel=16):
    """Deterministic params for the 10 ConvBlocks of Encoder (execution order)."""
    c = first_out_channel
    cfg = [
        (in_channel, c, 2),                        # conv1
        (c, 2 * c, 2),                             # conv2
        (2 * c, 4 * c, 2), (4 * c, 4 * c, 1),      # conv3
        (4 * c, 8 * c, 2), (8 * c, 8 * c, 1),      # conv4
        (8 * c, 16 * c, 2), (16 * c, 16 * c, 1),   # conv5
        (16 * c, 32 * c, 2), (32 * c, 32 * c, 1),  # conv6
    ]
    params = []
    for (cin, cout, s) in cfg:
        key, kw_, kb_ = jax.random.split(key, 3)
        fan_in = cin * 27
        bound = 1.0 / (fan_in ** 0.5)   # PyTorch Conv default init range
        w = jax.random.uniform(kw_, (3, 3, 3, cin, cout), jnp.float32, -bound, bound)
        b = jax.random.uniform(kb_, (cout,), jnp.float32, -bound, bound)
        params.append((w, b, s))
    return params


# ConvBlock indices after which Encoder.forward records an output (out1..out6).
_OUTPUT_BOUNDARIES = (0, 1, 3, 5, 7, 9)


def _ref_conv3d_leakyrelu(x, w, b, stride, alpha=0.1, cast_bf16=False):
    if cast_bf16:
        x = x.astype(jnp.bfloat16)
        w = w.astype(jnp.bfloat16)
    y = jax.lax.conv_general_dilated(
        x, w, window_strides=(stride,) * 3, padding=((1, 1),) * 3,
        dimension_numbers=("NDHWC", "DHWIO", "NDHWC"),
        preferred_element_type=jnp.float32)
    y = y + b
    return jnp.where(y >= 0, y, alpha * y)


if __name__ == "__main__":
    key = jax.random.PRNGKey(0)
    kx, kp = jax.random.split(key)

    # Small shapes: N=2, in_channel=2, 16^3 volume (matches Encoder(in_channel=2)).
    N, Cin, D, H, W = 2, 2, 16, 16, 16
    x_ncdhw = jax.random.normal(kx, (N, Cin, D, H, W), jnp.float32)
    x = jnp.transpose(x_ncdhw, (0, 2, 3, 4, 1))  # NCDHW -> NDHWC (channels-last)

    params = init_encoder_params(kp, in_channel=Cin, first_out_channel=16)
    weights = [(w, b) for (w, b, _) in params]
    strides = tuple(s for (_, _, s) in params)

    @jax.jit
    def run_encoder(x, weights):
        outs = []
        h = x
        for i, ((w, b), s) in enumerate(zip(weights, strides)):
            boundary = i in _OUTPUT_BOUNDARIES
            # Boundary (returned) activations stay f32; intermediates go bf16
            # (the next layer casts its matmul inputs to bf16 anyway).
            h = conv3d_leakyrelu(
                h, w, b, stride=s,
                out_dtype=jnp.float32 if boundary else jnp.bfloat16)
            if boundary:
                outs.append(h)
        return outs

    outs = jax.block_until_ready(run_encoder(x, weights))

    # References:
    #  (a) XLA conv3d with the SAME bf16 matmul inputs + f32 accumulation
    #      (like-for-like check of the Pallas lowering; tight tolerance).
    #  (b) pure f32 XLA conv3d (original module numerics); looser tolerance
    #      covering the deliberate bf16 cast of the matmul inputs.
    def run_ref(x, cast_bf16):
        outs = []
        h = x
        for i, ((w, b), s) in enumerate(zip(weights, strides)):
            h = _ref_conv3d_leakyrelu(h, w, b, s, cast_bf16=cast_bf16)
            if i in _OUTPUT_BOUNDARIES:
                outs.append(h)
        return outs

    ref_bf16 = run_ref(x, True)
    ref_f32 = run_ref(x, False)

    for o, rb, rf in zip(outs, ref_bf16, ref_f32):
        assert o.shape == rb.shape == rf.shape, (o.shape, rb.shape, rf.shape)
        o32 = o.astype(jnp.float32)
        scale_b = float(jnp.max(jnp.abs(rb)))
        err_b = float(jnp.max(jnp.abs(o32 - rb)))
        assert err_b <= 2e-3 * scale_b + 1e-6, ("bf16-ref mismatch", err_b, scale_b)
        scale_f = float(jnp.max(jnp.abs(rf)))
        err_f = float(jnp.max(jnp.abs(o32 - rf)))
        assert err_f <= 1e-1 * scale_f + 1e-5, ("f32-ref mismatch", err_f, scale_f)

    print("KERNEL_OK")
</pallas_src>

<mosaic_0001>
module attributes {stable_mosaic.version = 11 : i64} {
  func.func @_gemm_bias_lrelu_kernel(%arg0: i32, %arg1: i32, %arg2: memref<512x54xbf16, #tpu.memory_space<vmem>>, %arg3: memref<54x16xbf16, #tpu.memory_space<vmem>>, %arg4: memref<1x16xf32, #tpu.memory_space<vmem>>, %arg5: memref<512x16xf32, #tpu.memory_space<vmem>>) attributes {dimension_semantics = [#tpu.dimension_semantics<parallel>, #tpu.dimension_semantics<parallel>], iteration_bounds = array<i64: 2, 1>, scalar_prefetch = 0 : i64, scratch_operands = 0 : i64, tpu.core_type = #tpu.core_type<tc>, window_params = [{transform_indices = @transform_0, window_bounds = array<i64: 512, 54>}, {transform_indices = @transform_1, window_bounds = array<i64: 54, 16>}, {transform_indices = @transform_2, window_bounds = array<i64: 1, 16>}, {transform_indices = @transform_3, window_bounds = array<i64: 512, 16>}]} {
    %c0 = arith.constant 0 : index
    %c0_0 = arith.constant 0 : index
    %0 = vector.load %arg2[%c0, %c0_0] : memref<512x54xbf16, #tpu.memory_space<vmem>>, vector<512x54xbf16>
    %c0_1 = arith.constant 0 : index
    %c0_2 = arith.constant 0 : index
    %1 = vector.load %arg3[%c0_1, %c0_2] : memref<54x16xbf16, #tpu.memory_space<vmem>>, vector<54x16xbf16>
    %cst = arith.constant dense<0.000000e+00> : vector<512x16xf32>
    %2 = tpu.matmul %0, %1, %cst {dimension_numbers = #tpu.dot_dimension_numbers<[1], [0], [0], [1], [0, 0, 1, 1], [], []>} : vector<512x54xbf16>, vector<54x16xbf16>, vector<512x16xf32> -> vector<512x16xf32>
    %c0_3 = arith.constant 0 : index
    %c0_4 = arith.constant 0 : index
    %3 = vector.load %arg4[%c0_3, %c0_4] : memref<1x16xf32, #tpu.memory_space<vmem>>, vector<1x16xf32>
    %4 = vector.broadcast %3 : vector<1x16xf32> to vector<512x16xf32>
    %5 = arith.addf %2, %4 : vector<512x16xf32>
    %cst_5 = arith.constant 0.000000e+00 : f32
    %6 = vector.broadcast %cst_5 : f32 to vector<512x16xf32>
    %7 = arith.cmpf oge, %5, %6 : vector<512x16xf32>
    %cst_6 = arith.constant 1.000000e-01 : f32
    %8 = vector.broadcast %cst_6 : f32 to vector<512x16xf32>
    %9 = arith.mulf %8, %5 : vector<512x16xf32>
    %10 = arith.select %7, %5, %9 : vector<512x16xi1>, vector<512x16xf32>
    %c0_7 = arith.constant 0 : index
    %c0_8 = arith.constant 0 : index
    %11 = vector.load %arg5[%c0_7, %c0_8] : memref<512x16xf32, #tpu.memory_space<vmem>>, vector<512x16xf32>
    tpu.vector_store %arg5[%c0_7, %c0_8], %10 {strides = array<i32>} : memref<512x16xf32, #tpu.memory_space<vmem>>, vector<512x16xf32>,
    return
  }
  func.func @transform_0(%arg0: i32, %arg1: i32) -> (i32, i32) {
    %c0_i32 = arith.constant 0 : i32
    %c0_i32_0 = arith.constant 0 : i32
    return %arg0, %c0_i32 : i32, i32
  }
  func.func @transform_1(%arg0: i32, %arg1: i32) -> (i32, i32) {
    %c0_i32 = arith.constant 0 : i32
    %c0_i32_0 = arith.constant 0 : i32
    return %c0_i32, %arg1 : i32, i32
  }
  func.func @transform_2(%arg0: i32, %arg1: i32) -> (i32, i32) {
    %c0_i32 = arith.constant 0 : i32
    %c0_i32_0 = arith.constant 0 : i32
    return %c0_i32, %arg1 : i32, i32
  }
  func.func @transform_3(%arg0: i32, %arg1: i32) -> (i32, i32) {
    %c0_i32 = arith.constant 0 : i32
    return %arg0, %arg1 : i32, i32
  }
}

module attributes {stable_mosaic.version = 11 : i64} {
  func.func @_gemm_bias_lrelu_kernel(%arg0: i32, %arg1: i32, %arg2: memref<64x432xbf16, #tpu.memory_space<vmem>>, %arg3: memref<432x32xbf16, #tpu.memory_space<vmem>>, %arg4: memref<1x32xf32, #tpu.memory_space<vmem>>, %arg5: memref<64x32xf32, #tpu.memory_space<vmem>>) attributes {dimension_semantics = [#tpu.dimension_semantics<parallel>, #tpu.dimension_semantics<parallel>], iteration_bounds = array<i64: 2, 1>, scalar_prefetch = 0 : i64, scratch_operands = 0 : i64, tpu.core_type = #tpu.core_type<tc>, window_params = [{transform_indices = @transform_0, window_bounds = array<i64: 64, 432>}, {transform_indices = @transform_1, window_bounds = array<i64: 432, 32>}, {transform_indices = @transform_2, window_bounds = array<i64: 1, 32>}, {transform_indices = @transform_3, window_bounds = array<i64: 64, 32>}]} {
    %c0 = arith.constant 0 : index
    %c0_0 = arith.constant 0 : index
    %0 = vector.load %arg2[%c0, %c0_0] : memref<64x432xbf16, #tpu.memory_space<vmem>>, vector<64x432xbf16>
    %c0_1 = arith.constant 0 : index
    %c0_2 = arith.constant 0 : index
    %1 = vector.load %arg3[%c0_1, %c0_2] : memref<432x32xbf16, #tpu.memory_space<vmem>>, vector<432x32xbf16>
    %cst = arith.constant dense<0.000000e+00> : vector<64x32xf32>
    %2 = tpu.matmul %0, %1, %cst {dimension_numbers = #tpu.dot_dimension_numbers<[1], [0], [0], [1], [0, 0, 1, 1], [], []>} : vector<64x432xbf16>, vector<432x32xbf16>, vector<64x32xf32> -> vector<64x32xf32>
    %c0_3 = arith.constant 0 : index
    %c0_4 = arith.constant 0 : index
    %3 = vector.load %arg4[%c0_3, %c0_4] : memref<1x32xf32, #tpu.memory_space<vmem>>, vector<1x32xf32>
    %4 = vector.broadcast %3 : vector<1x32xf32> to vector<64x32xf32>
    %5 = arith.addf %2, %4 : vector<64x32xf32>
    %cst_5 = arith.constant 0.000000e+00 : f32
    %6 = vector.broadcast %cst_5 : f32 to vector<64x32xf32>
    %7 = arith.cmpf oge, %5, %6 : vector<64x32xf32>
    %cst_6 = arith.constant 1.000000e-01 : f32
    %8 = vector.broadcast %cst_6 : f32 to vector<64x32xf32>
    %9 = arith.mulf %8, %5 : vector<64x32xf32>
    %10 = arith.select %7, %5, %9 : vector<64x32xi1>, vector<64x32xf32>
    %c0_7 = arith.constant 0 : index
    %c0_8 = arith.constant 0 : index
    %11 = vector.load %arg5[%c0_7, %c0_8] : memref<64x32xf32, #tpu.memory_space<vmem>>, vector<64x32xf32>
    tpu.vector_store %arg5[%c0_7, %c0_8], %10 {strides = array<i32>} : memref<64x32xf32, #tpu.memory_space<vmem>>, vector<64x32xf32>,
    return
  }
  func.func @transform_0(%arg0: i32, %arg1: i32) -> (i32, i32) {
    %c0_i32 = arith.constant 0 : i32
    %c0_i32_0 = arith.constant 0 : i32
    return %arg0, %c0_i32 : i32, i32
  }
  func.func @transform_1(%arg0: i32, %arg1: i32) -> (i32, i32) {
    %c0_i32 = arith.constant 0 : i32
    %c0_i32_0 = arith.constant 0 : i32
    return %c0_i32, %arg1 : i32, i32
  }
  func.func @transform_2(%arg0: i32, %arg1: i32) -> (i32, i32) {
    %c0_i32 = arith.constant 0 : i32
    %c0_i32_0 = arith.constant 0 : i32
    return %c0_i32, %arg1 : i32, i32
  }
  func.func @transform_3(%arg0: i32, %arg1: i32) -> (i32, i32) {
    %c0_i32 = arith.constant 0 : i32
    return %arg0, %arg1 : i32, i32
  }
}

module attributes {stable_mosaic.version = 11 : i64} {
  func.func @_gemm_bias_lrelu_kernel(%arg0: i32, %arg1: i32, %arg2: memref<16x864xbf16, #tpu.memory_space<vmem>>, %arg3: memref<864x64xbf16, #tpu.memory_space<vmem>>, %arg4: memref<1x64xf32, #tpu.memory_space<vmem>>, %arg5: memref<16x64xbf16, #tpu.memory_space<vmem>>) attributes {dimension_semantics = [#tpu.dimension_semantics<parallel>, #tpu.dimension_semantics<parallel>], iteration_bounds = array<i64: 1, 1>, scalar_prefetch = 0 : i64, scratch_operands = 0 : i64, tpu.core_type = #tpu.core_type<tc>, window_params = [{transform_indices = @transform_0, window_bounds = array<i64: 16, 864>}, {transform_indices = @transform_1, window_bounds = array<i64: 864, 64>}, {transform_indices = @transform_2, window_bounds = array<i64: 1, 64>}, {transform_indices = @transform_3, window_bounds = array<i64: 16, 64>}]} {
    %c0 = arith.constant 0 : index
    %c0_0 = arith.constant 0 : index
    %0 = vector.load %arg2[%c0, %c0_0] : memref<16x864xbf16, #tpu.memory_space<vmem>>, vector<16x864xbf16>
    %c0_1 = arith.constant 0 : index
    %c0_2 = arith.constant 0 : index
    %1 = vector.load %arg3[%c0_1, %c0_2] : memref<864x64xbf16, #tpu.memory_space<vmem>>, vector<864x64xbf16>
    %cst = arith.constant dense<0.000000e+00> : vector<16x64xf32>
    %2 = tpu.matmul %0, %1, %cst {dimension_numbers = #tpu.dot_dimension_numbers<[1], [0], [0], [1], [0, 0, 1, 1], [], []>} : vector<16x864xbf16>, vector<864x64xbf16>, vector<16x64xf32> -> vector<16x64xf32>
    %c0_3 = arith.constant 0 : index
    %c0_4 = arith.constant 0 : index
    %3 = vector.load %arg4[%c0_3, %c0_4] : memref<1x64xf32, #tpu.memory_space<vmem>>, vector<1x64xf32>
    %4 = vector.broadcast %3 : vector<1x64xf32> to vector<16x64xf32>
    %5 = arith.addf %2, %4 : vector<16x64xf32>
    %cst_5 = arith.constant 0.000000e+00 : f32
    %6 = vector.broadcast %cst_5 : f32 to vector<16x64xf32>
    %7 = arith.cmpf oge, %5, %6 : vector<16x64xf32>
    %cst_6 = arith.constant 1.000000e-01 : f32
    %8 = vector.broadcast %cst_6 : f32 to vector<16x64xf32>
    %9 = arith.mulf %8, %5 : vector<16x64xf32>
    %10 = arith.select %7, %5, %9 : vector<16x64xi1>, vector<16x64xf32>
    %11 = arith.truncf %10 : vector<16x64xf32> to vector<16x64xbf16>
    %c0_7 = arith.constant 0 : index
    %c0_8 = arith.constant 0 : index
    %12 = vector.load %arg5[%c0_7, %c0_8] : memref<16x64xbf16, #tpu.memory_space<vmem>>, vector<16x64xbf16>
    tpu.vector_store %arg5[%c0_7, %c0_8], %11 {strides = array<i32>} : memref<16x64xbf16, #tpu.memory_space<vmem>>, vector<16x64xbf16>,
    return
  }
  func.func @transform_0(%arg0: i32, %arg1: i32) -> (i32, i32) {
    %c0_i32 = arith.constant 0 : i32
    %c0_i32_0 = arith.constant 0 : i32
    return %arg0, %c0_i32 : i32, i32
  }
  func.func @transform_1(%arg0: i32, %arg1: i32) -> (i32, i32) {
    %c0_i32 = arith.constant 0 : i32
    %c0_i32_0 = arith.constant 0 : i32
    return %c0_i32, %arg1 : i32, i32
  }
  func.func @transform_2(%arg0: i32, %arg1: i32) -> (i32, i32) {
    %c0_i32 = arith.constant 0 : i32
    %c0_i32_0 = arith.constant 0 : i32
    return %c0_i32, %arg1 : i32, i32
  }
  func.func @transform_3(%arg0: i32, %arg1: i32) -> (i32, i32) {
    %c0_i32 = arith.constant 0 : i32
    return %arg0, %arg1 : i32, i32
  }
}

module attributes {stable_mosaic.version = 11 : i64} {
  func.func @_gemm_bias_lrelu_kernel(%arg0: i32, %arg1: i32, %arg2: memref<2x512xbf16, #tpu.memory_space<vmem>>, %arg3: memref<512x128xbf16, #tpu.memory_space<vmem>>, %arg4: memref<1x128xf32, #tpu.memory_space<vmem>>, %arg5: memref<2x128xbf16, #tpu.memory_space<vmem>>) attributes {dimension_semantics = [#tpu.dimension_semantics<parallel>, #tpu.dimension_semantics<parallel>], iteration_bounds = array<i64: 1, 1>, scalar_prefetch = 0 : i64, scratch_operands = 0 : i64, tpu.core_type = #tpu.core_type<tc>, window_params = [{transform_indices = @transform_0, window_bounds = array<i64: 2, 512>}, {transform_indices = @transform_1, window_bounds = array<i64: 512, 128>}, {transform_indices = @transform_2, window_bounds = array<i64: 1, 128>}, {transform_indices = @transform_3, window_bounds = array<i64: 2, 128>}]} {
    %c0 = arith.constant 0 : index
    %c0_0 = arith.constant 0 : index
    %0 = vector.load %arg2[%c0, %c0_0] : memref<2x512xbf16, #tpu.memory_space<vmem>>, vector<2x512xbf16>
    %c0_1 = arith.constant 0 : index
    %c0_2 = arith.constant 0 : index
    %1 = vector.load %arg3[%c0_1, %c0_2] : memref<512x128xbf16, #tpu.memory_space<vmem>>, vector<512x128xbf16>
    %cst = arith.constant dense<0.000000e+00> : vector<2x128xf32>
    %2 = tpu.matmul %0, %1, %cst {dimension_numbers = #tpu.dot_dimension_numbers<[1], [0], [0], [1], [0, 0, 1, 1], [], []>} : vector<2x512xbf16>, vector<512x128xbf16>, vector<2x128xf32> -> vector<2x128xf32>
    %c0_3 = arith.constant 0 : index
    %c0_4 = arith.constant 0 : index
    %3 = vector.load %arg4[%c0_3, %c0_4] : memref<1x128xf32, #tpu.memory_space<vmem>>, vector<1x128xf32>
    %4 = vector.broadcast %3 : vector<1x128xf32> to vector<2x128xf32>
    %5 = arith.addf %2, %4 : vector<2x128xf32>
    %cst_5 = arith.constant 0.000000e+00 : f32
    %6 = vector.broadcast %cst_5 : f32 to vector<2x128xf32>
    %7 = arith.cmpf oge, %5, %6 : vector<2x128xf32>
    %cst_6 = arith.constant 1.000000e-01 : f32
    %8 = vector.broadcast %cst_6 : f32 to vector<2x128xf32>
    %9 = arith.mulf %8, %5 : vector<2x128xf32>
    %10 = arith.select %7, %5, %9 : vector<2x128xi1>, vector<2x128xf32>
    %11 = arith.truncf %10 : vector<2x128xf32> to vector<2x128xbf16>
    %c0_7 = arith.constant 0 : index
    %c0_8 = arith.constant 0 : index
    %12 = vector.load %arg5[%c0_7, %c0_8] : memref<2x128xbf16, #tpu.memory_space<vmem>>, vector<2x128xbf16>
    tpu.vector_store %arg5[%c0_7, %c0_8], %11 {strides = array<i32>} : memref<2x128xbf16, #tpu.memory_space<vmem>>, vector<2x128xbf16>,
    return
  }
  func.func @transform_0(%arg0: i32, %arg1: i32) -> (i32, i32) {
    %c0_i32 = arith.constant 0 : i32
    %c0_i32_0 = arith.constant 0 : i32
    return %arg0, %c0_i32 : i32, i32
  }
  func.func @transform_1(%arg0: i32, %arg1: i32) -> (i32, i32) {
    %c0_i32 = arith.constant 0 : i32
    %c0_i32_0 = arith.constant 0 : i32
    return %c0_i32, %arg1 : i32, i32
  }
  func.func @transform_2(%arg0: i32, %arg1: i32) -> (i32, i32) {
    %c0_i32 = arith.constant 0 : i32
    %c0_i32_0 = arith.constant 0 : i32
    return %c0_i32, %arg1 : i32, i32
  }
  func.func @transform_3(%arg0: i32, %arg1: i32) -> (i32, i32) {
    %c0_i32 = arith.constant 0 : i32
    return %arg0, %arg1 : i32, i32
  }
}

module attributes {stable_mosaic.version = 11 : i64} {
  func.func @_gemm_bias_lrelu_kernel(%arg0: i32, %arg1: i32, %arg2: memref<16x1728xbf16, #tpu.memory_space<vmem>>, %arg3: memref<1728x64xbf16, #tpu.memory_space<vmem>>, %arg4: memref<1x64xf32, #tpu.memory_space<vmem>>, %arg5: memref<16x64xf32, #tpu.memory_space<vmem>>) attributes {dimension_semantics = [#tpu.dimension_semantics<parallel>, #tpu.dimension_semantics<parallel>], iteration_bounds = array<i64: 1, 1>, scalar_prefetch = 0 : i64, scratch_operands = 0 : i64, tpu.core_type = #tpu.core_type<tc>, window_params = [{transform_indices = @transform_0, window_bounds = array<i64: 16, 1728>}, {transform_indices = @transform_1, window_bounds = array<i64: 1728, 64>}, {transform_indices = @transform_2, window_bounds = array<i64: 1, 64>}, {transform_indices = @transform_3, window_bounds = array<i64: 16, 64>}]} {
    %c0 = arith.constant 0 : index
    %c0_0 = arith.constant 0 : index
    %0 = vector.load %arg2[%c0, %c0_0] : memref<16x1728xbf16, #tpu.memory_space<vmem>>, vector<16x1728xbf16>
    %c0_1 = arith.constant 0 : index
    %c0_2 = arith.constant 0 : index
    %1 = vector.load %arg3[%c0_1, %c0_2] : memref<1728x64xbf16, #tpu.memory_space<vmem>>, vector<1728x64xbf16>
    %cst = arith.constant dense<0.000000e+00> : vector<16x64xf32>
    %2 = tpu.matmul %0, %1, %cst {dimension_numbers = #tpu.dot_dimension_numbers<[1], [0], [0], [1], [0, 0, 1, 1], [], []>} : vector<16x1728xbf16>, vector<1728x64xbf16>, vector<16x64xf32> -> vector<16x64xf32>
    %c0_3 = arith.constant 0 : index
    %c0_4 = arith.constant 0 : index
    %3 = vector.load %arg4[%c0_3, %c0_4] : memref<1x64xf32, #tpu.memory_space<vmem>>, vector<1x64xf32>
    %4 = vector.broadcast %3 : vector<1x64xf32> to vector<16x64xf32>
    %5 = arith.addf %2, %4 : vector<16x64xf32>
    %cst_5 = arith.constant 0.000000e+00 : f32
    %6 = vector.broadcast %cst_5 : f32 to vector<16x64xf32>
    %7 = arith.cmpf oge, %5, %6 : vector<16x64xf32>
    %cst_6 = arith.constant 1.000000e-01 : f32
    %8 = vector.broadcast %cst_6 : f32 to vector<16x64xf32>
    %9 = arith.mulf %8, %5 : vector<16x64xf32>
    %10 = arith.select %7, %5, %9 : vector<16x64xi1>, vector<16x64xf32>
    %c0_7 = arith.constant 0 : index
    %c0_8 = arith.constant 0 : index
    %11 = vector.load %arg5[%c0_7, %c0_8] : memref<16x64xf32, #tpu.memory_space<vmem>>, vector<16x64xf32>
    tpu.vector_store %arg5[%c0_7, %c0_8], %10 {strides = array<i32>} : memref<16x64xf32, #tpu.memory_space<vmem>>, vector<16x64xf32>,
    return
  }
  func.func @transform_0(%arg0: i32, %arg1: i32) -> (i32, i32) {
    %c0_i32 = arith.constant 0 : i32
    %c0_i32_0 = arith.constant 0 : i32
    return %arg0, %c0_i32 : i32, i32
  }
  func.func @transform_1(%arg0: i32, %arg1: i32) -> (i32, i32) {
    %c0_i32 = arith.constant 0 : i32
    %c0_i32_0 = arith.constant 0 : i32
    return %c0_i32, %arg1 : i32, i32
  }
  func.func @transform_2(%arg0: i32, %arg1: i32) -> (i32, i32) {
    %c0_i32 = arith.constant 0 : i32
    %c0_i32_0 = arith.constant 0 : i32
    return %c0_i32, %arg1 : i32, i32
  }
  func.func @transform_3(%arg0: i32, %arg1: i32) -> (i32, i32) {
    %c0_i32 = arith.constant 0 : i32
    return %arg0, %arg1 : i32, i32
  }
}

module attributes {stable_mosaic.version = 11 : i64} {
  func.func @_gemm_bias_lrelu_kernel(%arg0: i32, %arg1: i32, %arg2: memref<2x128xbf16, #tpu.memory_space<vmem>>, %arg3: memref<128x128xbf16, #tpu.memory_space<vmem>>, %arg4: memref<1x128xf32, #tpu.memory_space<vmem>>, %arg5: memref<2x128xf32, #tpu.memory_space<vmem>>) attributes {dimension_semantics = [#tpu.dimension_semantics<parallel>, #tpu.dimension_semantics<parallel>], iteration_bounds = array<i64: 1, 1>, scalar_prefetch = 0 : i64, scratch_operands = 0 : i64, tpu.core_type = #tpu.core_type<tc>, window_params = [{transform_indices = @transform_0, window_bounds = array<i64: 2, 128>}, {transform_indices = @transform_1, window_bounds = array<i64: 128, 128>}, {transform_indices = @transform_2, window_bounds = array<i64: 1, 128>}, {transform_indices = @transform_3, window_bounds = array<i64: 2, 128>}]} {
    %c0 = arith.constant 0 : index
    %c0_0 = arith.constant 0 : index
    %0 = vector.load %arg2[%c0, %c0_0] : memref<2x128xbf16, #tpu.memory_space<vmem>>, vector<2x128xbf16>
    %c0_1 = arith.constant 0 : index
    %c0_2 = arith.constant 0 : index
    %1 = vector.load %arg3[%c0_1, %c0_2] : memref<128x128xbf16, #tpu.memory_space<vmem>>, vector<128x128xbf16>
    %cst = arith.constant dense<0.000000e+00> : vector<2x128xf32>
    %2 = tpu.matmul %0, %1, %cst {dimension_numbers = #tpu.dot_dimension_numbers<[1], [0], [0], [1], [0, 0, 1, 1], [], []>} : vector<2x128xbf16>, vector<128x128xbf16>, vector<2x128xf32> -> vector<2x128xf32>
    %c0_3 = arith.constant 0 : index
    %c0_4 = arith.constant 0 : index
    %3 = vector.load %arg4[%c0_3, %c0_4] : memref<1x128xf32, #tpu.memory_space<vmem>>, vector<1x128xf32>
    %4 = vector.broadcast %3 : vector<1x128xf32> to vector<2x128xf32>
    %5 = arith.addf %2, %4 : vector<2x128xf32>
    %cst_5 = arith.constant 0.000000e+00 : f32
    %6 = vector.broadcast %cst_5 : f32 to vector<2x128xf32>
    %7 = arith.cmpf oge, %5, %6 : vector<2x128xf32>
    %cst_6 = arith.constant 1.000000e-01 : f32
    %8 = vector.broadcast %cst_6 : f32 to vector<2x128xf32>
    %9 = arith.mulf %8, %5 : vector<2x128xf32>
    %10 = arith.select %7, %5, %9 : vector<2x128xi1>, vector<2x128xf32>
    %c0_7 = arith.constant 0 : index
    %c0_8 = arith.constant 0 : index
    %11 = vector.load %arg5[%c0_7, %c0_8] : memref<2x128xf32, #tpu.memory_space<vmem>>, vector<2x128xf32>
    tpu.vector_store %arg5[%c0_7, %c0_8], %10 {strides = array<i32>} : memref<2x128xf32, #tpu.memory_space<vmem>>, vector<2x128xf32>,
    return
  }
  func.func @transform_0(%arg0: i32, %arg1: i32) -> (i32, i32) {
    %c0_i32 = arith.constant 0 : i32
    %c0_i32_0 = arith.constant 0 : i32
    return %arg0, %c0_i32 : i32, i32
  }
  func.func @transform_1(%arg0: i32, %arg1: i32) -> (i32, i32) {
    %c0_i32 = arith.constant 0 : i32
    %c0_i32_0 = arith.constant 0 : i32
    return %c0_i32, %arg1 : i32, i32
  }
  func.func @transform_2(%arg0: i32, %arg1: i32) -> (i32, i32) {
    %c0_i32 = arith.constant 0 : i32
    %c0_i32_0 = arith.constant 0 : i32
    return %c0_i32, %arg1 : i32, i32
  }
  func.func @transform_3(%arg0: i32, %arg1: i32) -> (i32, i32) {
    %c0_i32 = arith.constant 0 : i32
    return %arg0, %arg1 : i32, i32
  }
}

module attributes {stable_mosaic.version = 11 : i64} {
  func.func @_gemm_bias_lrelu_kernel(%arg0: i32, %arg1: i32, %arg2: memref<2x128xbf16, #tpu.memory_space<vmem>>, %arg3: memref<128x128xbf16, #tpu.memory_space<vmem>>, %arg4: memref<1x128xf32, #tpu.memory_space<vmem>>, %arg5: memref<2x128xbf16, #tpu.memory_space<vmem>>) attributes {dimension_semantics = [#tpu.dimension_semantics<parallel>, #tpu.dimension_semantics<parallel>], iteration_bounds = array<i64: 1, 2>, scalar_prefetch = 0 : i64, scratch_operands = 0 : i64, tpu.core_type = #tpu.core_type<tc>, window_params = [{transform_indices = @transform_0, window_bounds = array<i64: 2, 128>}, {transform_indices = @transform_1, window_bounds = array<i64: 128, 128>}, {transform_indices = @transform_2, window_bounds = array<i64: 1, 128>}, {transform_indices = @transform_3, window_bounds = array<i64: 2, 128>}]} {
    %c0 = arith.constant 0 : index
    %c0_0 = arith.constant 0 : index
    %0 = vector.load %arg2[%c0, %c0_0] : memref<2x128xbf16, #tpu.memory_space<vmem>>, vector<2x128xbf16>
    %c0_1 = arith.constant 0 : index
    %c0_2 = arith.constant 0 : index
    %1 = vector.load %arg3[%c0_1, %c0_2] : memref<128x128xbf16, #tpu.memory_space<vmem>>, vector<128x128xbf16>
    %cst = arith.constant dense<0.000000e+00> : vector<2x128xf32>
    %2 = tpu.matmul %0, %1, %cst {dimension_numbers = #tpu.dot_dimension_numbers<[1], [0], [0], [1], [0, 0, 1, 1], [], []>} : vector<2x128xbf16>, vector<128x128xbf16>, vector<2x128xf32> -> vector<2x128xf32>
    %c0_3 = arith.constant 0 : index
    %c0_4 = arith.constant 0 : index
    %3 = vector.load %arg4[%c0_3, %c0_4] : memref<1x128xf32, #tpu.memory_space<vmem>>, vector<1x128xf32>
    %4 = vector.broadcast %3 : vector<1x128xf32> to vector<2x128xf32>
    %5 = arith.addf %2, %4 : vector<2x128xf32>
    %cst_5 = arith.constant 0.000000e+00 : f32
    %6 = vector.broadcast %cst_5 : f32 to vector<2x128xf32>
    %7 = arith.cmpf oge, %5, %6 : vector<2x128xf32>
    %cst_6 = arith.constant 1.000000e-01 : f32
    %8 = vector.broadcast %cst_6 : f32 to vector<2x128xf32>
    %9 = arith.mulf %8, %5 : vector<2x128xf32>
    %10 = arith.select %7, %5, %9 : vector<2x128xi1>, vector<2x128xf32>
    %11 = arith.truncf %10 : vector<2x128xf32> to vector<2x128xbf16>
    %c0_7 = arith.constant 0 : index
    %c0_8 = arith.constant 0 : index
    %12 = vector.load %arg5[%c0_7, %c0_8] : memref<2x128xbf16, #tpu.memory_space<vmem>>, vector<2x128xbf16>
    tpu.vector_store %arg5[%c0_7, %c0_8], %11 {strides = array<i32>} : memref<2x128xbf16, #tpu.memory_space<vmem>>, vector<2x128xbf16>,
    return
  }
  func.func @transform_0(%arg0: i32, %arg1: i32) -> (i32, i32) {
    %c0_i32 = arith.constant 0 : i32
    %c0_i32_0 = arith.constant 0 : i32
    return %arg0, %c0_i32 : i32, i32
  }
  func.func @transform_1(%arg0: i32, %arg1: i32) -> (i32, i32) {
    %c0_i32 = arith.constant 0 : i32
    %c0_i32_0 = arith.constant 0 : i32
    return %c0_i32, %arg1 : i32, i32
  }
  func.func @transform_2(%arg0: i32, %arg1: i32) -> (i32, i32) {
    %c0_i32 = arith.constant 0 : i32
    %c0_i32_0 = arith.constant 0 : i32
    return %c0_i32, %arg1 : i32, i32
  }
  func.func @transform_3(%arg0: i32, %arg1: i32) -> (i32, i32) {
    %c0_i32 = arith.constant 0 : i32
    return %arg0, %arg1 : i32, i32
  }
}

module attributes {stable_mosaic.version = 11 : i64} {
  func.func @_gemm_bias_lrelu_kernel(%arg0: i32, %arg1: i32, %arg2: memref<2x256xbf16, #tpu.memory_space<vmem>>, %arg3: memref<256x128xbf16, #tpu.memory_space<vmem>>, %arg4: memref<1x128xf32, #tpu.memory_space<vmem>>, %arg5: memref<2x128xf32, #tpu.memory_space<vmem>>) attributes {dimension_semantics = [#tpu.dimension_semantics<parallel>, #tpu.dimension_semantics<parallel>], iteration_bounds = array<i64: 1, 2>, scalar_prefetch = 0 : i64, scratch_operands = 0 : i64, tpu.core_type = #tpu.core_type<tc>, window_params = [{transform_indices = @transform_0, window_bounds = array<i64: 2, 256>}, {transform_indices = @transform_1, window_bounds = array<i64: 256, 128>}, {transform_indices = @transform_2, window_bounds = array<i64: 1, 128>}, {transform_indices = @transform_3, window_bounds = array<i64: 2, 128>}]} {
    %c0 = arith.constant 0 : index
    %c0_0 = arith.constant 0 : index
    %0 = vector.load %arg2[%c0, %c0_0] : memref<2x256xbf16, #tpu.memory_space<vmem>>, vector<2x256xbf16>
    %c0_1 = arith.constant 0 : index
    %c0_2 = arith.constant 0 : index
    %1 = vector.load %arg3[%c0_1, %c0_2] : memref<256x128xbf16, #tpu.memory_space<vmem>>, vector<256x128xbf16>
    %cst = arith.constant dense<0.000000e+00> : vector<2x128xf32>
    %2 = tpu.matmul %0, %1, %cst {dimension_numbers = #tpu.dot_dimension_numbers<[1], [0], [0], [1], [0, 0, 1, 1], [], []>} : vector<2x256xbf16>, vector<256x128xbf16>, vector<2x128xf32> -> vector<2x128xf32>
    %c0_3 = arith.constant 0 : index
    %c0_4 = arith.constant 0 : index
    %3 = vector.load %arg4[%c0_3, %c0_4] : memref<1x128xf32, #tpu.memory_space<vmem>>, vector<1x128xf32>
    %4 = vector.broadcast %3 : vector<1x128xf32> to vector<2x128xf32>
    %5 = arith.addf %2, %4 : vector<2x128xf32>
    %cst_5 = arith.constant 0.000000e+00 : f32
    %6 = vector.broadcast %cst_5 : f32 to vector<2x128xf32>
    %7 = arith.cmpf oge, %5, %6 : vector<2x128xf32>
    %cst_6 = arith.constant 1.000000e-01 : f32
    %8 = vector.broadcast %cst_6 : f32 to vector<2x128xf32>
    %9 = arith.mulf %8, %5 : vector<2x128xf32>
    %10 = arith.select %7, %5, %9 : vector<2x128xi1>, vector<2x128xf32>
    %c0_7 = arith.constant 0 : index
    %c0_8 = arith.constant 0 : index
    %11 = vector.load %arg5[%c0_7, %c0_8] : memref<2x128xf32, #tpu.memory_space<vmem>>, vector<2x128xf32>
    tpu.vector_store %arg5[%c0_7, %c0_8], %10 {strides = array<i32>} : memref<2x128xf32, #tpu.memory_space<vmem>>, vector<2x128xf32>,
    return
  }
  func.func @transform_0(%arg0: i32, %arg1: i32) -> (i32, i32) {
    %c0_i32 = arith.constant 0 : i32
    %c0_i32_0 = arith.constant 0 : i32
    return %arg0, %c0_i32 : i32, i32
  }
  func.func @transform_1(%arg0: i32, %arg1: i32) -> (i32, i32) {
    %c0_i32 = arith.constant 0 : i32
    %c0_i32_0 = arith.constant 0 : i32
    return %c0_i32, %arg1 : i32, i32
  }
  func.func @transform_2(%arg0: i32, %arg1: i32) -> (i32, i32) {
    %c0_i32 = arith.constant 0 : i32
    %c0_i32_0 = arith.constant 0 : i32
    return %c0_i32, %arg1 : i32, i32
  }
  func.func @transform_3(%arg0: i32, %arg1: i32) -> (i32, i32) {
    %c0_i32 = arith.constant 0 : i32
    return %arg0, %arg1 : i32, i32
  }
}

module attributes {stable_mosaic.version = 11 : i64} {
  func.func @_gemm_bias_lrelu_kernel(%arg0: i32, %arg1: i32, %arg2: memref<2x256xbf16, #tpu.memory_space<vmem>>, %arg3: memref<256x256xbf16, #tpu.memory_space<vmem>>, %arg4: memref<1x256xf32, #tpu.memory_space<vmem>>, %arg5: memref<2x256xbf16, #tpu.memory_space<vmem>>) attributes {dimension_semantics = [#tpu.dimension_semantics<parallel>, #tpu.dimension_semantics<parallel>], iteration_bounds = array<i64: 1, 2>, scalar_prefetch = 0 : i64, scratch_operands = 0 : i64, tpu.core_type = #tpu.core_type<tc>, window_params = [{transform_indices = @transform_0, window_bounds = array<i64: 2, 256>}, {transform_indices = @transform_1, window_bounds = array<i64: 256, 256>}, {transform_indices = @transform_2, window_bounds = array<i64: 1, 256>}, {transform_indices = @transform_3, window_bounds = array<i64: 2, 256>}]} {
    %c0 = arith.constant 0 : index
    %c0_0 = arith.constant 0 : index
    %0 = vector.load %arg2[%c0, %c0_0] : memref<2x256xbf16, #tpu.memory_space<vmem>>, vector<2x256xbf16>
    %c0_1 = arith.constant 0 : index
    %c0_2 = arith.constant 0 : index
    %1 = vector.load %arg3[%c0_1, %c0_2] : memref<256x256xbf16, #tpu.memory_space<vmem>>, vector<256x256xbf16>
    %cst = arith.constant dense<0.000000e+00> : vector<2x256xf32>
    %2 = tpu.matmul %0, %1, %cst {dimension_numbers = #tpu.dot_dimension_numbers<[1], [0], [0], [1], [0, 0, 1, 1], [], []>} : vector<2x256xbf16>, vector<256x256xbf16>, vector<2x256xf32> -> vector<2x256xf32>
    %c0_3 = arith.constant 0 : index
    %c0_4 = arith.constant 0 : index
    %3 = vector.load %arg4[%c0_3, %c0_4] : memref<1x256xf32, #tpu.memory_space<vmem>>, vector<1x256xf32>
    %4 = vector.broadcast %3 : vector<1x256xf32> to vector<2x256xf32>
    %5 = arith.addf %2, %4 : vector<2x256xf32>
    %cst_5 = arith.constant 0.000000e+00 : f32
    %6 = vector.broadcast %cst_5 : f32 to vector<2x256xf32>
    %7 = arith.cmpf oge, %5, %6 : vector<2x256xf32>
    %cst_6 = arith.constant 1.000000e-01 : f32
    %8 = vector.broadcast %cst_6 : f32 to vector<2x256xf32>
    %9 = arith.mulf %8, %5 : vector<2x256xf32>
    %10 = arith.select %7, %5, %9 : vector<2x256xi1>, vector<2x256xf32>
    %11 = arith.truncf %10 : vector<2x256xf32> to vector<2x256xbf16>
    %c0_7 = arith.constant 0 : index
    %c0_8 = arith.constant 0 : index
    %12 = vector.load %arg5[%c0_7, %c0_8] : memref<2x256xbf16, #tpu.memory_space<vmem>>, vector<2x256xbf16>
    tpu.vector_store %arg5[%c0_7, %c0_8], %11 {strides = array<i32>} : memref<2x256xbf16, #tpu.memory_space<vmem>>, vector<2x256xbf16>,
    return
  }
  func.func @transform_0(%arg0: i32, %arg1: i32) -> (i32, i32) {
    %c0_i32 = arith.constant 0 : i32
    %c0_i32_0 = arith.constant 0 : i32
    return %arg0, %c0_i32 : i32, i32
  }
  func.func @transform_1(%arg0: i32, %arg1: i32) -> (i32, i32) {
    %c0_i32 = arith.constant 0 : i32
    %c0_i32_0 = arith.constant 0 : i32
    return %c0_i32, %arg1 : i32, i32
  }
  func.func @transform_2(%arg0: i32, %arg1: i32) -> (i32, i32) {
    %c0_i32 = arith.constant 0 : i32
    %c0_i32_0 = arith.constant 0 : i32
    return %c0_i32, %arg1 : i32, i32
  }
  func.func @transform_3(%arg0: i32, %arg1: i32) -> (i32, i32) {
    %c0_i32 = arith.constant 0 : i32
    return %arg0, %arg1 : i32, i32
  }
}

module attributes {stable_mosaic.version = 11 : i64} {
  func.func @_gemm_bias_lrelu_kernel(%arg0: i32, %arg1: i32, %arg2: memref<2x512xbf16, #tpu.memory_space<vmem>>, %arg3: memref<512x256xbf16, #tpu.memory_space<vmem>>, %arg4: memref<1x256xf32, #tpu.memory_space<vmem>>, %arg5: memref<2x256xf32, #tpu.memory_space<vmem>>) attributes {dimension_semantics = [#tpu.dimension_semantics<parallel>, #tpu.dimension_semantics<parallel>], iteration_bounds = array<i64: 1, 2>, scalar_prefetch = 0 : i64, scratch_operands = 0 : i64, tpu.core_type = #tpu.core_type<tc>, window_params = [{transform_indices = @transform_0, window_bounds = array<i64: 2, 512>}, {transform_indices = @transform_1, window_bounds = array<i64: 512, 256>}, {transform_indices = @transform_2, window_bounds = array<i64: 1, 256>}, {transform_indices = @transform_3, window_bounds = array<i64: 2, 256>}]} {
    %c0 = arith.constant 0 : index
    %c0_0 = arith.constant 0 : index
    %0 = vector.load %arg2[%c0, %c0_0] : memref<2x512xbf16, #tpu.memory_space<vmem>>, vector<2x512xbf16>
    %c0_1 = arith.constant 0 : index
    %c0_2 = arith.constant 0 : index
    %1 = vector.load %arg3[%c0_1, %c0_2] : memref<512x256xbf16, #tpu.memory_space<vmem>>, vector<512x256xbf16>
    %cst = arith.constant dense<0.000000e+00> : vector<2x256xf32>
    %2 = tpu.matmul %0, %1, %cst {dimension_numbers = #tpu.dot_dimension_numbers<[1], [0], [0], [1], [0, 0, 1, 1], [], []>} : vector<2x512xbf16>, vector<512x256xbf16>, vector<2x256xf32> -> vector<2x256xf32>
    %c0_3 = arith.constant 0 : index
    %c0_4 = arith.constant 0 : index
    %3 = vector.load %arg4[%c0_3, %c0_4] : memref<1x256xf32, #tpu.memory_space<vmem>>, vector<1x256xf32>
    %4 = vector.broadcast %3 : vector<1x256xf32> to vector<2x256xf32>
    %5 = arith.addf %2, %4 : vector<2x256xf32>
    %cst_5 = arith.constant 0.000000e+00 : f32
    %6 = vector.broadcast %cst_5 : f32 to vector<2x256xf32>
    %7 = arith.cmpf oge, %5, %6 : vector<2x256xf32>
    %cst_6 = arith.constant 1.000000e-01 : f32
    %8 = vector.broadcast %cst_6 : f32 to vector<2x256xf32>
    %9 = arith.mulf %8, %5 : vector<2x256xf32>
    %10 = arith.select %7, %5, %9 : vector<2x256xi1>, vector<2x256xf32>
    %c0_7 = arith.constant 0 : index
    %c0_8 = arith.constant 0 : index
    %11 = vector.load %arg5[%c0_7, %c0_8] : memref<2x256xf32, #tpu.memory_space<vmem>>, vector<2x256xf32>
    tpu.vector_store %arg5[%c0_7, %c0_8], %10 {strides = array<i32>} : memref<2x256xf32, #tpu.memory_space<vmem>>, vector<2x256xf32>,
    return
  }
  func.func @transform_0(%arg0: i32, %arg1: i32) -> (i32, i32) {
    %c0_i32 = arith.constant 0 : i32
    %c0_i32_0 = arith.constant 0 : i32
    return %arg0, %c0_i32 : i32, i32
  }
  func.func @transform_1(%arg0: i32, %arg1: i32) -> (i32, i32) {
    %c0_i32 = arith.constant 0 : i32
    %c0_i32_0 = arith.constant 0 : i32
    return %c0_i32, %arg1 : i32, i32
  }
  func.func @transform_2(%arg0: i32, %arg1: i32) -> (i32, i32) {
    %c0_i32 = arith.constant 0 : i32
    %c0_i32_0 = arith.constant 0 : i32
    return %c0_i32, %arg1 : i32, i32
  }
  func.func @transform_3(%arg0: i32, %arg1: i32) -> (i32, i32) {
    %c0_i32 = arith.constant 0 : i32
    return %arg0, %arg1 : i32, i32
  }
}

</mosaic_0001>

<llo_original>
// kernel: run_encoder.10
$region0: #{run_encoder.10}
  #allocation0 [shape = 'u32[]', space=smem, size = 0x4, offset = 0x4, fixed_abs, tag = 'smem constant byte address 0x4 - core index']
  #allocation1 [shape = 'u32[72,128]{1,0:T(1,128)}', space=vmem, size = 0x9000, scoped, tag = 'internal scratch']
  %s0 = inlined_call_operand.vmem [shape: bf16[1024,54], index: 0, kind: input, shape index: {}]
  %s1 = inlined_call_operand.vmem [shape: bf16[54,16], index: 1, kind: input, shape index: {}]
  %s2 = inlined_call_operand.vmem [shape: f32[1,16], index: 2, kind: input, shape index: {}]
  %s3 = inlined_call_operand.vmem [shape: f32[1024,16], index: 3, kind: output, shape index: {}]
  %s4 = sld [smem:[#allocation0]]
  $region45: #{run_encoder.10} parent=0
    _
  %s6 = ssub.s32 1, %s4
  %s7 = scalar_select 0, %s6, %s4
  loop: start=0, step=1, limit=4
  $region2: #{run_encoder.10} parent=0 // loop_pre_header
    _
  $region3: #{run_encoder.10} parent=0 // loop_header
    %s9 = sphi 0, %s13
    %p10 = scmp.ge.s32.totalorder %s9, 4
    %s16 = sphi 0, %s28
    %s17 = sphi 0, %s24
    %s18 = sphi 0, %s16
    %s19 = sphi 0, %s17
    %s20 = sphi 0, %s18
    %s21 = sphi 0, %s19
    %s31 = sphi 0, %s33
    %s34 = sphi 0, %s31
    %s35 = sphi 0, %s34
    %s51 = sphi 0, %s35
    %s57 = sphi 0, %s59
    %s60 = sphi 0, %s57
    %s61 = sphi 0, %s60
    %s77 = sphi 0, %s61
    %s83 = sphi 0, %s85
    %s86 = sphi 0, %s83
    %s87 = sphi 0, %s86
    %s103 = sphi 0, %s87
    %s111 = sphi 0, %s113
    %s114 = sphi 0, %s111
    %s115 = sphi 0, %s114
    %s131 = sphi 0, %s115
  $region4: #{run_encoder.10} parent=0 // loop_header_branch
    %12 = sbr.rel (%p10) target = $region8
  $region5: #{run_encoder.10} parent=0 // loop_body
    %s14 = ssub.s32 %s9, 1
    %s15 = ssub.s32 %s9, 2
    %s22 = sadd.s32 1, %s17
    %p23 = scmp.ge.s32.totalorder %s22, 1
    %s24 = scalar_select %p23, 0, %s22
    %s25 = sadd.s32 1, %s16
    %s26 = scalar_select %p23, %s25, %s16
    %p27 = scmp.ge.s32.totalorder %s26, 2
    %s28 = scalar_select %p27, 0, %s26
    %s29 = ssub.s32 %s16, %s28
    %p30 = scmp.eq.s32.totalorder %s29, 0
    %s32 = sadd.s32 %s31, 1
    %s33 = scalar_select %p30, %s31, %s32
    %p36 = pneg %p30
    %p37 = scmp.eq.s32.totalorder %s9, 1
    %p38 = por %p36, %p37
    %p39 = scmp.ne.s32.totalorder %s31, %s34
    %p40 = scmp.eq.s32.totalorder %s9, 0
    %p41 = por %p39, %p40
    %p42 = scmp.ne.s32.totalorder %s31, %s34
    %p43 = scmp.eq.s32.totalorder %s14, 1
    %p44 = por %p42, %p43
    %p45 = scmp.ne.s32.totalorder %s34, %s35
    %p46 = scmp.eq.s32.totalorder %s14, 0
    %p47 = por %p45, %p46
    %p48 = scmp.ne.s32.totalorder %s34, %s35
    %p49 = scmp.eq.s32.totalorder %s15, 1
    %p50 = por %p48, %p49
    %p52 = scmp.ne.s32.totalorder %s35, %s51
    %p53 = scmp.eq.s32.totalorder %s15, 0
    %p54 = por %p52, %p53
    %s55 = ssub.s32 %s17, %s24
    %p56 = scmp.eq.s32.totalorder %s55, 0
    %s58 = sadd.s32 %s57, 1
    %s59 = scalar_select %p56, %s57, %s58
    %p62 = pneg %p56
    %p63 = scmp.eq.s32.totalorder %s9, 1
    %p64 = por %p62, %p63
    %p65 = scmp.ne.s32.totalorder %s57, %s60
    %p66 = scmp.eq.s32.totalorder %s9, 0
    %p67 = por %p65, %p66
    %p68 = scmp.ne.s32.totalorder %s57, %s60
    %p69 = scmp.eq.s32.totalorder %s14, 1
    %p70 = por %p68, %p69
    %p71 = scmp.ne.s32.totalorder %s60, %s61
    %p72 = scmp.eq.s32.totalorder %s14, 0
    %p73 = por %p71, %p72
    %p74 = scmp.ne.s32.totalorder %s60, %s61
    %p75 = scmp.eq.s32.totalorder %s15, 1
    %p76 = por %p74, %p75
    %p78 = scmp.ne.s32.totalorder %s61, %s77
    %p79 = scmp.eq.s32.totalorder %s15, 0
    %p80 = por %p78, %p79
    %s81 = ssub.s32 %s17, %s24
    %p82 = scmp.eq.s32.totalorder %s81, 0
    %s84 = sadd.s32 %s83, 1
    %s85 = scalar_select %p82, %s83, %s84
    %p88 = pneg %p82
    %p89 = scmp.eq.s32.totalorder %s9, 1
    %p90 = por %p88, %p89
    %p91 = scmp.ne.s32.totalorder %s83, %s86
    %p92 = scmp.eq.s32.totalorder %s9, 0
    %p93 = por %p91, %p92
    %p94 = scmp.ne.s32.totalorder %s83, %s86
    %p95 = scmp.eq.s32.totalorder %s14, 1
    %p96 = por %p94, %p95
    %p97 = scmp.ne.s32.totalorder %s86, %s87
    %p98 = scmp.eq.s32.totalorder %s14, 0
    %p99 = por %p97, %p98
    %p100 = scmp.ne.s32.totalorder %s86, %s87
    %p101 = scmp.eq.s32.totalorder %s15, 1
    %p102 = por %p100, %p101
    %p104 = scmp.ne.s32.totalorder %s87, %s103
    %p105 = scmp.eq.s32.totalorder %s15, 0
    %p106 = por %p104, %p105
    %s107 = ssub.s32 %s16, %s28
    %s108 = ssub.s32 %s17, %s24
    %s109 = sor.u32 %s107, %s108
    %p110 = scmp.eq.s32.totalorder %s109, 0
    %s112 = sadd.s32 %s111, 1
    %s113 = scalar_select %p110, %s111, %s112
    %p116 = pneg %p110
    %p117 = scmp.eq.s32.totalorder %s9, 1
    %p118 = por %p116, %p117
    %p119 = scmp.ne.s32.totalorder %s111, %s114
    %p120 = scmp.eq.s32.totalorder %s9, 0
    %p121 = por %p119, %p120
    %p122 = scmp.ne.s32.totalorder %s111, %s114
    %p123 = scmp.eq.s32.totalorder %s14, 1
    %p124 = por %p122, %p123
    %p125 = scmp.ne.s32.totalorder %s114, %s115
    %p126 = scmp.eq.s32.totalorder %s14, 0
    %p127 = por %p125, %p126
    %p128 = scmp.ne.s32.totalorder %s114, %s115
    %p129 = scmp.eq.s32.totalorder %s15, 1
    %p130 = por %p128, %p129
    %p132 = scmp.ne.s32.totalorder %s115, %s131
    %p133 = scmp.eq.s32.totalorder %s15, 0
    %p134 = por %p132, %p133
    %p135 = scmp.le.s32.totalorder 1, %s9
    %p136 = scmp.lt.s32.totalorder %s9, 3
    %p137 = pnand %p135, %p136
    %p138 = pneg %p137
    // Predicated region
    $region9: #{run_encoder.10} parent=5 // pred_check
      _
    $region10: #{run_encoder.10} parent=5 // pred_check_branch
      %140 = sbr.rel (%p137) target = $region12
    $region11: #{run_encoder.10} parent=5 // pred_region
      %s141 = ssub.s32 %s9, 1
      // Predicated region
      $region13: #{run_encoder.10} parent=11 // pred_check
        %p142 = pneg %p73
      $region14: #{run_encoder.10} parent=11 // pred_check_branch
        %144 = sbr.rel (%p142) target = $region16
      $region15: #{run_encoder.10} parent=11 // pred_region
        %p145 = scmp.lt.s32.totalorder %s19, 0
        %s146 = scalar_select %p145, %s19, 0
        %s147 = smul.addr %s146, 4
        %s148 = scalar_lea.vmem %s1, %s147
      $region16: #{run_encoder.10} parent=11 // pred_fallthru
        _
      // Predicated region
      $region17: #{run_encoder.10} parent=11 // pred_check
        %p149 = pneg %p99
      $region18: #{run_encoder.10} parent=11 // pred_check_branch
        %151 = sbr.rel (%p149) target = $region20
      $region19: #{run_encoder.10} parent=11 // pred_region
        %p152 = scmp.lt.s32.totalorder %s19, 0
        %s153 = scalar_select %p152, %s19, 0
        %s154 = scalar_lea.vmem %s2, %s153
      $region20: #{run_encoder.10} parent=11 // pred_fallthru
        _
    $region12: #{run_encoder.10} parent=5 // pred_fallthru
      _
    %p155 = scmp.lt.s32.totalorder %s9, 2
    // Predicated region
    $region21: #{run_encoder.10} parent=5 // pred_check
      %p156 = pneg %p155
    $region22: #{run_encoder.10} parent=5 // pred_check_branch
      %158 = sbr.rel (%p156) target = $region24
    $region23: #{run_encoder.10} parent=5 // pred_region
      // Predicated region
      $region25: #{run_encoder.10} parent=23 // pred_check
        %p159 = pneg %p41
      $region26: #{run_encoder.10} parent=23 // pred_check_branch
        %161 = sbr.rel (%p159) target = $region28
      $region27: #{run_encoder.10} parent=23 // pred_region
        %s162 = smul.u32 64, %s16
        %p163 = scmp.lt.s32.totalorder %s162, 127
        %s164 = scalar_select %p163, %s162, 127
        %s165 = smul.addr %s164, 4
        %s166 = scalar_lea.vmem %s0, %s165
        %s167 = smul.u32 64, %s16
      $region28: #{run_encoder.10} parent=23 // pred_fallthru
        _
    $region24: #{run_encoder.10} parent=5 // pred_fallthru
      _
    %p168 = scmp.le.s32.totalorder 1, %s9
    %p169 = scmp.lt.s32.totalorder %s9, 3
    %p170 = pnand %p168, %p169
    %p171 = pneg %p170
    // Predicated region
    $region29: #{run_encoder.10} parent=5 // pred_check
      _
    $region30: #{run_encoder.10} parent=5 // pred_check_branch
      %173 = sbr.rel (%p170) target = $region32
    $region31: #{run_encoder.10} parent=5 // pred_region
      %s174 = ssub.s32 %s9, 1
      %s175 = smul.u32 64, %s18
      %p176 = scmp.lt.s32.totalorder %s175, 127
      %s177 = scalar_select %p176, %s175, 127
      %s178 = smul.addr %s177, 4
      %s179 = scalar_lea.vmem %s0, %s178
      %p180 = pneg %p47
      %p181 = pneg %p44
      %p182 = scmp.lt.s32.totalorder %s19, 0
      %s183 = scalar_select %p182, %s19, 0
      %s184 = smul.addr %s183, 4
      %s185 = scalar_lea.vmem %s1, %s184
      %p186 = pneg %p73
      %p187 = pneg %p70
      %p188 = scmp.lt.s32.totalorder %s19, 0
      %s189 = scalar_select %p188, %s19, 0
      %s190 = scalar_lea.vmem %s2, %s189
      %p191 = pneg %p99
      %p192 = pneg %p96
      %p193 = pneg %p127
      %p194 = pneg %p124
      %s195 = smul.u32 64, %s18
      %p196 = scmp.lt.s32.totalorder %s195, 127
      %s197 = scalar_select %p196, %s195, 127
      %p198 = scmp.lt.s32.totalorder %s19, 0
      %s199 = scalar_select %p198, %s19, 0
      %s200 = sadd.s32 %s199, %s197
      %s201 = smul.addr %s200, 8
      %s202 = scalar_lea.vmem %s3, %s201
      %s203 = smul.u32 64, %s18
      %p204 = scmp.lt.s32.totalorder %s203, 127
      %s205 = scalar_select %p204, %s203, 127
      %s206 = smul.addr %s205, 4
      %s207 = scalar_lea.vmem %s0, %s206
      %s208 = smul.u32 64, %s18
      %p209 = scmp.lt.s32.totalorder %s19, 0
      %s210 = scalar_select %p209, %s19, 0
      %s211 = smul.addr %s210, 4
      %s212 = scalar_lea.vmem %s1, %s211
      %p213 = scmp.lt.s32.totalorder %s19, 0
      %s214 = scalar_select %p213, %s19, 0
      %s215 = scalar_lea.vmem %s2, %s214
      %s216 = smul.u32 64, %s18
      %p217 = scmp.lt.s32.totalorder %s216, 127
      %s218 = scalar_select %p217, %s216, 127
      %p219 = scmp.lt.s32.totalorder %s19, 0
      %s220 = scalar_select %p219, %s19, 0
      %s221 = sadd.s32 %s220, %s218
      %s222 = smul.addr %s221, 8
      %s223 = scalar_lea.vmem %s3, %s222
      %s224 = smul.u32 64, %s18
      %v226 = vld [vmem:[%s207] sm:$0xf]
      %v227 = vld [vmem:[%s207 + $0x4] sm:$0xf]
      %v228 = vld [vmem:[%s207 + $0x8] sm:$0xf]
      %v229 = vld [vmem:[%s207 + $0xc] sm:$0xf]
      %v230 = vld [vmem:[%s207 + $0x10] sm:$0xf]
      %v231 = vld [vmem:[%s207 + $0x14] sm:$0xf]
      %v232 = vld [vmem:[%s207 + $0x18] sm:$0xf]
      %v233 = vld [vmem:[%s207 + $0x1c] sm:$0xf]
      %v234 = vld [vmem:[%s207 + $0x20] sm:$0xf]
      %v235 = vld [vmem:[%s207 + $0x24] sm:$0xf]
      %v236 = vld [vmem:[%s207 + $0x28] sm:$0xf]
      %v237 = vld [vmem:[%s207 + $0x2c] sm:$0xf]
      %v238 = vld [vmem:[%s207 + $0x30] sm:$0xf]
      %v239 = vld [vmem:[%s207 + $0x34] sm:$0xf]
      %v240 = vld [vmem:[%s207 + $0x38] sm:$0xf]
      %v241 = vld [vmem:[%s207 + $0x3c] sm:$0xf]
      %v242 = vld [vmem:[%s207 + $0x40] sm:$0xf]
      %v243 = vld [vmem:[%s207 + $0x44] sm:$0xf]
      %v244 = vld [vmem:[%s207 + $0x48] sm:$0xf]
      %v245 = vld [vmem:[%s207 + $0x4c] sm:$0xf]
      %v246 = vld [vmem:[%s207 + $0x50] sm:$0xf]
      %v247 = vld [vmem:[%s207 + $0x54] sm:$0xf]
      %v248 = vld [vmem:[%s207 + $0x58] sm:$0xf]
      %v249 = vld [vmem:[%s207 + $0x5c] sm:$0xf]
      %v250 = vld [vmem:[%s207 + $0x60] sm:$0xf]
      %v251 = vld [vmem:[%s207 + $0x64] sm:$0xf]
      %v252 = vld [vmem:[%s207 + $0x68] sm:$0xf]
      %v253 = vld [vmem:[%s207 + $0x6c] sm:$0xf]
      %v254 = vld [vmem:[%s207 + $0x70] sm:$0xf]
      %v255 = vld [vmem:[%s207 + $0x74] sm:$0xf]
      %v256 = vld [vmem:[%s207 + $0x78] sm:$0xf]
      %v257 = vld [vmem:[%s207 + $0x7c] sm:$0xf]
      %v258 = vld [vmem:[%s207 + $0x80] sm:$0xf]
      %v259 = vld [vmem:[%s207 + $0x84] sm:$0xf]
      %v260 = vld [vmem:[%s207 + $0x88] sm:$0xf]
      %v261 = vld [vmem:[%s207 + $0x8c] sm:$0xf]
      %v262 = vld [vmem:[%s207 + $0x90] sm:$0xf]
      %v263 = vld [vmem:[%s207 + $0x94] sm:$0xf]
      %v264 = vld [vmem:[%s207 + $0x98] sm:$0xf]
      %v265 = vld [vmem:[%s207 + $0x9c] sm:$0xf]
      %v266 = vld [vmem:[%s207 + $0xa0] sm:$0xf]
      %v267 = vld [vmem:[%s207 + $0xa4] sm:$0xf]
      %v268 = vld [vmem:[%s207 + $0xa8] sm:$0xf]
      %v269 = vld [vmem:[%s207 + $0xac] sm:$0xf]
      %v270 = vld [vmem:[%s207 + $0xb0] sm:$0xf]
      %v271 = vld [vmem:[%s207 + $0xb4] sm:$0xf]
      %v272 = vld [vmem:[%s207 + $0xb8] sm:$0xf]
      %v273 = vld [vmem:[%s207 + $0xbc] sm:$0xf]
      %v274 = vld [vmem:[%s207 + $0xc0] sm:$0xf]
      %v275 = vld [vmem:[%s207 + $0xc4] sm:$0xf]
      %v276 = vld [vmem:[%s207 + $0xc8] sm:$0xf]
      %v277 = vld [vmem:[%s207 + $0xcc] sm:$0xf]
      %v278 = vld [vmem:[%s207 + $0xd0] sm:$0xf]
      %v279 = vld [vmem:[%s207 + $0xd4] sm:$0xf]
      %v280 = vld [vmem:[%s207 + $0xd8] sm:$0xf]
      %v281 = vld [vmem:[%s207 + $0xdc] sm:$0xf]
      %v282 = vld [vmem:[%s207 + $0xe0] sm:$0xf]
      %v283 = vld [vmem:[%s207 + $0xe4] sm:$0xf]
      %v284 = vld [vmem:[%s207 + $0xe8] sm:$0xf]
      %v285 = vld [vmem:[%s207 + $0xec] sm:$0xf]
      %v286 = vld [vmem:[%s207 + $0xf0] sm:$0xf]
      %v287 = vld [vmem:[%s207 + $0xf4] sm:$0xf]
      %v288 = vld [vmem:[%s207 + $0xf8] sm:$0xf]
      %v289 = vld [vmem:[%s207 + $0xfc] sm:$0xf]
      %v290 = vld [vmem:[%s212] sm:$0xf]
      %v291 = vld [vmem:[%s212 + $0x4] sm:$0xf]
      %v292 = vld [vmem:[%s212 + $0x8] sm:$0xf]
      %v293 = vld [vmem:[%s212 + $0xc] sm:$0xf]
      %v294 = vld [vmem:[%s212 + $0x10] sm:$0xf]
      %v295 = vld [vmem:[%s212 + $0x14] sm:$0xf]
      %v296 = vld [vmem:[%s212 + $0x18] sm:$0x7]
      %v297 = vld [vmem:[%s215] sm:$0x1]
      %v299 = vperm.slane %v297, 0
      %v365 = vunpack.c.l.b16 %v226
      %v366 = vunpack.c.l.b16 %v227
      %v367 = vunpack.c.l.b16 %v228
      %v368 = vunpack.c.l.b16 %v229
      %v369 = vunpack.c.l.b16 %v230
      %v370 = vunpack.c.l.b16 %v231
      %v371 = vunpack.c.l.b16 %v232
      %v372 = vunpack.c.l.b16 %v233
      %v373 = vunpack.c.l.b16 %v234
      %v374 = vunpack.c.l.b16 %v235
      %v375 = vunpack.c.l.b16 %v236
      %v376 = vunpack.c.l.b16 %v237
      %v377 = vunpack.c.l.b16 %v238
      %v378 = vunpack.c.l.b16 %v239
      %v379 = vunpack.c.l.b16 %v240
      %v380 = vunpack.c.l.b16 %v241
      %v381 = vunpack.c.l.b16 %v242
      %v382 = vunpack.c.l.b16 %v243
      %v383 = vunpack.c.l.b16 %v244
      %v384 = vunpack.c.l.b16 %v245
      %v385 = vunpack.c.l.b16 %v246
      %v386 = vunpack.c.l.b16 %v247
      %v387 = vunpack.c.l.b16 %v248
      %v388 = vunpack.c.l.b16 %v249
      %v389 = vunpack.c.l.b16 %v250
      %v390 = vunpack.c.l.b16 %v251
      %v391 = vunpack.c.l.b16 %v252
      %v392 = vunpack.c.l.b16 %v253
      %v393 = vunpack.c.l.b16 %v254
      %v394 = vunpack.c.l.b16 %v255
      %v395 = vunpack.c.l.b16 %v256
      %v396 = vunpack.c.l.b16 %v257
      %v397 = vunpack.c.l.b16 %v258
      %v398 = vunpack.c.l.b16 %v259
      %v399 = vunpack.c.l.b16 %v260
      %v400 = vunpack.c.l.b16 %v261
      %v401 = vunpack.c.l.b16 %v262
      %v402 = vunpack.c.l.b16 %v263
      %v403 = vunpack.c.l.b16 %v264
      %v404 = vunpack.c.l.b16 %v265
      %v405 = vunpack.c.l.b16 %v266
      %v406 = vunpack.c.l.b16 %v267
      %v407 = vunpack.c.l.b16 %v268
      %v408 = vunpack.c.l.b16 %v269
      %v409 = vunpack.c.l.b16 %v270
      %v410 = vunpack.c.l.b16 %v271
      %v411 = vunpack.c.l.b16 %v272
      %v412 = vunpack.c.l.b16 %v273
      %v413 = vunpack.c.l.b16 %v274
      %v414 = vunpack.c.l.b16 %v275
      %v415 = vunpack.c.l.b16 %v276
      %v416 = vunpack.c.l.b16 %v277
      %v417 = vunpack.c.l.b16 %v278
      %v418 = vunpack.c.l.b16 %v279
      %v419 = vunpack.c.l.b16 %v280
      %v420 = vunpack.c.l.b16 %v281
      %v421 = vunpack.c.l.b16 %v282
      %v422 = vunpack.c.l.b16 %v283
      %v423 = vunpack.c.l.b16 %v284
      %v424 = vunpack.c.l.b16 %v285
      %v425 = vunpack.c.l.b16 %v286
      %v426 = vunpack.c.l.b16 %v287
      %v427 = vunpack.c.l.b16 %v288
      %v428 = vunpack.c.l.b16 %v289
      %v429 = vpack.c.b16 %v366, %v365
      %v430 = vpack.c.b16 %v368, %v367
      %v431 = vpack.c.b16 %v370, %v369
      %v432 = vpack.c.b16 %v372, %v371
      %v433 = vpack.c.b16 %v374, %v373
      %v434 = vpack.c.b16 %v376, %v375
      %v435 = vpack.c.b16 %v378, %v377
      %v436 = vpack.c.b16 %v380, %v379
      %v437 = vpack.c.b16 %v382, %v381
      %v438 = vpack.c.b16 %v384, %v383
      %v439 = vpack.c.b16 %v386, %v385
      %v440 = vpack.c.b16 %v388, %v387
      %v441 = vpack.c.b16 %v390, %v389
      %v442 = vpack.c.b16 %v392, %v391
      %v443 = vpack.c.b16 %v394, %v393
      %v444 = vpack.c.b16 %v396, %v395
      %v445 = vpack.c.b16 %v398, %v397
      %v446 = vpack.c.b16 %v400, %v399
      %v447 = vpack.c.b16 %v402, %v401
      %v448 = vpack.c.b16 %v404, %v403
      %v449 = vpack.c.b16 %v406, %v405
      %v450 = vpack.c.b16 %v408, %v407
      %v451 = vpack.c.b16 %v410, %v409
      %v452 = vpack.c.b16 %v412, %v411
      %v453 = vpack.c.b16 %v414, %v413
      %v454 = vpack.c.b16 %v416, %v415
      %v455 = vpack.c.b16 %v418, %v417
      %v456 = vpack.c.b16 %v420, %v419
      %v457 = vpack.c.b16 %v422, %v421
      %v458 = vpack.c.b16 %v424, %v423
      %v459 = vpack.c.b16 %v426, %v425
      %v460 = vpack.c.b16 %v428, %v427
      %v468 = vunpack.c.l.b16 %v290
      %v469 = vunpack.c.l.b16 %v291
      %v470 = vunpack.c.l.b16 %v292
      %v471 = vunpack.c.l.b16 %v293
      %v472 = vunpack.c.l.b16 %v294
      %v473 = vunpack.c.l.b16 %v295
      %v474 = vunpack.c.l.b16 %v296
      %v475 = vpack.c.b16 %v469, %v468
      %v476 = vpack.c.b16 %v471, %v470
      %v477 = vpack.c.b16 %v473, %v472
      %v478 = vpack.c.b16 %v474, %v474
      %vm482 = vcmask 441344
      %v484 = vsel %vm482, %v429, 0
      %v487 = vsel %vm482, %v430, 0
      %v490 = vsel %vm482, %v431, 0
      %v493 = vsel %vm482, %v432, 0
      %v496 = vsel %vm482, %v433, 0
      %v499 = vsel %vm482, %v434, 0
      %v502 = vsel %vm482, %v435, 0
      %v505 = vsel %vm482, %v436, 0
      %v508 = vsel %vm482, %v437, 0
      %v511 = vsel %vm482, %v438, 0
      %v514 = vsel %vm482, %v439, 0
      %v517 = vsel %vm482, %v440, 0
      %v520 = vsel %vm482, %v441, 0
      %v523 = vsel %vm482, %v442, 0
      %v526 = vsel %vm482, %v443, 0
      %v529 = vsel %vm482, %v444, 0
      %v532 = vsel %vm482, %v445, 0
      %v535 = vsel %vm482, %v446, 0
      %v538 = vsel %vm482, %v447, 0
      %v541 = vsel %vm482, %v448, 0
      %v544 = vsel %vm482, %v449, 0
      %v547 = vsel %vm482, %v450, 0
      %v550 = vsel %vm482, %v451, 0
      %v553 = vsel %vm482, %v452, 0
      %v556 = vsel %vm482, %v453, 0
      %v559 = vsel %vm482, %v454, 0
      %v562 = vsel %vm482, %v455, 0
      %v565 = vsel %vm482, %v456, 0
      %v568 = vsel %vm482, %v457, 0
      %v571 = vsel %vm482, %v458, 0
      %v574 = vsel %vm482, %v459, 0
      %v577 = vsel %vm482, %v460, 0
      %vm579 = vcmask 1042432
      %v581 = vsel %vm579, %v478, 0
      %583 = vmatpush.bf16.msra.mxu0 0
      %584 = vmatpush.bf16.msra.mxu0 0
      %585 = vmatpush.bf16.msra.mxu0 0
      %586 = vmatpush.bf16.msra.mxu0 0
      %587 = vmatpush.bf16.msra.mxu0 %v581
      %588 = vmatpush.bf16.msra.mxu0 %v477
      %589 = vmatpush.bf16.msra.mxu0 %v476
      %590 = vmatpush.bf16.msra.mxu0 %v475
      %591 = vmatmul.bf16.gmra.mxu0 %v484
      %v592 = vpop.f32.mrf.mxu0
      %v593 = vadd.f32 %v299, %v592
      %v594 = vpop.f32.mrf.mxu0
      %v595 = vadd.f32 %v299, %v594
      %596 = vmatmul.bf16.gmra.mxu0 %v487
      %v597 = vpop.f32.mrf.mxu0
      %v598 = vadd.f32 %v299, %v597
      %v599 = vpop.f32.mrf.mxu0
      %v600 = vadd.f32 %v299, %v599
      %601 = vmatmul.bf16.gmra.mxu0 %v490
      %v602 = vpop.f32.mrf.mxu0
      %v603 = vadd.f32 %v299, %v602
      %v604 = vpop.f32.mrf.mxu0
      %v605 = vadd.f32 %v299, %v604
      %606 = vmatmul.bf16.gmra.mxu0 %v493
      %v607 = vpop.f32.mrf.mxu0
      %v608 = vadd.f32 %v299, %v607
      %v609 = vpop.f32.mrf.mxu0
      %v610 = vadd.f32 %v299, %v609
      %611 = vmatmul.bf16.gmra.mxu0 %v496
      %v612 = vpop.f32.mrf.mxu0
      %v613 = vadd.f32 %v299, %v612
      %v614 = vpop.f32.mrf.mxu0
      %v615 = vadd.f32 %v299, %v614
      %616 = vmatmul.bf16.gmra.mxu0 %v499
      %v617 = vpop.f32.mrf.mxu0
      %v618 = vadd.f32 %v299, %v617
      %v619 = vpop.f32.mrf.mxu0
      %v620 = vadd.f32 %v299, %v619
      %621 = vmatmul.bf16.gmra.mxu0 %v502
      %v622 = vpop.f32.mrf.mxu0
      %v623 = vadd.f32 %v299, %v622
      %v624 = vpop.f32.mrf.mxu0
      %v625 = vadd.f32 %v299, %v624
      %626 = vmatmul.bf16.gmra.mxu0 %v505
      %v627 = vpop.f32.mrf.mxu0
      %v628 = vadd.f32 %v299, %v627
      %v629 = vpop.f32.mrf.mxu0
      %v630 = vadd.f32 %v299, %v629
      %631 = vmatmul.bf16.gmra.mxu0 %v508
      %v632 = vpop.f32.mrf.mxu0
      %v633 = vadd.f32 %v299, %v632
      %v634 = vpop.f32.mrf.mxu0
      %v635 = vadd.f32 %v299, %v634
      %636 = vmatmul.bf16.gmra.mxu0 %v511
      %v637 = vpop.f32.mrf.mxu0
      %v638 = vadd.f32 %v299, %v637
      %v639 = vpop.f32.mrf.mxu0
      %v640 = vadd.f32 %v299, %v639
      %641 = vmatmul.bf16.gmra.mxu0 %v514
      %v642 = vpop.f32.mrf.mxu0
      %v643 = vadd.f32 %v299, %v642
      %v644 = vpop.f32.mrf.mxu0
      %v645 = vadd.f32 %v299, %v644
      %646 = vmatmul.bf16.gmra.mxu0 %v517
      %v647 = vpop.f32.mrf.mxu0
      %v648 = vadd.f32 %v299, %v647
      %v649 = vpop.f32.mrf.mxu0
      %v650 = vadd.f32 %v299, %v649
      %651 = vmatmul.bf16.gmra.mxu0 %v520
      %v652 = vpop.f32.mrf.mxu0
      %v653 = vadd.f32 %v299, %v652
      %v654 = vpop.f32.mrf.mxu0
      %v655 = vadd.f32 %v299, %v654
      %656 = vmatmul.bf16.gmra.mxu0 %v523
      %v657 = vpop.f32.mrf.mxu0
      %v658 = vadd.f32 %v299, %v657
      %v659 = vpop.f32.mrf.mxu0
      %v660 = vadd.f32 %v299, %v659
      %661 = vmatmul.bf16.gmra.mxu0 %v526
      %v662 = vpop.f32.mrf.mxu0
      %v663 = vadd.f32 %v299, %v662
      %v664 = vpop.f32.mrf.mxu0
      %v665 = vadd.f32 %v299, %v664
      %666 = vmatmul.bf16.gmra.mxu0 %v529
      %v667 = vpop.f32.mrf.mxu0
      %v668 = vadd.f32 %v299, %v667
      %v669 = vpop.f32.mrf.mxu0
      %v670 = vadd.f32 %v299, %v669
      %671 = vmatmul.bf16.gmra.mxu0 %v532
      %v672 = vpop.f32.mrf.mxu0
      %v673 = vadd.f32 %v299, %v672
      %v674 = vpop.f32.mrf.mxu0
      %v675 = vadd.f32 %v299, %v674
      %676 = vmatmul.bf16.gmra.mxu0 %v535
      %v677 = vpop.f32.mrf.mxu0
      %v678 = vadd.f32 %v299, %v677
      %v679 = vpop.f32.mrf.mxu0
      %v680 = vadd.f32 %v299, %v679
      %681 = vmatmul.bf16.gmra.mxu0 %v538
      %v682 = vpop.f32.mrf.mxu0
      %v683 = vadd.f32 %v299, %v682
      %v684 = vpop.f32.mrf.mxu0
      %v685 = vadd.f32 %v299, %v684
      %686 = vmatmul.bf16.gmra.mxu0 %v541
      %v687 = vpop.f32.mrf.mxu0
      %v688 = vadd.f32 %v299, %v687
      %v689 = vpop.f32.mrf.mxu0
      %v690 = vadd.f32 %v299, %v689
      %691 = vmatmul.bf16.gmra.mxu0 %v544
      %v692 = vpop.f32.mrf.mxu0
      %v693 = vadd.f32 %v299, %v692
      %v694 = vpop.f32.mrf.mxu0
      %v695 = vadd.f32 %v299, %v694
      %696 = vmatmul.bf16.gmra.mxu0 %v547
      %v697 = vpop.f32.mrf.mxu0
      %v698 = vadd.f32 %v299, %v697
      %v699 = vpop.f32.mrf.mxu0
      %v700 = vadd.f32 %v299, %v699
      %701 = vmatmul.bf16.gmra.mxu0 %v550
      %v702 = vpop.f32.mrf.mxu0
      %v703 = vadd.f32 %v299, %v702
      %v704 = vpop.f32.mrf.mxu0
      %v705 = vadd.f32 %v299, %v704
      %706 = vmatmul.bf16.gmra.mxu0 %v553
      %v707 = vpop.f32.mrf.mxu0
      %v708 = vadd.f32 %v299, %v707
      %v709 = vpop.f32.mrf.mxu0
      %v710 = vadd.f32 %v299, %v709
      %711 = vmatmul.bf16.gmra.mxu0 %v556
      %v712 = vpop.f32.mrf.mxu0
      %v713 = vadd.f32 %v299, %v712
      %v714 = vpop.f32.mrf.mxu0
      %v715 = vadd.f32 %v299, %v714
      %716 = vmatmul.bf16.gmra.mxu0 %v559
      %v717 = vpop.f32.mrf.mxu0
      %v718 = vadd.f32 %v299, %v717
      %v719 = vpop.f32.mrf.mxu0
      %v720 = vadd.f32 %v299, %v719
      %721 = vmatmul.bf16.gmra.mxu0 %v562
      %v722 = vpop.f32.mrf.mxu0
      %v723 = vadd.f32 %v299, %v722
      %v724 = vpop.f32.mrf.mxu0
      %v725 = vadd.f32 %v299, %v724
      %726 = vmatmul.bf16.gmra.mxu0 %v565
      %v727 = vpop.f32.mrf.mxu0
      %v728 = vadd.f32 %v299, %v727
      %v729 = vpop.f32.mrf.mxu0
      %v730 = vadd.f32 %v299, %v729
      %731 = vmatmul.bf16.gmra.mxu0 %v568
      %v732 = vpop.f32.mrf.mxu0
      %v733 = vadd.f32 %v299, %v732
      %v734 = vpop.f32.mrf.mxu0
      %v735 = vadd.f32 %v299, %v734
      %736 = vmatmul.bf16.gmra.mxu0 %v571
      %v737 = vpop.f32.mrf.mxu0
      %v738 = vadd.f32 %v299, %v737
      %v739 = vpop.f32.mrf.mxu0
      %v740 = vadd.f32 %v299, %v739
      %741 = vmatmul.bf16.gmra.mxu0 %v574
      %v742 = vpop.f32.mrf.mxu0
      %v743 = vadd.f32 %v299, %v742
      %v744 = vpop.f32.mrf.mxu0
      %v745 = vadd.f32 %v299, %v744
      %746 = vmatmul.bf16.gmra.mxu0 %v577
      %v747 = vpop.f32.mrf.mxu0
      %v748 = vadd.f32 %v299, %v747
      %v749 = vpop.f32.mrf.mxu0
      %v750 = vadd.f32 %v299, %v749
      %751 = vdwg.mxu0
      %vm752 = vcmp.ge.f32.partialorder %v593, 0.0
      %vm753 = vcmp.ge.f32.partialorder %v595, 0.0
      %vm754 = vcmp.ge.f32.partialorder %v598, 0.0
      %vm755 = vcmp.ge.f32.partialorder %v600, 0.0
      %vm756 = vcmp.ge.f32.partialorder %v603, 0.0
      %vm757 = vcmp.ge.f32.partialorder %v605, 0.0
      %vm758 = vcmp.ge.f32.partialorder %v608, 0.0
      %vm759 = vcmp.ge.f32.partialorder %v610, 0.0
      %vm760 = vcmp.ge.f32.partialorder %v613, 0.0
      %vm761 = vcmp.ge.f32.partialorder %v615, 0.0
      %vm762 = vcmp.ge.f32.partialorder %v618, 0.0
      %vm763 = vcmp.ge.f32.partialorder %v620, 0.0
      %vm764 = vcmp.ge.f32.partialorder %v623, 0.0
      %vm765 = vcmp.ge.f32.partialorder %v625, 0.0
      %vm766 = vcmp.ge.f32.partialorder %v628, 0.0
      %vm767 = vcmp.ge.f32.partialorder %v630, 0.0
      %vm768 = vcmp.ge.f32.partialorder %v633, 0.0
      %vm769 = vcmp.ge.f32.partialorder %v635, 0.0
      %vm770 = vcmp.ge.f32.partialorder %v638, 0.0
      %vm771 = vcmp.ge.f32.partialorder %v640, 0.0
      %vm772 = vcmp.ge.f32.partialorder %v643, 0.0
      %vm773 = vcmp.ge.f32.partialorder %v645, 0.0
      %vm774 = vcmp.ge.f32.partialorder %v648, 0.0
      %vm775 = vcmp.ge.f32.partialorder %v650, 0.0
      %vm776 = vcmp.ge.f32.partialorder %v653, 0.0
      %vm777 = vcmp.ge.f32.partialorder %v655, 0.0
      %vm778 = vcmp.ge.f32.partialorder %v658, 0.0
      %vm779 = vcmp.ge.f32.partialorder %v660, 0.0
      %vm780 = vcmp.ge.f32.partialorder %v663, 0.0
      %vm781 = vcmp.ge.f32.partialorder %v665, 0.0
      %vm782 = vcmp.ge.f32.partialorder %v668, 0.0
      %vm783 = vcmp.ge.f32.partialorder %v670, 0.0
      %vm784 = vcmp.ge.f32.partialorder %v673, 0.0
      %vm785 = vcmp.ge.f32.partialorder %v675, 0.0
      %vm786 = vcmp.ge.f32.partialorder %v678, 0.0
      %vm787 = vcmp.ge.f32.partialorder %v680, 0.0
      %vm788 = vcmp.ge.f32.partialorder %v683, 0.0
      %vm789 = vcmp.ge.f32.partialorder %v685, 0.0
      %vm790 = vcmp.ge.f32.partialorder %v688, 0.0
      %vm791 = vcmp.ge.f32.partialorder %v690, 0.0
      %vm792 = vcmp.ge.f32.partialorder %v693, 0.0
      %vm793 = vcmp.ge.f32.partialorder %v695, 0.0
      %vm794 = vcmp.ge.f32.partialorder %v698, 0.0
      %vm795 = vcmp.ge.f32.partialorder %v700, 0.0
      %vm796 = vcmp.ge.f32.partialorder %v703, 0.0
      %vm797 = vcmp.ge.f32.partialorder %v705, 0.0
      %vm798 = vcmp.ge.f32.partialorder %v708, 0.0
      %vm799 = vcmp.ge.f32.partialorder %v710, 0.0
      %vm800 = vcmp.ge.f32.partialorder %v713, 0.0
      %vm801 = vcmp.ge.f32.partialorder %v715, 0.0
      %vm802 = vcmp.ge.f32.partialorder %v718, 0.0
      %vm803 = vcmp.ge.f32.partialorder %v720, 0.0
      %vm804 = vcmp.ge.f32.partialorder %v723, 0.0
      %vm805 = vcmp.ge.f32.partialorder %v725, 0.0
      %vm806 = vcmp.ge.f32.partialorder %v728, 0.0
      %vm807 = vcmp.ge.f32.partialorder %v730, 0.0
      %vm808 = vcmp.ge.f32.partialorder %v733, 0.0
      %vm809 = vcmp.ge.f32.partialorder %v735, 0.0
      %vm810 = vcmp.ge.f32.partialorder %v738, 0.0
      %vm811 = vcmp.ge.f32.partialorder %v740, 0.0
      %vm812 = vcmp.ge.f32.partialorder %v743, 0.0
      %vm813 = vcmp.ge.f32.partialorder %v745, 0.0
      %vm814 = vcmp.ge.f32.partialorder %v748, 0.0
      %vm815 = vcmp.ge.f32.partialorder %v750, 0.0
      %v816 = vmul.f32 %v593, 0.1
      %v817 = vmul.f32 %v595, 0.1
      %v818 = vmul.f32 %v598, 0.1
      %v819 = vmul.f32 %v600, 0.1
      %v820 = vmul.f32 %v603, 0.1
      %v821 = vmul.f32 %v605, 0.1
      %v822 = vmul.f32 %v608, 0.1
      %v823 = vmul.f32 %v610, 0.1
      %v824 = vmul.f32 %v613, 0.1
      %v825 = vmul.f32 %v615, 0.1
      %v826 = vmul.f32 %v618, 0.1
      %v827 = vmul.f32 %v620, 0.1
      %v828 = vmul.f32 %v623, 0.1
      %v829 = vmul.f32 %v625, 0.1
      %v830 = vmul.f32 %v628, 0.1
      %v831 = vmul.f32 %v630, 0.1
      %v832 = vmul.f32 %v633, 0.1
      %v833 = vmul.f32 %v635, 0.1
      %v834 = vmul.f32 %v638, 0.1
      %v835 = vmul.f32 %v640, 0.1
      %v836 = vmul.f32 %v643, 0.1
      %v837 = vmul.f32 %v645, 0.1
      %v838 = vmul.f32 %v648, 0.1
      %v839 = vmul.f32 %v650, 0.1
      %v840 = vmul.f32 %v653, 0.1
      %v841 = vmul.f32 %v655, 0.1
      %v842 = vmul.f32 %v658, 0.1
      %v843 = vmul.f32 %v660, 0.1
      %v844 = vmul.f32 %v663, 0.1
      %v845 = vmul.f32 %v665, 0.1
      %v846 = vmul.f32 %v668, 0.1
      %v847 = vmul.f32 %v670, 0.1
      %v848 = vmul.f32 %v673, 0.1
      %v849 = vmul.f32 %v675, 0.1
      %v850 = vmul.f32 %v678, 0.1
      %v851 = vmul.f32 %v680, 0.1
      %v852 = vmul.f32 %v683, 0.1
      %v853 = vmul.f32 %v685, 0.1
      %v854 = vmul.f32 %v688, 0.1
      %v855 = vmul.f32 %v690, 0.1
      %v856 = vmul.f32 %v693, 0.1
      %v857 = vmul.f32 %v695, 0.1
      %v858 = vmul.f32 %v698, 0.1
      %v859 = vmul.f32 %v700, 0.1
      %v860 = vmul.f32 %v703, 0.1
      %v861 = vmul.f32 %v705, 0.1
      %v862 = vmul.f32 %v708, 0.1
      %v863 = vmul.f32 %v710, 0.1
      %v864 = vmul.f32 %v713, 0.1
      %v865 = vmul.f32 %v715, 0.1
      %v866 = vmul.f32 %v718, 0.1
      %v867 = vmul.f32 %v720, 0.1
      %v868 = vmul.f32 %v723, 0.1
      %v869 = vmul.f32 %v725, 0.1
      %v870 = vmul.f32 %v728, 0.1
      %v871 = vmul.f32 %v730, 0.1
      %v872 = vmul.f32 %v733, 0.1
      %v873 = vmul.f32 %v735, 0.1
      %v874 = vmul.f32 %v738, 0.1
      %v875 = vmul.f32 %v740, 0.1
      %v876 = vmul.f32 %v743, 0.1
      %v877 = vmul.f32 %v745, 0.1
      %v878 = vmul.f32 %v748, 0.1
      %v879 = vmul.f32 %v750, 0.1
      %v880 = vsel %vm752, %v593, %v816
      %v881 = vsel %vm753, %v595, %v817
      %v882 = vsel %vm754, %v598, %v818
      %v883 = vsel %vm755, %v600, %v819
      %v884 = vsel %vm756, %v603, %v820
      %v885 = vsel %vm757, %v605, %v821
      %v886 = vsel %vm758, %v608, %v822
      %v887 = vsel %vm759, %v610, %v823
      %v888 = vsel %vm760, %v613, %v824
      %v889 = vsel %vm761, %v615, %v825
      %v890 = vsel %vm762, %v618, %v826
      %v891 = vsel %vm763, %v620, %v827
      %v892 = vsel %vm764, %v623, %v828
      %v893 = vsel %vm765, %v625, %v829
      %v894 = vsel %vm766, %v628, %v830
      %v895 = vsel %vm767, %v630, %v831
      %v896 = vsel %vm768, %v633, %v832
      %v897 = vsel %vm769, %v635, %v833
      %v898 = vsel %vm770, %v638, %v834
      %v899 = vsel %vm771, %v640, %v835
      %v900 = vsel %vm772, %v643, %v836
      %v901 = vsel %vm773, %v645, %v837
      %v902 = vsel %vm774, %v648, %v838
      %v903 = vsel %vm775, %v650, %v839
      %v904 = vsel %vm776, %v653, %v840
      %v905 = vsel %vm777, %v655, %v841
      %v906 = vsel %vm778, %v658, %v842
      %v907 = vsel %vm779, %v660, %v843
      %v908 = vsel %vm780, %v663, %v844
      %v909 = vsel %vm781, %v665, %v845
      %v910 = vsel %vm782, %v668, %v846
      %v911 = vsel %vm783, %v670, %v847
      %v912 = vsel %vm784, %v673, %v848
      %v913 = vsel %vm785, %v675, %v849
      %v914 = vsel %vm786, %v678, %v850
      %v915 = vsel %vm787, %v680, %v851
      %v916 = vsel %vm788, %v683, %v852
      %v917 = vsel %vm789, %v685, %v853
      %v918 = vsel %vm790, %v688, %v854
      %v919 = vsel %vm791, %v690, %v855
      %v920 = vsel %vm792, %v693, %v856
      %v921 = vsel %vm793, %v695, %v857
      %v922 = vsel %vm794, %v698, %v858
      %v923 = vsel %vm795, %v700, %v859
      %v924 = vsel %vm796, %v703, %v860
      %v925 = vsel %vm797, %v705, %v861
      %v926 = vsel %vm798, %v708, %v862
      %v927 = vsel %vm799, %v710, %v863
      %v928 = vsel %vm800, %v713, %v864
      %v929 = vsel %vm801, %v715, %v865
      %v930 = vsel %vm802, %v718, %v866
      %v931 = vsel %vm803, %v720, %v867
      %v932 = vsel %vm804, %v723, %v868
      %v933 = vsel %vm805, %v725, %v869
      %v934 = vsel %vm806, %v728, %v870
      %v935 = vsel %vm807, %v730, %v871
      %v936 = vsel %vm808, %v733, %v872
      %v937 = vsel %vm809, %v735, %v873
      %v938 = vsel %vm810, %v738, %v874
      %v939 = vsel %vm811, %v740, %v875
      %v940 = vsel %vm812, %v743, %v876
      %v941 = vsel %vm813, %v745, %v877
      %v942 = vsel %vm814, %v748, %v878
      %v943 = vsel %vm815, %v750, %v879
      %vm944 = vcmask 130048
      %945 = vst.msk [vmem:[%s223] sm:$0xff] %vm944, %v880
      %946 = vst.msk [vmem:[%s223 + $0x8] sm:$0xff] %vm944, %v881
      %947 = vst.msk [vmem:[%s223 + $0x10] sm:$0xff] %vm944, %v882
      %948 = vst.msk [vmem:[%s223 + $0x18] sm:$0xff] %vm944, %v883
      %949 = vst.msk [vmem:[%s223 + $0x20] sm:$0xff] %vm944, %v884
      %950 = vst.msk [vmem:[%s223 + $0x28] sm:$0xff] %vm944, %v885
      %951 = vst.msk [vmem:[%s223 + $0x30] sm:$0xff] %vm944, %v886
      %952 = vst.msk [vmem:[%s223 + $0x38] sm:$0xff] %vm944, %v887
      %953 = vst.msk [vmem:[%s223 + $0x40] sm:$0xff] %vm944, %v888
      %954 = vst.msk [vmem:[%s223 + $0x48] sm:$0xff] %vm944, %v889
      %955 = vst.msk [vmem:[%s223 + $0x50] sm:$0xff] %vm944, %v890
      %956 = vst.msk [vmem:[%s223 + $0x58] sm:$0xff] %vm944, %v891
      %957 = vst.msk [vmem:[%s223 + $0x60] sm:$0xff] %vm944, %v892
      %958 = vst.msk [vmem:[%s223 + $0x68] sm:$0xff] %vm944, %v893
      %959 = vst.msk [vmem:[%s223 + $0x70] sm:$0xff] %vm944, %v894
      %960 = vst.msk [vmem:[%s223 + $0x78] sm:$0xff] %vm944, %v895
      %961 = vst.msk [vmem:[%s223 + $0x80] sm:$0xff] %vm944, %v896
      %962 = vst.msk [vmem:[%s223 + $0x88] sm:$0xff] %vm944, %v897
      %963 = vst.msk [vmem:[%s223 + $0x90] sm:$0xff] %vm944, %v898
      %964 = vst.msk [vmem:[%s223 + $0x98] sm:$0xff] %vm944, %v899
      %965 = vst.msk [vmem:[%s223 + $0xa0] sm:$0xff] %vm944, %v900
      %966 = vst.msk [vmem:[%s223 + $0xa8] sm:$0xff] %vm944, %v901
      %967 = vst.msk [vmem:[%s223 + $0xb0] sm:$0xff] %vm944, %v902
      %968 = vst.msk [vmem:[%s223 + $0xb8] sm:$0xff] %vm944, %v903
      %969 = vst.msk [vmem:[%s223 + $0xc0] sm:$0xff] %vm944, %v904
      %970 = vst.msk [vmem:[%s223 + $0xc8] sm:$0xff] %vm944, %v905
      %971 = vst.msk [vmem:[%s223 + $0xd0] sm:$0xff] %vm944, %v906
      %972 = vst.msk [vmem:[%s223 + $0xd8] sm:$0xff] %vm944, %v907
      %973 = vst.msk [vmem:[%s223 + $0xe0] sm:$0xff] %vm944, %v908
      %974 = vst.msk [vmem:[%s223 + $0xe8] sm:$0xff] %vm944, %v909
      %975 = vst.msk [vmem:[%s223 + $0xf0] sm:$0xff] %vm944, %v910
      %976 = vst.msk [vmem:[%s223 + $0xf8] sm:$0xff] %vm944, %v911
      %977 = vst.msk [vmem:[%s223 + $0x100] sm:$0xff] %vm944, %v912
      %978 = vst.msk [vmem:[%s223 + $0x108] sm:$0xff] %vm944, %v913
      %979 = vst.msk [vmem:[%s223 + $0x110] sm:$0xff] %vm944, %v914
      %980 = vst.msk [vmem:[%s223 + $0x118] sm:$0xff] %vm944, %v915
      %981 = vst.msk [vmem:[%s223 + $0x120] sm:$0xff] %vm944, %v916
      %982 = vst.msk [vmem:[%s223 + $0x128] sm:$0xff] %vm944, %v917
      %983 = vst.msk [vmem:[%s223 + $0x130] sm:$0xff] %vm944, %v918
      %984 = vst.msk [vmem:[%s223 + $0x138] sm:$0xff] %vm944, %v919
      %985 = vst.msk [vmem:[%s223 + $0x140] sm:$0xff] %vm944, %v920
      %986 = vst.msk [vmem:[%s223 + $0x148] sm:$0xff] %vm944, %v921
      %987 = vst.msk [vmem:[%s223 + $0x150] sm:$0xff] %vm944, %v922
      %988 = vst.msk [vmem:[%s223 + $0x158] sm:$0xff] %vm944, %v923
      %989 = vst.msk [vmem:[%s223 + $0x160] sm:$0xff] %vm944, %v924
      %990 = vst.msk [vmem:[%s223 + $0x168] sm:$0xff] %vm944, %v925
      %991 = vst.msk [vmem:[%s223 + $0x170] sm:$0xff] %vm944, %v926
      %992 = vst.msk [vmem:[%s223 + $0x178] sm:$0xff] %vm944, %v927
      %993 = vst.msk [vmem:[%s223 + $0x180] sm:$0xff] %vm944, %v928
      %994 = vst.msk [vmem:[%s223 + $0x188] sm:$0xff] %vm944, %v929
      %995 = vst.msk [vmem:[%s223 + $0x190] sm:$0xff] %vm944, %v930
      %996 = vst.msk [vmem:[%s223 + $0x198] sm:$0xff] %vm944, %v931
      %997 = vst.msk [vmem:[%s223 + $0x1a0] sm:$0xff] %vm944, %v932
      %998 = vst.msk [vmem:[%s223 + $0x1a8] sm:$0xff] %vm944, %v933
      %999 = vst.msk [vmem:[%s223 + $0x1b0] sm:$0xff] %vm944, %v934
      %1000 = vst.msk [vmem:[%s223 + $0x1b8] sm:$0xff] %vm944, %v935
      %1001 = vst.msk [vmem:[%s223 + $0x1c0] sm:$0xff] %vm944, %v936
      %1002 = vst.msk [vmem:[%s223 + $0x1c8] sm:$0xff] %vm944, %v937
      %1003 = vst.msk [vmem:[%s223 + $0x1d0] sm:$0xff] %vm944, %v938
      %1004 = vst.msk [vmem:[%s223 + $0x1d8] sm:$0xff] %vm944, %v939
      %1005 = vst.msk [vmem:[%s223 + $0x1e0] sm:$0xff] %vm944, %v940
      %1006 = vst.msk [vmem:[%s223 + $0x1e8] sm:$0xff] %vm944, %v941
      %1007 = vst.msk [vmem:[%s223 + $0x1f0] sm:$0xff] %vm944, %v942
      %1008 = vst.msk [vmem:[%s223 + $0x1f8] sm:$0xff] %vm944, %v943
      %s1009 = smul.u32 64, %s18
      %p1010 = scmp.lt.s32.totalorder %s1009, 127
      %s1011 = scalar_select %p1010, %s1009, 127
      %p1012 = scmp.lt.s32.totalorder %s19, 0
      %s1013 = scalar_select %p1012, %s19, 0
      %s1014 = sadd.s32 %s1013, %s1011
      %s1015 = smul.addr %s1014, 8
      %s1016 = scalar_lea.vmem %s3, %s1015
      // Predicated region
      $region33: #{run_encoder.10} parent=31 // pred_check
        %p1017 = pneg %p124
      $region34: #{run_encoder.10} parent=31 // pred_check_branch
        %1019 = sbr.rel (%p1017) target = $region36
      $region35: #{run_encoder.10} parent=31 // pred_region
        %s1020 = smul.u32 64, %s18
      $region36: #{run_encoder.10} parent=31 // pred_fallthru
        _
    $region32: #{run_encoder.10} parent=5 // pred_fallthru
      _
    %p1021 = scmp.le.s32.totalorder 2, %s9
    // Predicated region
    $region37: #{run_encoder.10} parent=5 // pred_check
      %p1022 = pneg %p1021
    $region38: #{run_encoder.10} parent=5 // pred_check_branch
      %1024 = sbr.rel (%p1022) target = $region40
    $region39: #{run_encoder.10} parent=5 // pred_region
      %s1025 = ssub.s32 %s9, 2
      // Predicated region
      $region41: #{run_encoder.10} parent=39 // pred_check
        %p1026 = pneg %p130
      $region42: #{run_encoder.10} parent=39 // pred_check_branch
        %1028 = sbr.rel (%p1026) target = $region44
      $region43: #{run_encoder.10} parent=39 // pred_region
        %s1029 = smul.u32 64, %s20
        %p1030 = scmp.lt.s32.totalorder %s1029, 127
        %s1031 = scalar_select %p1030, %s1029, 127
        %p1032 = scmp.lt.s32.totalorder %s21, 0
        %s1033 = scalar_select %p1032, %s21, 0
        %s1034 = sadd.s32 %s1033, %s1031
        %s1035 = smul.addr %s1034, 8
        %s1036 = scalar_lea.vmem %s3, %s1035
      $region44: #{run_encoder.10} parent=39 // pred_fallthru
        _
    $region40: #{run_encoder.10} parent=5 // pred_fallthru
      _
  $region6: #{run_encoder.10} parent=0 // loop_footer
    %s13 = sadd.s32 1, %s9
  $region7: #{run_encoder.10} parent=0 // loop_footer_branch
    %8 = sbr.rel target = $region3
  $region8: #{run_encoder.10} parent=0 // loop_exit
    _

// kernel: run_encoder.11
$region0: #{run_encoder.11}
  #allocation0 [shape = 'u32[]', space=smem, size = 0x4, offset = 0x4, fixed_abs, tag = 'smem constant byte address 0x4 - core index']
  #allocation1 [shape = 'u32[72,128]{1,0:T(1,128)}', space=vmem, size = 0x9000, scoped, tag = 'internal scratch']
  %s0 = inlined_call_operand.vmem [shape: bf16[128,432], index: 0, kind: input, shape index: {}]
  %s1 = inlined_call_operand.vmem [shape: bf16[432,32], index: 1, kind: input, shape index: {}]
  %s2 = inlined_call_operand.vmem [shape: f32[1,32], index: 2, kind: input, shape index: {}]
  %s3 = inlined_call_operand.vmem [shape: f32[128,32], index: 3, kind: output, shape index: {}]
  %s4 = sld [smem:[#allocation0]]
  $region45: #{run_encoder.11} parent=0
    _
  %s6 = ssub.s32 1, %s4
  %s7 = scalar_select 0, %s6, %s4
  loop: start=0, step=1, limit=4
  $region2: #{run_encoder.11} parent=0 // loop_pre_header
    _
  $region3: #{run_encoder.11} parent=0 // loop_header
    %s9 = sphi 0, %s13
    %p10 = scmp.ge.s32.totalorder %s9, 4
    %s16 = sphi 0, %s28
    %s17 = sphi 0, %s24
    %s18 = sphi 0, %s16
    %s19 = sphi 0, %s17
    %s20 = sphi 0, %s18
    %s21 = sphi 0, %s19
    %s31 = sphi 0, %s33
    %s34 = sphi 0, %s31
    %s35 = sphi 0, %s34
    %s51 = sphi 0, %s35
    %s57 = sphi 0, %s59
    %s60 = sphi 0, %s57
    %s61 = sphi 0, %s60
    %s77 = sphi 0, %s61
    %s83 = sphi 0, %s85
    %s86 = sphi 0, %s83
    %s87 = sphi 0, %s86
    %s103 = sphi 0, %s87
    %s111 = sphi 0, %s113
    %s114 = sphi 0, %s111
    %s115 = sphi 0, %s114
    %s131 = sphi 0, %s115
  $region4: #{run_encoder.11} parent=0 // loop_header_branch
    %12 = sbr.rel (%p10) target = $region8
  $region5: #{run_encoder.11} parent=0 // loop_body
    %s14 = ssub.s32 %s9, 1
    %s15 = ssub.s32 %s9, 2
    %s22 = sadd.s32 1, %s17
    %p23 = scmp.ge.s32.totalorder %s22, 1
    %s24 = scalar_select %p23, 0, %s22
    %s25 = sadd.s32 1, %s16
    %s26 = scalar_select %p23, %s25, %s16
    %p27 = scmp.ge.s32.totalorder %s26, 2
    %s28 = scalar_select %p27, 0, %s26
    %s29 = ssub.s32 %s16, %s28
    %p30 = scmp.eq.s32.totalorder %s29, 0
    %s32 = sadd.s32 %s31, 1
    %s33 = scalar_select %p30, %s31, %s32
    %p36 = pneg %p30
    %p37 = scmp.eq.s32.totalorder %s9, 1
    %p38 = por %p36, %p37
    %p39 = scmp.ne.s32.totalorder %s31, %s34
    %p40 = scmp.eq.s32.totalorder %s9, 0
    %p41 = por %p39, %p40
    %p42 = scmp.ne.s32.totalorder %s31, %s34
    %p43 = scmp.eq.s32.totalorder %s14, 1
    %p44 = por %p42, %p43
    %p45 = scmp.ne.s32.totalorder %s34, %s35
    %p46 = scmp.eq.s32.totalorder %s14, 0
    %p47 = por %p45, %p46
    %p48 = scmp.ne.s32.totalorder %s34, %s35
    %p49 = scmp.eq.s32.totalorder %s15, 1
    %p50 = por %p48, %p49
    %p52 = scmp.ne.s32.totalorder %s35, %s51
    %p53 = scmp.eq.s32.totalorder %s15, 0
    %p54 = por %p52, %p53
    %s55 = ssub.s32 %s17, %s24
    %p56 = scmp.eq.s32.totalorder %s55, 0
    %s58 = sadd.s32 %s57, 1
    %s59 = scalar_select %p56, %s57, %s58
    %p62 = pneg %p56
    %p63 = scmp.eq.s32.totalorder %s9, 1
    %p64 = por %p62, %p63
    %p65 = scmp.ne.s32.totalorder %s57, %s60
    %p66 = scmp.eq.s32.totalorder %s9, 0
    %p67 = por %p65, %p66
    %p68 = scmp.ne.s32.totalorder %s57, %s60
    %p69 = scmp.eq.s32.totalorder %s14, 1
    %p70 = por %p68, %p69
    %p71 = scmp.ne.s32.totalorder %s60, %s61
    %p72 = scmp.eq.s32.totalorder %s14, 0
    %p73 = por %p71, %p72
    %p74 = scmp.ne.s32.totalorder %s60, %s61
    %p75 = scmp.eq.s32.totalorder %s15, 1
    %p76 = por %p74, %p75
    %p78 = scmp.ne.s32.totalorder %s61, %s77
    %p79 = scmp.eq.s32.totalorder %s15, 0
    %p80 = por %p78, %p79
    %s81 = ssub.s32 %s17, %s24
    %p82 = scmp.eq.s32.totalorder %s81, 0
    %s84 = sadd.s32 %s83, 1
    %s85 = scalar_select %p82, %s83, %s84
    %p88 = pneg %p82
    %p89 = scmp.eq.s32.totalorder %s9, 1
    %p90 = por %p88, %p89
    %p91 = scmp.ne.s32.totalorder %s83, %s86
    %p92 = scmp.eq.s32.totalorder %s9, 0
    %p93 = por %p91, %p92
    %p94 = scmp.ne.s32.totalorder %s83, %s86
    %p95 = scmp.eq.s32.totalorder %s14, 1
    %p96 = por %p94, %p95
    %p97 = scmp.ne.s32.totalorder %s86, %s87
    %p98 = scmp.eq.s32.totalorder %s14, 0
    %p99 = por %p97, %p98
    %p100 = scmp.ne.s32.totalorder %s86, %s87
    %p101 = scmp.eq.s32.totalorder %s15, 1
    %p102 = por %p100, %p101
    %p104 = scmp.ne.s32.totalorder %s87, %s103
    %p105 = scmp.eq.s32.totalorder %s15, 0
    %p106 = por %p104, %p105
    %s107 = ssub.s32 %s16, %s28
    %s108 = ssub.s32 %s17, %s24
    %s109 = sor.u32 %s107, %s108
    %p110 = scmp.eq.s32.totalorder %s109, 0
    %s112 = sadd.s32 %s111, 1
    %s113 = scalar_select %p110, %s111, %s112
    %p116 = pneg %p110
    %p117 = scmp.eq.s32.totalorder %s9, 1
    %p118 = por %p116, %p117
    %p119 = scmp.ne.s32.totalorder %s111, %s114
    %p120 = scmp.eq.s32.totalorder %s9, 0
    %p121 = por %p119, %p120
    %p122 = scmp.ne.s32.totalorder %s111, %s114
    %p123 = scmp.eq.s32.totalorder %s14, 1
    %p124 = por %p122, %p123
    %p125 = scmp.ne.s32.totalorder %s114, %s115
    %p126 = scmp.eq.s32.totalorder %s14, 0
    %p127 = por %p125, %p126
    %p128 = scmp.ne.s32.totalorder %s114, %s115
    %p129 = scmp.eq.s32.totalorder %s15, 1
    %p130 = por %p128, %p129
    %p132 = scmp.ne.s32.totalorder %s115, %s131
    %p133 = scmp.eq.s32.totalorder %s15, 0
    %p134 = por %p132, %p133
    %p135 = scmp.le.s32.totalorder 1, %s9
    %p136 = scmp.lt.s32.totalorder %s9, 3
    %p137 = pnand %p135, %p136
    %p138 = pneg %p137
    // Predicated region
    $region9: #{run_encoder.11} parent=5 // pred_check
      _
    $region10: #{run_encoder.11} parent=5 // pred_check_branch
      %140 = sbr.rel (%p137) target = $region12
    $region11: #{run_encoder.11} parent=5 // pred_region
      %s141 = ssub.s32 %s9, 1
      // Predicated region
      $region13: #{run_encoder.11} parent=11 // pred_check
        %p142 = pneg %p73
      $region14: #{run_encoder.11} parent=11 // pred_check_branch
        %144 = sbr.rel (%p142) target = $region16
      $region15: #{run_encoder.11} parent=11 // pred_region
        %p145 = scmp.lt.s32.totalorder %s19, 0
        %s146 = scalar_select %p145, %s19, 0
        %s147 = smul.addr %s146, 4
        %s148 = scalar_lea.vmem %s1, %s147
      $region16: #{run_encoder.11} parent=11 // pred_fallthru
        _
      // Predicated region
      $region17: #{run_encoder.11} parent=11 // pred_check
        %p149 = pneg %p99
      $region18: #{run_encoder.11} parent=11 // pred_check_branch
        %151 = sbr.rel (%p149) target = $region20
      $region19: #{run_encoder.11} parent=11 // pred_region
        %p152 = scmp.lt.s32.totalorder %s19, 0
        %s153 = scalar_select %p152, %s19, 0
        %s154 = scalar_lea.vmem %s2, %s153
      $region20: #{run_encoder.11} parent=11 // pred_fallthru
        _
    $region12: #{run_encoder.11} parent=5 // pred_fallthru
      _
    %p155 = scmp.lt.s32.totalorder %s9, 2
    // Predicated region
    $region21: #{run_encoder.11} parent=5 // pred_check
      %p156 = pneg %p155
    $region22: #{run_encoder.11} parent=5 // pred_check_branch
      %158 = sbr.rel (%p156) target = $region24
    $region23: #{run_encoder.11} parent=5 // pred_region
      // Predicated region
      $region25: #{run_encoder.11} parent=23 // pred_check
        %p159 = pneg %p41
      $region26: #{run_encoder.11} parent=23 // pred_check_branch
        %161 = sbr.rel (%p159) target = $region28
      $region27: #{run_encoder.11} parent=23 // pred_region
        %s162 = smul.u32 8, %s16
        %p163 = scmp.lt.s32.totalorder %s162, 15
        %s164 = scalar_select %p163, %s162, 15
        %s165 = smul.addr %s164, 4
        %s166 = smul.addr %s165, 4
        %s167 = scalar_lea.vmem %s0, %s166
        %s168 = smul.u32 8, %s16
      $region28: #{run_encoder.11} parent=23 // pred_fallthru
        _
    $region24: #{run_encoder.11} parent=5 // pred_fallthru
      _
    %p169 = scmp.le.s32.totalorder 1, %s9
    %p170 = scmp.lt.s32.totalorder %s9, 3
    %p171 = pnand %p169, %p170
    %p172 = pneg %p171
    // Predicated region
    $region29: #{run_encoder.11} parent=5 // pred_check
      _
    $region30: #{run_encoder.11} parent=5 // pred_check_branch
      %174 = sbr.rel (%p171) target = $region32
    $region31: #{run_encoder.11} parent=5 // pred_region
      %s175 = ssub.s32 %s9, 1
      %s176 = smul.u32 8, %s18
      %p177 = scmp.lt.s32.totalorder %s176, 15
      %s178 = scalar_select %p177, %s176, 15
      %s179 = smul.addr %s178, 4
      %s180 = smul.addr %s179, 4
      %s181 = scalar_lea.vmem %s0, %s180
      %p182 = pneg %p47
      %p183 = pneg %p44
      %p184 = scmp.lt.s32.totalorder %s19, 0
      %s185 = scalar_select %p184, %s19, 0
      %s186 = smul.addr %s185, 4
      %s187 = scalar_lea.vmem %s1, %s186
      %p188 = pneg %p73
      %p189 = pneg %p70
      %p190 = scmp.lt.s32.totalorder %s19, 0
      %s191 = scalar_select %p190, %s19, 0
      %s192 = scalar_lea.vmem %s2, %s191
      %p193 = pneg %p99
      %p194 = pneg %p96
      %p195 = pneg %p127
      %p196 = pneg %p124
      %s197 = smul.u32 8, %s18
      %p198 = scmp.lt.s32.totalorder %s197, 15
      %s199 = scalar_select %p198, %s197, 15
      %p200 = scmp.lt.s32.totalorder %s19, 0
      %s201 = scalar_select %p200, %s19, 0
      %s202 = sadd.s32 %s201, %s199
      %s203 = smul.addr %s202, 8
      %s204 = scalar_lea.vmem %s3, %s203
      %s205 = smul.u32 8, %s18
      %p206 = scmp.lt.s32.totalorder %s205, 15
      %s207 = scalar_select %p206, %s205, 15
      %s208 = smul.addr %s207, 4
      %s209 = smul.addr %s208, 4
      %s210 = scalar_lea.vmem %s0, %s209
      %s211 = smul.u32 8, %s18
      %p212 = scmp.lt.s32.totalorder %s19, 0
      %s213 = scalar_select %p212, %s19, 0
      %s214 = smul.addr %s213, 4
      %s215 = scalar_lea.vmem %s1, %s214
      %p216 = scmp.lt.s32.totalorder %s19, 0
      %s217 = scalar_select %p216, %s19, 0
      %s218 = scalar_lea.vmem %s2, %s217
      %s219 = smul.u32 8, %s18
      %p220 = scmp.lt.s32.totalorder %s219, 15
      %s221 = scalar_select %p220, %s219, 15
      %p222 = scmp.lt.s32.totalorder %s19, 0
      %s223 = scalar_select %p222, %s19, 0
      %s224 = sadd.s32 %s223, %s221
      %s225 = smul.addr %s224, 8
      %s226 = scalar_lea.vmem %s3, %s225
      %s227 = smul.u32 8, %s18
      %v229 = vld [vmem:[%s210] sm:$0xff]
      %v230 = vld [vmem:[%s210 + $0x8] sm:$0xff]
      %v231 = vld [vmem:[%s210 + $0x10] sm:$0xff]
      %v232 = vld [vmem:[%s210 + $0x18] sm:$0xff]
      %v233 = vld [vmem:[%s210 + $0x20] sm:$0xff]
      %v234 = vld [vmem:[%s210 + $0x28] sm:$0xff]
      %v235 = vld [vmem:[%s210 + $0x30] sm:$0xff]
      %v236 = vld [vmem:[%s210 + $0x38] sm:$0xff]
      %v237 = vld [vmem:[%s210 + $0x40] sm:$0xff]
      %v238 = vld [vmem:[%s210 + $0x48] sm:$0xff]
      %v239 = vld [vmem:[%s210 + $0x50] sm:$0xff]
      %v240 = vld [vmem:[%s210 + $0x58] sm:$0xff]
      %v241 = vld [vmem:[%s210 + $0x60] sm:$0xff]
      %v242 = vld [vmem:[%s210 + $0x68] sm:$0xff]
      %v243 = vld [vmem:[%s210 + $0x70] sm:$0xff]
      %v244 = vld [vmem:[%s210 + $0x78] sm:$0xff]
      %v245 = vld [vmem:[%s215] sm:$0xf]
      %v246 = vld [vmem:[%s215 + $0x4] sm:$0xf]
      %v247 = vld [vmem:[%s215 + $0x8] sm:$0xf]
      %v248 = vld [vmem:[%s215 + $0xc] sm:$0xf]
      %v249 = vld [vmem:[%s215 + $0x10] sm:$0xf]
      %v250 = vld [vmem:[%s215 + $0x14] sm:$0xf]
      %v251 = vld [vmem:[%s215 + $0x18] sm:$0xf]
      %v252 = vld [vmem:[%s215 + $0x1c] sm:$0xf]
      %v253 = vld [vmem:[%s215 + $0x20] sm:$0xf]
      %v254 = vld [vmem:[%s215 + $0x24] sm:$0xf]
      %v255 = vld [vmem:[%s215 + $0x28] sm:$0xf]
      %v256 = vld [vmem:[%s215 + $0x2c] sm:$0xf]
      %v257 = vld [vmem:[%s215 + $0x30] sm:$0xf]
      %v258 = vld [vmem:[%s215 + $0x34] sm:$0xf]
      %v259 = vld [vmem:[%s215 + $0x38] sm:$0xf]
      %v260 = vld [vmem:[%s215 + $0x3c] sm:$0xf]
      %v261 = vld [vmem:[%s215 + $0x40] sm:$0xf]
      %v262 = vld [vmem:[%s215 + $0x44] sm:$0xf]
      %v263 = vld [vmem:[%s215 + $0x48] sm:$0xf]
      %v264 = vld [vmem:[%s215 + $0x4c] sm:$0xf]
      %v265 = vld [vmem:[%s215 + $0x50] sm:$0xf]
      %v266 = vld [vmem:[%s215 + $0x54] sm:$0xf]
      %v267 = vld [vmem:[%s215 + $0x58] sm:$0xf]
      %v268 = vld [vmem:[%s215 + $0x5c] sm:$0xf]
      %v269 = vld [vmem:[%s215 + $0x60] sm:$0xf]
      %v270 = vld [vmem:[%s215 + $0x64] sm:$0xf]
      %v271 = vld [vmem:[%s215 + $0x68] sm:$0xf]
      %v272 = vld [vmem:[%s215 + $0x6c] sm:$0xf]
      %v273 = vld [vmem:[%s215 + $0x70] sm:$0xf]
      %v274 = vld [vmem:[%s215 + $0x74] sm:$0xf]
      %v275 = vld [vmem:[%s215 + $0x78] sm:$0xf]
      %v276 = vld [vmem:[%s215 + $0x7c] sm:$0xf]
      %v277 = vld [vmem:[%s215 + $0x80] sm:$0xf]
      %v278 = vld [vmem:[%s215 + $0x84] sm:$0xf]
      %v279 = vld [vmem:[%s215 + $0x88] sm:$0xf]
      %v280 = vld [vmem:[%s215 + $0x8c] sm:$0xf]
      %v281 = vld [vmem:[%s215 + $0x90] sm:$0xf]
      %v282 = vld [vmem:[%s215 + $0x94] sm:$0xf]
      %v283 = vld [vmem:[%s215 + $0x98] sm:$0xf]
      %v284 = vld [vmem:[%s215 + $0x9c] sm:$0xf]
      %v285 = vld [vmem:[%s215 + $0xa0] sm:$0xf]
      %v286 = vld [vmem:[%s215 + $0xa4] sm:$0xf]
      %v287 = vld [vmem:[%s215 + $0xa8] sm:$0xf]
      %v288 = vld [vmem:[%s215 + $0xac] sm:$0xf]
      %v289 = vld [vmem:[%s215 + $0xb0] sm:$0xf]
      %v290 = vld [vmem:[%s215 + $0xb4] sm:$0xf]
      %v291 = vld [vmem:[%s215 + $0xb8] sm:$0xf]
      %v292 = vld [vmem:[%s215 + $0xbc] sm:$0xf]
      %v293 = vld [vmem:[%s215 + $0xc0] sm:$0xf]
      %v294 = vld [vmem:[%s215 + $0xc4] sm:$0xf]
      %v295 = vld [vmem:[%s215 + $0xc8] sm:$0xf]
      %v296 = vld [vmem:[%s215 + $0xcc] sm:$0xf]
      %v297 = vld [vmem:[%s215 + $0xd0] sm:$0xf]
      %v298 = vld [vmem:[%s215 + $0xd4] sm:$0xf]
      %v299 = vld [vmem:[%s218] sm:$0x1]
      %v301 = vperm.slane %v299, 0
      %v319 = vunpack.c.l.b16 %v229
      %v320 = vunpack.c.h.b16 %v229
      %v321 = vunpack.c.l.b16 %v230
      %v322 = vunpack.c.h.b16 %v230
      %v323 = vunpack.c.l.b16 %v231
      %v324 = vunpack.c.h.b16 %v231
      %v325 = vunpack.c.l.b16 %v232
      %v326 = vunpack.c.h.b16 %v232
      %v327 = vunpack.c.l.b16 %v233
      %v328 = vunpack.c.h.b16 %v233
      %v329 = vunpack.c.l.b16 %v234
      %v330 = vunpack.c.h.b16 %v234
      %v331 = vunpack.c.l.b16 %v235
      %v332 = vunpack.c.h.b16 %v235
      %v333 = vunpack.c.l.b16 %v236
      %v334 = vunpack.c.h.b16 %v236
      %v335 = vunpack.c.l.b16 %v237
      %v336 = vunpack.c.h.b16 %v237
      %v337 = vunpack.c.l.b16 %v238
      %v338 = vunpack.c.h.b16 %v238
      %v339 = vunpack.c.l.b16 %v239
      %v340 = vunpack.c.h.b16 %v239
      %v341 = vunpack.c.l.b16 %v240
      %v342 = vunpack.c.h.b16 %v240
      %v343 = vunpack.c.l.b16 %v241
      %v344 = vunpack.c.h.b16 %v241
      %v345 = vunpack.c.l.b16 %v242
      %v346 = vunpack.c.h.b16 %v242
      %v347 = vunpack.c.l.b16 %v243
      %v348 = vunpack.c.h.b16 %v243
      %v349 = vunpack.c.l.b16 %v244
      %v350 = vunpack.c.h.b16 %v244
      %v351 = vpack.c.b16 %v323, %v319
      %v352 = vpack.c.b16 %v324, %v320
      %v353 = vpack.c.b16 %v325, %v321
      %v354 = vpack.c.b16 %v326, %v322
      %v355 = vpack.c.b16 %v331, %v327
      %v356 = vpack.c.b16 %v332, %v328
      %v357 = vpack.c.b16 %v333, %v329
      %v358 = vpack.c.b16 %v334, %v330
      %v359 = vpack.c.b16 %v339, %v335
      %v360 = vpack.c.b16 %v340, %v336
      %v361 = vpack.c.b16 %v341, %v337
      %v362 = vpack.c.b16 %v342, %v338
      %v363 = vpack.c.b16 %v347, %v343
      %v364 = vpack.c.b16 %v348, %v344
      %v365 = vpack.c.b16 %v349, %v345
      %v366 = vpack.c.b16 %v350, %v346
      %v433 = vunpack.c.l.b16 %v245
      %v434 = vunpack.c.l.b16 %v246
      %v435 = vunpack.c.l.b16 %v247
      %v436 = vunpack.c.l.b16 %v248
      %v437 = vunpack.c.l.b16 %v249
      %v438 = vunpack.c.l.b16 %v250
      %v439 = vunpack.c.l.b16 %v251
      %v440 = vunpack.c.l.b16 %v252
      %v441 = vunpack.c.l.b16 %v253
      %v442 = vunpack.c.l.b16 %v254
      %v443 = vunpack.c.l.b16 %v255
      %v444 = vunpack.c.l.b16 %v256
      %v445 = vunpack.c.l.b16 %v257
      %v446 = vunpack.c.l.b16 %v258
      %v447 = vunpack.c.l.b16 %v259
      %v448 = vunpack.c.l.b16 %v260
      %v449 = vunpack.c.l.b16 %v261
      %v450 = vunpack.c.l.b16 %v262
      %v451 = vunpack.c.l.b16 %v263
      %v452 = vunpack.c.l.b16 %v264
      %v453 = vunpack.c.l.b16 %v265
      %v454 = vunpack.c.l.b16 %v266
      %v455 = vunpack.c.l.b16 %v267
      %v456 = vunpack.c.l.b16 %v268
      %v457 = vunpack.c.l.b16 %v269
      %v458 = vunpack.c.l.b16 %v270
      %v459 = vunpack.c.l.b16 %v271
      %v460 = vunpack.c.l.b16 %v272
      %v461 = vunpack.c.l.b16 %v273
      %v462 = vunpack.c.l.b16 %v274
      %v463 = vunpack.c.l.b16 %v275
      %v464 = vunpack.c.l.b16 %v276
      %v465 = vunpack.c.l.b16 %v277
      %v466 = vunpack.c.l.b16 %v278
      %v467 = vunpack.c.l.b16 %v279
      %v468 = vunpack.c.l.b16 %v280
      %v469 = vunpack.c.l.b16 %v281
      %v470 = vunpack.c.l.b16 %v282
      %v471 = vunpack.c.l.b16 %v283
      %v472 = vunpack.c.l.b16 %v284
      %v473 = vunpack.c.l.b16 %v285
      %v474 = vunpack.c.l.b16 %v286
      %v475 = vunpack.c.l.b16 %v287
      %v476 = vunpack.c.l.b16 %v288
      %v477 = vunpack.c.l.b16 %v289
      %v478 = vunpack.c.l.b16 %v290
      %v479 = vunpack.c.l.b16 %v291
      %v480 = vunpack.c.l.b16 %v292
      %v481 = vunpack.c.l.b16 %v293
      %v482 = vunpack.c.l.b16 %v294
      %v483 = vunpack.c.l.b16 %v295
      %v484 = vunpack.c.l.b16 %v296
      %v485 = vunpack.c.l.b16 %v297
      %v486 = vunpack.c.l.b16 %v298
      %v487 = vpack.c.b16 %v434, %v433
      %v488 = vpack.c.b16 %v436, %v435
      %v489 = vpack.c.b16 %v438, %v437
      %v490 = vpack.c.b16 %v440, %v439
      %v491 = vpack.c.b16 %v442, %v441
      %v492 = vpack.c.b16 %v444, %v443
      %v493 = vpack.c.b16 %v446, %v445
      %v494 = vpack.c.b16 %v448, %v447
      %v495 = vpack.c.b16 %v450, %v449
      %v496 = vpack.c.b16 %v452, %v451
      %v497 = vpack.c.b16 %v454, %v453
      %v498 = vpack.c.b16 %v456, %v455
      %v499 = vpack.c.b16 %v458, %v457
      %v500 = vpack.c.b16 %v460, %v459
      %v501 = vpack.c.b16 %v462, %v461
      %v502 = vpack.c.b16 %v464, %v463
      %v503 = vpack.c.b16 %v466, %v465
      %v504 = vpack.c.b16 %v468, %v467
      %v505 = vpack.c.b16 %v470, %v469
      %v506 = vpack.c.b16 %v472, %v471
      %v507 = vpack.c.b16 %v474, %v473
      %v508 = vpack.c.b16 %v476, %v475
      %v509 = vpack.c.b16 %v478, %v477
      %v510 = vpack.c.b16 %v480, %v479
      %v511 = vpack.c.b16 %v482, %v481
      %v512 = vpack.c.b16 %v484, %v483
      %v513 = vpack.c.b16 %v486, %v485
      %vm541 = vcmask 392192
      %v543 = vsel %vm541, %v354, 0
      %v546 = vsel %vm541, %v358, 0
      %v549 = vsel %vm541, %v362, 0
      %v552 = vsel %vm541, %v366, 0
      %554 = vmatpush.bf16.msra.mxu0 %v494
      %555 = vmatpush.bf16.msra.mxu0 %v493
      %556 = vmatpush.bf16.msra.mxu0 %v492
      %557 = vmatpush.bf16.msra.mxu0 %v491
      %558 = vmatpush.bf16.msra.mxu0 %v490
      %559 = vmatpush.bf16.msra.mxu0 %v489
      %560 = vmatpush.bf16.msra.mxu0 %v488
      %561 = vmatpush.bf16.msra.mxu0 %v487
      %562 = vmatmul.bf16.gmra.mxu0 %v351
      %v563 = vpop.f32.mrf.mxu0
      %v564 = vadd.f32 %v301, %v563
      %v565 = vpop.f32.mrf.mxu0
      %v566 = vadd.f32 %v301, %v565
      %567 = vmatmul.bf16.gmra.mxu0 %v355
      %v568 = vpop.f32.mrf.mxu0
      %v569 = vadd.f32 %v301, %v568
      %v570 = vpop.f32.mrf.mxu0
      %v571 = vadd.f32 %v301, %v570
      %572 = vmatmul.bf16.gmra.mxu0 %v359
      %v573 = vpop.f32.mrf.mxu0
      %v574 = vadd.f32 %v301, %v573
      %v575 = vpop.f32.mrf.mxu0
      %v576 = vadd.f32 %v301, %v575
      %577 = vmatmul.bf16.gmra.mxu0 %v363
      %v578 = vpop.f32.mrf.mxu0
      %v579 = vadd.f32 %v301, %v578
      %v580 = vpop.f32.mrf.mxu0
      %v581 = vadd.f32 %v301, %v580
      %582 = vdwg.mxu0
      %583 = vmatpush.bf16.msra.mxu0 %v502
      %584 = vmatpush.bf16.msra.mxu0 %v501
      %585 = vmatpush.bf16.msra.mxu0 %v500
      %586 = vmatpush.bf16.msra.mxu0 %v499
      %587 = vmatpush.bf16.msra.mxu0 %v498
      %588 = vmatpush.bf16.msra.mxu0 %v497
      %589 = vmatpush.bf16.msra.mxu0 %v496
      %590 = vmatpush.bf16.msra.mxu0 %v495
      %591 = vmatmul.bf16.gmra.mxu0 %v352
      %v592 = vpop.f32.mrf.mxu0
      %v593 = vadd.f32 %v564, %v592
      %v594 = vpop.f32.mrf.mxu0
      %v595 = vadd.f32 %v566, %v594
      %596 = vmatmul.bf16.gmra.mxu0 %v356
      %v597 = vpop.f32.mrf.mxu0
      %v598 = vadd.f32 %v569, %v597
      %v599 = vpop.f32.mrf.mxu0
      %v600 = vadd.f32 %v571, %v599
      %601 = vmatmul.bf16.gmra.mxu0 %v360
      %v602 = vpop.f32.mrf.mxu0
      %v603 = vadd.f32 %v574, %v602
      %v604 = vpop.f32.mrf.mxu0
      %v605 = vadd.f32 %v576, %v604
      %606 = vmatmul.bf16.gmra.mxu0 %v364
      %v607 = vpop.f32.mrf.mxu0
      %v608 = vadd.f32 %v579, %v607
      %v609 = vpop.f32.mrf.mxu0
      %v610 = vadd.f32 %v581, %v609
      %611 = vdwg.mxu0
      %612 = vmatpush.bf16.msra.mxu0 %v510
      %613 = vmatpush.bf16.msra.mxu0 %v509
      %614 = vmatpush.bf16.msra.mxu0 %v508
      %615 = vmatpush.bf16.msra.mxu0 %v507
      %616 = vmatpush.bf16.msra.mxu0 %v506
      %617 = vmatpush.bf16.msra.mxu0 %v505
      %618 = vmatpush.bf16.msra.mxu0 %v504
      %619 = vmatpush.bf16.msra.mxu0 %v503
      %620 = vmatmul.bf16.gmra.mxu0 %v353
      %v621 = vpop.f32.mrf.mxu0
      %v622 = vadd.f32 %v593, %v621
      %v623 = vpop.f32.mrf.mxu0
      %v624 = vadd.f32 %v595, %v623
      %625 = vmatmul.bf16.gmra.mxu0 %v357
      %v626 = vpop.f32.mrf.mxu0
      %v627 = vadd.f32 %v598, %v626
      %v628 = vpop.f32.mrf.mxu0
      %v629 = vadd.f32 %v600, %v628
      %630 = vmatmul.bf16.gmra.mxu0 %v361
      %v631 = vpop.f32.mrf.mxu0
      %v632 = vadd.f32 %v603, %v631
      %v633 = vpop.f32.mrf.mxu0
      %v634 = vadd.f32 %v605, %v633
      %635 = vmatmul.bf16.gmra.mxu0 %v365
      %v636 = vpop.f32.mrf.mxu0
      %v637 = vadd.f32 %v608, %v636
      %v638 = vpop.f32.mrf.mxu0
      %v639 = vadd.f32 %v610, %v638
      %640 = vdwg.mxu0
      %641 = vmatpush.bf16.msra.mxu0 0
      %642 = vmatpush.bf16.msra.mxu0 0
      %643 = vmatpush.bf16.msra.mxu0 0
      %644 = vmatpush.bf16.msra.mxu0 0
      %645 = vmatpush.bf16.msra.mxu0 0
      %646 = vmatpush.bf16.msra.mxu0 %v513
      %647 = vmatpush.bf16.msra.mxu0 %v512
      %648 = vmatpush.bf16.msra.mxu0 %v511
      %649 = vmatmul.bf16.gmra.mxu0 %v543
      %v650 = vpop.f32.mrf.mxu0
      %v651 = vadd.f32 %v622, %v650
      %v652 = vpop.f32.mrf.mxu0
      %v653 = vadd.f32 %v624, %v652
      %654 = vmatmul.bf16.gmra.mxu0 %v546
      %v655 = vpop.f32.mrf.mxu0
      %v656 = vadd.f32 %v627, %v655
      %v657 = vpop.f32.mrf.mxu0
      %v658 = vadd.f32 %v629, %v657
      %659 = vmatmul.bf16.gmra.mxu0 %v549
      %v660 = vpop.f32.mrf.mxu0
      %v661 = vadd.f32 %v632, %v660
      %v662 = vpop.f32.mrf.mxu0
      %v663 = vadd.f32 %v634, %v662
      %664 = vmatmul.bf16.gmra.mxu0 %v552
      %v665 = vpop.f32.mrf.mxu0
      %v666 = vadd.f32 %v637, %v665
      %v667 = vpop.f32.mrf.mxu0
      %v668 = vadd.f32 %v639, %v667
      %669 = vdwg.mxu0
      %vm670 = vcmp.ge.f32.partialorder %v651, 0.0
      %vm671 = vcmp.ge.f32.partialorder %v653, 0.0
      %vm672 = vcmp.ge.f32.partialorder %v656, 0.0
      %vm673 = vcmp.ge.f32.partialorder %v658, 0.0
      %vm674 = vcmp.ge.f32.partialorder %v661, 0.0
      %vm675 = vcmp.ge.f32.partialorder %v663, 0.0
      %vm676 = vcmp.ge.f32.partialorder %v666, 0.0
      %vm677 = vcmp.ge.f32.partialorder %v668, 0.0
      %v678 = vmul.f32 %v651, 0.1
      %v679 = vmul.f32 %v653, 0.1
      %v680 = vmul.f32 %v656, 0.1
      %v681 = vmul.f32 %v658, 0.1
      %v682 = vmul.f32 %v661, 0.1
      %v683 = vmul.f32 %v663, 0.1
      %v684 = vmul.f32 %v666, 0.1
      %v685 = vmul.f32 %v668, 0.1
      %v686 = vsel %vm670, %v651, %v678
      %v687 = vsel %vm671, %v653, %v679
      %v688 = vsel %vm672, %v656, %v680
      %v689 = vsel %vm673, %v658, %v681
      %v690 = vsel %vm674, %v661, %v682
      %v691 = vsel %vm675, %v663, %v683
      %v692 = vsel %vm676, %v666, %v684
      %v693 = vsel %vm677, %v668, %v685
      %vm694 = vcmask 261120
      %695 = vst.msk [vmem:[%s226] sm:$0xff] %vm694, %v686
      %696 = vst.msk [vmem:[%s226 + $0x8] sm:$0xff] %vm694, %v687
      %697 = vst.msk [vmem:[%s226 + $0x10] sm:$0xff] %vm694, %v688
      %698 = vst.msk [vmem:[%s226 + $0x18] sm:$0xff] %vm694, %v689
      %699 = vst.msk [vmem:[%s226 + $0x20] sm:$0xff] %vm694, %v690
      %700 = vst.msk [vmem:[%s226 + $0x28] sm:$0xff] %vm694, %v691
      %701 = vst.msk [vmem:[%s226 + $0x30] sm:$0xff] %vm694, %v692
      %702 = vst.msk [vmem:[%s226 + $0x38] sm:$0xff] %vm694, %v693
      %s703 = smul.u32 8, %s18
      %p704 = scmp.lt.s32.totalorder %s703, 15
      %s705 = scalar_select %p704, %s703, 15
      %p706 = scmp.lt.s32.totalorder %s19, 0
      %s707 = scalar_select %p706, %s19, 0
      %s708 = sadd.s32 %s707, %s705
      %s709 = smul.addr %s708, 8
      %s710 = scalar_lea.vmem %s3, %s709
      // Predicated region
      $region33: #{run_encoder.11} parent=31 // pred_check
        %p711 = pneg %p124
      $region34: #{run_encoder.11} parent=31 // pred_check_branch
        %713 = sbr.rel (%p711) target = $region36
      $region35: #{run_encoder.11} parent=31 // pred_region
        %s714 = smul.u32 8, %s18
      $region36: #{run_encoder.11} parent=31 // pred_fallthru
        _
    $region32: #{run_encoder.11} parent=5 // pred_fallthru
      _
    %p715 = scmp.le.s32.totalorder 2, %s9
    // Predicated region
    $region37: #{run_encoder.11} parent=5 // pred_check
      %p716 = pneg %p715
    $region38: #{run_encoder.11} parent=5 // pred_check_branch
      %718 = sbr.rel (%p716) target = $region40
    $region39: #{run_encoder.11} parent=5 // pred_region
      %s719 = ssub.s32 %s9, 2
      // Predicated region
      $region41: #{run_encoder.11} parent=39 // pred_check
        %p720 = pneg %p130
      $region42: #{run_encoder.11} parent=39 // pred_check_branch
        %722 = sbr.rel (%p720) target = $region44
      $region43: #{run_encoder.11} parent=39 // pred_region
        %s723 = smul.u32 8, %s20
        %p724 = scmp.lt.s32.totalorder %s723, 15
        %s725 = scalar_select %p724, %s723, 15
        %p726 = scmp.lt.s32.totalorder %s21, 0
        %s727 = scalar_select %p726, %s21, 0
        %s728 = sadd.s32 %s727, %s725
        %s729 = smul.addr %s728, 8
        %s730 = scalar_lea.vmem %s3, %s729
      $region44: #{run_encoder.11} parent=39 // pred_fallthru
        _
    $region40: #{run_encoder.11} parent=5 // pred_fallthru
      _
  $region6: #{run_encoder.11} parent=0 // loop_footer
    %s13 = sadd.s32 1, %s9
  $region7: #{run_encoder.11} parent=0 // loop_footer_branch
    %8 = sbr.rel target = $region3
  $region8: #{run_encoder.11} parent=0 // loop_exit
    _

// kernel: run_encoder.12
$region0: #{run_encoder.12}
  #allocation0 [shape = 'u32[]', space=smem, size = 0x4, offset = 0x4, fixed_abs, tag = 'smem constant byte address 0x4 - core index']
  #allocation1 [shape = 'u32[72,128]{1,0:T(1,128)}', space=vmem, size = 0x9000, scoped, tag = 'internal scratch']
  %s0 = inlined_call_operand.vmem [shape: bf16[16,864], index: 0, kind: input, shape index: {}]
  %s1 = inlined_call_operand.vmem [shape: bf16[864,64], index: 1, kind: input, shape index: {}]
  %s2 = inlined_call_operand.vmem [shape: f32[1,64], index: 2, kind: input, shape index: {}]
  %s3 = inlined_call_operand.vmem [shape: bf16[16,64], index: 3, kind: output, shape index: {}]
  %s4 = sld [smem:[#allocation0]]
  $region22: #{run_encoder.12} parent=0
    _
  %s6 = ssub.s32 1, %s4
  %s7 = scalar_select 0, %s6, %s4
  // Predicated region
  $region2: #{run_encoder.12} parent=0 // pred_check
    _
  $region3: #{run_encoder.12} parent=0 // pred_check_branch
    %9 = sbr.rel (0) target = $region5
  $region4: #{run_encoder.12} parent=0 // pred_region
    _
  $region5: #{run_encoder.12} parent=0 // pred_fallthru
    _
  // Predicated region
  $region6: #{run_encoder.12} parent=0 // pred_check
    _
  $region7: #{run_encoder.12} parent=0 // pred_check_branch
    %11 = sbr.rel (0) target = $region9
  $region8: #{run_encoder.12} parent=0 // pred_region
    _
  $region9: #{run_encoder.12} parent=0 // pred_fallthru
    _
  // Predicated region
  $region10: #{run_encoder.12} parent=0 // pred_check
    _
  $region11: #{run_encoder.12} parent=0 // pred_check_branch
    %13 = sbr.rel (0) target = $region13
  $region12: #{run_encoder.12} parent=0 // pred_region
    _
  $region13: #{run_encoder.12} parent=0 // pred_fallthru
    _
  %v15 = vld [vmem:[%s0] sm:$0xff]
  %v16 = vld [vmem:[%s0 + $0x8] sm:$0xff]
  %v17 = vld [vmem:[%s0 + $0x10] sm:$0xff]
  %v18 = vld [vmem:[%s0 + $0x18] sm:$0xf]
  %v19 = vld [vmem:[%s0 + $0x1c] sm:$0xff]
  %v20 = vld [vmem:[%s0 + $0x24] sm:$0xff]
  %v21 = vld [vmem:[%s0 + $0x2c] sm:$0xff]
  %v22 = vld [vmem:[%s0 + $0x34] sm:$0xf]
  %v23 = vld [vmem:[%s1] sm:$0xf]
  %v24 = vld [vmem:[%s1 + $0x4] sm:$0xf]
  %v25 = vld [vmem:[%s1 + $0x8] sm:$0xf]
  %v26 = vld [vmem:[%s1 + $0xc] sm:$0xf]
  %v27 = vld [vmem:[%s1 + $0x10] sm:$0xf]
  %v28 = vld [vmem:[%s1 + $0x14] sm:$0xf]
  %v29 = vld [vmem:[%s1 + $0x18] sm:$0xf]
  %v30 = vld [vmem:[%s1 + $0x1c] sm:$0xf]
  %v31 = vld [vmem:[%s1 + $0x20] sm:$0xf]
  %v32 = vld [vmem:[%s1 + $0x24] sm:$0xf]
  %v33 = vld [vmem:[%s1 + $0x28] sm:$0xf]
  %v34 = vld [vmem:[%s1 + $0x2c] sm:$0xf]
  %v35 = vld [vmem:[%s1 + $0x30] sm:$0xf]
  %v36 = vld [vmem:[%s1 + $0x34] sm:$0xf]
  %v37 = vld [vmem:[%s1 + $0x38] sm:$0xf]
  %v38 = vld [vmem:[%s1 + $0x3c] sm:$0xf]
  %v39 = vld [vmem:[%s1 + $0x40] sm:$0xf]
  %v40 = vld [vmem:[%s1 + $0x44] sm:$0xf]
  %v41 = vld [vmem:[%s1 + $0x48] sm:$0xf]
  %v42 = vld [vmem:[%s1 + $0x4c] sm:$0xf]
  %v43 = vld [vmem:[%s1 + $0x50] sm:$0xf]
  %v44 = vld [vmem:[%s1 + $0x54] sm:$0xf]
  %v45 = vld [vmem:[%s1 + $0x58] sm:$0xf]
  %v46 = vld [vmem:[%s1 + $0x5c] sm:$0xf]
  %v47 = vld [vmem:[%s1 + $0x60] sm:$0xf]
  %v48 = vld [vmem:[%s1 + $0x64] sm:$0xf]
  %v49 = vld [vmem:[%s1 + $0x68] sm:$0xf]
  %v50 = vld [vmem:[%s1 + $0x6c] sm:$0xf]
  %v51 = vld [vmem:[%s1 + $0x70] sm:$0xf]
  %v52 = vld [vmem:[%s1 + $0x74] sm:$0xf]
  %v53 = vld [vmem:[%s1 + $0x78] sm:$0xf]
  %v54 = vld [vmem:[%s1 + $0x7c] sm:$0xf]
  %v55 = vld [vmem:[%s1 + $0x80] sm:$0xf]
  %v56 = vld [vmem:[%s1 + $0x84] sm:$0xf]
  %v57 = vld [vmem:[%s1 + $0x88] sm:$0xf]
  %v58 = vld [vmem:[%s1 + $0x8c] sm:$0xf]
  %v59 = vld [vmem:[%s1 + $0x90] sm:$0xf]
  %v60 = vld [vmem:[%s1 + $0x94] sm:$0xf]
  %v61 = vld [vmem:[%s1 + $0x98] sm:$0xf]
  %v62 = vld [vmem:[%s1 + $0x9c] sm:$0xf]
  %v63 = vld [vmem:[%s1 + $0xa0] sm:$0xf]
  %v64 = vld [vmem:[%s1 + $0xa4] sm:$0xf]
  %v65 = vld [vmem:[%s1 + $0xa8] sm:$0xf]
  %v66 = vld [vmem:[%s1 + $0xac] sm:$0xf]
  %v67 = vld [vmem:[%s1 + $0xb0] sm:$0xf]
  %v68 = vld [vmem:[%s1 + $0xb4] sm:$0xf]
  %v69 = vld [vmem:[%s1 + $0xb8] sm:$0xf]
  %v70 = vld [vmem:[%s1 + $0xbc] sm:$0xf]
  %v71 = vld [vmem:[%s1 + $0xc0] sm:$0xf]
  %v72 = vld [vmem:[%s1 + $0xc4] sm:$0xf]
  %v73 = vld [vmem:[%s1 + $0xc8] sm:$0xf]
  %v74 = vld [vmem:[%s1 + $0xcc] sm:$0xf]
  %v75 = vld [vmem:[%s1 + $0xd0] sm:$0xf]
  %v76 = vld [vmem:[%s1 + $0xd4] sm:$0xf]
  %v77 = vld [vmem:[%s1 + $0xd8] sm:$0xf]
  %v78 = vld [vmem:[%s1 + $0xdc] sm:$0xf]
  %v79 = vld [vmem:[%s1 + $0xe0] sm:$0xf]
  %v80 = vld [vmem:[%s1 + $0xe4] sm:$0xf]
  %v81 = vld [vmem:[%s1 + $0xe8] sm:$0xf]
  %v82 = vld [vmem:[%s1 + $0xec] sm:$0xf]
  %v83 = vld [vmem:[%s1 + $0xf0] sm:$0xf]
  %v84 = vld [vmem:[%s1 + $0xf4] sm:$0xf]
  %v85 = vld [vmem:[%s1 + $0xf8] sm:$0xf]
  %v86 = vld [vmem:[%s1 + $0xfc] sm:$0xf]
  %v87 = vld [vmem:[%s1 + $0x100] sm:$0xf]
  %v88 = vld [vmem:[%s1 + $0x104] sm:$0xf]
  %v89 = vld [vmem:[%s1 + $0x108] sm:$0xf]
  %v90 = vld [vmem:[%s1 + $0x10c] sm:$0xf]
  %v91 = vld [vmem:[%s1 + $0x110] sm:$0xf]
  %v92 = vld [vmem:[%s1 + $0x114] sm:$0xf]
  %v93 = vld [vmem:[%s1 + $0x118] sm:$0xf]
  %v94 = vld [vmem:[%s1 + $0x11c] sm:$0xf]
  %v95 = vld [vmem:[%s1 + $0x120] sm:$0xf]
  %v96 = vld [vmem:[%s1 + $0x124] sm:$0xf]
  %v97 = vld [vmem:[%s1 + $0x128] sm:$0xf]
  %v98 = vld [vmem:[%s1 + $0x12c] sm:$0xf]
  %v99 = vld [vmem:[%s1 + $0x130] sm:$0xf]
  %v100 = vld [vmem:[%s1 + $0x134] sm:$0xf]
  %v101 = vld [vmem:[%s1 + $0x138] sm:$0xf]
  %v102 = vld [vmem:[%s1 + $0x13c] sm:$0xf]
  %v103 = vld [vmem:[%s1 + $0x140] sm:$0xf]
  %v104 = vld [vmem:[%s1 + $0x144] sm:$0xf]
  %v105 = vld [vmem:[%s1 + $0x148] sm:$0xf]
  %v106 = vld [vmem:[%s1 + $0x14c] sm:$0xf]
  %v107 = vld [vmem:[%s1 + $0x150] sm:$0xf]
  %v108 = vld [vmem:[%s1 + $0x154] sm:$0xf]
  %v109 = vld [vmem:[%s1 + $0x158] sm:$0xf]
  %v110 = vld [vmem:[%s1 + $0x15c] sm:$0xf]
  %v111 = vld [vmem:[%s1 + $0x160] sm:$0xf]
  %v112 = vld [vmem:[%s1 + $0x164] sm:$0xf]
  %v113 = vld [vmem:[%s1 + $0x168] sm:$0xf]
  %v114 = vld [vmem:[%s1 + $0x16c] sm:$0xf]
  %v115 = vld [vmem:[%s1 + $0x170] sm:$0xf]
  %v116 = vld [vmem:[%s1 + $0x174] sm:$0xf]
  %v117 = vld [vmem:[%s1 + $0x178] sm:$0xf]
  %v118 = vld [vmem:[%s1 + $0x17c] sm:$0xf]
  %v119 = vld [vmem:[%s1 + $0x180] sm:$0xf]
  %v120 = vld [vmem:[%s1 + $0x184] sm:$0xf]
  %v121 = vld [vmem:[%s1 + $0x188] sm:$0xf]
  %v122 = vld [vmem:[%s1 + $0x18c] sm:$0xf]
  %v123 = vld [vmem:[%s1 + $0x190] sm:$0xf]
  %v124 = vld [vmem:[%s1 + $0x194] sm:$0xf]
  %v125 = vld [vmem:[%s1 + $0x198] sm:$0xf]
  %v126 = vld [vmem:[%s1 + $0x19c] sm:$0xf]
  %v127 = vld [vmem:[%s1 + $0x1a0] sm:$0xf]
  %v128 = vld [vmem:[%s1 + $0x1a4] sm:$0xf]
  %v129 = vld [vmem:[%s1 + $0x1a8] sm:$0xf]
  %v130 = vld [vmem:[%s1 + $0x1ac] sm:$0xf]
  %v131 = vld [vmem:[%s2] sm:$0x1]
  %v133 = vperm.slane %v131, 0
  %v143 = vunpack.c.l.b16 %v15
  %v144 = vunpack.c.h.b16 %v15
  %v145 = vunpack.c.l.b16 %v16
  %v146 = vunpack.c.h.b16 %v16
  %v147 = vunpack.c.l.b16 %v17
  %v148 = vunpack.c.h.b16 %v17
  %v149 = vunpack.c.l.b16 %v18
  %v150 = vunpack.c.l.b16 %v19
  %v151 = vunpack.c.h.b16 %v19
  %v152 = vunpack.c.l.b16 %v20
  %v153 = vunpack.c.h.b16 %v20
  %v154 = vunpack.c.l.b16 %v21
  %v155 = vunpack.c.h.b16 %v21
  %v156 = vunpack.c.l.b16 %v22
  %v157 = vpack.c.b16 %v150, %v143
  %v158 = vpack.c.b16 %v151, %v144
  %v159 = vpack.c.b16 %v152, %v145
  %v160 = vpack.c.b16 %v153, %v146
  %v161 = vpack.c.b16 %v154, %v147
  %v162 = vpack.c.b16 %v155, %v148
  %v163 = vpack.c.b16 %v156, %v149
  %v278 = vunpack.c.l.b16 %v23
  %v279 = vunpack.c.l.b16 %v24
  %v280 = vunpack.c.l.b16 %v25
  %v281 = vunpack.c.l.b16 %v26
  %v282 = vunpack.c.l.b16 %v27
  %v283 = vunpack.c.l.b16 %v28
  %v284 = vunpack.c.l.b16 %v29
  %v285 = vunpack.c.l.b16 %v30
  %v286 = vunpack.c.l.b16 %v31
  %v287 = vunpack.c.l.b16 %v32
  %v288 = vunpack.c.l.b16 %v33
  %v289 = vunpack.c.l.b16 %v34
  %v290 = vunpack.c.l.b16 %v35
  %v291 = vunpack.c.l.b16 %v36
  %v292 = vunpack.c.l.b16 %v37
  %v293 = vunpack.c.l.b16 %v38
  %v294 = vunpack.c.l.b16 %v39
  %v295 = vunpack.c.l.b16 %v40
  %v296 = vunpack.c.l.b16 %v41
  %v297 = vunpack.c.l.b16 %v42
  %v298 = vunpack.c.l.b16 %v43
  %v299 = vunpack.c.l.b16 %v44
  %v300 = vunpack.c.l.b16 %v45
  %v301 = vunpack.c.l.b16 %v46
  %v302 = vunpack.c.l.b16 %v47
  %v303 = vunpack.c.l.b16 %v48
  %v304 = vunpack.c.l.b16 %v49
  %v305 = vunpack.c.l.b16 %v50
  %v306 = vunpack.c.l.b16 %v51
  %v307 = vunpack.c.l.b16 %v52
  %v308 = vunpack.c.l.b16 %v53
  %v309 = vunpack.c.l.b16 %v54
  %v310 = vunpack.c.l.b16 %v55
  %v311 = vunpack.c.l.b16 %v56
  %v312 = vunpack.c.l.b16 %v57
  %v313 = vunpack.c.l.b16 %v58
  %v314 = vunpack.c.l.b16 %v59
  %v315 = vunpack.c.l.b16 %v60
  %v316 = vunpack.c.l.b16 %v61
  %v317 = vunpack.c.l.b16 %v62
  %v318 = vunpack.c.l.b16 %v63
  %v319 = vunpack.c.l.b16 %v64
  %v320 = vunpack.c.l.b16 %v65
  %v321 = vunpack.c.l.b16 %v66
  %v322 = vunpack.c.l.b16 %v67
  %v323 = vunpack.c.l.b16 %v68
  %v324 = vunpack.c.l.b16 %v69
  %v325 = vunpack.c.l.b16 %v70
  %v326 = vunpack.c.l.b16 %v71
  %v327 = vunpack.c.l.b16 %v72
  %v328 = vunpack.c.l.b16 %v73
  %v329 = vunpack.c.l.b16 %v74
  %v330 = vunpack.c.l.b16 %v75
  %v331 = vunpack.c.l.b16 %v76
  %v332 = vunpack.c.l.b16 %v77
  %v333 = vunpack.c.l.b16 %v78
  %v334 = vunpack.c.l.b16 %v79
  %v335 = vunpack.c.l.b16 %v80
  %v336 = vunpack.c.l.b16 %v81
  %v337 = vunpack.c.l.b16 %v82
  %v338 = vunpack.c.l.b16 %v83
  %v339 = vunpack.c.l.b16 %v84
  %v340 = vunpack.c.l.b16 %v85
  %v341 = vunpack.c.l.b16 %v86
  %v342 = vunpack.c.l.b16 %v87
  %v343 = vunpack.c.l.b16 %v88
  %v344 = vunpack.c.l.b16 %v89
  %v345 = vunpack.c.l.b16 %v90
  %v346 = vunpack.c.l.b16 %v91
  %v347 = vunpack.c.l.b16 %v92
  %v348 = vunpack.c.l.b16 %v93
  %v349 = vunpack.c.l.b16 %v94
  %v350 = vunpack.c.l.b16 %v95
  %v351 = vunpack.c.l.b16 %v96
  %v352 = vunpack.c.l.b16 %v97
  %v353 = vunpack.c.l.b16 %v98
  %v354 = vunpack.c.l.b16 %v99
  %v355 = vunpack.c.l.b16 %v100
  %v356 = vunpack.c.l.b16 %v101
  %v357 = vunpack.c.l.b16 %v102
  %v358 = vunpack.c.l.b16 %v103
  %v359 = vunpack.c.l.b16 %v104
  %v360 = vunpack.c.l.b16 %v105
  %v361 = vunpack.c.l.b16 %v106
  %v362 = vunpack.c.l.b16 %v107
  %v363 = vunpack.c.l.b16 %v108
  %v364 = vunpack.c.l.b16 %v109
  %v365 = vunpack.c.l.b16 %v110
  %v366 = vunpack.c.l.b16 %v111
  %v367 = vunpack.c.l.b16 %v112
  %v368 = vunpack.c.l.b16 %v113
  %v369 = vunpack.c.l.b16 %v114
  %v370 = vunpack.c.l.b16 %v115
  %v371 = vunpack.c.l.b16 %v116
  %v372 = vunpack.c.l.b16 %v117
  %v373 = vunpack.c.l.b16 %v118
  %v374 = vunpack.c.l.b16 %v119
  %v375 = vunpack.c.l.b16 %v120
  %v376 = vunpack.c.l.b16 %v121
  %v377 = vunpack.c.l.b16 %v122
  %v378 = vunpack.c.l.b16 %v123
  %v379 = vunpack.c.l.b16 %v124
  %v380 = vunpack.c.l.b16 %v125
  %v381 = vunpack.c.l.b16 %v126
  %v382 = vunpack.c.l.b16 %v127
  %v383 = vunpack.c.l.b16 %v128
  %v384 = vunpack.c.l.b16 %v129
  %v385 = vunpack.c.l.b16 %v130
  %v386 = vpack.c.b16 %v279, %v278
  %v387 = vpack.c.b16 %v281, %v280
  %v388 = vpack.c.b16 %v283, %v282
  %v389 = vpack.c.b16 %v285, %v284
  %v390 = vpack.c.b16 %v287, %v286
  %v391 = vpack.c.b16 %v289, %v288
  %v392 = vpack.c.b16 %v291, %v290
  %v393 = vpack.c.b16 %v293, %v292
  %v394 = vpack.c.b16 %v295, %v294
  %v395 = vpack.c.b16 %v297, %v296
  %v396 = vpack.c.b16 %v299, %v298
  %v397 = vpack.c.b16 %v301, %v300
  %v398 = vpack.c.b16 %v303, %v302
  %v399 = vpack.c.b16 %v305, %v304
  %v400 = vpack.c.b16 %v307, %v306
  %v401 = vpack.c.b16 %v309, %v308
  %v402 = vpack.c.b16 %v311, %v310
  %v403 = vpack.c.b16 %v313, %v312
  %v404 = vpack.c.b16 %v315, %v314
  %v405 = vpack.c.b16 %v317, %v316
  %v406 = vpack.c.b16 %v319, %v318
  %v407 = vpack.c.b16 %v321, %v320
  %v408 = vpack.c.b16 %v323, %v322
  %v409 = vpack.c.b16 %v325, %v324
  %v410 = vpack.c.b16 %v327, %v326
  %v411 = vpack.c.b16 %v329, %v328
  %v412 = vpack.c.b16 %v331, %v330
  %v413 = vpack.c.b16 %v333, %v332
  %v414 = vpack.c.b16 %v335, %v334
  %v415 = vpack.c.b16 %v337, %v336
  %v416 = vpack.c.b16 %v339, %v338
  %v417 = vpack.c.b16 %v341, %v340
  %v418 = vpack.c.b16 %v343, %v342
  %v419 = vpack.c.b16 %v345, %v344
  %v420 = vpack.c.b16 %v347, %v346
  %v421 = vpack.c.b16 %v349, %v348
  %v422 = vpack.c.b16 %v351, %v350
  %v423 = vpack.c.b16 %v353, %v352
  %v424 = vpack.c.b16 %v355, %v354
  %v425 = vpack.c.b16 %v357, %v356
  %v426 = vpack.c.b16 %v359, %v358
  %v427 = vpack.c.b16 %v361, %v360
  %v428 = vpack.c.b16 %v363, %v362
  %v429 = vpack.c.b16 %v365, %v364
  %v430 = vpack.c.b16 %v367, %v366
  %v431 = vpack.c.b16 %v369, %v368
  %v432 = vpack.c.b16 %v371, %v370
  %v433 = vpack.c.b16 %v373, %v372
  %v434 = vpack.c.b16 %v375, %v374
  %v435 = vpack.c.b16 %v377, %v376
  %v436 = vpack.c.b16 %v379, %v378
  %v437 = vpack.c.b16 %v381, %v380
  %v438 = vpack.c.b16 %v383, %v382
  %v439 = vpack.c.b16 %v385, %v384
  %vm494 = vcmask 785408
  %v496 = vsel %vm494, %v163, 0
  %498 = vmatpush.bf16.msra.mxu0 %v393
  %499 = vmatpush.bf16.msra.mxu0 %v392
  %500 = vmatpush.bf16.msra.mxu0 %v391
  %501 = vmatpush.bf16.msra.mxu0 %v390
  %502 = vmatpush.bf16.msra.mxu0 %v389
  %503 = vmatpush.bf16.msra.mxu0 %v388
  %504 = vmatpush.bf16.msra.mxu0 %v387
  %505 = vmatpush.bf16.msra.mxu0 %v386
  %506 = vmatmul.bf16.gmra.mxu0 %v157
  %v507 = vpop.f32.mrf.mxu0
  %v508 = vadd.f32 %v133, %v507
  %v509 = vpop.f32.mrf.mxu0
  %v510 = vadd.f32 %v133, %v509
  %511 = vdwg.mxu0
  %512 = vmatpush.bf16.msra.mxu0 %v401
  %513 = vmatpush.bf16.msra.mxu0 %v400
  %514 = vmatpush.bf16.msra.mxu0 %v399
  %515 = vmatpush.bf16.msra.mxu0 %v398
  %516 = vmatpush.bf16.msra.mxu0 %v397
  %517 = vmatpush.bf16.msra.mxu0 %v396
  %518 = vmatpush.bf16.msra.mxu0 %v395
  %519 = vmatpush.bf16.msra.mxu0 %v394
  %520 = vmatmul.bf16.gmra.mxu0 %v158
  %v521 = vpop.f32.mrf.mxu0
  %v522 = vadd.f32 %v508, %v521
  %v523 = vpop.f32.mrf.mxu0
  %v524 = vadd.f32 %v510, %v523
  %525 = vdwg.mxu0
  %526 = vmatpush.bf16.msra.mxu0 %v409
  %527 = vmatpush.bf16.msra.mxu0 %v408
  %528 = vmatpush.bf16.msra.mxu0 %v407
  %529 = vmatpush.bf16.msra.mxu0 %v406
  %530 = vmatpush.bf16.msra.mxu0 %v405
  %531 = vmatpush.bf16.msra.mxu0 %v404
  %532 = vmatpush.bf16.msra.mxu0 %v403
  %533 = vmatpush.bf16.msra.mxu0 %v402
  %534 = vmatmul.bf16.gmra.mxu0 %v159
  %v535 = vpop.f32.mrf.mxu0
  %v536 = vadd.f32 %v522, %v535
  %v537 = vpop.f32.mrf.mxu0
  %v538 = vadd.f32 %v524, %v537
  %539 = vdwg.mxu0
  %540 = vmatpush.bf16.msra.mxu0 %v417
  %541 = vmatpush.bf16.msra.mxu0 %v416
  %542 = vmatpush.bf16.msra.mxu0 %v415
  %543 = vmatpush.bf16.msra.mxu0 %v414
  %544 = vmatpush.bf16.msra.mxu0 %v413
  %545 = vmatpush.bf16.msra.mxu0 %v412
  %546 = vmatpush.bf16.msra.mxu0 %v411
  %547 = vmatpush.bf16.msra.mxu0 %v410
  %548 = vmatmul.bf16.gmra.mxu0 %v160
  %v549 = vpop.f32.mrf.mxu0
  %v550 = vadd.f32 %v536, %v549
  %v551 = vpop.f32.mrf.mxu0
  %v552 = vadd.f32 %v538, %v551
  %553 = vdwg.mxu0
  %554 = vmatpush.bf16.msra.mxu0 %v425
  %555 = vmatpush.bf16.msra.mxu0 %v424
  %556 = vmatpush.bf16.msra.mxu0 %v423
  %557 = vmatpush.bf16.msra.mxu0 %v422
  %558 = vmatpush.bf16.msra.mxu0 %v421
  %559 = vmatpush.bf16.msra.mxu0 %v420
  %560 = vmatpush.bf16.msra.mxu0 %v419
  %561 = vmatpush.bf16.msra.mxu0 %v418
  %562 = vmatmul.bf16.gmra.mxu0 %v161
  %v563 = vpop.f32.mrf.mxu0
  %v564 = vadd.f32 %v550, %v563
  %v565 = vpop.f32.mrf.mxu0
  %v566 = vadd.f32 %v552, %v565
  %567 = vdwg.mxu0
  %568 = vmatpush.bf16.msra.mxu0 %v433
  %569 = vmatpush.bf16.msra.mxu0 %v432
  %570 = vmatpush.bf16.msra.mxu0 %v431
  %571 = vmatpush.bf16.msra.mxu0 %v430
  %572 = vmatpush.bf16.msra.mxu0 %v429
  %573 = vmatpush.bf16.msra.mxu0 %v428
  %574 = vmatpush.bf16.msra.mxu0 %v427
  %575 = vmatpush.bf16.msra.mxu0 %v426
  %576 = vmatmul.bf16.gmra.mxu0 %v162
  %v577 = vpop.f32.mrf.mxu0
  %v578 = vadd.f32 %v564, %v577
  %v579 = vpop.f32.mrf.mxu0
  %v580 = vadd.f32 %v566, %v579
  %581 = vdwg.mxu0
  %582 = vmatpush.bf16.msra.mxu0 0
  %583 = vmatpush.bf16.msra.mxu0 0
  %584 = vmatpush.bf16.msra.mxu0 %v439
  %585 = vmatpush.bf16.msra.mxu0 %v438
  %586 = vmatpush.bf16.msra.mxu0 %v437
  %587 = vmatpush.bf16.msra.mxu0 %v436
  %588 = vmatpush.bf16.msra.mxu0 %v435
  %589 = vmatpush.bf16.msra.mxu0 %v434
  %590 = vmatmul.bf16.gmra.mxu0 %v496
  %v591 = vpop.f32.mrf.mxu0
  %v592 = vadd.f32 %v578, %v591
  %v593 = vpop.f32.mrf.mxu0
  %v594 = vadd.f32 %v580, %v593
  %595 = vdwg.mxu0
  %vm596 = vcmp.ge.f32.partialorder %v592, 0.0
  %vm597 = vcmp.ge.f32.partialorder %v594, 0.0
  %v598 = vmul.f32 %v592, 0.1
  %v599 = vmul.f32 %v594, 0.1
  %v600 = vsel %vm596, %v592, %v598
  %v601 = vsel %vm597, %v594, %v599
  %v602 = vpack.c.bf16 %v600, %v600
  %v603 = vpack.c.bf16 %v601, %v601
  %vm604 = vcmask 519168
  %605 = vst.msk [vmem:[%s3] sm:$0xf] %vm604, %v602
  %606 = vst.msk [vmem:[%s3 + $0x4] sm:$0xf] %vm604, %v603
  // Predicated region
  $region14: #{run_encoder.12} parent=0 // pred_check
    _
  $region15: #{run_encoder.12} parent=0 // pred_check_branch
    %608 = sbr.rel (0) target = $region17
  $region16: #{run_encoder.12} parent=0 // pred_region
    _
  $region17: #{run_encoder.12} parent=0 // pred_fallthru
    _
  // Predicated region
  $region18: #{run_encoder.12} parent=0 // pred_check
    _
  $region19: #{run_encoder.12} parent=0 // pred_check_branch
    %610 = sbr.rel (0) target = $region21
  $region20: #{run_encoder.12} parent=0 // pred_region
    _
  $region21: #{run_encoder.12} parent=0 // pred_fallthru
    _

// kernel: run_encoder.14
$region0: #{run_encoder.14}
  #allocation0 [shape = 'u32[]', space=smem, size = 0x4, offset = 0x4, fixed_abs, tag = 'smem constant byte address 0x4 - core index']
  #allocation1 [shape = 'u32[72,128]{1,0:T(1,128)}', space=vmem, size = 0x9000, scoped, tag = 'internal scratch']
  %s0 = inlined_call_operand.vmem [shape: bf16[2,512], index: 0, kind: input, shape index: {}]
  %s1 = inlined_call_operand.vmem [shape: bf16[512,128], index: 1, kind: input, shape index: {}]
  %s2 = inlined_call_operand.vmem [shape: f32[1,128], index: 2, kind: input, shape index: {}]
  %s3 = inlined_call_operand.vmem [shape: bf16[2,128], index: 3, kind: output, shape index: {}]
  %s4 = sld [smem:[#allocation0]]
  $region22: #{run_encoder.14} parent=0
    _
  %s6 = ssub.s32 1, %s4
  %s7 = scalar_select 0, %s6, %s4
  // Predicated region
  $region2: #{run_encoder.14} parent=0 // pred_check
    _
  $region3: #{run_encoder.14} parent=0 // pred_check_branch
    %9 = sbr.rel (0) target = $region5
  $region4: #{run_encoder.14} parent=0 // pred_region
    _
  $region5: #{run_encoder.14} parent=0 // pred_fallthru
    _
  // Predicated region
  $region6: #{run_encoder.14} parent=0 // pred_check
    _
  $region7: #{run_encoder.14} parent=0 // pred_check_branch
    %11 = sbr.rel (0) target = $region9
  $region8: #{run_encoder.14} parent=0 // pred_region
    _
  $region9: #{run_encoder.14} parent=0 // pred_fallthru
    _
  // Predicated region
  $region10: #{run_encoder.14} parent=0 // pred_check
    _
  $region11: #{run_encoder.14} parent=0 // pred_check_branch
    %13 = sbr.rel (0) target = $region13
  $region12: #{run_encoder.14} parent=0 // pred_region
    _
  $region13: #{run_encoder.14} parent=0 // pred_fallthru
    _
  %v14 = vld [vmem:[%s0] sm:$0xf]
  %v15 = vld [vmem:[%s1] sm:$0xf]
  %v16 = vld [vmem:[%s1 + $0x4] sm:$0xf]
  %v17 = vld [vmem:[%s1 + $0x8] sm:$0xf]
  %v18 = vld [vmem:[%s1 + $0xc] sm:$0xf]
  %v19 = vld [vmem:[%s1 + $0x10] sm:$0xf]
  %v20 = vld [vmem:[%s1 + $0x14] sm:$0xf]
  %v21 = vld [vmem:[%s1 + $0x18] sm:$0xf]
  %v22 = vld [vmem:[%s1 + $0x1c] sm:$0xf]
  %v23 = vld [vmem:[%s1 + $0x20] sm:$0xf]
  %v24 = vld [vmem:[%s1 + $0x24] sm:$0xf]
  %v25 = vld [vmem:[%s1 + $0x28] sm:$0xf]
  %v26 = vld [vmem:[%s1 + $0x2c] sm:$0xf]
  %v27 = vld [vmem:[%s1 + $0x30] sm:$0xf]
  %v28 = vld [vmem:[%s1 + $0x34] sm:$0xf]
  %v29 = vld [vmem:[%s1 + $0x38] sm:$0xf]
  %v30 = vld [vmem:[%s1 + $0x3c] sm:$0xf]
  %v31 = vld [vmem:[%s1 + $0x40] sm:$0xf]
  %v32 = vld [vmem:[%s1 + $0x44] sm:$0xf]
  %v33 = vld [vmem:[%s1 + $0x48] sm:$0xf]
  %v34 = vld [vmem:[%s1 + $0x4c] sm:$0xf]
  %v35 = vld [vmem:[%s1 + $0x50] sm:$0xf]
  %v36 = vld [vmem:[%s1 + $0x54] sm:$0xf]
  %v37 = vld [vmem:[%s1 + $0x58] sm:$0xf]
  %v38 = vld [vmem:[%s1 + $0x5c] sm:$0xf]
  %v39 = vld [vmem:[%s1 + $0x60] sm:$0xf]
  %v40 = vld [vmem:[%s1 + $0x64] sm:$0xf]
  %v41 = vld [vmem:[%s1 + $0x68] sm:$0xf]
  %v42 = vld [vmem:[%s1 + $0x6c] sm:$0xf]
  %v43 = vld [vmem:[%s1 + $0x70] sm:$0xf]
  %v44 = vld [vmem:[%s1 + $0x74] sm:$0xf]
  %v45 = vld [vmem:[%s1 + $0x78] sm:$0xf]
  %v46 = vld [vmem:[%s1 + $0x7c] sm:$0xf]
  %v47 = vld [vmem:[%s1 + $0x80] sm:$0xf]
  %v48 = vld [vmem:[%s1 + $0x84] sm:$0xf]
  %v49 = vld [vmem:[%s1 + $0x88] sm:$0xf]
  %v50 = vld [vmem:[%s1 + $0x8c] sm:$0xf]
  %v51 = vld [vmem:[%s1 + $0x90] sm:$0xf]
  %v52 = vld [vmem:[%s1 + $0x94] sm:$0xf]
  %v53 = vld [vmem:[%s1 + $0x98] sm:$0xf]
  %v54 = vld [vmem:[%s1 + $0x9c] sm:$0xf]
  %v55 = vld [vmem:[%s1 + $0xa0] sm:$0xf]
  %v56 = vld [vmem:[%s1 + $0xa4] sm:$0xf]
  %v57 = vld [vmem:[%s1 + $0xa8] sm:$0xf]
  %v58 = vld [vmem:[%s1 + $0xac] sm:$0xf]
  %v59 = vld [vmem:[%s1 + $0xb0] sm:$0xf]
  %v60 = vld [vmem:[%s1 + $0xb4] sm:$0xf]
  %v61 = vld [vmem:[%s1 + $0xb8] sm:$0xf]
  %v62 = vld [vmem:[%s1 + $0xbc] sm:$0xf]
  %v63 = vld [vmem:[%s1 + $0xc0] sm:$0xf]
  %v64 = vld [vmem:[%s1 + $0xc4] sm:$0xf]
  %v65 = vld [vmem:[%s1 + $0xc8] sm:$0xf]
  %v66 = vld [vmem:[%s1 + $0xcc] sm:$0xf]
  %v67 = vld [vmem:[%s1 + $0xd0] sm:$0xf]
  %v68 = vld [vmem:[%s1 + $0xd4] sm:$0xf]
  %v69 = vld [vmem:[%s1 + $0xd8] sm:$0xf]
  %v70 = vld [vmem:[%s1 + $0xdc] sm:$0xf]
  %v71 = vld [vmem:[%s1 + $0xe0] sm:$0xf]
  %v72 = vld [vmem:[%s1 + $0xe4] sm:$0xf]
  %v73 = vld [vmem:[%s1 + $0xe8] sm:$0xf]
  %v74 = vld [vmem:[%s1 + $0xec] sm:$0xf]
  %v75 = vld [vmem:[%s1 + $0xf0] sm:$0xf]
  %v76 = vld [vmem:[%s1 + $0xf4] sm:$0xf]
  %v77 = vld [vmem:[%s1 + $0xf8] sm:$0xf]
  %v78 = vld [vmem:[%s1 + $0xfc] sm:$0xf]
  %v79 = vld [vmem:[%s2] sm:$0x1]
  %v81 = vperm.slane %v79, 0
  %84 = vst [vmem:[#allocation1] ss:$9 sm:$0xff] %v14
  %v85 = vld [vmem:[#allocation1] sm:$0xff]
  %v86 = vld [vmem:[#allocation1 + $0x9] sm:$0xff]
  %v87 = vld [vmem:[#allocation1 + $0x12] sm:$0xff]
  %v88 = vld [vmem:[#allocation1 + $0x1b] sm:$0xff]
  %v157 = vunpack.c.l.b16 %v15
  %v158 = vunpack.c.l.b16 %v16
  %v159 = vunpack.c.l.b16 %v17
  %v160 = vunpack.c.l.b16 %v18
  %v161 = vunpack.c.l.b16 %v19
  %v162 = vunpack.c.l.b16 %v20
  %v163 = vunpack.c.l.b16 %v21
  %v164 = vunpack.c.l.b16 %v22
  %v165 = vunpack.c.l.b16 %v23
  %v166 = vunpack.c.l.b16 %v24
  %v167 = vunpack.c.l.b16 %v25
  %v168 = vunpack.c.l.b16 %v26
  %v169 = vunpack.c.l.b16 %v27
  %v170 = vunpack.c.l.b16 %v28
  %v171 = vunpack.c.l.b16 %v29
  %v172 = vunpack.c.l.b16 %v30
  %v173 = vunpack.c.l.b16 %v31
  %v174 = vunpack.c.l.b16 %v32
  %v175 = vunpack.c.l.b16 %v33
  %v176 = vunpack.c.l.b16 %v34
  %v177 = vunpack.c.l.b16 %v35
  %v178 = vunpack.c.l.b16 %v36
  %v179 = vunpack.c.l.b16 %v37
  %v180 = vunpack.c.l.b16 %v38
  %v181 = vunpack.c.l.b16 %v39
  %v182 = vunpack.c.l.b16 %v40
  %v183 = vunpack.c.l.b16 %v41
  %v184 = vunpack.c.l.b16 %v42
  %v185 = vunpack.c.l.b16 %v43
  %v186 = vunpack.c.l.b16 %v44
  %v187 = vunpack.c.l.b16 %v45
  %v188 = vunpack.c.l.b16 %v46
  %v189 = vunpack.c.l.b16 %v47
  %v190 = vunpack.c.l.b16 %v48
  %v191 = vunpack.c.l.b16 %v49
  %v192 = vunpack.c.l.b16 %v50
  %v193 = vunpack.c.l.b16 %v51
  %v194 = vunpack.c.l.b16 %v52
  %v195 = vunpack.c.l.b16 %v53
  %v196 = vunpack.c.l.b16 %v54
  %v197 = vunpack.c.l.b16 %v55
  %v198 = vunpack.c.l.b16 %v56
  %v199 = vunpack.c.l.b16 %v57
  %v200 = vunpack.c.l.b16 %v58
  %v201 = vunpack.c.l.b16 %v59
  %v202 = vunpack.c.l.b16 %v60
  %v203 = vunpack.c.l.b16 %v61
  %v204 = vunpack.c.l.b16 %v62
  %v205 = vunpack.c.l.b16 %v63
  %v206 = vunpack.c.l.b16 %v64
  %v207 = vunpack.c.l.b16 %v65
  %v208 = vunpack.c.l.b16 %v66
  %v209 = vunpack.c.l.b16 %v67
  %v210 = vunpack.c.l.b16 %v68
  %v211 = vunpack.c.l.b16 %v69
  %v212 = vunpack.c.l.b16 %v70
  %v213 = vunpack.c.l.b16 %v71
  %v214 = vunpack.c.l.b16 %v72
  %v215 = vunpack.c.l.b16 %v73
  %v216 = vunpack.c.l.b16 %v74
  %v217 = vunpack.c.l.b16 %v75
  %v218 = vunpack.c.l.b16 %v76
  %v219 = vunpack.c.l.b16 %v77
  %v220 = vunpack.c.l.b16 %v78
  %v221 = vpack.c.b16 %v158, %v157
  %v222 = vpack.c.b16 %v160, %v159
  %v223 = vpack.c.b16 %v162, %v161
  %v224 = vpack.c.b16 %v164, %v163
  %v225 = vpack.c.b16 %v166, %v165
  %v226 = vpack.c.b16 %v168, %v167
  %v227 = vpack.c.b16 %v170, %v169
  %v228 = vpack.c.b16 %v172, %v171
  %v229 = vpack.c.b16 %v174, %v173
  %v230 = vpack.c.b16 %v176, %v175
  %v231 = vpack.c.b16 %v178, %v177
  %v232 = vpack.c.b16 %v180, %v179
  %v233 = vpack.c.b16 %v182, %v181
  %v234 = vpack.c.b16 %v184, %v183
  %v235 = vpack.c.b16 %v186, %v185
  %v236 = vpack.c.b16 %v188, %v187
  %v237 = vpack.c.b16 %v190, %v189
  %v238 = vpack.c.b16 %v192, %v191
  %v239 = vpack.c.b16 %v194, %v193
  %v240 = vpack.c.b16 %v196, %v195
  %v241 = vpack.c.b16 %v198, %v197
  %v242 = vpack.c.b16 %v200, %v199
  %v243 = vpack.c.b16 %v202, %v201
  %v244 = vpack.c.b16 %v204, %v203
  %v245 = vpack.c.b16 %v206, %v205
  %v246 = vpack.c.b16 %v208, %v207
  %v247 = vpack.c.b16 %v210, %v209
  %v248 = vpack.c.b16 %v212, %v211
  %v249 = vpack.c.b16 %v214, %v213
  %v250 = vpack.c.b16 %v216, %v215
  %v251 = vpack.c.b16 %v218, %v217
  %v252 = vpack.c.b16 %v220, %v219
  %285 = vmatpush.bf16.msra.mxu0 %v228
  %286 = vmatpush.bf16.msra.mxu0 %v227
  %287 = vmatpush.bf16.msra.mxu0 %v226
  %288 = vmatpush.bf16.msra.mxu0 %v225
  %289 = vmatpush.bf16.msra.mxu0 %v224
  %290 = vmatpush.bf16.msra.mxu0 %v223
  %291 = vmatpush.bf16.msra.mxu0 %v222
  %292 = vmatpush.bf16.msra.mxu0 %v221
  %293 = vmatmul.bf16.gmra.mxu0 %v85
  %v294 = vpop.f32.mrf.mxu0
  %v295 = vadd.f32 %v81, %v294
  %v296 = vpop.f32.mrf.mxu0
  %297 = vdwg.mxu0
  %298 = vmatpush.bf16.msra.mxu0 %v236
  %299 = vmatpush.bf16.msra.mxu0 %v235
  %300 = vmatpush.bf16.msra.mxu0 %v234
  %301 = vmatpush.bf16.msra.mxu0 %v233
  %302 = vmatpush.bf16.msra.mxu0 %v232
  %303 = vmatpush.bf16.msra.mxu0 %v231
  %304 = vmatpush.bf16.msra.mxu0 %v230
  %305 = vmatpush.bf16.msra.mxu0 %v229
  %306 = vmatmul.bf16.gmra.mxu0 %v86
  %v307 = vpop.f32.mrf.mxu0
  %v308 = vadd.f32 %v295, %v307
  %v309 = vpop.f32.mrf.mxu0
  %310 = vdwg.mxu0
  %311 = vmatpush.bf16.msra.mxu0 %v244
  %312 = vmatpush.bf16.msra.mxu0 %v243
  %313 = vmatpush.bf16.msra.mxu0 %v242
  %314 = vmatpush.bf16.msra.mxu0 %v241
  %315 = vmatpush.bf16.msra.mxu0 %v240
  %316 = vmatpush.bf16.msra.mxu0 %v239
  %317 = vmatpush.bf16.msra.mxu0 %v238
  %318 = vmatpush.bf16.msra.mxu0 %v237
  %319 = vmatmul.bf16.gmra.mxu0 %v87
  %v320 = vpop.f32.mrf.mxu0
  %v321 = vadd.f32 %v308, %v320
  %v322 = vpop.f32.mrf.mxu0
  %323 = vdwg.mxu0
  %324 = vmatpush.bf16.msra.mxu0 %v252
  %325 = vmatpush.bf16.msra.mxu0 %v251
  %326 = vmatpush.bf16.msra.mxu0 %v250
  %327 = vmatpush.bf16.msra.mxu0 %v249
  %328 = vmatpush.bf16.msra.mxu0 %v248
  %329 = vmatpush.bf16.msra.mxu0 %v247
  %330 = vmatpush.bf16.msra.mxu0 %v246
  %331 = vmatpush.bf16.msra.mxu0 %v245
  %332 = vmatmul.bf16.gmra.mxu0 %v88
  %v333 = vpop.f32.mrf.mxu0
  %v334 = vadd.f32 %v321, %v333
  %v335 = vpop.f32.mrf.mxu0
  %336 = vdwg.mxu0
  %vm337 = vcmp.ge.f32.partialorder %v334, 0.0
  %v338 = vmul.f32 %v334, 0.1
  %v339 = vsel %vm337, %v334, %v338
  %v340 = vpack.c.bf16 %v339, %v339
  %341 = vst [vmem:[%s3] sm:$0x1] %v340
  // Predicated region
  $region14: #{run_encoder.14} parent=0 // pred_check
    _
  $region15: #{run_encoder.14} parent=0 // pred_check_branch
    %343 = sbr.rel (0) target = $region17
  $region16: #{run_encoder.14} parent=0 // pred_region
    _
  $region17: #{run_encoder.14} parent=0 // pred_fallthru
    _
  // Predicated region
  $region18: #{run_encoder.14} parent=0 // pred_check
    _
  $region19: #{run_encoder.14} parent=0 // pred_check_branch
    %345 = sbr.rel (0) target = $region21
  $region20: #{run_encoder.14} parent=0 // pred_region
    _
  $region21: #{run_encoder.14} parent=0 // pred_fallthru
    _

// kernel: run_encoder.15
$region0: #{run_encoder.15}
  #allocation0 [shape = 'u32[]', space=smem, size = 0x4, offset = 0x4, fixed_abs, tag = 'smem constant byte address 0x4 - core index']
  #allocation1 [shape = 'u32[72,128]{1,0:T(1,128)}', space=vmem, size = 0x9000, scoped, tag = 'internal scratch']
  %s0 = inlined_call_operand.vmem [shape: bf16[2,128], index: 0, kind: input, shape index: {}]
  %s1 = inlined_call_operand.vmem [shape: bf16[128,128], index: 1, kind: input, shape index: {}]
  %s2 = inlined_call_operand.vmem [shape: f32[1,128], index: 2, kind: input, shape index: {}]
  %s3 = inlined_call_operand.vmem [shape: f32[2,128], index: 3, kind: output, shape index: {}]
  %s4 = sld [smem:[#allocation0]]
  $region22: #{run_encoder.15} parent=0
    _
  %s6 = ssub.s32 1, %s4
  %s7 = scalar_select 0, %s6, %s4
  // Predicated region
  $region2: #{run_encoder.15} parent=0 // pred_check
    _
  $region3: #{run_encoder.15} parent=0 // pred_check_branch
    %9 = sbr.rel (0) target = $region5
  $region4: #{run_encoder.15} parent=0 // pred_region
    _
  $region5: #{run_encoder.15} parent=0 // pred_fallthru
    _
  // Predicated region
  $region6: #{run_encoder.15} parent=0 // pred_check
    _
  $region7: #{run_encoder.15} parent=0 // pred_check_branch
    %11 = sbr.rel (0) target = $region9
  $region8: #{run_encoder.15} parent=0 // pred_region
    _
  $region9: #{run_encoder.15} parent=0 // pred_fallthru
    _
  // Predicated region
  $region10: #{run_encoder.15} parent=0 // pred_check
    _
  $region11: #{run_encoder.15} parent=0 // pred_check_branch
    %13 = sbr.rel (0) target = $region13
  $region12: #{run_encoder.15} parent=0 // pred_region
    _
  $region13: #{run_encoder.15} parent=0 // pred_fallthru
    _
  %v14 = vld [vmem:[%s0] sm:$0x1]
  %v15 = vld [vmem:[%s1] sm:$0xf]
  %v16 = vld [vmem:[%s1 + $0x4] sm:$0xf]
  %v17 = vld [vmem:[%s1 + $0x8] sm:$0xf]
  %v18 = vld [vmem:[%s1 + $0xc] sm:$0xf]
  %v19 = vld [vmem:[%s1 + $0x10] sm:$0xf]
  %v20 = vld [vmem:[%s1 + $0x14] sm:$0xf]
  %v21 = vld [vmem:[%s1 + $0x18] sm:$0xf]
  %v22 = vld [vmem:[%s1 + $0x1c] sm:$0xf]
  %v23 = vld [vmem:[%s1 + $0x20] sm:$0xf]
  %v24 = vld [vmem:[%s1 + $0x24] sm:$0xf]
  %v25 = vld [vmem:[%s1 + $0x28] sm:$0xf]
  %v26 = vld [vmem:[%s1 + $0x2c] sm:$0xf]
  %v27 = vld [vmem:[%s1 + $0x30] sm:$0xf]
  %v28 = vld [vmem:[%s1 + $0x34] sm:$0xf]
  %v29 = vld [vmem:[%s1 + $0x38] sm:$0xf]
  %v30 = vld [vmem:[%s1 + $0x3c] sm:$0xf]
  %v31 = vld [vmem:[%s2] sm:$0x1]
  %v33 = vperm.slane %v31, 0
  %v51 = vunpack.c.l.b16 %v15
  %v52 = vunpack.c.l.b16 %v16
  %v53 = vunpack.c.l.b16 %v17
  %v54 = vunpack.c.l.b16 %v18
  %v55 = vunpack.c.l.b16 %v19
  %v56 = vunpack.c.l.b16 %v20
  %v57 = vunpack.c.l.b16 %v21
  %v58 = vunpack.c.l.b16 %v22
  %v59 = vunpack.c.l.b16 %v23
  %v60 = vunpack.c.l.b16 %v24
  %v61 = vunpack.c.l.b16 %v25
  %v62 = vunpack.c.l.b16 %v26
  %v63 = vunpack.c.l.b16 %v27
  %v64 = vunpack.c.l.b16 %v28
  %v65 = vunpack.c.l.b16 %v29
  %v66 = vunpack.c.l.b16 %v30
  %v67 = vpack.c.b16 %v52, %v51
  %v68 = vpack.c.b16 %v54, %v53
  %v69 = vpack.c.b16 %v56, %v55
  %v70 = vpack.c.b16 %v58, %v57
  %v71 = vpack.c.b16 %v60, %v59
  %v72 = vpack.c.b16 %v62, %v61
  %v73 = vpack.c.b16 %v64, %v63
  %v74 = vpack.c.b16 %v66, %v65
  %83 = vmatpush.bf16.msra.mxu0 %v74
  %84 = vmatpush.bf16.msra.mxu0 %v73
  %85 = vmatpush.bf16.msra.mxu0 %v72
  %86 = vmatpush.bf16.msra.mxu0 %v71
  %87 = vmatpush.bf16.msra.mxu0 %v70
  %88 = vmatpush.bf16.msra.mxu0 %v69
  %89 = vmatpush.bf16.msra.mxu0 %v68
  %90 = vmatpush.bf16.msra.mxu0 %v67
  %91 = vmatmul.bf16.gmra.mxu0 %v14
  %v92 = vpop.f32.mrf.mxu0
  %v93 = vadd.f32 %v33, %v92
  %v94 = vpop.f32.mrf.mxu0
  %95 = vdwg.mxu0
  %vm96 = vcmp.ge.f32.partialorder %v93, 0.0
  %v97 = vmul.f32 %v93, 0.1
  %v98 = vsel %vm96, %v93, %v97
  %99 = vst [vmem:[%s3] sm:$0x3] %v98
  // Predicated region
  $region14: #{run_encoder.15} parent=0 // pred_check
    _
  $region15: #{run_encoder.15} parent=0 // pred_check_branch
    %101 = sbr.rel (0) target = $region17
  $region16: #{run_encoder.15} parent=0 // pred_region
    _
  $region17: #{run_encoder.15} parent=0 // pred_fallthru
    _
  // Predicated region
  $region18: #{run_encoder.15} parent=0 // pred_check
    _
  $region19: #{run_encoder.15} parent=0 // pred_check_branch
    %103 = sbr.rel (0) target = $region21
  $region20: #{run_encoder.15} parent=0 // pred_region
    _
  $region21: #{run_encoder.15} parent=0 // pred_fallthru
    _

// kernel: run_encoder.16
$region0: #{run_encoder.16}
  #allocation0 [shape = 'u32[]', space=smem, size = 0x4, offset = 0x4, fixed_abs, tag = 'smem constant byte address 0x4 - core index']
  #allocation1 [shape = 'u32[72,128]{1,0:T(1,128)}', space=vmem, size = 0x9000, scoped, tag = 'internal scratch']
  %s0 = inlined_call_operand.vmem [shape: bf16[2,128], index: 0, kind: input, shape index: {}]
  %s1 = inlined_call_operand.vmem [shape: bf16[128,256], index: 1, kind: input, shape index: {}]
  %s2 = inlined_call_operand.vmem [shape: f32[1,256], index: 2, kind: input, shape index: {}]
  %s3 = inlined_call_operand.vmem [shape: bf16[2,256], index: 3, kind: output, shape index: {}]
  %s4 = sld [smem:[#allocation0]]
  $region86: #{run_encoder.16} parent=0
    _
  %s6 = ssub.s32 1, %s4
  %s7 = scalar_select 0, %s6, %s4
  $region1: #{run_encoder.16} parent=0
    #allocation2 [shape = 'u8[65536]{0}', space=vmem, size = 0x10000, scoped, tag = 'input window, operand 1']
    loop: start=0, step=1, limit=4
    $region2: #{run_encoder.16} parent=1 // loop_pre_header
      _
    $region3: #{run_encoder.16} parent=1 // loop_header
      %s9 = sphi 0, %s13
      %p10 = scmp.ge.s32.totalorder %s9, 4
      %s16 = sphi 0, %s28
      %s17 = sphi 0, %s24
      %s18 = sphi 0, %s16
      %s19 = sphi 0, %s17
      %s20 = sphi 0, %s18
      %s21 = sphi 0, %s19
      %s31 = sphi 0, %s33
      %s34 = sphi 0, %s31
      %s35 = sphi 0, %s34
      %s51 = sphi 0, %s35
      %s57 = sphi 0, %s59
      %s60 = sphi 0, %s57
      %s61 = sphi 0, %s60
      %s77 = sphi 0, %s61
      %s83 = sphi 0, %s85
      %s86 = sphi 0, %s83
      %s87 = sphi 0, %s86
      %s103 = sphi 0, %s87
      %s111 = sphi 0, %s113
      %s114 = sphi 0, %s111
      %s115 = sphi 0, %s114
      %s131 = sphi 0, %s115
    $region4: #{run_encoder.16} parent=1 // loop_header_branch
      %12 = sbr.rel (%p10) target = $region8
    $region5: #{run_encoder.16} parent=1 // loop_body
      %s14 = ssub.s32 %s9, 1
      %s15 = ssub.s32 %s9, 2
      %s22 = sadd.s32 1, %s17
      %p23 = scmp.ge.s32.totalorder %s22, 2
      %s24 = scalar_select %p23, 0, %s22
      %s25 = sadd.s32 1, %s16
      %s26 = scalar_select %p23, %s25, %s16
      %p27 = scmp.ge.s32.totalorder %s26, 1
      %s28 = scalar_select %p27, 0, %s26
      %s29 = ssub.s32 %s16, %s28
      %p30 = scmp.eq.s32.totalorder %s29, 0
      %s32 = sadd.s32 %s31, 1
      %s33 = scalar_select %p30, %s31, %s32
      %p36 = pneg %p30
      %p37 = scmp.eq.s32.totalorder %s9, 1
      %p38 = por %p36, %p37
      %p39 = scmp.ne.s32.totalorder %s31, %s34
      %p40 = scmp.eq.s32.totalorder %s9, 0
      %p41 = por %p39, %p40
      %p42 = scmp.ne.s32.totalorder %s31, %s34
      %p43 = scmp.eq.s32.totalorder %s14, 1
      %p44 = por %p42, %p43
      %p45 = scmp.ne.s32.totalorder %s34, %s35
      %p46 = scmp.eq.s32.totalorder %s14, 0
      %p47 = por %p45, %p46
      %p48 = scmp.ne.s32.totalorder %s34, %s35
      %p49 = scmp.eq.s32.totalorder %s15, 1
      %p50 = por %p48, %p49
      %p52 = scmp.ne.s32.totalorder %s35, %s51
      %p53 = scmp.eq.s32.totalorder %s15, 0
      %p54 = por %p52, %p53
      %s55 = ssub.s32 %s17, %s24
      %p56 = scmp.eq.s32.totalorder %s55, 0
      %s58 = sadd.s32 %s57, 1
      %s59 = scalar_select %p56, %s57, %s58
      %p62 = pneg %p56
      %p63 = scmp.eq.s32.totalorder %s9, 1
      %p64 = por %p62, %p63
      %p65 = scmp.ne.s32.totalorder %s57, %s60
      %p66 = scmp.eq.s32.totalorder %s9, 0
      %p67 = por %p65, %p66
      %p68 = scmp.ne.s32.totalorder %s57, %s60
      %p69 = scmp.eq.s32.totalorder %s14, 1
      %p70 = por %p68, %p69
      %p71 = scmp.ne.s32.totalorder %s60, %s61
      %p72 = scmp.eq.s32.totalorder %s14, 0
      %p73 = por %p71, %p72
      %p74 = scmp.ne.s32.totalorder %s60, %s61
      %p75 = scmp.eq.s32.totalorder %s15, 1
      %p76 = por %p74, %p75
      %p78 = scmp.ne.s32.totalorder %s61, %s77
      %p79 = scmp.eq.s32.totalorder %s15, 0
      %p80 = por %p78, %p79
      %s81 = ssub.s32 %s17, %s24
      %p82 = scmp.eq.s32.totalorder %s81, 0
      %s84 = sadd.s32 %s83, 1
      %s85 = scalar_select %p82, %s83, %s84
      %p88 = pneg %p82
      %p89 = scmp.eq.s32.totalorder %s9, 1
      %p90 = por %p88, %p89
      %p91 = scmp.ne.s32.totalorder %s83, %s86
      %p92 = scmp.eq.s32.totalorder %s9, 0
      %p93 = por %p91, %p92
      %p94 = scmp.ne.s32.totalorder %s83, %s86
      %p95 = scmp.eq.s32.totalorder %s14, 1
      %p96 = por %p94, %p95
      %p97 = scmp.ne.s32.totalorder %s86, %s87
      %p98 = scmp.eq.s32.totalorder %s14, 0
      %p99 = por %p97, %p98
      %p100 = scmp.ne.s32.totalorder %s86, %s87
      %p101 = scmp.eq.s32.totalorder %s15, 1
      %p102 = por %p100, %p101
      %p104 = scmp.ne.s32.totalorder %s87, %s103
      %p105 = scmp.eq.s32.totalorder %s15, 0
      %p106 = por %p104, %p105
      %s107 = ssub.s32 %s16, %s28
      %s108 = ssub.s32 %s17, %s24
      %s109 = sor.u32 %s107, %s108
      %p110 = scmp.eq.s32.totalorder %s109, 0
      %s112 = sadd.s32 %s111, 1
      %s113 = scalar_select %p110, %s111, %s112
      %p116 = pneg %p110
      %p117 = scmp.eq.s32.totalorder %s9, 1
      %p118 = por %p116, %p117
      %p119 = scmp.ne.s32.totalorder %s111, %s114
      %p120 = scmp.eq.s32.totalorder %s9, 0
      %p121 = por %p119, %p120
      %p122 = scmp.ne.s32.totalorder %s111, %s114
      %p123 = scmp.eq.s32.totalorder %s14, 1
      %p124 = por %p122, %p123
      %p125 = scmp.ne.s32.totalorder %s114, %s115
      %p126 = scmp.eq.s32.totalorder %s14, 0
      %p127 = por %p125, %p126
      %p128 = scmp.ne.s32.totalorder %s114, %s115
      %p129 = scmp.eq.s32.totalorder %s15, 1
      %p130 = por %p128, %p129
      %p132 = scmp.ne.s32.totalorder %s115, %s131
      %p133 = scmp.eq.s32.totalorder %s15, 0
      %p134 = por %p132, %p133
      %p135 = scmp.le.s32.totalorder 1, %s9
      %p136 = scmp.lt.s32.totalorder %s9, 3
      %p137 = pnand %p135, %p136
      %p138 = pneg %p137
      // Predicated region
      $region9: #{run_encoder.16} parent=5 // pred_check
        _
      $region10: #{run_encoder.16} parent=5 // pred_check_branch
        %140 = sbr.rel (%p137) target = $region12
      $region11: #{run_encoder.16} parent=5 // pred_region
        %s141 = ssub.s32 %s9, 1
        // Predicated region
        $region13: #{run_encoder.16} parent=11 // pred_check
          %p142 = pneg %p47
        $region14: #{run_encoder.16} parent=11 // pred_check_branch
          %144 = sbr.rel (%p142) target = $region16
        $region15: #{run_encoder.16} parent=11 // pred_region
          %p145 = scmp.lt.s32.totalorder %s18, 0
          %s146 = scalar_select %p145, %s18, 0
          %s147 = scalar_lea.vmem %s0, %s146
        $region16: #{run_encoder.16} parent=11 // pred_fallthru
          _
      $region12: #{run_encoder.16} parent=5 // pred_fallthru
        _
      %p148 = scmp.lt.s32.totalorder %s9, 2
      // Predicated region
      $region17: #{run_encoder.16} parent=5 // pred_check
        %p149 = pneg %p148
      $region18: #{run_encoder.16} parent=5 // pred_check_branch
        %151 = sbr.rel (%p149) target = $region20
      $region19: #{run_encoder.16} parent=5 // pred_region
        // Predicated region
        $region21: #{run_encoder.16} parent=19 // pred_check
          %p152 = pneg %p67
        $region22: #{run_encoder.16} parent=19 // pred_check_branch
          %154 = sbr.rel (%p152) target = $region24
        $region23: #{run_encoder.16} parent=19 // pred_region
          %s155 = sand.u32 %s57, 1
          %s156 = sand.u32 %s57, 1
          %s157 = smul.addr %s156, 64
          %s158 = scalar_lea.vmem [#allocation2], %s157
          %s159 = smul.addr %s17, 4
          %s160 = scalar_lea.vmem %s1, %s159
          // Predicated region
          $region25: #{run_encoder.16} parent=23 // pred_check
            _
          $region26: #{run_encoder.16} parent=23 // pred_check_branch
            %162 = sbr.rel (0) target = $region28
          $region27: #{run_encoder.16} parent=23 // pred_region
            // Predicated region
            $region29: #{run_encoder.16} parent=27 // pred_check
              _
            $region30: #{run_encoder.16} parent=27 // pred_check_branch
              %164 = sbr.rel target = $region32
            $region31: #{run_encoder.16} parent=27 // pred_region
              // Predicated region
              $region44: #{run_encoder.16} parent=31 // pred_check
                _
              $region45: #{run_encoder.16} parent=31 // pred_check_branch
                %210 = sbr.rel (0) target = $region47
              $region46: #{run_encoder.16} parent=31 // pred_region
                loop: start=0, step=1, limit=1
                $region48: #{run_encoder.16} parent=46 // loop_pre_header
                  _
                $region49: #{run_encoder.16} parent=46 // loop_header
                  %s212 = sphi 0, %s216
                  %p213 = scmp.ge.s32.totalorder %s212, 1
                  %s217 = sphi %s160, %s160
                  %s218 = sphi %s158, %s158
                $region50: #{run_encoder.16} parent=46 // loop_header_branch
                  %215 = sbr.rel (%p213) target = $region54
                $region51: #{run_encoder.16} parent=46 // loop_body
                  _
                $region52: #{run_encoder.16} parent=46 // loop_footer
                  %s216 = sadd.s32 1, %s212
                $region53: #{run_encoder.16} parent=46 // loop_footer_branch
                  %211 = sbr.rel target = $region49
                $region54: #{run_encoder.16} parent=46 // loop_exit
                  _
                %s220 = ssub.s32 16, 1
                loop: start=0, step=1, limit=1
                $region55: #{run_encoder.16} parent=46 // loop_pre_header
                  _
                $region56: #{run_encoder.16} parent=46 // loop_header
                  %s222 = sphi 0, %s226
                  %p223 = scmp.ge.s32.totalorder %s222, 1
                  %s227 = sphi %s160, %s160
                  %s228 = sphi %s158, %s158
                $region57: #{run_encoder.16} parent=46 // loop_header_branch
                  %225 = sbr.rel (%p223) target = $region61
                $region58: #{run_encoder.16} parent=46 // loop_body
                  %v229 = vld [vmem:[%s227] sm:%s220]
                  %230 = vst [vmem:[%s228] sm:%s220] %v229
                  %v231 = vld [vmem:[%s227 + $0x8] sm:%s220]
                  %232 = vst [vmem:[%s228 + $0x4] sm:%s220] %v231
                  %v233 = vld [vmem:[%s227 + $0x10] sm:%s220]
                  %234 = vst [vmem:[%s228 + $0x8] sm:%s220] %v233
                  %v235 = vld [vmem:[%s227 + $0x18] sm:%s220]
                  %236 = vst [vmem:[%s228 + $0xc] sm:%s220] %v235
                  %v237 = vld [vmem:[%s227 + $0x20] sm:%s220]
                  %238 = vst [vmem:[%s228 + $0x10] sm:%s220] %v237
                  %v239 = vld [vmem:[%s227 + $0x28] sm:%s220]
                  %240 = vst [vmem:[%s228 + $0x14] sm:%s220] %v239
                  %v241 = vld [vmem:[%s227 + $0x30] sm:%s220]
                  %242 = vst [vmem:[%s228 + $0x18] sm:%s220] %v241
                  %v243 = vld [vmem:[%s227 + $0x38] sm:%s220]
                  %244 = vst [vmem:[%s228 + $0x1c] sm:%s220] %v243
                  %v245 = vld [vmem:[%s227 + $0x40] sm:%s220]
                  %246 = vst [vmem:[%s228 + $0x20] sm:%s220] %v245
                  %v247 = vld [vmem:[%s227 + $0x48] sm:%s220]
                  %248 = vst [vmem:[%s228 + $0x24] sm:%s220] %v247
                  %v249 = vld [vmem:[%s227 + $0x50] sm:%s220]
                  %250 = vst [vmem:[%s228 + $0x28] sm:%s220] %v249
                  %v251 = vld [vmem:[%s227 + $0x58] sm:%s220]
                  %252 = vst [vmem:[%s228 + $0x2c] sm:%s220] %v251
                  %v253 = vld [vmem:[%s227 + $0x60] sm:%s220]
                  %254 = vst [vmem:[%s228 + $0x30] sm:%s220] %v253
                  %v255 = vld [vmem:[%s227 + $0x68] sm:%s220]
                  %256 = vst [vmem:[%s228 + $0x34] sm:%s220] %v255
                  %v257 = vld [vmem:[%s227 + $0x70] sm:%s220]
                  %258 = vst [vmem:[%s228 + $0x38] sm:%s220] %v257
                  %v259 = vld [vmem:[%s227 + $0x78] sm:%s220]
                  %260 = vst [vmem:[%s228 + $0x3c] sm:%s220] %v259
                $region59: #{run_encoder.16} parent=46 // loop_footer
                  %s226 = sadd.s32 1, %s222
                $region60: #{run_encoder.16} parent=46 // loop_footer_branch
                  %221 = sbr.rel target = $region56
                $region61: #{run_encoder.16} parent=46 // loop_exit
                  _
              $region47: #{run_encoder.16} parent=31 // pred_fallthru
                _
            $region32: #{run_encoder.16} parent=27 // pred_fallthru
              _
            // Predicated region
            $region33: #{run_encoder.16} parent=27 // pred_check
              _
            $region34: #{run_encoder.16} parent=27 // pred_check_branch
              %166 = sbr.rel (0) target = $region36
            $region35: #{run_encoder.16} parent=27 // pred_region
              %s168 = ssub.s32 16, 1
              loop: start=0, step=1, limit=1
              $region37: #{run_encoder.16} parent=35 // loop_pre_header
                _
              $region38: #{run_encoder.16} parent=35 // loop_header
                %s170 = sphi 0, %s174
                %p171 = scmp.ge.s32.totalorder %s170, 1
                %s175 = sphi %s160, %s160
                %s176 = sphi %s158, %s158
              $region39: #{run_encoder.16} parent=35 // loop_header_branch
                %173 = sbr.rel (%p171) target = $region43
              $region40: #{run_encoder.16} parent=35 // loop_body
                %v177 = vld [vmem:[%s175] sm:%s168]
                %178 = vst [vmem:[%s176] sm:%s168] %v177
                %v179 = vld [vmem:[%s175 + $0x8] sm:%s168]
                %180 = vst [vmem:[%s176 + $0x4] sm:%s168] %v179
                %v181 = vld [vmem:[%s175 + $0x10] sm:%s168]
                %182 = vst [vmem:[%s176 + $0x8] sm:%s168] %v181
                %v183 = vld [vmem:[%s175 + $0x18] sm:%s168]
                %184 = vst [vmem:[%s176 + $0xc] sm:%s168] %v183
                %v185 = vld [vmem:[%s175 + $0x20] sm:%s168]
                %186 = vst [vmem:[%s176 + $0x10] sm:%s168] %v185
                %v187 = vld [vmem:[%s175 + $0x28] sm:%s168]
                %188 = vst [vmem:[%s176 + $0x14] sm:%s168] %v187
                %v189 = vld [vmem:[%s175 + $0x30] sm:%s168]
                %190 = vst [vmem:[%s176 + $0x18] sm:%s168] %v189
                %v191 = vld [vmem:[%s175 + $0x38] sm:%s168]
                %192 = vst [vmem:[%s176 + $0x1c] sm:%s168] %v191
                %v193 = vld [vmem:[%s175 + $0x40] sm:%s168]
                %194 = vst [vmem:[%s176 + $0x20] sm:%s168] %v193
                %v195 = vld [vmem:[%s175 + $0x48] sm:%s168]
                %196 = vst [vmem:[%s176 + $0x24] sm:%s168] %v195
                %v197 = vld [vmem:[%s175 + $0x50] sm:%s168]
                %198 = vst [vmem:[%s176 + $0x28] sm:%s168] %v197
                %v199 = vld [vmem:[%s175 + $0x58] sm:%s168]
                %200 = vst [vmem:[%s176 + $0x2c] sm:%s168] %v199
                %v201 = vld [vmem:[%s175 + $0x60] sm:%s168]
                %202 = vst [vmem:[%s176 + $0x30] sm:%s168] %v201
                %v203 = vld [vmem:[%s175 + $0x68] sm:%s168]
                %204 = vst [vmem:[%s176 + $0x34] sm:%s168] %v203
                %v205 = vld [vmem:[%s175 + $0x70] sm:%s168]
                %206 = vst [vmem:[%s176 + $0x38] sm:%s168] %v205
                %v207 = vld [vmem:[%s175 + $0x78] sm:%s168]
                %208 = vst [vmem:[%s176 + $0x3c] sm:%s168] %v207
              $region41: #{run_encoder.16} parent=35 // loop_footer
                %s174 = sadd.s32 1, %s170
              $region42: #{run_encoder.16} parent=35 // loop_footer_branch
                %169 = sbr.rel target = $region38
              $region43: #{run_encoder.16} parent=35 // loop_exit
                _
            $region36: #{run_encoder.16} parent=27 // pred_fallthru
              _
          $region28: #{run_encoder.16} parent=23 // pred_fallthru
            _
          %261 = vnop
        $region24: #{run_encoder.16} parent=19 // pred_fallthru
          _
        // Predicated region
        $region62: #{run_encoder.16} parent=19 // pred_check
          %p262 = pneg %p93
        $region63: #{run_encoder.16} parent=19 // pred_check_branch
          %264 = sbr.rel (%p262) target = $region65
        $region64: #{run_encoder.16} parent=19 // pred_region
          %p265 = scmp.lt.s32.totalorder %s17, 1
          %s266 = scalar_select %p265, %s17, 1
          %s267 = scalar_lea.vmem %s2, %s266
        $region65: #{run_encoder.16} parent=19 // pred_fallthru
          _
      $region20: #{run_encoder.16} parent=5 // pred_fallthru
        _
      %p268 = scmp.le.s32.totalorder 1, %s9
      %p269 = scmp.lt.s32.totalorder %s9, 3
      %p270 = pnand %p268, %p269
      %p271 = pneg %p270
      // Predicated region
      $region66: #{run_encoder.16} parent=5 // pred_check
        _
      $region67: #{run_encoder.16} parent=5 // pred_check_branch
        %273 = sbr.rel (%p270) target = $region69
      $region68: #{run_encoder.16} parent=5 // pred_region
        %s274 = ssub.s32 %s9, 1
        %s275 = sand.u32 %s60, 1
        %s276 = sand.u32 %s60, 1
        %s277 = smul.addr %s276, 64
        %s278 = scalar_lea.vmem [#allocation2], %s277
        // Predicated region
        $region70: #{run_encoder.16} parent=68 // pred_check
          %p279 = pneg %p73
        $region71: #{run_encoder.16} parent=68 // pred_check_branch
          %281 = sbr.rel (%p279) target = $region73
        $region72: #{run_encoder.16} parent=68 // pred_region
          _
        $region73: #{run_encoder.16} parent=68 // pred_fallthru
          _
        %p282 = scmp.lt.s32.totalorder %s18, 0
        %s283 = scalar_select %p282, %s18, 0
        %s284 = scalar_lea.vmem %s0, %s283
        %p285 = pneg %p47
        %p286 = pneg %p44
        %s287 = sand.u32 %s60, 1
        %s288 = sand.u32 %s60, 1
        %s289 = smul.addr %s288, 64
        %s290 = scalar_lea.vmem [#allocation2], %s289
        %p291 = pneg %p73
        %p292 = pneg %p70
        %p293 = scmp.lt.s32.totalorder %s19, 1
        %s294 = scalar_select %p293, %s19, 1
        %s295 = scalar_lea.vmem %s2, %s294
        %p296 = pneg %p99
        %p297 = pneg %p96
        %p298 = pneg %p127
        %p299 = pneg %p124
        %p300 = scmp.lt.s32.totalorder %s18, 0
        %s301 = scalar_select %p300, %s18, 0
        %p302 = scmp.lt.s32.totalorder %s19, 1
        %s303 = scalar_select %p302, %s19, 1
        %s304 = smul.addr %s301, 2
        %s305 = sadd.s32 %s303, %s304
        %s306 = scalar_lea.vmem %s3, %s305
        %p307 = scmp.lt.s32.totalorder %s18, 0
        %s308 = scalar_select %p307, %s18, 0
        %s309 = scalar_lea.vmem %s0, %s308
        %p310 = scmp.lt.s32.totalorder %s19, 1
        %s311 = scalar_select %p310, %s19, 1
        %s312 = scalar_lea.vmem %s2, %s311
        %p313 = scmp.lt.s32.totalorder %s18, 0
        %s314 = scalar_select %p313, %s18, 0
        %p315 = scmp.lt.s32.totalorder %s19, 1
        %s316 = scalar_select %p315, %s19, 1
        %s317 = smul.addr %s314, 2
        %s318 = sadd.s32 %s316, %s317
        %s319 = scalar_lea.vmem %s3, %s318
        %v320 = vld [vmem:[%s309] sm:$0x1]
        %v321 = vld [vmem:[%s278] sm:$0xf]
        %v322 = vld [vmem:[%s278 + $0x4] sm:$0xf]
        %v323 = vld [vmem:[%s278 + $0x8] sm:$0xf]
        %v324 = vld [vmem:[%s278 + $0xc] sm:$0xf]
        %v325 = vld [vmem:[%s278 + $0x10] sm:$0xf]
        %v326 = vld [vmem:[%s278 + $0x14] sm:$0xf]
        %v327 = vld [vmem:[%s278 + $0x18] sm:$0xf]
        %v328 = vld [vmem:[%s278 + $0x1c] sm:$0xf]
        %v329 = vld [vmem:[%s278 + $0x20] sm:$0xf]
        %v330 = vld [vmem:[%s278 + $0x24] sm:$0xf]
        %v331 = vld [vmem:[%s278 + $0x28] sm:$0xf]
        %v332 = vld [vmem:[%s278 + $0x2c] sm:$0xf]
        %v333 = vld [vmem:[%s278 + $0x30] sm:$0xf]
        %v334 = vld [vmem:[%s278 + $0x34] sm:$0xf]
        %v335 = vld [vmem:[%s278 + $0x38] sm:$0xf]
        %v336 = vld [vmem:[%s278 + $0x3c] sm:$0xf]
        %v337 = vld [vmem:[%s312] sm:$0x1]
        %v339 = vperm.slane %v337, 0
        %v357 = vunpack.c.l.b16 %v321
        %v358 = vunpack.c.l.b16 %v322
        %v359 = vunpack.c.l.b16 %v323
        %v360 = vunpack.c.l.b16 %v324
        %v361 = vunpack.c.l.b16 %v325
        %v362 = vunpack.c.l.b16 %v326
        %v363 = vunpack.c.l.b16 %v327
        %v364 = vunpack.c.l.b16 %v328
        %v365 = vunpack.c.l.b16 %v329
        %v366 = vunpack.c.l.b16 %v330
        %v367 = vunpack.c.l.b16 %v331
        %v368 = vunpack.c.l.b16 %v332
        %v369 = vunpack.c.l.b16 %v333
        %v370 = vunpack.c.l.b16 %v334
        %v371 = vunpack.c.l.b16 %v335
        %v372 = vunpack.c.l.b16 %v336
        %v373 = vpack.c.b16 %v358, %v357
        %v374 = vpack.c.b16 %v360, %v359
        %v375 = vpack.c.b16 %v362, %v361
        %v376 = vpack.c.b16 %v364, %v363
        %v377 = vpack.c.b16 %v366, %v365
        %v378 = vpack.c.b16 %v368, %v367
        %v379 = vpack.c.b16 %v370, %v369
        %v380 = vpack.c.b16 %v372, %v371
        %389 = vmatpush.bf16.msra.mxu0 %v380
        %390 = vmatpush.bf16.msra.mxu0 %v379
        %391 = vmatpush.bf16.msra.mxu0 %v378
        %392 = vmatpush.bf16.msra.mxu0 %v377
        %393 = vmatpush.bf16.msra.mxu0 %v376
        %394 = vmatpush.bf16.msra.mxu0 %v375
        %395 = vmatpush.bf16.msra.mxu0 %v374
        %396 = vmatpush.bf16.msra.mxu0 %v373
        %397 = vmatmul.bf16.gmra.mxu0 %v320
        %v398 = vpop.f32.mrf.mxu0
        %v399 = vadd.f32 %v339, %v398
        %v400 = vpop.f32.mrf.mxu0
        %401 = vdwg.mxu0
        %vm402 = vcmp.ge.f32.partialorder %v399, 0.0
        %v403 = vmul.f32 %v399, 0.1
        %v404 = vsel %vm402, %v399, %v403
        %v405 = vpack.c.bf16 %v404, %v404
        %406 = vst [vmem:[%s319] sm:$0x1] %v405
        %p407 = scmp.lt.s32.totalorder %s18, 0
        %s408 = scalar_select %p407, %s18, 0
        %p409 = scmp.lt.s32.totalorder %s19, 1
        %s410 = scalar_select %p409, %s19, 1
        %s411 = smul.addr %s408, 2
        %s412 = sadd.s32 %s410, %s411
        %s413 = scalar_lea.vmem %s3, %s412
        // Predicated region
        $region74: #{run_encoder.16} parent=68 // pred_check
          %p414 = pneg %p124
        $region75: #{run_encoder.16} parent=68 // pred_check_branch
          %416 = sbr.rel (%p414) target = $region77
        $region76: #{run_encoder.16} parent=68 // pred_region
          _
        $region77: #{run_encoder.16} parent=68 // pred_fallthru
          _
      $region69: #{run_encoder.16} parent=5 // pred_fallthru
        _
      %p417 = scmp.le.s32.totalorder 2, %s9
      // Predicated region
      $region78: #{run_encoder.16} parent=5 // pred_check
        %p418 = pneg %p417
      $region79: #{run_encoder.16} parent=5 // pred_check_branch
        %420 = sbr.rel (%p418) target = $region81
      $region80: #{run_encoder.16} parent=5 // pred_region
        %s421 = ssub.s32 %s9, 2
        // Predicated region
        $region82: #{run_encoder.16} parent=80 // pred_check
          %p422 = pneg %p130
        $region83: #{run_encoder.16} parent=80 // pred_check_branch
          %424 = sbr.rel (%p422) target = $region85
        $region84: #{run_encoder.16} parent=80 // pred_region
          %p425 = scmp.lt.s32.totalorder %s20, 0
          %s426 = scalar_select %p425, %s20, 0
          %p427 = scmp.lt.s32.totalorder %s21, 1
          %s428 = scalar_select %p427, %s21, 1
          %s429 = smul.addr %s426, 2
          %s430 = sadd.s32 %s428, %s429
          %s431 = scalar_lea.vmem %s3, %s430
        $region85: #{run_encoder.16} parent=80 // pred_fallthru
          _
      $region81: #{run_encoder.16} parent=5 // pred_fallthru
        _
    $region6: #{run_encoder.16} parent=1 // loop_footer
      %s13 = sadd.s32 1, %s9
    $region7: #{run_encoder.16} parent=1 // loop_footer_branch
      %8 = sbr.rel target = $region3
    $region8: #{run_encoder.16} parent=1 // loop_exit
      _

// kernel: run_encoder.17
$region0: #{run_encoder.17}
  #allocation0 [shape = 'u32[]', space=smem, size = 0x4, offset = 0x4, fixed_abs, tag = 'smem constant byte address 0x4 - core index']
  #allocation1 [shape = 'u32[72,128]{1,0:T(1,128)}', space=vmem, size = 0x9000, scoped, tag = 'internal scratch']
  %s0 = inlined_call_operand.vmem [shape: bf16[2,256], index: 0, kind: input, shape index: {}]
  %s1 = inlined_call_operand.vmem [shape: bf16[256,256], index: 1, kind: input, shape index: {}]
  %s2 = inlined_call_operand.vmem [shape: f32[1,256], index: 2, kind: input, shape index: {}]
  %s3 = inlined_call_operand.vmem [shape: f32[2,256], index: 3, kind: output, shape index: {}]
  %s4 = sld [smem:[#allocation0]]
  $region86: #{run_encoder.17} parent=0
    _
  %s6 = ssub.s32 1, %s4
  %s7 = scalar_select 0, %s6, %s4
  $region1: #{run_encoder.17} parent=0
    #allocation2 [shape = 'u8[131072]{0}', space=vmem, size = 0x20000, scoped, tag = 'input window, operand 1']
    loop: start=0, step=1, limit=4
    $region2: #{run_encoder.17} parent=1 // loop_pre_header
      _
    $region3: #{run_encoder.17} parent=1 // loop_header
      %s9 = sphi 0, %s13
      %p10 = scmp.ge.s32.totalorder %s9, 4
      %s16 = sphi 0, %s28
      %s17 = sphi 0, %s24
      %s18 = sphi 0, %s16
      %s19 = sphi 0, %s17
      %s20 = sphi 0, %s18
      %s21 = sphi 0, %s19
      %s31 = sphi 0, %s33
      %s34 = sphi 0, %s31
      %s35 = sphi 0, %s34
      %s51 = sphi 0, %s35
      %s57 = sphi 0, %s59
      %s60 = sphi 0, %s57
      %s61 = sphi 0, %s60
      %s77 = sphi 0, %s61
      %s83 = sphi 0, %s85
      %s86 = sphi 0, %s83
      %s87 = sphi 0, %s86
      %s103 = sphi 0, %s87
      %s111 = sphi 0, %s113
      %s114 = sphi 0, %s111
      %s115 = sphi 0, %s114
      %s131 = sphi 0, %s115
    $region4: #{run_encoder.17} parent=1 // loop_header_branch
      %12 = sbr.rel (%p10) target = $region8
    $region5: #{run_encoder.17} parent=1 // loop_body
      %s14 = ssub.s32 %s9, 1
      %s15 = ssub.s32 %s9, 2
      %s22 = sadd.s32 1, %s17
      %p23 = scmp.ge.s32.totalorder %s22, 2
      %s24 = scalar_select %p23, 0, %s22
      %s25 = sadd.s32 1, %s16
      %s26 = scalar_select %p23, %s25, %s16
      %p27 = scmp.ge.s32.totalorder %s26, 1
      %s28 = scalar_select %p27, 0, %s26
      %s29 = ssub.s32 %s16, %s28
      %p30 = scmp.eq.s32.totalorder %s29, 0
      %s32 = sadd.s32 %s31, 1
      %s33 = scalar_select %p30, %s31, %s32
      %p36 = pneg %p30
      %p37 = scmp.eq.s32.totalorder %s9, 1
      %p38 = por %p36, %p37
      %p39 = scmp.ne.s32.totalorder %s31, %s34
      %p40 = scmp.eq.s32.totalorder %s9, 0
      %p41 = por %p39, %p40
      %p42 = scmp.ne.s32.totalorder %s31, %s34
      %p43 = scmp.eq.s32.totalorder %s14, 1
      %p44 = por %p42, %p43
      %p45 = scmp.ne.s32.totalorder %s34, %s35
      %p46 = scmp.eq.s32.totalorder %s14, 0
      %p47 = por %p45, %p46
      %p48 = scmp.ne.s32.totalorder %s34, %s35
      %p49 = scmp.eq.s32.totalorder %s15, 1
      %p50 = por %p48, %p49
      %p52 = scmp.ne.s32.totalorder %s35, %s51
      %p53 = scmp.eq.s32.totalorder %s15, 0
      %p54 = por %p52, %p53
      %s55 = ssub.s32 %s17, %s24
      %p56 = scmp.eq.s32.totalorder %s55, 0
      %s58 = sadd.s32 %s57, 1
      %s59 = scalar_select %p56, %s57, %s58
      %p62 = pneg %p56
      %p63 = scmp.eq.s32.totalorder %s9, 1
      %p64 = por %p62, %p63
      %p65 = scmp.ne.s32.totalorder %s57, %s60
      %p66 = scmp.eq.s32.totalorder %s9, 0
      %p67 = por %p65, %p66
      %p68 = scmp.ne.s32.totalorder %s57, %s60
      %p69 = scmp.eq.s32.totalorder %s14, 1
      %p70 = por %p68, %p69
      %p71 = scmp.ne.s32.totalorder %s60, %s61
      %p72 = scmp.eq.s32.totalorder %s14, 0
      %p73 = por %p71, %p72
      %p74 = scmp.ne.s32.totalorder %s60, %s61
      %p75 = scmp.eq.s32.totalorder %s15, 1
      %p76 = por %p74, %p75
      %p78 = scmp.ne.s32.totalorder %s61, %s77
      %p79 = scmp.eq.s32.totalorder %s15, 0
      %p80 = por %p78, %p79
      %s81 = ssub.s32 %s17, %s24
      %p82 = scmp.eq.s32.totalorder %s81, 0
      %s84 = sadd.s32 %s83, 1
      %s85 = scalar_select %p82, %s83, %s84
      %p88 = pneg %p82
      %p89 = scmp.eq.s32.totalorder %s9, 1
      %p90 = por %p88, %p89
      %p91 = scmp.ne.s32.totalorder %s83, %s86
      %p92 = scmp.eq.s32.totalorder %s9, 0
      %p93 = por %p91, %p92
      %p94 = scmp.ne.s32.totalorder %s83, %s86
      %p95 = scmp.eq.s32.totalorder %s14, 1
      %p96 = por %p94, %p95
      %p97 = scmp.ne.s32.totalorder %s86, %s87
      %p98 = scmp.eq.s32.totalorder %s14, 0
      %p99 = por %p97, %p98
      %p100 = scmp.ne.s32.totalorder %s86, %s87
      %p101 = scmp.eq.s32.totalorder %s15, 1
      %p102 = por %p100, %p101
      %p104 = scmp.ne.s32.totalorder %s87, %s103
      %p105 = scmp.eq.s32.totalorder %s15, 0
      %p106 = por %p104, %p105
      %s107 = ssub.s32 %s16, %s28
      %s108 = ssub.s32 %s17, %s24
      %s109 = sor.u32 %s107, %s108
      %p110 = scmp.eq.s32.totalorder %s109, 0
      %s112 = sadd.s32 %s111, 1
      %s113 = scalar_select %p110, %s111, %s112
      %p116 = pneg %p110
      %p117 = scmp.eq.s32.totalorder %s9, 1
      %p118 = por %p116, %p117
      %p119 = scmp.ne.s32.totalorder %s111, %s114
      %p120 = scmp.eq.s32.totalorder %s9, 0
      %p121 = por %p119, %p120
      %p122 = scmp.ne.s32.totalorder %s111, %s114
      %p123 = scmp.eq.s32.totalorder %s14, 1
      %p124 = por %p122, %p123
      %p125 = scmp.ne.s32.totalorder %s114, %s115
      %p126 = scmp.eq.s32.totalorder %s14, 0
      %p127 = por %p125, %p126
      %p128 = scmp.ne.s32.totalorder %s114, %s115
      %p129 = scmp.eq.s32.totalorder %s15, 1
      %p130 = por %p128, %p129
      %p132 = scmp.ne.s32.totalorder %s115, %s131
      %p133 = scmp.eq.s32.totalorder %s15, 0
      %p134 = por %p132, %p133
      %p135 = scmp.le.s32.totalorder 1, %s9
      %p136 = scmp.lt.s32.totalorder %s9, 3
      %p137 = pnand %p135, %p136
      %p138 = pneg %p137
      // Predicated region
      $region9: #{run_encoder.17} parent=5 // pred_check
        _
      $region10: #{run_encoder.17} parent=5 // pred_check_branch
        %140 = sbr.rel (%p137) target = $region12
      $region11: #{run_encoder.17} parent=5 // pred_region
        %s141 = ssub.s32 %s9, 1
        // Predicated region
        $region13: #{run_encoder.17} parent=11 // pred_check
          %p142 = pneg %p47
        $region14: #{run_encoder.17} parent=11 // pred_check_branch
          %144 = sbr.rel (%p142) target = $region16
        $region15: #{run_encoder.17} parent=11 // pred_region
          %p145 = scmp.lt.s32.totalorder %s18, 0
          %s146 = scalar_select %p145, %s18, 0
          %s147 = smul.addr %s146, 2
          %s148 = scalar_lea.vmem %s0, %s147
        $region16: #{run_encoder.17} parent=11 // pred_fallthru
          _
      $region12: #{run_encoder.17} parent=5 // pred_fallthru
        _
      %p149 = scmp.lt.s32.totalorder %s9, 2
      // Predicated region
      $region17: #{run_encoder.17} parent=5 // pred_check
        %p150 = pneg %p149
      $region18: #{run_encoder.17} parent=5 // pred_check_branch
        %152 = sbr.rel (%p150) target = $region20
      $region19: #{run_encoder.17} parent=5 // pred_region
        // Predicated region
        $region21: #{run_encoder.17} parent=19 // pred_check
          %p153 = pneg %p67
        $region22: #{run_encoder.17} parent=19 // pred_check_branch
          %155 = sbr.rel (%p153) target = $region24
        $region23: #{run_encoder.17} parent=19 // pred_region
          %s156 = sand.u32 %s57, 1
          %s157 = sand.u32 %s57, 1
          %s158 = smul.addr %s157, 128
          %s159 = scalar_lea.vmem [#allocation2], %s158
          %s160 = smul.addr %s17, 4
          %s161 = scalar_lea.vmem %s1, %s160
          // Predicated region
          $region25: #{run_encoder.17} parent=23 // pred_check
            _
          $region26: #{run_encoder.17} parent=23 // pred_check_branch
            %163 = sbr.rel (0) target = $region28
          $region27: #{run_encoder.17} parent=23 // pred_region
            // Predicated region
            $region29: #{run_encoder.17} parent=27 // pred_check
              _
            $region30: #{run_encoder.17} parent=27 // pred_check_branch
              %165 = sbr.rel target = $region32
            $region31: #{run_encoder.17} parent=27 // pred_region
              // Predicated region
              $region44: #{run_encoder.17} parent=31 // pred_check
                _
              $region45: #{run_encoder.17} parent=31 // pred_check_branch
                %243 = sbr.rel (0) target = $region47
              $region46: #{run_encoder.17} parent=31 // pred_region
                loop: start=0, step=1, limit=1
                $region48: #{run_encoder.17} parent=46 // loop_pre_header
                  _
                $region49: #{run_encoder.17} parent=46 // loop_header
                  %s245 = sphi 0, %s249
                  %p246 = scmp.ge.s32.totalorder %s245, 1
                  %s250 = sphi %s161, %s161
                  %s251 = sphi %s159, %s159
                $region50: #{run_encoder.17} parent=46 // loop_header_branch
                  %248 = sbr.rel (%p246) target = $region54
                $region51: #{run_encoder.17} parent=46 // loop_body
                  _
                $region52: #{run_encoder.17} parent=46 // loop_footer
                  %s249 = sadd.s32 1, %s245
                $region53: #{run_encoder.17} parent=46 // loop_footer_branch
                  %244 = sbr.rel target = $region49
                $region54: #{run_encoder.17} parent=46 // loop_exit
                  _
                %s253 = ssub.s32 16, 1
                loop: start=0, step=1, limit=1
                $region55: #{run_encoder.17} parent=46 // loop_pre_header
                  _
                $region56: #{run_encoder.17} parent=46 // loop_header
                  %s255 = sphi 0, %s259
                  %p256 = scmp.ge.s32.totalorder %s255, 1
                  %s260 = sphi %s161, %s161
                  %s261 = sphi %s159, %s159
                $region57: #{run_encoder.17} parent=46 // loop_header_branch
                  %258 = sbr.rel (%p256) target = $region61
                $region58: #{run_encoder.17} parent=46 // loop_body
                  %v262 = vld [vmem:[%s260] sm:%s253]
                  %263 = vst [vmem:[%s261] sm:%s253] %v262
                  %v264 = vld [vmem:[%s260 + $0x8] sm:%s253]
                  %265 = vst [vmem:[%s261 + $0x4] sm:%s253] %v264
                  %v266 = vld [vmem:[%s260 + $0x10] sm:%s253]
                  %267 = vst [vmem:[%s261 + $0x8] sm:%s253] %v266
                  %v268 = vld [vmem:[%s260 + $0x18] sm:%s253]
                  %269 = vst [vmem:[%s261 + $0xc] sm:%s253] %v268
                  %v270 = vld [vmem:[%s260 + $0x20] sm:%s253]
                  %271 = vst [vmem:[%s261 + $0x10] sm:%s253] %v270
                  %v272 = vld [vmem:[%s260 + $0x28] sm:%s253]
                  %273 = vst [vmem:[%s261 + $0x14] sm:%s253] %v272
                  %v274 = vld [vmem:[%s260 + $0x30] sm:%s253]
                  %275 = vst [vmem:[%s261 + $0x18] sm:%s253] %v274
                  %v276 = vld [vmem:[%s260 + $0x38] sm:%s253]
                  %277 = vst [vmem:[%s261 + $0x1c] sm:%s253] %v276
                  %v278 = vld [vmem:[%s260 + $0x40] sm:%s253]
                  %279 = vst [vmem:[%s261 + $0x20] sm:%s253] %v278
                  %v280 = vld [vmem:[%s260 + $0x48] sm:%s253]
                  %281 = vst [vmem:[%s261 + $0x24] sm:%s253] %v280
                  %v282 = vld [vmem:[%s260 + $0x50] sm:%s253]
                  %283 = vst [vmem:[%s261 + $0x28] sm:%s253] %v282
                  %v284 = vld [vmem:[%s260 + $0x58] sm:%s253]
                  %285 = vst [vmem:[%s261 + $0x2c] sm:%s253] %v284
                  %v286 = vld [vmem:[%s260 + $0x60] sm:%s253]
                  %287 = vst [vmem:[%s261 + $0x30] sm:%s253] %v286
                  %v288 = vld [vmem:[%s260 + $0x68] sm:%s253]
                  %289 = vst [vmem:[%s261 + $0x34] sm:%s253] %v288
                  %v290 = vld [vmem:[%s260 + $0x70] sm:%s253]
                  %291 = vst [vmem:[%s261 + $0x38] sm:%s253] %v290
                  %v292 = vld [vmem:[%s260 + $0x78] sm:%s253]
                  %293 = vst [vmem:[%s261 + $0x3c] sm:%s253] %v292
                  %v294 = vld [vmem:[%s260 + $0x80] sm:%s253]
                  %295 = vst [vmem:[%s261 + $0x40] sm:%s253] %v294
                  %v296 = vld [vmem:[%s260 + $0x88] sm:%s253]
                  %297 = vst [vmem:[%s261 + $0x44] sm:%s253] %v296
                  %v298 = vld [vmem:[%s260 + $0x90] sm:%s253]
                  %299 = vst [vmem:[%s261 + $0x48] sm:%s253] %v298
                  %v300 = vld [vmem:[%s260 + $0x98] sm:%s253]
                  %301 = vst [vmem:[%s261 + $0x4c] sm:%s253] %v300
                  %v302 = vld [vmem:[%s260 + $0xa0] sm:%s253]
                  %303 = vst [vmem:[%s261 + $0x50] sm:%s253] %v302
                  %v304 = vld [vmem:[%s260 + $0xa8] sm:%s253]
                  %305 = vst [vmem:[%s261 + $0x54] sm:%s253] %v304
                  %v306 = vld [vmem:[%s260 + $0xb0] sm:%s253]
                  %307 = vst [vmem:[%s261 + $0x58] sm:%s253] %v306
                  %v308 = vld [vmem:[%s260 + $0xb8] sm:%s253]
                  %309 = vst [vmem:[%s261 + $0x5c] sm:%s253] %v308
                  %v310 = vld [vmem:[%s260 + $0xc0] sm:%s253]
                  %311 = vst [vmem:[%s261 + $0x60] sm:%s253] %v310
                  %v312 = vld [vmem:[%s260 + $0xc8] sm:%s253]
                  %313 = vst [vmem:[%s261 + $0x64] sm:%s253] %v312
                  %v314 = vld [vmem:[%s260 + $0xd0] sm:%s253]
                  %315 = vst [vmem:[%s261 + $0x68] sm:%s253] %v314
                  %v316 = vld [vmem:[%s260 + $0xd8] sm:%s253]
                  %317 = vst [vmem:[%s261 + $0x6c] sm:%s253] %v316
                  %v318 = vld [vmem:[%s260 + $0xe0] sm:%s253]
                  %319 = vst [vmem:[%s261 + $0x70] sm:%s253] %v318
                  %v320 = vld [vmem:[%s260 + $0xe8] sm:%s253]
                  %321 = vst [vmem:[%s261 + $0x74] sm:%s253] %v320
                  %v322 = vld [vmem:[%s260 + $0xf0] sm:%s253]
                  %323 = vst [vmem:[%s261 + $0x78] sm:%s253] %v322
                  %v324 = vld [vmem:[%s260 + $0xf8] sm:%s253]
                  %325 = vst [vmem:[%s261 + $0x7c] sm:%s253] %v324
                $region59: #{run_encoder.17} parent=46 // loop_footer
                  %s259 = sadd.s32 1, %s255
                $region60: #{run_encoder.17} parent=46 // loop_footer_branch
                  %254 = sbr.rel target = $region56
                $region61: #{run_encoder.17} parent=46 // loop_exit
                  _
              $region47: #{run_encoder.17} parent=31 // pred_fallthru
                _
            $region32: #{run_encoder.17} parent=27 // pred_fallthru
              _
            // Predicated region
            $region33: #{run_encoder.17} parent=27 // pred_check
              _
            $region34: #{run_encoder.17} parent=27 // pred_check_branch
              %167 = sbr.rel (0) target = $region36
            $region35: #{run_encoder.17} parent=27 // pred_region
              %s169 = ssub.s32 16, 1
              loop: start=0, step=1, limit=1
              $region37: #{run_encoder.17} parent=35 // loop_pre_header
                _
              $region38: #{run_encoder.17} parent=35 // loop_header
                %s171 = sphi 0, %s175
                %p172 = scmp.ge.s32.totalorder %s171, 1
                %s176 = sphi %s161, %s161
                %s177 = sphi %s159, %s159
              $region39: #{run_encoder.17} parent=35 // loop_header_branch
                %174 = sbr.rel (%p172) target = $region43
              $region40: #{run_encoder.17} parent=35 // loop_body
                %v178 = vld [vmem:[%s176] sm:%s169]
                %179 = vst [vmem:[%s177] sm:%s169] %v178
                %v180 = vld [vmem:[%s176 + $0x8] sm:%s169]
                %181 = vst [vmem:[%s177 + $0x4] sm:%s169] %v180
                %v182 = vld [vmem:[%s176 + $0x10] sm:%s169]
                %183 = vst [vmem:[%s177 + $0x8] sm:%s169] %v182
                %v184 = vld [vmem:[%s176 + $0x18] sm:%s169]
                %185 = vst [vmem:[%s177 + $0xc] sm:%s169] %v184
                %v186 = vld [vmem:[%s176 + $0x20] sm:%s169]
                %187 = vst [vmem:[%s177 + $0x10] sm:%s169] %v186
                %v188 = vld [vmem:[%s176 + $0x28] sm:%s169]
                %189 = vst [vmem:[%s177 + $0x14] sm:%s169] %v188
                %v190 = vld [vmem:[%s176 + $0x30] sm:%s169]
                %191 = vst [vmem:[%s177 + $0x18] sm:%s169] %v190
                %v192 = vld [vmem:[%s176 + $0x38] sm:%s169]
                %193 = vst [vmem:[%s177 + $0x1c] sm:%s169] %v192
                %v194 = vld [vmem:[%s176 + $0x40] sm:%s169]
                %195 = vst [vmem:[%s177 + $0x20] sm:%s169] %v194
                %v196 = vld [vmem:[%s176 + $0x48] sm:%s169]
                %197 = vst [vmem:[%s177 + $0x24] sm:%s169] %v196
                %v198 = vld [vmem:[%s176 + $0x50] sm:%s169]
                %199 = vst [vmem:[%s177 + $0x28] sm:%s169] %v198
                %v200 = vld [vmem:[%s176 + $0x58] sm:%s169]
                %201 = vst [vmem:[%s177 + $0x2c] sm:%s169] %v200
                %v202 = vld [vmem:[%s176 + $0x60] sm:%s169]
                %203 = vst [vmem:[%s177 + $0x30] sm:%s169] %v202
                %v204 = vld [vmem:[%s176 + $0x68] sm:%s169]
                %205 = vst [vmem:[%s177 + $0x34] sm:%s169] %v204
                %v206 = vld [vmem:[%s176 + $0x70] sm:%s169]
                %207 = vst [vmem:[%s177 + $0x38] sm:%s169] %v206
                %v208 = vld [vmem:[%s176 + $0x78] sm:%s169]
                %209 = vst [vmem:[%s177 + $0x3c] sm:%s169] %v208
                %v210 = vld [vmem:[%s176 + $0x80] sm:%s169]
                %211 = vst [vmem:[%s177 + $0x40] sm:%s169] %v210
                %v212 = vld [vmem:[%s176 + $0x88] sm:%s169]
                %213 = vst [vmem:[%s177 + $0x44] sm:%s169] %v212
                %v214 = vld [vmem:[%s176 + $0x90] sm:%s169]
                %215 = vst [vmem:[%s177 + $0x48] sm:%s169] %v214
                %v216 = vld [vmem:[%s176 + $0x98] sm:%s169]
                %217 = vst [vmem:[%s177 + $0x4c] sm:%s169] %v216
                %v218 = vld [vmem:[%s176 + $0xa0] sm:%s169]
                %219 = vst [vmem:[%s177 + $0x50] sm:%s169] %v218
                %v220 = vld [vmem:[%s176 + $0xa8] sm:%s169]
                %221 = vst [vmem:[%s177 + $0x54] sm:%s169] %v220
                %v222 = vld [vmem:[%s176 + $0xb0] sm:%s169]
                %223 = vst [vmem:[%s177 + $0x58] sm:%s169] %v222
                %v224 = vld [vmem:[%s176 + $0xb8] sm:%s169]
                %225 = vst [vmem:[%s177 + $0x5c] sm:%s169] %v224
                %v226 = vld [vmem:[%s176 + $0xc0] sm:%s169]
                %227 = vst [vmem:[%s177 + $0x60] sm:%s169] %v226
                %v228 = vld [vmem:[%s176 + $0xc8] sm:%s169]
                %229 = vst [vmem:[%s177 + $0x64] sm:%s169] %v228
                %v230 = vld [vmem:[%s176 + $0xd0] sm:%s169]
                %231 = vst [vmem:[%s177 + $0x68] sm:%s169] %v230
                %v232 = vld [vmem:[%s176 + $0xd8] sm:%s169]
                %233 = vst [vmem:[%s177 + $0x6c] sm:%s169] %v232
                %v234 = vld [vmem:[%s176 + $0xe0] sm:%s169]
                %235 = vst [vmem:[%s177 + $0x70] sm:%s169] %v234
                %v236 = vld [vmem:[%s176 + $0xe8] sm:%s169]
                %237 = vst [vmem:[%s177 + $0x74] sm:%s169] %v236
                %v238 = vld [vmem:[%s176 + $0xf0] sm:%s169]
                %239 = vst [vmem:[%s177 + $0x78] sm:%s169] %v238
                %v240 = vld [vmem:[%s176 + $0xf8] sm:%s169]
                %241 = vst [vmem:[%s177 + $0x7c] sm:%s169] %v240
              $region41: #{run_encoder.17} parent=35 // loop_footer
                %s175 = sadd.s32 1, %s171
              $region42: #{run_encoder.17} parent=35 // loop_footer_branch
                %170 = sbr.rel target = $region38
              $region43: #{run_encoder.17} parent=35 // loop_exit
                _
            $region36: #{run_encoder.17} parent=27 // pred_fallthru
              _
          $region28: #{run_encoder.17} parent=23 // pred_fallthru
            _
          %326 = vnop
        $region24: #{run_encoder.17} parent=19 // pred_fallthru
          _
        // Predicated region
        $region62: #{run_encoder.17} parent=19 // pred_check
          %p327 = pneg %p93
        $region63: #{run_encoder.17} parent=19 // pred_check_branch
          %329 = sbr.rel (%p327) target = $region65
        $region64: #{run_encoder.17} parent=19 // pred_region
          %p330 = scmp.lt.s32.totalorder %s17, 1
          %s331 = scalar_select %p330, %s17, 1
          %s332 = scalar_lea.vmem %s2, %s331
        $region65: #{run_encoder.17} parent=19 // pred_fallthru
          _
      $region20: #{run_encoder.17} parent=5 // pred_fallthru
        _
      %p333 = scmp.le.s32.totalorder 1, %s9
      %p334 = scmp.lt.s32.totalorder %s9, 3
      %p335 = pnand %p333, %p334
      %p336 = pneg %p335
      // Predicated region
      $region66: #{run_encoder.17} parent=5 // pred_check
        _
      $region67: #{run_encoder.17} parent=5 // pred_check_branch
        %338 = sbr.rel (%p335) target = $region69
      $region68: #{run_encoder.17} parent=5 // pred_region
        %s339 = ssub.s32 %s9, 1
        %s340 = sand.u32 %s60, 1
        %s341 = sand.u32 %s60, 1
        %s342 = smul.addr %s341, 128
        %s343 = scalar_lea.vmem [#allocation2], %s342
        // Predicated region
        $region70: #{run_encoder.17} parent=68 // pred_check
          %p344 = pneg %p73
        $region71: #{run_encoder.17} parent=68 // pred_check_branch
          %346 = sbr.rel (%p344) target = $region73
        $region72: #{run_encoder.17} parent=68 // pred_region
          _
        $region73: #{run_encoder.17} parent=68 // pred_fallthru
          _
        %p347 = scmp.lt.s32.totalorder %s18, 0
        %s348 = scalar_select %p347, %s18, 0
        %s349 = smul.addr %s348, 2
        %s350 = scalar_lea.vmem %s0, %s349
        %p351 = pneg %p47
        %p352 = pneg %p44
        %s353 = sand.u32 %s60, 1
        %s354 = sand.u32 %s60, 1
        %s355 = smul.addr %s354, 128
        %s356 = scalar_lea.vmem [#allocation2], %s355
        %p357 = pneg %p73
        %p358 = pneg %p70
        %p359 = scmp.lt.s32.totalorder %s19, 1
        %s360 = scalar_select %p359, %s19, 1
        %s361 = scalar_lea.vmem %s2, %s360
        %p362 = pneg %p99
        %p363 = pneg %p96
        %p364 = pneg %p127
        %p365 = pneg %p124
        %p366 = scmp.lt.s32.totalorder %s18, 0
        %s367 = scalar_select %p366, %s18, 0
        %p368 = scmp.lt.s32.totalorder %s19, 1
        %s369 = scalar_select %p368, %s19, 1
        %s370 = smul.addr %s367, 2
        %s371 = sadd.s32 %s369, %s370
        %s372 = smul.addr %s371, 2
        %s373 = scalar_lea.vmem %s3, %s372
        %p374 = scmp.lt.s32.totalorder %s18, 0
        %s375 = scalar_select %p374, %s18, 0
        %s376 = smul.addr %s375, 2
        %s377 = scalar_lea.vmem %s0, %s376
        %p378 = scmp.lt.s32.totalorder %s19, 1
        %s379 = scalar_select %p378, %s19, 1
        %s380 = scalar_lea.vmem %s2, %s379
        %p381 = scmp.lt.s32.totalorder %s18, 0
        %s382 = scalar_select %p381, %s18, 0
        %p383 = scmp.lt.s32.totalorder %s19, 1
        %s384 = scalar_select %p383, %s19, 1
        %s385 = smul.addr %s382, 2
        %s386 = sadd.s32 %s384, %s385
        %s387 = smul.addr %s386, 2
        %s388 = scalar_lea.vmem %s3, %s387
        %v389 = vld [vmem:[%s377] sm:$0x3]
        %v390 = vld [vmem:[%s343] sm:$0xf]
        %v391 = vld [vmem:[%s343 + $0x4] sm:$0xf]
        %v392 = vld [vmem:[%s343 + $0x8] sm:$0xf]
        %v393 = vld [vmem:[%s343 + $0xc] sm:$0xf]
        %v394 = vld [vmem:[%s343 + $0x10] sm:$0xf]
        %v395 = vld [vmem:[%s343 + $0x14] sm:$0xf]
        %v396 = vld [vmem:[%s343 + $0x18] sm:$0xf]
        %v397 = vld [vmem:[%s343 + $0x1c] sm:$0xf]
        %v398 = vld [vmem:[%s343 + $0x20] sm:$0xf]
        %v399 = vld [vmem:[%s343 + $0x24] sm:$0xf]
        %v400 = vld [vmem:[%s343 + $0x28] sm:$0xf]
        %v401 = vld [vmem:[%s343 + $0x2c] sm:$0xf]
        %v402 = vld [vmem:[%s343 + $0x30] sm:$0xf]
        %v403 = vld [vmem:[%s343 + $0x34] sm:$0xf]
        %v404 = vld [vmem:[%s343 + $0x38] sm:$0xf]
        %v405 = vld [vmem:[%s343 + $0x3c] sm:$0xf]
        %v406 = vld [vmem:[%s343 + $0x40] sm:$0xf]
        %v407 = vld [vmem:[%s343 + $0x44] sm:$0xf]
        %v408 = vld [vmem:[%s343 + $0x48] sm:$0xf]
        %v409 = vld [vmem:[%s343 + $0x4c] sm:$0xf]
        %v410 = vld [vmem:[%s343 + $0x50] sm:$0xf]
        %v411 = vld [vmem:[%s343 + $0x54] sm:$0xf]
        %v412 = vld [vmem:[%s343 + $0x58] sm:$0xf]
        %v413 = vld [vmem:[%s343 + $0x5c] sm:$0xf]
        %v414 = vld [vmem:[%s343 + $0x60] sm:$0xf]
        %v415 = vld [vmem:[%s343 + $0x64] sm:$0xf]
        %v416 = vld [vmem:[%s343 + $0x68] sm:$0xf]
        %v417 = vld [vmem:[%s343 + $0x6c] sm:$0xf]
        %v418 = vld [vmem:[%s343 + $0x70] sm:$0xf]
        %v419 = vld [vmem:[%s343 + $0x74] sm:$0xf]
        %v420 = vld [vmem:[%s343 + $0x78] sm:$0xf]
        %v421 = vld [vmem:[%s343 + $0x7c] sm:$0xf]
        %v422 = vld [vmem:[%s380] sm:$0x1]
        %v424 = vperm.slane %v422, 0
        %427 = vst [vmem:[#allocation1] ss:$9 sm:$0xff] %v389
        %v428 = vld [vmem:[#allocation1] sm:$0xff]
        %v429 = vld [vmem:[#allocation1 + $0x9] sm:$0xff]
        %v464 = vunpack.c.l.b16 %v390
        %v465 = vunpack.c.l.b16 %v391
        %v466 = vunpack.c.l.b16 %v392
        %v467 = vunpack.c.l.b16 %v393
        %v468 = vunpack.c.l.b16 %v394
        %v469 = vunpack.c.l.b16 %v395
        %v470 = vunpack.c.l.b16 %v396
        %v471 = vunpack.c.l.b16 %v397
        %v472 = vunpack.c.l.b16 %v398
        %v473 = vunpack.c.l.b16 %v399
        %v474 = vunpack.c.l.b16 %v400
        %v475 = vunpack.c.l.b16 %v401
        %v476 = vunpack.c.l.b16 %v402
        %v477 = vunpack.c.l.b16 %v403
        %v478 = vunpack.c.l.b16 %v404
        %v479 = vunpack.c.l.b16 %v405
        %v480 = vunpack.c.l.b16 %v406
        %v481 = vunpack.c.l.b16 %v407
        %v482 = vunpack.c.l.b16 %v408
        %v483 = vunpack.c.l.b16 %v409
        %v484 = vunpack.c.l.b16 %v410
        %v485 = vunpack.c.l.b16 %v411
        %v486 = vunpack.c.l.b16 %v412
        %v487 = vunpack.c.l.b16 %v413
        %v488 = vunpack.c.l.b16 %v414
        %v489 = vunpack.c.l.b16 %v415
        %v490 = vunpack.c.l.b16 %v416
        %v491 = vunpack.c.l.b16 %v417
        %v492 = vunpack.c.l.b16 %v418
        %v493 = vunpack.c.l.b16 %v419
        %v494 = vunpack.c.l.b16 %v420
        %v495 = vunpack.c.l.b16 %v421
        %v496 = vpack.c.b16 %v465, %v464
        %v497 = vpack.c.b16 %v467, %v466
        %v498 = vpack.c.b16 %v469, %v468
        %v499 = vpack.c.b16 %v471, %v470
        %v500 = vpack.c.b16 %v473, %v472
        %v501 = vpack.c.b16 %v475, %v474
        %v502 = vpack.c.b16 %v477, %v476
        %v503 = vpack.c.b16 %v479, %v478
        %v504 = vpack.c.b16 %v481, %v480
        %v505 = vpack.c.b16 %v483, %v482
        %v506 = vpack.c.b16 %v485, %v484
        %v507 = vpack.c.b16 %v487, %v486
        %v508 = vpack.c.b16 %v489, %v488
        %v509 = vpack.c.b16 %v491, %v490
        %v510 = vpack.c.b16 %v493, %v492
        %v511 = vpack.c.b16 %v495, %v494
        %528 = vmatpush.bf16.msra.mxu0 %v503
        %529 = vmatpush.bf16.msra.mxu0 %v502
        %530 = vmatpush.bf16.msra.mxu0 %v501
        %531 = vmatpush.bf16.msra.mxu0 %v500
        %532 = vmatpush.bf16.msra.mxu0 %v499
        %533 = vmatpush.bf16.msra.mxu0 %v498
        %534 = vmatpush.bf16.msra.mxu0 %v497
        %535 = vmatpush.bf16.msra.mxu0 %v496
        %536 = vmatmul.bf16.gmra.mxu0 %v428
        %v537 = vpop.f32.mrf.mxu0
        %v538 = vadd.f32 %v424, %v537
        %v539 = vpop.f32.mrf.mxu0
        %540 = vdwg.mxu0
        %541 = vmatpush.bf16.msra.mxu0 %v511
        %542 = vmatpush.bf16.msra.mxu0 %v510
        %543 = vmatpush.bf16.msra.mxu0 %v509
        %544 = vmatpush.bf16.msra.mxu0 %v508
        %545 = vmatpush.bf16.msra.mxu0 %v507
        %546 = vmatpush.bf16.msra.mxu0 %v506
        %547 = vmatpush.bf16.msra.mxu0 %v505
        %548 = vmatpush.bf16.msra.mxu0 %v504
        %549 = vmatmul.bf16.gmra.mxu0 %v429
        %v550 = vpop.f32.mrf.mxu0
        %v551 = vadd.f32 %v538, %v550
        %v552 = vpop.f32.mrf.mxu0
        %553 = vdwg.mxu0
        %vm554 = vcmp.ge.f32.partialorder %v551, 0.0
        %v555 = vmul.f32 %v551, 0.1
        %v556 = vsel %vm554, %v551, %v555
        %557 = vst [vmem:[%s388] sm:$0x3] %v556
        %p558 = scmp.lt.s32.totalorder %s18, 0
        %s559 = scalar_select %p558, %s18, 0
        %p560 = scmp.lt.s32.totalorder %s19, 1
        %s561 = scalar_select %p560, %s19, 1
        %s562 = smul.addr %s559, 2
        %s563 = sadd.s32 %s561, %s562
        %s564 = smul.addr %s563, 2
        %s565 = scalar_lea.vmem %s3, %s564
        // Predicated region
        $region74: #{run_encoder.17} parent=68 // pred_check
          %p566 = pneg %p124
        $region75: #{run_encoder.17} parent=68 // pred_check_branch
          %568 = sbr.rel (%p566) target = $region77
        $region76: #{run_encoder.17} parent=68 // pred_region
          _
        $region77: #{run_encoder.17} parent=68 // pred_fallthru
          _
      $region69: #{run_encoder.17} parent=5 // pred_fallthru
        _
      %p569 = scmp.le.s32.totalorder 2, %s9
      // Predicated region
      $region78: #{run_encoder.17} parent=5 // pred_check
        %p570 = pneg %p569
      $region79: #{run_encoder.17} parent=5 // pred_check_branch
        %572 = sbr.rel (%p570) target = $region81
      $region80: #{run_encoder.17} parent=5 // pred_region
        %s573 = ssub.s32 %s9, 2
        // Predicated region
        $region82: #{run_encoder.17} parent=80 // pred_check
          %p574 = pneg %p130
        $region83: #{run_encoder.17} parent=80 // pred_check_branch
          %576 = sbr.rel (%p574) target = $region85
        $region84: #{run_encoder.17} parent=80 // pred_region
          %p577 = scmp.lt.s32.totalorder %s20, 0
          %s578 = scalar_select %p577, %s20, 0
          %p579 = scmp.lt.s32.totalorder %s21, 1
          %s580 = scalar_select %p579, %s21, 1
          %s581 = smul.addr %s578, 2
          %s582 = sadd.s32 %s580, %s581
          %s583 = smul.addr %s582, 2
          %s584 = scalar_lea.vmem %s3, %s583
        $region85: #{run_encoder.17} parent=80 // pred_fallthru
          _
      $region81: #{run_encoder.17} parent=5 // pred_fallthru
        _
    $region6: #{run_encoder.17} parent=1 // loop_footer
      %s13 = sadd.s32 1, %s9
    $region7: #{run_encoder.17} parent=1 // loop_footer_branch
      %8 = sbr.rel target = $region3
    $region8: #{run_encoder.17} parent=1 // loop_exit
      _

// kernel: run_encoder.13
$region0: #{run_encoder.13}
  #allocation0 [shape = 'u32[]', space=smem, size = 0x4, offset = 0x4, fixed_abs, tag = 'smem constant byte address 0x4 - core index']
  #allocation1 [shape = 'u32[72,128]{1,0:T(1,128)}', space=vmem, size = 0x9000, scoped, tag = 'internal scratch']
  %s0 = inlined_call_operand.vmem [shape: bf16[16,1728], index: 0, kind: input, shape index: {}]
  %s1 = inlined_call_operand.vmem [shape: bf16[1728,64], index: 1, kind: input, shape index: {}]
  %s2 = inlined_call_operand.vmem [shape: f32[1,64], index: 2, kind: input, shape index: {}]
  %s3 = inlined_call_operand.vmem [shape: f32[16,64], index: 3, kind: output, shape index: {}]
  %s4 = sld [smem:[#allocation0]]
  $region22: #{run_encoder.13} parent=0
    _
  %s6 = ssub.s32 1, %s4
  %s7 = scalar_select 0, %s6, %s4
  // Predicated region
  $region2: #{run_encoder.13} parent=0 // pred_check
    _
  $region3: #{run_encoder.13} parent=0 // pred_check_branch
    %9 = sbr.rel (0) target = $region5
  $region4: #{run_encoder.13} parent=0 // pred_region
    _
  $region5: #{run_encoder.13} parent=0 // pred_fallthru
    _
  // Predicated region
  $region6: #{run_encoder.13} parent=0 // pred_check
    _
  $region7: #{run_encoder.13} parent=0 // pred_check_branch
    %11 = sbr.rel (0) target = $region9
  $region8: #{run_encoder.13} parent=0 // pred_region
    _
  $region9: #{run_encoder.13} parent=0 // pred_fallthru
    _
  // Predicated region
  $region10: #{run_encoder.13} parent=0 // pred_check
    _
  $region11: #{run_encoder.13} parent=0 // pred_check_branch
    %13 = sbr.rel (0) target = $region13
  $region12: #{run_encoder.13} parent=0 // pred_region
    _
  $region13: #{run_encoder.13} parent=0 // pred_fallthru
    _
  %v15 = vld [vmem:[%s0] sm:$0xff]
  %v16 = vld [vmem:[%s0 + $0x8] sm:$0xff]
  %v17 = vld [vmem:[%s0 + $0x10] sm:$0xff]
  %v18 = vld [vmem:[%s0 + $0x18] sm:$0xff]
  %v19 = vld [vmem:[%s0 + $0x20] sm:$0xff]
  %v20 = vld [vmem:[%s0 + $0x28] sm:$0xff]
  %v21 = vld [vmem:[%s0 + $0x30] sm:$0xff]
  %v22 = vld [vmem:[%s0 + $0x38] sm:$0xff]
  %v23 = vld [vmem:[%s0 + $0x40] sm:$0xff]
  %v24 = vld [vmem:[%s0 + $0x48] sm:$0xff]
  %v25 = vld [vmem:[%s0 + $0x50] sm:$0xff]
  %v26 = vld [vmem:[%s0 + $0x58] sm:$0xff]
  %v27 = vld [vmem:[%s0 + $0x60] sm:$0xff]
  %v28 = vld [vmem:[%s0 + $0x68] sm:$0xff]
  %v29 = vld [vmem:[%s1] sm:$0xf]
  %v30 = vld [vmem:[%s1 + $0x4] sm:$0xf]
  %v31 = vld [vmem:[%s1 + $0x8] sm:$0xf]
  %v32 = vld [vmem:[%s1 + $0xc] sm:$0xf]
  %v33 = vld [vmem:[%s1 + $0x10] sm:$0xf]
  %v34 = vld [vmem:[%s1 + $0x14] sm:$0xf]
  %v35 = vld [vmem:[%s1 + $0x18] sm:$0xf]
  %v36 = vld [vmem:[%s1 + $0x1c] sm:$0xf]
  %v37 = vld [vmem:[%s1 + $0x20] sm:$0xf]
  %v38 = vld [vmem:[%s1 + $0x24] sm:$0xf]
  %v39 = vld [vmem:[%s1 + $0x28] sm:$0xf]
  %v40 = vld [vmem:[%s1 + $0x2c] sm:$0xf]
  %v41 = vld [vmem:[%s1 + $0x30] sm:$0xf]
  %v42 = vld [vmem:[%s1 + $0x34] sm:$0xf]
  %v43 = vld [vmem:[%s1 + $0x38] sm:$0xf]
  %v44 = vld [vmem:[%s1 + $0x3c] sm:$0xf]
  %v45 = vld [vmem:[%s1 + $0x40] sm:$0xf]
  %v46 = vld [vmem:[%s1 + $0x44] sm:$0xf]
  %v47 = vld [vmem:[%s1 + $0x48] sm:$0xf]
  %v48 = vld [vmem:[%s1 + $0x4c] sm:$0xf]
  %v49 = vld [vmem:[%s1 + $0x50] sm:$0xf]
  %v50 = vld [vmem:[%s1 + $0x54] sm:$0xf]
  %v51 = vld [vmem:[%s1 + $0x58] sm:$0xf]
  %v52 = vld [vmem:[%s1 + $0x5c] sm:$0xf]
  %v53 = vld [vmem:[%s1 + $0x60] sm:$0xf]
  %v54 = vld [vmem:[%s1 + $0x64] sm:$0xf]
  %v55 = vld [vmem:[%s1 + $0x68] sm:$0xf]
  %v56 = vld [vmem:[%s1 + $0x6c] sm:$0xf]
  %v57 = vld [vmem:[%s1 + $0x70] sm:$0xf]
  %v58 = vld [vmem:[%s1 + $0x74] sm:$0xf]
  %v59 = vld [vmem:[%s1 + $0x78] sm:$0xf]
  %v60 = vld [vmem:[%s1 + $0x7c] sm:$0xf]
  %v61 = vld [vmem:[%s1 + $0x80] sm:$0xf]
  %v62 = vld [vmem:[%s1 + $0x84] sm:$0xf]
  %v63 = vld [vmem:[%s1 + $0x88] sm:$0xf]
  %v64 = vld [vmem:[%s1 + $0x8c] sm:$0xf]
  %v65 = vld [vmem:[%s1 + $0x90] sm:$0xf]
  %v66 = vld [vmem:[%s1 + $0x94] sm:$0xf]
  %v67 = vld [vmem:[%s1 + $0x98] sm:$0xf]
  %v68 = vld [vmem:[%s1 + $0x9c] sm:$0xf]
  %v69 = vld [vmem:[%s1 + $0xa0] sm:$0xf]
  %v70 = vld [vmem:[%s1 + $0xa4] sm:$0xf]
  %v71 = vld [vmem:[%s1 + $0xa8] sm:$0xf]
  %v72 = vld [vmem:[%s1 + $0xac] sm:$0xf]
  %v73 = vld [vmem:[%s1 + $0xb0] sm:$0xf]
  %v74 = vld [vmem:[%s1 + $0xb4] sm:$0xf]
  %v75 = vld [vmem:[%s1 + $0xb8] sm:$0xf]
  %v76 = vld [vmem:[%s1 + $0xbc] sm:$0xf]
  %v77 = vld [vmem:[%s1 + $0xc0] sm:$0xf]
  %v78 = vld [vmem:[%s1 + $0xc4] sm:$0xf]
  %v79 = vld [vmem:[%s1 + $0xc8] sm:$0xf]
  %v80 = vld [vmem:[%s1 + $0xcc] sm:$0xf]
  %v81 = vld [vmem:[%s1 + $0xd0] sm:$0xf]
  %v82 = vld [vmem:[%s1 + $0xd4] sm:$0xf]
  %v83 = vld [vmem:[%s1 + $0xd8] sm:$0xf]
  %v84 = vld [vmem:[%s1 + $0xdc] sm:$0xf]
  %v85 = vld [vmem:[%s1 + $0xe0] sm:$0xf]
  %v86 = vld [vmem:[%s1 + $0xe4] sm:$0xf]
  %v87 = vld [vmem:[%s1 + $0xe8] sm:$0xf]
  %v88 = vld [vmem:[%s1 + $0xec] sm:$0xf]
  %v89 = vld [vmem:[%s1 + $0xf0] sm:$0xf]
  %v90 = vld [vmem:[%s1 + $0xf4] sm:$0xf]
  %v91 = vld [vmem:[%s1 + $0xf8] sm:$0xf]
  %v92 = vld [vmem:[%s1 + $0xfc] sm:$0xf]
  %v93 = vld [vmem:[%s1 + $0x100] sm:$0xf]
  %v94 = vld [vmem:[%s1 + $0x104] sm:$0xf]
  %v95 = vld [vmem:[%s1 + $0x108] sm:$0xf]
  %v96 = vld [vmem:[%s1 + $0x10c] sm:$0xf]
  %v97 = vld [vmem:[%s1 + $0x110] sm:$0xf]
  %v98 = vld [vmem:[%s1 + $0x114] sm:$0xf]
  %v99 = vld [vmem:[%s1 + $0x118] sm:$0xf]
  %v100 = vld [vmem:[%s1 + $0x11c] sm:$0xf]
  %v101 = vld [vmem:[%s1 + $0x120] sm:$0xf]
  %v102 = vld [vmem:[%s1 + $0x124] sm:$0xf]
  %v103 = vld [vmem:[%s1 + $0x128] sm:$0xf]
  %v104 = vld [vmem:[%s1 + $0x12c] sm:$0xf]
  %v105 = vld [vmem:[%s1 + $0x130] sm:$0xf]
  %v106 = vld [vmem:[%s1 + $0x134] sm:$0xf]
  %v107 = vld [vmem:[%s1 + $0x138] sm:$0xf]
  %v108 = vld [vmem:[%s1 + $0x13c] sm:$0xf]
  %v109 = vld [vmem:[%s1 + $0x140] sm:$0xf]
  %v110 = vld [vmem:[%s1 + $0x144] sm:$0xf]
  %v111 = vld [vmem:[%s1 + $0x148] sm:$0xf]
  %v112 = vld [vmem:[%s1 + $0x14c] sm:$0xf]
  %v113 = vld [vmem:[%s1 + $0x150] sm:$0xf]
  %v114 = vld [vmem:[%s1 + $0x154] sm:$0xf]
  %v115 = vld [vmem:[%s1 + $0x158] sm:$0xf]
  %v116 = vld [vmem:[%s1 + $0x15c] sm:$0xf]
  %v117 = vld [vmem:[%s1 + $0x160] sm:$0xf]
  %v118 = vld [vmem:[%s1 + $0x164] sm:$0xf]
  %v119 = vld [vmem:[%s1 + $0x168] sm:$0xf]
  %v120 = vld [vmem:[%s1 + $0x16c] sm:$0xf]
  %v121 = vld [vmem:[%s1 + $0x170] sm:$0xf]
  %v122 = vld [vmem:[%s1 + $0x174] sm:$0xf]
  %v123 = vld [vmem:[%s1 + $0x178] sm:$0xf]
  %v124 = vld [vmem:[%s1 + $0x17c] sm:$0xf]
  %v125 = vld [vmem:[%s1 + $0x180] sm:$0xf]
  %v126 = vld [vmem:[%s1 + $0x184] sm:$0xf]
  %v127 = vld [vmem:[%s1 + $0x188] sm:$0xf]
  %v128 = vld [vmem:[%s1 + $0x18c] sm:$0xf]
  %v129 = vld [vmem:[%s1 + $0x190] sm:$0xf]
  %v130 = vld [vmem:[%s1 + $0x194] sm:$0xf]
  %v131 = vld [vmem:[%s1 + $0x198] sm:$0xf]
  %v132 = vld [vmem:[%s1 + $0x19c] sm:$0xf]
  %v133 = vld [vmem:[%s1 + $0x1a0] sm:$0xf]
  %v134 = vld [vmem:[%s1 + $0x1a4] sm:$0xf]
  %v135 = vld [vmem:[%s1 + $0x1a8] sm:$0xf]
  %v136 = vld [vmem:[%s1 + $0x1ac] sm:$0xf]
  %v137 = vld [vmem:[%s1 + $0x1b0] sm:$0xf]
  %v138 = vld [vmem:[%s1 + $0x1b4] sm:$0xf]
  %v139 = vld [vmem:[%s1 + $0x1b8] sm:$0xf]
  %v140 = vld [vmem:[%s1 + $0x1bc] sm:$0xf]
  %v141 = vld [vmem:[%s1 + $0x1c0] sm:$0xf]
  %v142 = vld [vmem:[%s1 + $0x1c4] sm:$0xf]
  %v143 = vld [vmem:[%s1 + $0x1c8] sm:$0xf]
  %v144 = vld [vmem:[%s1 + $0x1cc] sm:$0xf]
  %v145 = vld [vmem:[%s1 + $0x1d0] sm:$0xf]
  %v146 = vld [vmem:[%s1 + $0x1d4] sm:$0xf]
  %v147 = vld [vmem:[%s1 + $0x1d8] sm:$0xf]
  %v148 = vld [vmem:[%s1 + $0x1dc] sm:$0xf]
  %v149 = vld [vmem:[%s1 + $0x1e0] sm:$0xf]
  %v150 = vld [vmem:[%s1 + $0x1e4] sm:$0xf]
  %v151 = vld [vmem:[%s1 + $0x1e8] sm:$0xf]
  %v152 = vld [vmem:[%s1 + $0x1ec] sm:$0xf]
  %v153 = vld [vmem:[%s1 + $0x1f0] sm:$0xf]
  %v154 = vld [vmem:[%s1 + $0x1f4] sm:$0xf]
  %v155 = vld [vmem:[%s1 + $0x1f8] sm:$0xf]
  %v156 = vld [vmem:[%s1 + $0x1fc] sm:$0xf]
  %v157 = vld [vmem:[%s1 + $0x200] sm:$0xf]
  %v158 = vld [vmem:[%s1 + $0x204] sm:$0xf]
  %v159 = vld [vmem:[%s1 + $0x208] sm:$0xf]
  %v160 = vld [vmem:[%s1 + $0x20c] sm:$0xf]
  %v161 = vld [vmem:[%s1 + $0x210] sm:$0xf]
  %v162 = vld [vmem:[%s1 + $0x214] sm:$0xf]
  %v163 = vld [vmem:[%s1 + $0x218] sm:$0xf]
  %v164 = vld [vmem:[%s1 + $0x21c] sm:$0xf]
  %v165 = vld [vmem:[%s1 + $0x220] sm:$0xf]
  %v166 = vld [vmem:[%s1 + $0x224] sm:$0xf]
  %v167 = vld [vmem:[%s1 + $0x228] sm:$0xf]
  %v168 = vld [vmem:[%s1 + $0x22c] sm:$0xf]
  %v169 = vld [vmem:[%s1 + $0x230] sm:$0xf]
  %v170 = vld [vmem:[%s1 + $0x234] sm:$0xf]
  %v171 = vld [vmem:[%s1 + $0x238] sm:$0xf]
  %v172 = vld [vmem:[%s1 + $0x23c] sm:$0xf]
  %v173 = vld [vmem:[%s1 + $0x240] sm:$0xf]
  %v174 = vld [vmem:[%s1 + $0x244] sm:$0xf]
  %v175 = vld [vmem:[%s1 + $0x248] sm:$0xf]
  %v176 = vld [vmem:[%s1 + $0x24c] sm:$0xf]
  %v177 = vld [vmem:[%s1 + $0x250] sm:$0xf]
  %v178 = vld [vmem:[%s1 + $0x254] sm:$0xf]
  %v179 = vld [vmem:[%s1 + $0x258] sm:$0xf]
  %v180 = vld [vmem:[%s1 + $0x25c] sm:$0xf]
  %v181 = vld [vmem:[%s1 + $0x260] sm:$0xf]
  %v182 = vld [vmem:[%s1 + $0x264] sm:$0xf]
  %v183 = vld [vmem:[%s1 + $0x268] sm:$0xf]
  %v184 = vld [vmem:[%s1 + $0x26c] sm:$0xf]
  %v185 = vld [vmem:[%s1 + $0x270] sm:$0xf]
  %v186 = vld [vmem:[%s1 + $0x274] sm:$0xf]
  %v187 = vld [vmem:[%s1 + $0x278] sm:$0xf]
  %v188 = vld [vmem:[%s1 + $0x27c] sm:$0xf]
  %v189 = vld [vmem:[%s1 + $0x280] sm:$0xf]
  %v190 = vld [vmem:[%s1 + $0x284] sm:$0xf]
  %v191 = vld [vmem:[%s1 + $0x288] sm:$0xf]
  %v192 = vld [vmem:[%s1 + $0x28c] sm:$0xf]
  %v193 = vld [vmem:[%s1 + $0x290] sm:$0xf]
  %v194 = vld [vmem:[%s1 + $0x294] sm:$0xf]
  %v195 = vld [vmem:[%s1 + $0x298] sm:$0xf]
  %v196 = vld [vmem:[%s1 + $0x29c] sm:$0xf]
  %v197 = vld [vmem:[%s1 + $0x2a0] sm:$0xf]
  %v198 = vld [vmem:[%s1 + $0x2a4] sm:$0xf]
  %v199 = vld [vmem:[%s1 + $0x2a8] sm:$0xf]
  %v200 = vld [vmem:[%s1 + $0x2ac] sm:$0xf]
  %v201 = vld [vmem:[%s1 + $0x2b0] sm:$0xf]
  %v202 = vld [vmem:[%s1 + $0x2b4] sm:$0xf]
  %v203 = vld [vmem:[%s1 + $0x2b8] sm:$0xf]
  %v204 = vld [vmem:[%s1 + $0x2bc] sm:$0xf]
  %v205 = vld [vmem:[%s1 + $0x2c0] sm:$0xf]
  %v206 = vld [vmem:[%s1 + $0x2c4] sm:$0xf]
  %v207 = vld [vmem:[%s1 + $0x2c8] sm:$0xf]
  %v208 = vld [vmem:[%s1 + $0x2cc] sm:$0xf]
  %v209 = vld [vmem:[%s1 + $0x2d0] sm:$0xf]
  %v210 = vld [vmem:[%s1 + $0x2d4] sm:$0xf]
  %v211 = vld [vmem:[%s1 + $0x2d8] sm:$0xf]
  %v212 = vld [vmem:[%s1 + $0x2dc] sm:$0xf]
  %v213 = vld [vmem:[%s1 + $0x2e0] sm:$0xf]
  %v214 = vld [vmem:[%s1 + $0x2e4] sm:$0xf]
  %v215 = vld [vmem:[%s1 + $0x2e8] sm:$0xf]
  %v216 = vld [vmem:[%s1 + $0x2ec] sm:$0xf]
  %v217 = vld [vmem:[%s1 + $0x2f0] sm:$0xf]
  %v218 = vld [vmem:[%s1 + $0x2f4] sm:$0xf]
  %v219 = vld [vmem:[%s1 + $0x2f8] sm:$0xf]
  %v220 = vld [vmem:[%s1 + $0x2fc] sm:$0xf]
  %v221 = vld [vmem:[%s1 + $0x300] sm:$0xf]
  %v222 = vld [vmem:[%s1 + $0x304] sm:$0xf]
  %v223 = vld [vmem:[%s1 + $0x308] sm:$0xf]
  %v224 = vld [vmem:[%s1 + $0x30c] sm:$0xf]
  %v225 = vld [vmem:[%s1 + $0x310] sm:$0xf]
  %v226 = vld [vmem:[%s1 + $0x314] sm:$0xf]
  %v227 = vld [vmem:[%s1 + $0x318] sm:$0xf]
  %v228 = vld [vmem:[%s1 + $0x31c] sm:$0xf]
  %v229 = vld [vmem:[%s1 + $0x320] sm:$0xf]
  %v230 = vld [vmem:[%s1 + $0x324] sm:$0xf]
  %v231 = vld [vmem:[%s1 + $0x328] sm:$0xf]
  %v232 = vld [vmem:[%s1 + $0x32c] sm:$0xf]
  %v233 = vld [vmem:[%s1 + $0x330] sm:$0xf]
  %v234 = vld [vmem:[%s1 + $0x334] sm:$0xf]
  %v235 = vld [vmem:[%s1 + $0x338] sm:$0xf]
  %v236 = vld [vmem:[%s1 + $0x33c] sm:$0xf]
  %v237 = vld [vmem:[%s1 + $0x340] sm:$0xf]
  %v238 = vld [vmem:[%s1 + $0x344] sm:$0xf]
  %v239 = vld [vmem:[%s1 + $0x348] sm:$0xf]
  %v240 = vld [vmem:[%s1 + $0x34c] sm:$0xf]
  %v241 = vld [vmem:[%s1 + $0x350] sm:$0xf]
  %v242 = vld [vmem:[%s1 + $0x354] sm:$0xf]
  %v243 = vld [vmem:[%s1 + $0x358] sm:$0xf]
  %v244 = vld [vmem:[%s1 + $0x35c] sm:$0xf]
  %v245 = vld [vmem:[%s2] sm:$0x1]
  %v247 = vperm.slane %v245, 0
  %v263 = vunpack.c.l.b16 %v15
  %v264 = vunpack.c.h.b16 %v15
  %v265 = vunpack.c.l.b16 %v16
  %v266 = vunpack.c.h.b16 %v16
  %v267 = vunpack.c.l.b16 %v17
  %v268 = vunpack.c.h.b16 %v17
  %v269 = vunpack.c.l.b16 %v18
  %v270 = vunpack.c.h.b16 %v18
  %v271 = vunpack.c.l.b16 %v19
  %v272 = vunpack.c.h.b16 %v19
  %v273 = vunpack.c.l.b16 %v20
  %v274 = vunpack.c.h.b16 %v20
  %v275 = vunpack.c.l.b16 %v21
  %v276 = vunpack.c.h.b16 %v21
  %v277 = vunpack.c.l.b16 %v22
  %v278 = vunpack.c.h.b16 %v22
  %v279 = vunpack.c.l.b16 %v23
  %v280 = vunpack.c.h.b16 %v23
  %v281 = vunpack.c.l.b16 %v24
  %v282 = vunpack.c.h.b16 %v24
  %v283 = vunpack.c.l.b16 %v25
  %v284 = vunpack.c.h.b16 %v25
  %v285 = vunpack.c.l.b16 %v26
  %v286 = vunpack.c.h.b16 %v26
  %v287 = vunpack.c.l.b16 %v27
  %v288 = vunpack.c.h.b16 %v27
  %v289 = vunpack.c.l.b16 %v28
  %v290 = vunpack.c.h.b16 %v28
  %v291 = vpack.c.b16 %v277, %v263
  %v292 = vpack.c.b16 %v278, %v264
  %v293 = vpack.c.b16 %v279, %v265
  %v294 = vpack.c.b16 %v280, %v266
  %v295 = vpack.c.b16 %v281, %v267
  %v296 = vpack.c.b16 %v282, %v268
  %v297 = vpack.c.b16 %v283, %v269
  %v298 = vpack.c.b16 %v284, %v270
  %v299 = vpack.c.b16 %v285, %v271
  %v300 = vpack.c.b16 %v286, %v272
  %v301 = vpack.c.b16 %v287, %v273
  %v302 = vpack.c.b16 %v288, %v274
  %v303 = vpack.c.b16 %v289, %v275
  %v304 = vpack.c.b16 %v290, %v276
  %v534 = vunpack.c.l.b16 %v29
  %v535 = vunpack.c.l.b16 %v30
  %v536 = vunpack.c.l.b16 %v31
  %v537 = vunpack.c.l.b16 %v32
  %v538 = vunpack.c.l.b16 %v33
  %v539 = vunpack.c.l.b16 %v34
  %v540 = vunpack.c.l.b16 %v35
  %v541 = vunpack.c.l.b16 %v36
  %v542 = vunpack.c.l.b16 %v37
  %v543 = vunpack.c.l.b16 %v38
  %v544 = vunpack.c.l.b16 %v39
  %v545 = vunpack.c.l.b16 %v40
  %v546 = vunpack.c.l.b16 %v41
  %v547 = vunpack.c.l.b16 %v42
  %v548 = vunpack.c.l.b16 %v43
  %v549 = vunpack.c.l.b16 %v44
  %v550 = vunpack.c.l.b16 %v45
  %v551 = vunpack.c.l.b16 %v46
  %v552 = vunpack.c.l.b16 %v47
  %v553 = vunpack.c.l.b16 %v48
  %v554 = vunpack.c.l.b16 %v49
  %v555 = vunpack.c.l.b16 %v50
  %v556 = vunpack.c.l.b16 %v51
  %v557 = vunpack.c.l.b16 %v52
  %v558 = vunpack.c.l.b16 %v53
  %v559 = vunpack.c.l.b16 %v54
  %v560 = vunpack.c.l.b16 %v55
  %v561 = vunpack.c.l.b16 %v56
  %v562 = vunpack.c.l.b16 %v57
  %v563 = vunpack.c.l.b16 %v58
  %v564 = vunpack.c.l.b16 %v59
  %v565 = vunpack.c.l.b16 %v60
  %v566 = vunpack.c.l.b16 %v61
  %v567 = vunpack.c.l.b16 %v62
  %v568 = vunpack.c.l.b16 %v63
  %v569 = vunpack.c.l.b16 %v64
  %v570 = vunpack.c.l.b16 %v65
  %v571 = vunpack.c.l.b16 %v66
  %v572 = vunpack.c.l.b16 %v67
  %v573 = vunpack.c.l.b16 %v68
  %v574 = vunpack.c.l.b16 %v69
  %v575 = vunpack.c.l.b16 %v70
  %v576 = vunpack.c.l.b16 %v71
  %v577 = vunpack.c.l.b16 %v72
  %v578 = vunpack.c.l.b16 %v73
  %v579 = vunpack.c.l.b16 %v74
  %v580 = vunpack.c.l.b16 %v75
  %v581 = vunpack.c.l.b16 %v76
  %v582 = vunpack.c.l.b16 %v77
  %v583 = vunpack.c.l.b16 %v78
  %v584 = vunpack.c.l.b16 %v79
  %v585 = vunpack.c.l.b16 %v80
  %v586 = vunpack.c.l.b16 %v81
  %v587 = vunpack.c.l.b16 %v82
  %v588 = vunpack.c.l.b16 %v83
  %v589 = vunpack.c.l.b16 %v84
  %v590 = vunpack.c.l.b16 %v85
  %v591 = vunpack.c.l.b16 %v86
  %v592 = vunpack.c.l.b16 %v87
  %v593 = vunpack.c.l.b16 %v88
  %v594 = vunpack.c.l.b16 %v89
  %v595 = vunpack.c.l.b16 %v90
  %v596 = vunpack.c.l.b16 %v91
  %v597 = vunpack.c.l.b16 %v92
  %v598 = vunpack.c.l.b16 %v93
  %v599 = vunpack.c.l.b16 %v94
  %v600 = vunpack.c.l.b16 %v95
  %v601 = vunpack.c.l.b16 %v96
  %v602 = vunpack.c.l.b16 %v97
  %v603 = vunpack.c.l.b16 %v98
  %v604 = vunpack.c.l.b16 %v99
  %v605 = vunpack.c.l.b16 %v100
  %v606 = vunpack.c.l.b16 %v101
  %v607 = vunpack.c.l.b16 %v102
  %v608 = vunpack.c.l.b16 %v103
  %v609 = vunpack.c.l.b16 %v104
  %v610 = vunpack.c.l.b16 %v105
  %v611 = vunpack.c.l.b16 %v106
  %v612 = vunpack.c.l.b16 %v107
  %v613 = vunpack.c.l.b16 %v108
  %v614 = vunpack.c.l.b16 %v109
  %v615 = vunpack.c.l.b16 %v110
  %v616 = vunpack.c.l.b16 %v111
  %v617 = vunpack.c.l.b16 %v112
  %v618 = vunpack.c.l.b16 %v113
  %v619 = vunpack.c.l.b16 %v114
  %v620 = vunpack.c.l.b16 %v115
  %v621 = vunpack.c.l.b16 %v116
  %v622 = vunpack.c.l.b16 %v117
  %v623 = vunpack.c.l.b16 %v118
  %v624 = vunpack.c.l.b16 %v119
  %v625 = vunpack.c.l.b16 %v120
  %v626 = vunpack.c.l.b16 %v121
  %v627 = vunpack.c.l.b16 %v122
  %v628 = vunpack.c.l.b16 %v123
  %v629 = vunpack.c.l.b16 %v124
  %v630 = vunpack.c.l.b16 %v125
  %v631 = vunpack.c.l.b16 %v126
  %v632 = vunpack.c.l.b16 %v127
  %v633 = vunpack.c.l.b16 %v128
  %v634 = vunpack.c.l.b16 %v129
  %v635 = vunpack.c.l.b16 %v130
  %v636 = vunpack.c.l.b16 %v131
  %v637 = vunpack.c.l.b16 %v132
  %v638 = vunpack.c.l.b16 %v133
  %v639 = vunpack.c.l.b16 %v134
  %v640 = vunpack.c.l.b16 %v135
  %v641 = vunpack.c.l.b16 %v136
  %v642 = vunpack.c.l.b16 %v137
  %v643 = vunpack.c.l.b16 %v138
  %v644 = vunpack.c.l.b16 %v139
  %v645 = vunpack.c.l.b16 %v140
  %v646 = vunpack.c.l.b16 %v141
  %v647 = vunpack.c.l.b16 %v142
  %v648 = vunpack.c.l.b16 %v143
  %v649 = vunpack.c.l.b16 %v144
  %v650 = vunpack.c.l.b16 %v145
  %v651 = vunpack.c.l.b16 %v146
  %v652 = vunpack.c.l.b16 %v147
  %v653 = vunpack.c.l.b16 %v148
  %v654 = vunpack.c.l.b16 %v149
  %v655 = vunpack.c.l.b16 %v150
  %v656 = vunpack.c.l.b16 %v151
  %v657 = vunpack.c.l.b16 %v152
  %v658 = vunpack.c.l.b16 %v153
  %v659 = vunpack.c.l.b16 %v154
  %v660 = vunpack.c.l.b16 %v155
  %v661 = vunpack.c.l.b16 %v156
  %v662 = vunpack.c.l.b16 %v157
  %v663 = vunpack.c.l.b16 %v158
  %v664 = vunpack.c.l.b16 %v159
  %v665 = vunpack.c.l.b16 %v160
  %v666 = vunpack.c.l.b16 %v161
  %v667 = vunpack.c.l.b16 %v162
  %v668 = vunpack.c.l.b16 %v163
  %v669 = vunpack.c.l.b16 %v164
  %v670 = vunpack.c.l.b16 %v165
  %v671 = vunpack.c.l.b16 %v166
  %v672 = vunpack.c.l.b16 %v167
  %v673 = vunpack.c.l.b16 %v168
  %v674 = vunpack.c.l.b16 %v169
  %v675 = vunpack.c.l.b16 %v170
  %v676 = vunpack.c.l.b16 %v171
  %v677 = vunpack.c.l.b16 %v172
  %v678 = vunpack.c.l.b16 %v173
  %v679 = vunpack.c.l.b16 %v174
  %v680 = vunpack.c.l.b16 %v175
  %v681 = vunpack.c.l.b16 %v176
  %v682 = vunpack.c.l.b16 %v177
  %v683 = vunpack.c.l.b16 %v178
  %v684 = vunpack.c.l.b16 %v179
  %v685 = vunpack.c.l.b16 %v180
  %v686 = vunpack.c.l.b16 %v181
  %v687 = vunpack.c.l.b16 %v182
  %v688 = vunpack.c.l.b16 %v183
  %v689 = vunpack.c.l.b16 %v184
  %v690 = vunpack.c.l.b16 %v185
  %v691 = vunpack.c.l.b16 %v186
  %v692 = vunpack.c.l.b16 %v187
  %v693 = vunpack.c.l.b16 %v188
  %v694 = vunpack.c.l.b16 %v189
  %v695 = vunpack.c.l.b16 %v190
  %v696 = vunpack.c.l.b16 %v191
  %v697 = vunpack.c.l.b16 %v192
  %v698 = vunpack.c.l.b16 %v193
  %v699 = vunpack.c.l.b16 %v194
  %v700 = vunpack.c.l.b16 %v195
  %v701 = vunpack.c.l.b16 %v196
  %v702 = vunpack.c.l.b16 %v197
  %v703 = vunpack.c.l.b16 %v198
  %v704 = vunpack.c.l.b16 %v199
  %v705 = vunpack.c.l.b16 %v200
  %v706 = vunpack.c.l.b16 %v201
  %v707 = vunpack.c.l.b16 %v202
  %v708 = vunpack.c.l.b16 %v203
  %v709 = vunpack.c.l.b16 %v204
  %v710 = vunpack.c.l.b16 %v205
  %v711 = vunpack.c.l.b16 %v206
  %v712 = vunpack.c.l.b16 %v207
  %v713 = vunpack.c.l.b16 %v208
  %v714 = vunpack.c.l.b16 %v209
  %v715 = vunpack.c.l.b16 %v210
  %v716 = vunpack.c.l.b16 %v211
  %v717 = vunpack.c.l.b16 %v212
  %v718 = vunpack.c.l.b16 %v213
  %v719 = vunpack.c.l.b16 %v214
  %v720 = vunpack.c.l.b16 %v215
  %v721 = vunpack.c.l.b16 %v216
  %v722 = vunpack.c.l.b16 %v217
  %v723 = vunpack.c.l.b16 %v218
  %v724 = vunpack.c.l.b16 %v219
  %v725 = vunpack.c.l.b16 %v220
  %v726 = vunpack.c.l.b16 %v221
  %v727 = vunpack.c.l.b16 %v222
  %v728 = vunpack.c.l.b16 %v223
  %v729 = vunpack.c.l.b16 %v224
  %v730 = vunpack.c.l.b16 %v225
  %v731 = vunpack.c.l.b16 %v226
  %v732 = vunpack.c.l.b16 %v227
  %v733 = vunpack.c.l.b16 %v228
  %v734 = vunpack.c.l.b16 %v229
  %v735 = vunpack.c.l.b16 %v230
  %v736 = vunpack.c.l.b16 %v231
  %v737 = vunpack.c.l.b16 %v232
  %v738 = vunpack.c.l.b16 %v233
  %v739 = vunpack.c.l.b16 %v234
  %v740 = vunpack.c.l.b16 %v235
  %v741 = vunpack.c.l.b16 %v236
  %v742 = vunpack.c.l.b16 %v237
  %v743 = vunpack.c.l.b16 %v238
  %v744 = vunpack.c.l.b16 %v239
  %v745 = vunpack.c.l.b16 %v240
  %v746 = vunpack.c.l.b16 %v241
  %v747 = vunpack.c.l.b16 %v242
  %v748 = vunpack.c.l.b16 %v243
  %v749 = vunpack.c.l.b16 %v244
  %v750 = vpack.c.b16 %v535, %v534
  %v751 = vpack.c.b16 %v537, %v536
  %v752 = vpack.c.b16 %v539, %v538
  %v753 = vpack.c.b16 %v541, %v540
  %v754 = vpack.c.b16 %v543, %v542
  %v755 = vpack.c.b16 %v545, %v544
  %v756 = vpack.c.b16 %v547, %v546
  %v757 = vpack.c.b16 %v549, %v548
  %v758 = vpack.c.b16 %v551, %v550
  %v759 = vpack.c.b16 %v553, %v552
  %v760 = vpack.c.b16 %v555, %v554
  %v761 = vpack.c.b16 %v557, %v556
  %v762 = vpack.c.b16 %v559, %v558
  %v763 = vpack.c.b16 %v561, %v560
  %v764 = vpack.c.b16 %v563, %v562
  %v765 = vpack.c.b16 %v565, %v564
  %v766 = vpack.c.b16 %v567, %v566
  %v767 = vpack.c.b16 %v569, %v568
  %v768 = vpack.c.b16 %v571, %v570
  %v769 = vpack.c.b16 %v573, %v572
  %v770 = vpack.c.b16 %v575, %v574
  %v771 = vpack.c.b16 %v577, %v576
  %v772 = vpack.c.b16 %v579, %v578
  %v773 = vpack.c.b16 %v581, %v580
  %v774 = vpack.c.b16 %v583, %v582
  %v775 = vpack.c.b16 %v585, %v584
  %v776 = vpack.c.b16 %v587, %v586
  %v777 = vpack.c.b16 %v589, %v588
  %v778 = vpack.c.b16 %v591, %v590
  %v779 = vpack.c.b16 %v593, %v592
  %v780 = vpack.c.b16 %v595, %v594
  %v781 = vpack.c.b16 %v597, %v596
  %v782 = vpack.c.b16 %v599, %v598
  %v783 = vpack.c.b16 %v601, %v600
  %v784 = vpack.c.b16 %v603, %v602
  %v785 = vpack.c.b16 %v605, %v604
  %v786 = vpack.c.b16 %v607, %v606
  %v787 = vpack.c.b16 %v609, %v608
  %v788 = vpack.c.b16 %v611, %v610
  %v789 = vpack.c.b16 %v613, %v612
  %v790 = vpack.c.b16 %v615, %v614
  %v791 = vpack.c.b16 %v617, %v616
  %v792 = vpack.c.b16 %v619, %v618
  %v793 = vpack.c.b16 %v621, %v620
  %v794 = vpack.c.b16 %v623, %v622
  %v795 = vpack.c.b16 %v625, %v624
  %v796 = vpack.c.b16 %v627, %v626
  %v797 = vpack.c.b16 %v629, %v628
  %v798 = vpack.c.b16 %v631, %v630
  %v799 = vpack.c.b16 %v633, %v632
  %v800 = vpack.c.b16 %v635, %v634
  %v801 = vpack.c.b16 %v637, %v636
  %v802 = vpack.c.b16 %v639, %v638
  %v803 = vpack.c.b16 %v641, %v640
  %v804 = vpack.c.b16 %v643, %v642
  %v805 = vpack.c.b16 %v645, %v644
  %v806 = vpack.c.b16 %v647, %v646
  %v807 = vpack.c.b16 %v649, %v648
  %v808 = vpack.c.b16 %v651, %v650
  %v809 = vpack.c.b16 %v653, %v652
  %v810 = vpack.c.b16 %v655, %v654
  %v811 = vpack.c.b16 %v657, %v656
  %v812 = vpack.c.b16 %v659, %v658
  %v813 = vpack.c.b16 %v661, %v660
  %v814 = vpack.c.b16 %v663, %v662
  %v815 = vpack.c.b16 %v665, %v664
  %v816 = vpack.c.b16 %v667, %v666
  %v817 = vpack.c.b16 %v669, %v668
  %v818 = vpack.c.b16 %v671, %v670
  %v819 = vpack.c.b16 %v673, %v672
  %v820 = vpack.c.b16 %v675, %v674
  %v821 = vpack.c.b16 %v677, %v676
  %v822 = vpack.c.b16 %v679, %v678
  %v823 = vpack.c.b16 %v681, %v680
  %v824 = vpack.c.b16 %v683, %v682
  %v825 = vpack.c.b16 %v685, %v684
  %v826 = vpack.c.b16 %v687, %v686
  %v827 = vpack.c.b16 %v689, %v688
  %v828 = vpack.c.b16 %v691, %v690
  %v829 = vpack.c.b16 %v693, %v692
  %v830 = vpack.c.b16 %v695, %v694
  %v831 = vpack.c.b16 %v697, %v696
  %v832 = vpack.c.b16 %v699, %v698
  %v833 = vpack.c.b16 %v701, %v700
  %v834 = vpack.c.b16 %v703, %v702
  %v835 = vpack.c.b16 %v705, %v704
  %v836 = vpack.c.b16 %v707, %v706
  %v837 = vpack.c.b16 %v709, %v708
  %v838 = vpack.c.b16 %v711, %v710
  %v839 = vpack.c.b16 %v713, %v712
  %v840 = vpack.c.b16 %v715, %v714
  %v841 = vpack.c.b16 %v717, %v716
  %v842 = vpack.c.b16 %v719, %v718
  %v843 = vpack.c.b16 %v721, %v720
  %v844 = vpack.c.b16 %v723, %v722
  %v845 = vpack.c.b16 %v725, %v724
  %v846 = vpack.c.b16 %v727, %v726
  %v847 = vpack.c.b16 %v729, %v728
  %v848 = vpack.c.b16 %v731, %v730
  %v849 = vpack.c.b16 %v733, %v732
  %v850 = vpack.c.b16 %v735, %v734
  %v851 = vpack.c.b16 %v737, %v736
  %v852 = vpack.c.b16 %v739, %v738
  %v853 = vpack.c.b16 %v741, %v740
  %v854 = vpack.c.b16 %v743, %v742
  %v855 = vpack.c.b16 %v745, %v744
  %v856 = vpack.c.b16 %v747, %v746
  %v857 = vpack.c.b16 %v749, %v748
  %vm966 = vcmask 523264
  %v968 = vsel %vm966, %v304, 0
  %970 = vmatpush.bf16.msra.mxu0 %v757
  %971 = vmatpush.bf16.msra.mxu0 %v756
  %972 = vmatpush.bf16.msra.mxu0 %v755
  %973 = vmatpush.bf16.msra.mxu0 %v754
  %974 = vmatpush.bf16.msra.mxu0 %v753
  %975 = vmatpush.bf16.msra.mxu0 %v752
  %976 = vmatpush.bf16.msra.mxu0 %v751
  %977 = vmatpush.bf16.msra.mxu0 %v750
  %978 = vmatmul.bf16.gmra.mxu0 %v291
  %v979 = vpop.f32.mrf.mxu0
  %v980 = vadd.f32 %v247, %v979
  %v981 = vpop.f32.mrf.mxu0
  %v982 = vadd.f32 %v247, %v981
  %983 = vdwg.mxu0
  %984 = vmatpush.bf16.msra.mxu0 %v765
  %985 = vmatpush.bf16.msra.mxu0 %v764
  %986 = vmatpush.bf16.msra.mxu0 %v763
  %987 = vmatpush.bf16.msra.mxu0 %v762
  %988 = vmatpush.bf16.msra.mxu0 %v761
  %989 = vmatpush.bf16.msra.mxu0 %v760
  %990 = vmatpush.bf16.msra.mxu0 %v759
  %991 = vmatpush.bf16.msra.mxu0 %v758
  %992 = vmatmul.bf16.gmra.mxu0 %v292
  %v993 = vpop.f32.mrf.mxu0
  %v994 = vadd.f32 %v980, %v993
  %v995 = vpop.f32.mrf.mxu0
  %v996 = vadd.f32 %v982, %v995
  %997 = vdwg.mxu0
  %998 = vmatpush.bf16.msra.mxu0 %v773
  %999 = vmatpush.bf16.msra.mxu0 %v772
  %1000 = vmatpush.bf16.msra.mxu0 %v771
  %1001 = vmatpush.bf16.msra.mxu0 %v770
  %1002 = vmatpush.bf16.msra.mxu0 %v769
  %1003 = vmatpush.bf16.msra.mxu0 %v768
  %1004 = vmatpush.bf16.msra.mxu0 %v767
  %1005 = vmatpush.bf16.msra.mxu0 %v766
  %1006 = vmatmul.bf16.gmra.mxu0 %v293
  %v1007 = vpop.f32.mrf.mxu0
  %v1008 = vadd.f32 %v994, %v1007
  %v1009 = vpop.f32.mrf.mxu0
  %v1010 = vadd.f32 %v996, %v1009
  %1011 = vdwg.mxu0
  %1012 = vmatpush.bf16.msra.mxu0 %v781
  %1013 = vmatpush.bf16.msra.mxu0 %v780
  %1014 = vmatpush.bf16.msra.mxu0 %v779
  %1015 = vmatpush.bf16.msra.mxu0 %v778
  %1016 = vmatpush.bf16.msra.mxu0 %v777
  %1017 = vmatpush.bf16.msra.mxu0 %v776
  %1018 = vmatpush.bf16.msra.mxu0 %v775
  %1019 = vmatpush.bf16.msra.mxu0 %v774
  %1020 = vmatmul.bf16.gmra.mxu0 %v294
  %v1021 = vpop.f32.mrf.mxu0
  %v1022 = vadd.f32 %v1008, %v1021
  %v1023 = vpop.f32.mrf.mxu0
  %v1024 = vadd.f32 %v1010, %v1023
  %1025 = vdwg.mxu0
  %1026 = vmatpush.bf16.msra.mxu0 %v789
  %1027 = vmatpush.bf16.msra.mxu0 %v788
  %1028 = vmatpush.bf16.msra.mxu0 %v787
  %1029 = vmatpush.bf16.msra.mxu0 %v786
  %1030 = vmatpush.bf16.msra.mxu0 %v785
  %1031 = vmatpush.bf16.msra.mxu0 %v784
  %1032 = vmatpush.bf16.msra.mxu0 %v783
  %1033 = vmatpush.bf16.msra.mxu0 %v782
  %1034 = vmatmul.bf16.gmra.mxu0 %v295
  %v1035 = vpop.f32.mrf.mxu0
  %v1036 = vadd.f32 %v1022, %v1035
  %v1037 = vpop.f32.mrf.mxu0
  %v1038 = vadd.f32 %v1024, %v1037
  %1039 = vdwg.mxu0
  %1040 = vmatpush.bf16.msra.mxu0 %v797
  %1041 = vmatpush.bf16.msra.mxu0 %v796
  %1042 = vmatpush.bf16.msra.mxu0 %v795
  %1043 = vmatpush.bf16.msra.mxu0 %v794
  %1044 = vmatpush.bf16.msra.mxu0 %v793
  %1045 = vmatpush.bf16.msra.mxu0 %v792
  %1046 = vmatpush.bf16.msra.mxu0 %v791
  %1047 = vmatpush.bf16.msra.mxu0 %v790
  %1048 = vmatmul.bf16.gmra.mxu0 %v296
  %v1049 = vpop.f32.mrf.mxu0
  %v1050 = vadd.f32 %v1036, %v1049
  %v1051 = vpop.f32.mrf.mxu0
  %v1052 = vadd.f32 %v1038, %v1051
  %1053 = vdwg.mxu0
  %1054 = vmatpush.bf16.msra.mxu0 %v805
  %1055 = vmatpush.bf16.msra.mxu0 %v804
  %1056 = vmatpush.bf16.msra.mxu0 %v803
  %1057 = vmatpush.bf16.msra.mxu0 %v802
  %1058 = vmatpush.bf16.msra.mxu0 %v801
  %1059 = vmatpush.bf16.msra.mxu0 %v800
  %1060 = vmatpush.bf16.msra.mxu0 %v799
  %1061 = vmatpush.bf16.msra.mxu0 %v798
  %1062 = vmatmul.bf16.gmra.mxu0 %v297
  %v1063 = vpop.f32.mrf.mxu0
  %v1064 = vadd.f32 %v1050, %v1063
  %v1065 = vpop.f32.mrf.mxu0
  %v1066 = vadd.f32 %v1052, %v1065
  %1067 = vdwg.mxu0
  %1068 = vmatpush.bf16.msra.mxu0 %v813
  %1069 = vmatpush.bf16.msra.mxu0 %v812
  %1070 = vmatpush.bf16.msra.mxu0 %v811
  %1071 = vmatpush.bf16.msra.mxu0 %v810
  %1072 = vmatpush.bf16.msra.mxu0 %v809
  %1073 = vmatpush.bf16.msra.mxu0 %v808
  %1074 = vmatpush.bf16.msra.mxu0 %v807
  %1075 = vmatpush.bf16.msra.mxu0 %v806
  %1076 = vmatmul.bf16.gmra.mxu0 %v298
  %v1077 = vpop.f32.mrf.mxu0
  %v1078 = vadd.f32 %v1064, %v1077
  %v1079 = vpop.f32.mrf.mxu0
  %v1080 = vadd.f32 %v1066, %v1079
  %1081 = vdwg.mxu0
  %1082 = vmatpush.bf16.msra.mxu0 %v821
  %1083 = vmatpush.bf16.msra.mxu0 %v820
  %1084 = vmatpush.bf16.msra.mxu0 %v819
  %1085 = vmatpush.bf16.msra.mxu0 %v818
  %1086 = vmatpush.bf16.msra.mxu0 %v817
  %1087 = vmatpush.bf16.msra.mxu0 %v816
  %1088 = vmatpush.bf16.msra.mxu0 %v815
  %1089 = vmatpush.bf16.msra.mxu0 %v814
  %1090 = vmatmul.bf16.gmra.mxu0 %v299
  %v1091 = vpop.f32.mrf.mxu0
  %v1092 = vadd.f32 %v1078, %v1091
  %v1093 = vpop.f32.mrf.mxu0
  %v1094 = vadd.f32 %v1080, %v1093
  %1095 = vdwg.mxu0
  %1096 = vmatpush.bf16.msra.mxu0 %v829
  %1097 = vmatpush.bf16.msra.mxu0 %v828
  %1098 = vmatpush.bf16.msra.mxu0 %v827
  %1099 = vmatpush.bf16.msra.mxu0 %v826
  %1100 = vmatpush.bf16.msra.mxu0 %v825
  %1101 = vmatpush.bf16.msra.mxu0 %v824
  %1102 = vmatpush.bf16.msra.mxu0 %v823
  %1103 = vmatpush.bf16.msra.mxu0 %v822
  %1104 = vmatmul.bf16.gmra.mxu0 %v300
  %v1105 = vpop.f32.mrf.mxu0
  %v1106 = vadd.f32 %v1092, %v1105
  %v1107 = vpop.f32.mrf.mxu0
  %v1108 = vadd.f32 %v1094, %v1107
  %1109 = vdwg.mxu0
  %1110 = vmatpush.bf16.msra.mxu0 %v837
  %1111 = vmatpush.bf16.msra.mxu0 %v836
  %1112 = vmatpush.bf16.msra.mxu0 %v835
  %1113 = vmatpush.bf16.msra.mxu0 %v834
  %1114 = vmatpush.bf16.msra.mxu0 %v833
  %1115 = vmatpush.bf16.msra.mxu0 %v832
  %1116 = vmatpush.bf16.msra.mxu0 %v831
  %1117 = vmatpush.bf16.msra.mxu0 %v830
  %1118 = vmatmul.bf16.gmra.mxu0 %v301
  %v1119 = vpop.f32.mrf.mxu0
  %v1120 = vadd.f32 %v1106, %v1119
  %v1121 = vpop.f32.mrf.mxu0
  %v1122 = vadd.f32 %v1108, %v1121
  %1123 = vdwg.mxu0
  %1124 = vmatpush.bf16.msra.mxu0 %v845
  %1125 = vmatpush.bf16.msra.mxu0 %v844
  %1126 = vmatpush.bf16.msra.mxu0 %v843
  %1127 = vmatpush.bf16.msra.mxu0 %v842
  %1128 = vmatpush.bf16.msra.mxu0 %v841
  %1129 = vmatpush.bf16.msra.mxu0 %v840
  %1130 = vmatpush.bf16.msra.mxu0 %v839
  %1131 = vmatpush.bf16.msra.mxu0 %v838
  %1132 = vmatmul.bf16.gmra.mxu0 %v302
  %v1133 = vpop.f32.mrf.mxu0
  %v1134 = vadd.f32 %v1120, %v1133
  %v1135 = vpop.f32.mrf.mxu0
  %v1136 = vadd.f32 %v1122, %v1135
  %1137 = vdwg.mxu0
  %1138 = vmatpush.bf16.msra.mxu0 %v853
  %1139 = vmatpush.bf16.msra.mxu0 %v852
  %1140 = vmatpush.bf16.msra.mxu0 %v851
  %1141 = vmatpush.bf16.msra.mxu0 %v850
  %1142 = vmatpush.bf16.msra.mxu0 %v849
  %1143 = vmatpush.bf16.msra.mxu0 %v848
  %1144 = vmatpush.bf16.msra.mxu0 %v847
  %1145 = vmatpush.bf16.msra.mxu0 %v846
  %1146 = vmatmul.bf16.gmra.mxu0 %v303
  %v1147 = vpop.f32.mrf.mxu0
  %v1148 = vadd.f32 %v1134, %v1147
  %v1149 = vpop.f32.mrf.mxu0
  %v1150 = vadd.f32 %v1136, %v1149
  %1151 = vdwg.mxu0
  %1152 = vmatpush.bf16.msra.mxu0 0
  %1153 = vmatpush.bf16.msra.mxu0 0
  %1154 = vmatpush.bf16.msra.mxu0 0
  %1155 = vmatpush.bf16.msra.mxu0 0
  %1156 = vmatpush.bf16.msra.mxu0 %v857
  %1157 = vmatpush.bf16.msra.mxu0 %v856
  %1158 = vmatpush.bf16.msra.mxu0 %v855
  %1159 = vmatpush.bf16.msra.mxu0 %v854
  %1160 = vmatmul.bf16.gmra.mxu0 %v968
  %v1161 = vpop.f32.mrf.mxu0
  %v1162 = vadd.f32 %v1148, %v1161
  %v1163 = vpop.f32.mrf.mxu0
  %v1164 = vadd.f32 %v1150, %v1163
  %1165 = vdwg.mxu0
  %vm1166 = vcmp.ge.f32.partialorder %v1162, 0.0
  %vm1167 = vcmp.ge.f32.partialorder %v1164, 0.0
  %v1168 = vmul.f32 %v1162, 0.1
  %v1169 = vmul.f32 %v1164, 0.1
  %v1170 = vsel %vm1166, %v1162, %v1168
  %v1171 = vsel %vm1167, %v1164, %v1169
  %1172 = vst.msk [vmem:[%s3] sm:$0xff] %vm966, %v1170
  %1173 = vst.msk [vmem:[%s3 + $0x8] sm:$0xff] %vm966, %v1171
  // Predicated region
  $region14: #{run_encoder.13} parent=0 // pred_check
    _
  $region15: #{run_encoder.13} parent=0 // pred_check_branch
    %1175 = sbr.rel (0) target = $region17
  $region16: #{run_encoder.13} parent=0 // pred_region
    _
  $region17: #{run_encoder.13} parent=0 // pred_fallthru
    _
  // Predicated region
  $region18: #{run_encoder.13} parent=0 // pred_check
    _
  $region19: #{run_encoder.13} parent=0 // pred_check_branch
    %1177 = sbr.rel (0) target = $region21
  $region20: #{run_encoder.13} parent=0 // pred_region
    _
  $region21: #{run_encoder.13} parent=0 // pred_fallthru
    _

// kernel: run_encoder.18
$region0: #{run_encoder.18}
  #allocation0 [shape = 'u32[]', space=smem, size = 0x4, offset = 0x4, fixed_abs, tag = 'smem constant byte address 0x4 - core index']
  #allocation1 [shape = 'u32[72,128]{1,0:T(1,128)}', space=vmem, size = 0x9000, scoped, tag = 'internal scratch']
  %s0 = inlined_call_operand.vmem [shape: bf16[2,256], index: 0, kind: input, shape index: {}]
  %s1 = inlined_call_operand.vmem [shape: bf16[256,512], index: 1, kind: input, shape index: {}]
  %s2 = inlined_call_operand.vmem [shape: f32[1,512], index: 2, kind: input, shape index: {}]
  %s3 = inlined_call_operand.vmem [shape: bf16[2,512], index: 3, kind: output, shape index: {}]
  %s4 = sld [smem:[#allocation0]]
  $region83: #{run_encoder.18} parent=0
    _
  %s6 = ssub.s32 1, %s4
  %s7 = scalar_select 0, %s6, %s4
  $region1: #{run_encoder.18} parent=0
    #allocation2 [shape = 'u8[262144]{0}', space=vmem, size = 0x40000, scoped, tag = 'input window, operand 1']
    loop: start=0, step=1, limit=4
    $region2: #{run_encoder.18} parent=1 // loop_pre_header
      _
    $region3: #{run_encoder.18} parent=1 // loop_header
      %s9 = sphi 0, %s13
      %p10 = scmp.ge.s32.totalorder %s9, 4
      %s16 = sphi 0, %s28
      %s17 = sphi 0, %s24
      %s18 = sphi 0, %s16
      %s19 = sphi 0, %s17
      %s20 = sphi 0, %s18
      %s21 = sphi 0, %s19
      %s31 = sphi 0, %s33
      %s34 = sphi 0, %s31
      %s35 = sphi 0, %s34
      %s51 = sphi 0, %s35
      %s57 = sphi 0, %s59
      %s60 = sphi 0, %s57
      %s61 = sphi 0, %s60
      %s77 = sphi 0, %s61
      %s83 = sphi 0, %s85
      %s86 = sphi 0, %s83
      %s87 = sphi 0, %s86
      %s103 = sphi 0, %s87
      %s111 = sphi 0, %s113
      %s114 = sphi 0, %s111
      %s115 = sphi 0, %s114
      %s131 = sphi 0, %s115
    $region4: #{run_encoder.18} parent=1 // loop_header_branch
      %12 = sbr.rel (%p10) target = $region8
    $region5: #{run_encoder.18} parent=1 // loop_body
      %s14 = ssub.s32 %s9, 1
      %s15 = ssub.s32 %s9, 2
      %s22 = sadd.s32 1, %s17
      %p23 = scmp.ge.s32.totalorder %s22, 2
      %s24 = scalar_select %p23, 0, %s22
      %s25 = sadd.s32 1, %s16
      %s26 = scalar_select %p23, %s25, %s16
      %p27 = scmp.ge.s32.totalorder %s26, 1
      %s28 = scalar_select %p27, 0, %s26
      %s29 = ssub.s32 %s16, %s28
      %p30 = scmp.eq.s32.totalorder %s29, 0
      %s32 = sadd.s32 %s31, 1
      %s33 = scalar_select %p30, %s31, %s32
      %p36 = pneg %p30
      %p37 = scmp.eq.s32.totalorder %s9, 1
      %p38 = por %p36, %p37
      %p39 = scmp.ne.s32.totalorder %s31, %s34
      %p40 = scmp.eq.s32.totalorder %s9, 0
      %p41 = por %p39, %p40
      %p42 = scmp.ne.s32.totalorder %s31, %s34
      %p43 = scmp.eq.s32.totalorder %s14, 1
      %p44 = por %p42, %p43
      %p45 = scmp.ne.s32.totalorder %s34, %s35
      %p46 = scmp.eq.s32.totalorder %s14, 0
      %p47 = por %p45, %p46
      %p48 = scmp.ne.s32.totalorder %s34, %s35
      %p49 = scmp.eq.s32.totalorder %s15, 1
      %p50 = por %p48, %p49
      %p52 = scmp.ne.s32.totalorder %s35, %s51
      %p53 = scmp.eq.s32.totalorder %s15, 0
      %p54 = por %p52, %p53
      %s55 = ssub.s32 %s17, %s24
      %p56 = scmp.eq.s32.totalorder %s55, 0
      %s58 = sadd.s32 %s57, 1
      %s59 = scalar_select %p56, %s57, %s58
      %p62 = pneg %p56
      %p63 = scmp.eq.s32.totalorder %s9, 1
      %p64 = por %p62, %p63
      %p65 = scmp.ne.s32.totalorder %s57, %s60
      %p66 = scmp.eq.s32.totalorder %s9, 0
      %p67 = por %p65, %p66
      %p68 = scmp.ne.s32.totalorder %s57, %s60
      %p69 = scmp.eq.s32.totalorder %s14, 1
      %p70 = por %p68, %p69
      %p71 = scmp.ne.s32.totalorder %s60, %s61
      %p72 = scmp.eq.s32.totalorder %s14, 0
      %p73 = por %p71, %p72
      %p74 = scmp.ne.s32.totalorder %s60, %s61
      %p75 = scmp.eq.s32.totalorder %s15, 1
      %p76 = por %p74, %p75
      %p78 = scmp.ne.s32.totalorder %s61, %s77
      %p79 = scmp.eq.s32.totalorder %s15, 0
      %p80 = por %p78, %p79
      %s81 = ssub.s32 %s17, %s24
      %p82 = scmp.eq.s32.totalorder %s81, 0
      %s84 = sadd.s32 %s83, 1
      %s85 = scalar_select %p82, %s83, %s84
      %p88 = pneg %p82
      %p89 = scmp.eq.s32.totalorder %s9, 1
      %p90 = por %p88, %p89
      %p91 = scmp.ne.s32.totalorder %s83, %s86
      %p92 = scmp.eq.s32.totalorder %s9, 0
      %p93 = por %p91, %p92
      %p94 = scmp.ne.s32.totalorder %s83, %s86
      %p95 = scmp.eq.s32.totalorder %s14, 1
      %p96 = por %p94, %p95
      %p97 = scmp.ne.s32.totalorder %s86, %s87
      %p98 = scmp.eq.s32.totalorder %s14, 0
      %p99 = por %p97, %p98
      %p100 = scmp.ne.s32.totalorder %s86, %s87
      %p101 = scmp.eq.s32.totalorder %s15, 1
      %p102 = por %p100, %p101
      %p104 = scmp.ne.s32.totalorder %s87, %s103
      %p105 = scmp.eq.s32.totalorder %s15, 0
      %p106 = por %p104, %p105
      %s107 = ssub.s32 %s16, %s28
      %s108 = ssub.s32 %s17, %s24
      %s109 = sor.u32 %s107, %s108
      %p110 = scmp.eq.s32.totalorder %s109, 0
      %s112 = sadd.s32 %s111, 1
      %s113 = scalar_select %p110, %s111, %s112
      %p116 = pneg %p110
      %p117 = scmp.eq.s32.totalorder %s9, 1
      %p118 = por %p116, %p117
      %p119 = scmp.ne.s32.totalorder %s111, %s114
      %p120 = scmp.eq.s32.totalorder %s9, 0
      %p121 = por %p119, %p120
      %p122 = scmp.ne.s32.totalorder %s111, %s114
      %p123 = scmp.eq.s32.totalorder %s14, 1
      %p124 = por %p122, %p123
      %p125 = scmp.ne.s32.totalorder %s114, %s115
      %p126 = scmp.eq.s32.totalorder %s14, 0
      %p127 = por %p125, %p126
      %p128 = scmp.ne.s32.totalorder %s114, %s115
      %p129 = scmp.eq.s32.totalorder %s15, 1
      %p130 = por %p128, %p129
      %p132 = scmp.ne.s32.totalorder %s115, %s131
      %p133 = scmp.eq.s32.totalorder %s15, 0
      %p134 = por %p132, %p133
      %p135 = scmp.le.s32.totalorder 1, %s9
      %p136 = scmp.lt.s32.totalorder %s9, 3
      %p137 = pnand %p135, %p136
      %p138 = pneg %p137
      // Predicated region
      $region9: #{run_encoder.18} parent=5 // pred_check
        _
      $region10: #{run_encoder.18} parent=5 // pred_check_branch
        %140 = sbr.rel (%p137) target = $region12
      $region11: #{run_encoder.18} parent=5 // pred_region
        %s141 = ssub.s32 %s9, 1
        // Predicated region
        $region13: #{run_encoder.18} parent=11 // pred_check
          %p142 = pneg %p47
        $region14: #{run_encoder.18} parent=11 // pred_check_branch
          %144 = sbr.rel (%p142) target = $region16
        $region15: #{run_encoder.18} parent=11 // pred_region
          %p145 = scmp.lt.s32.totalorder %s18, 0
          %s146 = scalar_select %p145, %s18, 0
          %s147 = smul.addr %s146, 2
          %s148 = scalar_lea.vmem %s0, %s147
        $region16: #{run_encoder.18} parent=11 // pred_fallthru
          _
      $region12: #{run_encoder.18} parent=5 // pred_fallthru
        _
      %p149 = scmp.lt.s32.totalorder %s9, 2
      // Predicated region
      $region17: #{run_encoder.18} parent=5 // pred_check
        %p150 = pneg %p149
      $region18: #{run_encoder.18} parent=5 // pred_check_branch
        %152 = sbr.rel (%p150) target = $region20
      $region19: #{run_encoder.18} parent=5 // pred_region
        // Predicated region
        $region21: #{run_encoder.18} parent=19 // pred_check
          %p153 = pneg %p67
        $region22: #{run_encoder.18} parent=19 // pred_check_branch
          %155 = sbr.rel (%p153) target = $region24
        $region23: #{run_encoder.18} parent=19 // pred_region
          %s156 = sand.u32 %s57, 1
          %s157 = sand.u32 %s57, 1
          %s158 = smul.addr %s157, 256
          %s159 = scalar_lea.vmem [#allocation2], %s158
          %s160 = smul.u32 2, %s17
          %s161 = smul.addr %s160, 4
          %s162 = scalar_lea.vmem %s1, %s161
          // Predicated region
          $region25: #{run_encoder.18} parent=23 // pred_check
            _
          $region26: #{run_encoder.18} parent=23 // pred_check_branch
            %164 = sbr.rel (0) target = $region28
          $region27: #{run_encoder.18} parent=23 // pred_region
            // Predicated region
            $region29: #{run_encoder.18} parent=27 // pred_check
              _
            $region30: #{run_encoder.18} parent=27 // pred_check_branch
              %166 = sbr.rel (0) target = $region32
            $region31: #{run_encoder.18} parent=27 // pred_region
              // Predicated region
              $region44: #{run_encoder.18} parent=31 // pred_check
                _
              $region45: #{run_encoder.18} parent=31 // pred_check_branch
                %244 = sbr.rel (0) target = $region47
              $region46: #{run_encoder.18} parent=31 // pred_region
                loop: start=0, step=1, limit=1
                $region48: #{run_encoder.18} parent=46 // loop_pre_header
                  _
                $region49: #{run_encoder.18} parent=46 // loop_header
                  %s246 = sphi 0, %s250
                  %p247 = scmp.ge.s32.totalorder %s246, 1
                  %s251 = sphi %s162, %s162
                  %s252 = sphi %s159, %s159
                $region50: #{run_encoder.18} parent=46 // loop_header_branch
                  %249 = sbr.rel (%p247) target = $region54
                $region51: #{run_encoder.18} parent=46 // loop_body
                  %v253 = vld [vmem:[%s251] sm:$0xff]
                  %254 = vst [vmem:[%s252] sm:$0xff] %v253
                  %v255 = vld [vmem:[%s251 + $0x10] sm:$0xff]
                  %256 = vst [vmem:[%s252 + $0x8] sm:$0xff] %v255
                  %v257 = vld [vmem:[%s251 + $0x20] sm:$0xff]
                  %258 = vst [vmem:[%s252 + $0x10] sm:$0xff] %v257
                  %v259 = vld [vmem:[%s251 + $0x30] sm:$0xff]
                  %260 = vst [vmem:[%s252 + $0x18] sm:$0xff] %v259
                  %v261 = vld [vmem:[%s251 + $0x40] sm:$0xff]
                  %262 = vst [vmem:[%s252 + $0x20] sm:$0xff] %v261
                  %v263 = vld [vmem:[%s251 + $0x50] sm:$0xff]
                  %264 = vst [vmem:[%s252 + $0x28] sm:$0xff] %v263
                  %v265 = vld [vmem:[%s251 + $0x60] sm:$0xff]
                  %266 = vst [vmem:[%s252 + $0x30] sm:$0xff] %v265
                  %v267 = vld [vmem:[%s251 + $0x70] sm:$0xff]
                  %268 = vst [vmem:[%s252 + $0x38] sm:$0xff] %v267
                  %v269 = vld [vmem:[%s251 + $0x80] sm:$0xff]
                  %270 = vst [vmem:[%s252 + $0x40] sm:$0xff] %v269
                  %v271 = vld [vmem:[%s251 + $0x90] sm:$0xff]
                  %272 = vst [vmem:[%s252 + $0x48] sm:$0xff] %v271
                  %v273 = vld [vmem:[%s251 + $0xa0] sm:$0xff]
                  %274 = vst [vmem:[%s252 + $0x50] sm:$0xff] %v273
                  %v275 = vld [vmem:[%s251 + $0xb0] sm:$0xff]
                  %276 = vst [vmem:[%s252 + $0x58] sm:$0xff] %v275
                  %v277 = vld [vmem:[%s251 + $0xc0] sm:$0xff]
                  %278 = vst [vmem:[%s252 + $0x60] sm:$0xff] %v277
                  %v279 = vld [vmem:[%s251 + $0xd0] sm:$0xff]
                  %280 = vst [vmem:[%s252 + $0x68] sm:$0xff] %v279
                  %v281 = vld [vmem:[%s251 + $0xe0] sm:$0xff]
                  %282 = vst [vmem:[%s252 + $0x70] sm:$0xff] %v281
                  %v283 = vld [vmem:[%s251 + $0xf0] sm:$0xff]
                  %284 = vst [vmem:[%s252 + $0x78] sm:$0xff] %v283
                  %v285 = vld [vmem:[%s251 + $0x100] sm:$0xff]
                  %286 = vst [vmem:[%s252 + $0x80] sm:$0xff] %v285
                  %v287 = vld [vmem:[%s251 + $0x110] sm:$0xff]
                  %288 = vst [vmem:[%s252 + $0x88] sm:$0xff] %v287
                  %v289 = vld [vmem:[%s251 + $0x120] sm:$0xff]
                  %290 = vst [vmem:[%s252 + $0x90] sm:$0xff] %v289
                  %v291 = vld [vmem:[%s251 + $0x130] sm:$0xff]
                  %292 = vst [vmem:[%s252 + $0x98] sm:$0xff] %v291
                  %v293 = vld [vmem:[%s251 + $0x140] sm:$0xff]
                  %294 = vst [vmem:[%s252 + $0xa0] sm:$0xff] %v293
                  %v295 = vld [vmem:[%s251 + $0x150] sm:$0xff]
                  %296 = vst [vmem:[%s252 + $0xa8] sm:$0xff] %v295
                  %v297 = vld [vmem:[%s251 + $0x160] sm:$0xff]
                  %298 = vst [vmem:[%s252 + $0xb0] sm:$0xff] %v297
                  %v299 = vld [vmem:[%s251 + $0x170] sm:$0xff]
                  %300 = vst [vmem:[%s252 + $0xb8] sm:$0xff] %v299
                  %v301 = vld [vmem:[%s251 + $0x180] sm:$0xff]
                  %302 = vst [vmem:[%s252 + $0xc0] sm:$0xff] %v301
                  %v303 = vld [vmem:[%s251 + $0x190] sm:$0xff]
                  %304 = vst [vmem:[%s252 + $0xc8] sm:$0xff] %v303
                  %v305 = vld [vmem:[%s251 + $0x1a0] sm:$0xff]
                  %306 = vst [vmem:[%s252 + $0xd0] sm:$0xff] %v305
                  %v307 = vld [vmem:[%s251 + $0x1b0] sm:$0xff]
                  %308 = vst [vmem:[%s252 + $0xd8] sm:$0xff] %v307
                  %v309 = vld [vmem:[%s251 + $0x1c0] sm:$0xff]
                  %310 = vst [vmem:[%s252 + $0xe0] sm:$0xff] %v309
                  %v311 = vld [vmem:[%s251 + $0x1d0] sm:$0xff]
                  %312 = vst [vmem:[%s252 + $0xe8] sm:$0xff] %v311
                  %v313 = vld [vmem:[%s251 + $0x1e0] sm:$0xff]
                  %314 = vst [vmem:[%s252 + $0xf0] sm:$0xff] %v313
                  %v315 = vld [vmem:[%s251 + $0x1f0] sm:$0xff]
                  %316 = vst [vmem:[%s252 + $0xf8] sm:$0xff] %v315
                $region52: #{run_encoder.18} parent=46 // loop_footer
                  %s250 = sadd.s32 1, %s246
                $region53: #{run_encoder.18} parent=46 // loop_footer_branch
                  %245 = sbr.rel target = $region49
                $region54: #{run_encoder.18} parent=46 // loop_exit
                  _
              $region47: #{run_encoder.18} parent=31 // pred_fallthru
                _
              // Predicated region
              $region55: #{run_encoder.18} parent=31 // pred_check
                _
              $region56: #{run_encoder.18} parent=31 // pred_check_branch
                %318 = sbr.rel target = $region58
              $region57: #{run_encoder.18} parent=31 // pred_region
                _
              $region58: #{run_encoder.18} parent=31 // pred_fallthru
                _
            $region32: #{run_encoder.18} parent=27 // pred_fallthru
              _
            // Predicated region
            $region33: #{run_encoder.18} parent=27 // pred_check
              _
            $region34: #{run_encoder.18} parent=27 // pred_check_branch
              %168 = sbr.rel target = $region36
            $region35: #{run_encoder.18} parent=27 // pred_region
              %s170 = ssub.s32 256, 1
              loop: start=0, step=1, limit=1
              $region37: #{run_encoder.18} parent=35 // loop_pre_header
                _
              $region38: #{run_encoder.18} parent=35 // loop_header
                %s172 = sphi 0, %s176
                %p173 = scmp.ge.s32.totalorder %s172, 1
                %s177 = sphi %s162, %s162
                %s178 = sphi %s159, %s159
              $region39: #{run_encoder.18} parent=35 // loop_header_branch
                %175 = sbr.rel (%p173) target = $region43
              $region40: #{run_encoder.18} parent=35 // loop_body
                %v179 = vld [vmem:[%s177] sm:%s170]
                %180 = vst [vmem:[%s178] sm:%s170] %v179
                %v181 = vld [vmem:[%s177 + $0x10] sm:%s170]
                %182 = vst [vmem:[%s178 + $0x8] sm:%s170] %v181
                %v183 = vld [vmem:[%s177 + $0x20] sm:%s170]
                %184 = vst [vmem:[%s178 + $0x10] sm:%s170] %v183
                %v185 = vld [vmem:[%s177 + $0x30] sm:%s170]
                %186 = vst [vmem:[%s178 + $0x18] sm:%s170] %v185
                %v187 = vld [vmem:[%s177 + $0x40] sm:%s170]
                %188 = vst [vmem:[%s178 + $0x20] sm:%s170] %v187
                %v189 = vld [vmem:[%s177 + $0x50] sm:%s170]
                %190 = vst [vmem:[%s178 + $0x28] sm:%s170] %v189
                %v191 = vld [vmem:[%s177 + $0x60] sm:%s170]
                %192 = vst [vmem:[%s178 + $0x30] sm:%s170] %v191
                %v193 = vld [vmem:[%s177 + $0x70] sm:%s170]
                %194 = vst [vmem:[%s178 + $0x38] sm:%s170] %v193
                %v195 = vld [vmem:[%s177 + $0x80] sm:%s170]
                %196 = vst [vmem:[%s178 + $0x40] sm:%s170] %v195
                %v197 = vld [vmem:[%s177 + $0x90] sm:%s170]
                %198 = vst [vmem:[%s178 + $0x48] sm:%s170] %v197
                %v199 = vld [vmem:[%s177 + $0xa0] sm:%s170]
                %200 = vst [vmem:[%s178 + $0x50] sm:%s170] %v199
                %v201 = vld [vmem:[%s177 + $0xb0] sm:%s170]
                %202 = vst [vmem:[%s178 + $0x58] sm:%s170] %v201
                %v203 = vld [vmem:[%s177 + $0xc0] sm:%s170]
                %204 = vst [vmem:[%s178 + $0x60] sm:%s170] %v203
                %v205 = vld [vmem:[%s177 + $0xd0] sm:%s170]
                %206 = vst [vmem:[%s178 + $0x68] sm:%s170] %v205
                %v207 = vld [vmem:[%s177 + $0xe0] sm:%s170]
                %208 = vst [vmem:[%s178 + $0x70] sm:%s170] %v207
                %v209 = vld [vmem:[%s177 + $0xf0] sm:%s170]
                %210 = vst [vmem:[%s178 + $0x78] sm:%s170] %v209
                %v211 = vld [vmem:[%s177 + $0x100] sm:%s170]
                %212 = vst [vmem:[%s178 + $0x80] sm:%s170] %v211
                %v213 = vld [vmem:[%s177 + $0x110] sm:%s170]
                %214 = vst [vmem:[%s178 + $0x88] sm:%s170] %v213
                %v215 = vld [vmem:[%s177 + $0x120] sm:%s170]
                %216 = vst [vmem:[%s178 + $0x90] sm:%s170] %v215
                %v217 = vld [vmem:[%s177 + $0x130] sm:%s170]
                %218 = vst [vmem:[%s178 + $0x98] sm:%s170] %v217
                %v219 = vld [vmem:[%s177 + $0x140] sm:%s170]
                %220 = vst [vmem:[%s178 + $0xa0] sm:%s170] %v219
                %v221 = vld [vmem:[%s177 + $0x150] sm:%s170]
                %222 = vst [vmem:[%s178 + $0xa8] sm:%s170] %v221
                %v223 = vld [vmem:[%s177 + $0x160] sm:%s170]
                %224 = vst [vmem:[%s178 + $0xb0] sm:%s170] %v223
                %v225 = vld [vmem:[%s177 + $0x170] sm:%s170]
                %226 = vst [vmem:[%s178 + $0xb8] sm:%s170] %v225
                %v227 = vld [vmem:[%s177 + $0x180] sm:%s170]
                %228 = vst [vmem:[%s178 + $0xc0] sm:%s170] %v227
                %v229 = vld [vmem:[%s177 + $0x190] sm:%s170]
                %230 = vst [vmem:[%s178 + $0xc8] sm:%s170] %v229
                %v231 = vld [vmem:[%s177 + $0x1a0] sm:%s170]
                %232 = vst [vmem:[%s178 + $0xd0] sm:%s170] %v231
                %v233 = vld [vmem:[%s177 + $0x1b0] sm:%s170]
                %234 = vst [vmem:[%s178 + $0xd8] sm:%s170] %v233
                %v235 = vld [vmem:[%s177 + $0x1c0] sm:%s170]
                %236 = vst [vmem:[%s178 + $0xe0] sm:%s170] %v235
                %v237 = vld [vmem:[%s177 + $0x1d0] sm:%s170]
                %238 = vst [vmem:[%s178 + $0xe8] sm:%s170] %v237
                %v239 = vld [vmem:[%s177 + $0x1e0] sm:%s170]
                %240 = vst [vmem:[%s178 + $0xf0] sm:%s170] %v239
                %v241 = vld [vmem:[%s177 + $0x1f0] sm:%s170]
                %242 = vst [vmem:[%s178 + $0xf8] sm:%s170] %v241
              $region41: #{run_encoder.18} parent=35 // loop_footer
                %s176 = sadd.s32 1, %s172
              $region42: #{run_encoder.18} parent=35 // loop_footer_branch
                %171 = sbr.rel target = $region38
              $region43: #{run_encoder.18} parent=35 // loop_exit
                _
            $region36: #{run_encoder.18} parent=27 // pred_fallthru
              _
          $region28: #{run_encoder.18} parent=23 // pred_fallthru
            _
          %319 = vnop
        $region24: #{run_encoder.18} parent=19 // pred_fallthru
          _
        // Predicated region
        $region59: #{run_encoder.18} parent=19 // pred_check
          %p320 = pneg %p93
        $region60: #{run_encoder.18} parent=19 // pred_check_branch
          %322 = sbr.rel (%p320) target = $region62
        $region61: #{run_encoder.18} parent=19 // pred_region
          %s323 = smul.u32 2, %s17
          %p324 = scmp.lt.s32.totalorder %s323, 3
          %s325 = scalar_select %p324, %s323, 3
          %s326 = scalar_lea.vmem %s2, %s325
          %s327 = smul.u32 2, %s17
        $region62: #{run_encoder.18} parent=19 // pred_fallthru
          _
      $region20: #{run_encoder.18} parent=5 // pred_fallthru
        _
      %p328 = scmp.le.s32.totalorder 1, %s9
      %p329 = scmp.lt.s32.totalorder %s9, 3
      %p330 = pnand %p328, %p329
      %p331 = pneg %p330
      // Predicated region
      $region63: #{run_encoder.18} parent=5 // pred_check
        _
      $region64: #{run_encoder.18} parent=5 // pred_check_branch
        %333 = sbr.rel (%p330) target = $region66
      $region65: #{run_encoder.18} parent=5 // pred_region
        %s334 = ssub.s32 %s9, 1
        %s335 = sand.u32 %s60, 1
        %s336 = sand.u32 %s60, 1
        %s337 = smul.addr %s336, 256
        %s338 = scalar_lea.vmem [#allocation2], %s337
        // Predicated region
        $region67: #{run_encoder.18} parent=65 // pred_check
          %p339 = pneg %p73
        $region68: #{run_encoder.18} parent=65 // pred_check_branch
          %341 = sbr.rel (%p339) target = $region70
        $region69: #{run_encoder.18} parent=65 // pred_region
          _
        $region70: #{run_encoder.18} parent=65 // pred_fallthru
          _
        %p342 = scmp.lt.s32.totalorder %s18, 0
        %s343 = scalar_select %p342, %s18, 0
        %s344 = smul.addr %s343, 2
        %s345 = scalar_lea.vmem %s0, %s344
        %p346 = pneg %p47
        %p347 = pneg %p44
        %s348 = sand.u32 %s60, 1
        %s349 = sand.u32 %s60, 1
        %s350 = smul.addr %s349, 256
        %s351 = scalar_lea.vmem [#allocation2], %s350
        %p352 = pneg %p73
        %p353 = pneg %p70
        %s354 = smul.u32 2, %s19
        %p355 = scmp.lt.s32.totalorder %s354, 3
        %s356 = scalar_select %p355, %s354, 3
        %s357 = scalar_lea.vmem %s2, %s356
        %p358 = pneg %p99
        %p359 = pneg %p96
        %p360 = pneg %p127
        %p361 = pneg %p124
        %s362 = smul.u32 2, %s19
        %p363 = scmp.lt.s32.totalorder %s18, 0
        %s364 = scalar_select %p363, %s18, 0
        %p365 = scmp.lt.s32.totalorder %s362, 3
        %s366 = scalar_select %p365, %s362, 3
        %s367 = smul.addr %s364, 4
        %s368 = sadd.s32 %s366, %s367
        %s369 = scalar_lea.vmem %s3, %s368
        %p370 = scmp.lt.s32.totalorder %s18, 0
        %s371 = scalar_select %p370, %s18, 0
        %s372 = smul.addr %s371, 2
        %s373 = scalar_lea.vmem %s0, %s372
        %s374 = smul.u32 2, %s19
        %s375 = smul.u32 2, %s19
        %p376 = scmp.lt.s32.totalorder %s375, 3
        %s377 = scalar_select %p376, %s375, 3
        %s378 = scalar_lea.vmem %s2, %s377
        %s379 = smul.u32 2, %s19
        %s380 = smul.u32 2, %s19
        %p381 = scmp.lt.s32.totalorder %s18, 0
        %s382 = scalar_select %p381, %s18, 0
        %p383 = scmp.lt.s32.totalorder %s380, 3
        %s384 = scalar_select %p383, %s380, 3
        %s385 = smul.addr %s382, 4
        %s386 = sadd.s32 %s384, %s385
        %s387 = scalar_lea.vmem %s3, %s386
        %s388 = smul.u32 2, %s19
        %v389 = vld [vmem:[%s373] sm:$0x3]
        %v390 = vld [vmem:[%s338] sm:$0xff]
        %v391 = vld [vmem:[%s338 + $0x8] sm:$0xff]
        %v392 = vld [vmem:[%s338 + $0x10] sm:$0xff]
        %v393 = vld [vmem:[%s338 + $0x18] sm:$0xff]
        %v394 = vld [vmem:[%s338 + $0x20] sm:$0xff]
        %v395 = vld [vmem:[%s338 + $0x28] sm:$0xff]
        %v396 = vld [vmem:[%s338 + $0x30] sm:$0xff]
        %v397 = vld [vmem:[%s338 + $0x38] sm:$0xff]
        %v398 = vld [vmem:[%s338 + $0x40] sm:$0xff]
        %v399 = vld [vmem:[%s338 + $0x48] sm:$0xff]
        %v400 = vld [vmem:[%s338 + $0x50] sm:$0xff]
        %v401 = vld [vmem:[%s338 + $0x58] sm:$0xff]
        %v402 = vld [vmem:[%s338 + $0x60] sm:$0xff]
        %v403 = vld [vmem:[%s338 + $0x68] sm:$0xff]
        %v404 = vld [vmem:[%s338 + $0x70] sm:$0xff]
        %v405 = vld [vmem:[%s338 + $0x78] sm:$0xff]
        %v406 = vld [vmem:[%s338 + $0x80] sm:$0xff]
        %v407 = vld [vmem:[%s338 + $0x88] sm:$0xff]
        %v408 = vld [vmem:[%s338 + $0x90] sm:$0xff]
        %v409 = vld [vmem:[%s338 + $0x98] sm:$0xff]
        %v410 = vld [vmem:[%s338 + $0xa0] sm:$0xff]
        %v411 = vld [vmem:[%s338 + $0xa8] sm:$0xff]
        %v412 = vld [vmem:[%s338 + $0xb0] sm:$0xff]
        %v413 = vld [vmem:[%s338 + $0xb8] sm:$0xff]
        %v414 = vld [vmem:[%s338 + $0xc0] sm:$0xff]
        %v415 = vld [vmem:[%s338 + $0xc8] sm:$0xff]
        %v416 = vld [vmem:[%s338 + $0xd0] sm:$0xff]
        %v417 = vld [vmem:[%s338 + $0xd8] sm:$0xff]
        %v418 = vld [vmem:[%s338 + $0xe0] sm:$0xff]
        %v419 = vld [vmem:[%s338 + $0xe8] sm:$0xff]
        %v420 = vld [vmem:[%s338 + $0xf0] sm:$0xff]
        %v421 = vld [vmem:[%s338 + $0xf8] sm:$0xff]
        %v422 = vld [vmem:[%s378] sm:$0x3]
        %v424 = vperm.slane %v422, 0
        %v425 = vperm.slane %v422, 1
        %429 = vst [vmem:[#allocation1] ss:$9 sm:$0xff] %v389
        %v430 = vld [vmem:[#allocation1] sm:$0xff]
        %v431 = vld [vmem:[#allocation1 + $0x9] sm:$0xff]
        %v466 = vunpack.c.l.b16 %v390
        %v467 = vunpack.c.h.b16 %v390
        %v468 = vunpack.c.l.b16 %v391
        %v469 = vunpack.c.h.b16 %v391
        %v470 = vunpack.c.l.b16 %v392
        %v471 = vunpack.c.h.b16 %v392
        %v472 = vunpack.c.l.b16 %v393
        %v473 = vunpack.c.h.b16 %v393
        %v474 = vunpack.c.l.b16 %v394
        %v475 = vunpack.c.h.b16 %v394
        %v476 = vunpack.c.l.b16 %v395
        %v477 = vunpack.c.h.b16 %v395
        %v478 = vunpack.c.l.b16 %v396
        %v479 = vunpack.c.h.b16 %v396
        %v480 = vunpack.c.l.b16 %v397
        %v481 = vunpack.c.h.b16 %v397
        %v482 = vunpack.c.l.b16 %v398
        %v483 = vunpack.c.h.b16 %v398
        %v484 = vunpack.c.l.b16 %v399
        %v485 = vunpack.c.h.b16 %v399
        %v486 = vunpack.c.l.b16 %v400
        %v487 = vunpack.c.h.b16 %v400
        %v488 = vunpack.c.l.b16 %v401
        %v489 = vunpack.c.h.b16 %v401
        %v490 = vunpack.c.l.b16 %v402
        %v491 = vunpack.c.h.b16 %v402
        %v492 = vunpack.c.l.b16 %v403
        %v493 = vunpack.c.h.b16 %v403
        %v494 = vunpack.c.l.b16 %v404
        %v495 = vunpack.c.h.b16 %v404
        %v496 = vunpack.c.l.b16 %v405
        %v497 = vunpack.c.h.b16 %v405
        %v498 = vunpack.c.l.b16 %v406
        %v499 = vunpack.c.h.b16 %v406
        %v500 = vunpack.c.l.b16 %v407
        %v501 = vunpack.c.h.b16 %v407
        %v502 = vunpack.c.l.b16 %v408
        %v503 = vunpack.c.h.b16 %v408
        %v504 = vunpack.c.l.b16 %v409
        %v505 = vunpack.c.h.b16 %v409
        %v506 = vunpack.c.l.b16 %v410
        %v507 = vunpack.c.h.b16 %v410
        %v508 = vunpack.c.l.b16 %v411
        %v509 = vunpack.c.h.b16 %v411
        %v510 = vunpack.c.l.b16 %v412
        %v511 = vunpack.c.h.b16 %v412
        %v512 = vunpack.c.l.b16 %v413
        %v513 = vunpack.c.h.b16 %v413
        %v514 = vunpack.c.l.b16 %v414
        %v515 = vunpack.c.h.b16 %v414
        %v516 = vunpack.c.l.b16 %v415
        %v517 = vunpack.c.h.b16 %v415
        %v518 = vunpack.c.l.b16 %v416
        %v519 = vunpack.c.h.b16 %v416
        %v520 = vunpack.c.l.b16 %v417
        %v521 = vunpack.c.h.b16 %v417
        %v522 = vunpack.c.l.b16 %v418
        %v523 = vunpack.c.h.b16 %v418
        %v524 = vunpack.c.l.b16 %v419
        %v525 = vunpack.c.h.b16 %v419
        %v526 = vunpack.c.l.b16 %v420
        %v527 = vunpack.c.h.b16 %v420
        %v528 = vunpack.c.l.b16 %v421
        %v529 = vunpack.c.h.b16 %v421
        %v530 = vpack.c.b16 %v468, %v466
        %v531 = vpack.c.b16 %v469, %v467
        %v532 = vpack.c.b16 %v472, %v470
        %v533 = vpack.c.b16 %v473, %v471
        %v534 = vpack.c.b16 %v476, %v474
        %v535 = vpack.c.b16 %v477, %v475
        %v536 = vpack.c.b16 %v480, %v478
        %v537 = vpack.c.b16 %v481, %v479
        %v538 = vpack.c.b16 %v484, %v482
        %v539 = vpack.c.b16 %v485, %v483
        %v540 = vpack.c.b16 %v488, %v486
        %v541 = vpack.c.b16 %v489, %v487
        %v542 = vpack.c.b16 %v492, %v490
        %v543 = vpack.c.b16 %v493, %v491
        %v544 = vpack.c.b16 %v496, %v494
        %v545 = vpack.c.b16 %v497, %v495
        %v546 = vpack.c.b16 %v500, %v498
        %v547 = vpack.c.b16 %v501, %v499
        %v548 = vpack.c.b16 %v504, %v502
        %v549 = vpack.c.b16 %v505, %v503
        %v550 = vpack.c.b16 %v508, %v506
        %v551 = vpack.c.b16 %v509, %v507
        %v552 = vpack.c.b16 %v512, %v510
        %v553 = vpack.c.b16 %v513, %v511
        %v554 = vpack.c.b16 %v516, %v514
        %v555 = vpack.c.b16 %v517, %v515
        %v556 = vpack.c.b16 %v520, %v518
        %v557 = vpack.c.b16 %v521, %v519
        %v558 = vpack.c.b16 %v524, %v522
        %v559 = vpack.c.b16 %v525, %v523
        %v560 = vpack.c.b16 %v528, %v526
        %v561 = vpack.c.b16 %v529, %v527
        %594 = vmatpush.bf16.msra.mxu0 %v544
        %595 = vmatpush.bf16.msra.mxu0 %v542
        %596 = vmatpush.bf16.msra.mxu0 %v540
        %597 = vmatpush.bf16.msra.mxu0 %v538
        %598 = vmatpush.bf16.msra.mxu0 %v536
        %599 = vmatpush.bf16.msra.mxu0 %v534
        %600 = vmatpush.bf16.msra.mxu0 %v532
        %601 = vmatpush.bf16.msra.mxu0 %v530
        %602 = vmatmul.bf16.gmra.mxu0 %v430
        %v603 = vpop.f32.mrf.mxu0
        %v604 = vadd.f32 %v424, %v603
        %v605 = vpop.f32.mrf.mxu0
        %606 = vdwg.mxu0
        %607 = vmatpush.bf16.msra.mxu0 %v560
        %608 = vmatpush.bf16.msra.mxu0 %v558
        %609 = vmatpush.bf16.msra.mxu0 %v556
        %610 = vmatpush.bf16.msra.mxu0 %v554
        %611 = vmatpush.bf16.msra.mxu0 %v552
        %612 = vmatpush.bf16.msra.mxu0 %v550
        %613 = vmatpush.bf16.msra.mxu0 %v548
        %614 = vmatpush.bf16.msra.mxu0 %v546
        %615 = vmatmul.bf16.gmra.mxu0 %v431
        %v616 = vpop.f32.mrf.mxu0
        %v617 = vadd.f32 %v604, %v616
        %v618 = vpop.f32.mrf.mxu0
        %619 = vdwg.mxu0
        %620 = vmatpush.bf16.msra.mxu0 %v545
        %621 = vmatpush.bf16.msra.mxu0 %v543
        %622 = vmatpush.bf16.msra.mxu0 %v541
        %623 = vmatpush.bf16.msra.mxu0 %v539
        %624 = vmatpush.bf16.msra.mxu0 %v537
        %625 = vmatpush.bf16.msra.mxu0 %v535
        %626 = vmatpush.bf16.msra.mxu0 %v533
        %627 = vmatpush.bf16.msra.mxu0 %v531
        %628 = vmatmul.bf16.gmra.mxu0 %v430
        %v629 = vpop.f32.mrf.mxu0
        %v630 = vadd.f32 %v425, %v629
        %v631 = vpop.f32.mrf.mxu0
        %632 = vdwg.mxu0
        %633 = vmatpush.bf16.msra.mxu0 %v561
        %634 = vmatpush.bf16.msra.mxu0 %v559
        %635 = vmatpush.bf16.msra.mxu0 %v557
        %636 = vmatpush.bf16.msra.mxu0 %v555
        %637 = vmatpush.bf16.msra.mxu0 %v553
        %638 = vmatpush.bf16.msra.mxu0 %v551
        %639 = vmatpush.bf16.msra.mxu0 %v549
        %640 = vmatpush.bf16.msra.mxu0 %v547
        %641 = vmatmul.bf16.gmra.mxu0 %v431
        %v642 = vpop.f32.mrf.mxu0
        %v643 = vadd.f32 %v630, %v642
        %v644 = vpop.f32.mrf.mxu0
        %645 = vdwg.mxu0
        %vm646 = vcmp.ge.f32.partialorder %v617, 0.0
        %vm647 = vcmp.ge.f32.partialorder %v643, 0.0
        %v648 = vmul.f32 %v617, 0.1
        %v649 = vmul.f32 %v643, 0.1
        %v650 = vsel %vm646, %v617, %v648
        %v651 = vsel %vm647, %v643, %v649
        %v652 = vpack.c.bf16 %v651, %v650
        %v654 = vrot.slane %v652, 3
        %vm655 = vcmask 1040384
        %v658 = vsel %vm655, %v652, %v654
        %660 = vst [vmem:[%s387] sm:$0x3] %v658
        %s661 = smul.u32 2, %s19
        %p662 = scmp.lt.s32.totalorder %s18, 0
        %s663 = scalar_select %p662, %s18, 0
        %p664 = scmp.lt.s32.totalorder %s661, 3
        %s665 = scalar_select %p664, %s661, 3
        %s666 = smul.addr %s663, 4
        %s667 = sadd.s32 %s665, %s666
        %s668 = scalar_lea.vmem %s3, %s667
        // Predicated region
        $region71: #{run_encoder.18} parent=65 // pred_check
          %p669 = pneg %p124
        $region72: #{run_encoder.18} parent=65 // pred_check_branch
          %671 = sbr.rel (%p669) target = $region74
        $region73: #{run_encoder.18} parent=65 // pred_region
          %s672 = smul.u32 2, %s19
        $region74: #{run_encoder.18} parent=65 // pred_fallthru
          _
      $region66: #{run_encoder.18} parent=5 // pred_fallthru
        _
      %p673 = scmp.le.s32.totalorder 2, %s9
      // Predicated region
      $region75: #{run_encoder.18} parent=5 // pred_check
        %p674 = pneg %p673
      $region76: #{run_encoder.18} parent=5 // pred_check_branch
        %676 = sbr.rel (%p674) target = $region78
      $region77: #{run_encoder.18} parent=5 // pred_region
        %s677 = ssub.s32 %s9, 2
        // Predicated region
        $region79: #{run_encoder.18} parent=77 // pred_check
          %p678 = pneg %p130
        $region80: #{run_encoder.18} parent=77 // pred_check_branch
          %680 = sbr.rel (%p678) target = $region82
        $region81: #{run_encoder.18} parent=77 // pred_region
          %s681 = smul.u32 2, %s21
          %p682 = scmp.lt.s32.totalorder %s20, 0
          %s683 = scalar_select %p682, %s20, 0
          %p684 = scmp.lt.s32.totalorder %s681, 3
          %s685 = scalar_select %p684, %s681, 3
          %s686 = smul.addr %s683, 4
          %s687 = sadd.s32 %s685, %s686
          %s688 = scalar_lea.vmem %s3, %s687
        $region82: #{run_encoder.18} parent=77 // pred_fallthru
          _
      $region78: #{run_encoder.18} parent=5 // pred_fallthru
        _
    $region6: #{run_encoder.18} parent=1 // loop_footer
      %s13 = sadd.s32 1, %s9
    $region7: #{run_encoder.18} parent=1 // loop_footer_branch
      %8 = sbr.rel target = $region3
    $region8: #{run_encoder.18} parent=1 // loop_exit
      _

// kernel: run_encoder.19
$region0: #{run_encoder.19}
  #allocation0 [shape = 'u32[]', space=smem, size = 0x4, offset = 0x4, fixed_abs, tag = 'smem constant byte address 0x4 - core index']
  #allocation1 [shape = 'u32[72,128]{1,0:T(1,128)}', space=vmem, size = 0x9000, scoped, tag = 'internal scratch']
  %s0 = inlined_call_operand.vmem [shape: bf16[2,512], index: 0, kind: input, shape index: {}]
  %s1 = inlined_call_operand.vmem [shape: bf16[512,512], index: 1, kind: input, shape index: {}]
  %s2 = inlined_call_operand.vmem [shape: f32[1,512], index: 2, kind: input, shape index: {}]
  %s3 = inlined_call_operand.vmem [shape: f32[2,512], index: 3, kind: output, shape index: {}]
  %s4 = sld [smem:[#allocation0]]
  $region83: #{run_encoder.19} parent=0
    _
  %s6 = ssub.s32 1, %s4
  %s7 = scalar_select 0, %s6, %s4
  $region1: #{run_encoder.19} parent=0
    #allocation2 [shape = 'u8[524288]{0}', space=vmem, size = 0x80000, scoped, tag = 'input window, operand 1']
    loop: start=0, step=1, limit=4
    $region2: #{run_encoder.19} parent=1 // loop_pre_header
      _
    $region3: #{run_encoder.19} parent=1 // loop_header
      %s9 = sphi 0, %s13
      %p10 = scmp.ge.s32.totalorder %s9, 4
      %s16 = sphi 0, %s28
      %s17 = sphi 0, %s24
      %s18 = sphi 0, %s16
      %s19 = sphi 0, %s17
      %s20 = sphi 0, %s18
      %s21 = sphi 0, %s19
      %s31 = sphi 0, %s33
      %s34 = sphi 0, %s31
      %s35 = sphi 0, %s34
      %s51 = sphi 0, %s35
      %s57 = sphi 0, %s59
      %s60 = sphi 0, %s57
      %s61 = sphi 0, %s60
      %s77 = sphi 0, %s61
      %s83 = sphi 0, %s85
      %s86 = sphi 0, %s83
      %s87 = sphi 0, %s86
      %s103 = sphi 0, %s87
      %s111 = sphi 0, %s113
      %s114 = sphi 0, %s111
      %s115 = sphi 0, %s114
      %s131 = sphi 0, %s115
    $region4: #{run_encoder.19} parent=1 // loop_header_branch
      %12 = sbr.rel (%p10) target = $region8
    $region5: #{run_encoder.19} parent=1 // loop_body
      %s14 = ssub.s32 %s9, 1
      %s15 = ssub.s32 %s9, 2
      %s22 = sadd.s32 1, %s17
      %p23 = scmp.ge.s32.totalorder %s22, 2
      %s24 = scalar_select %p23, 0, %s22
      %s25 = sadd.s32 1, %s16
      %s26 = scalar_select %p23, %s25, %s16
      %p27 = scmp.ge.s32.totalorder %s26, 1
      %s28 = scalar_select %p27, 0, %s26
      %s29 = ssub.s32 %s16, %s28
      %p30 = scmp.eq.s32.totalorder %s29, 0
      %s32 = sadd.s32 %s31, 1
      %s33 = scalar_select %p30, %s31, %s32
      %p36 = pneg %p30
      %p37 = scmp.eq.s32.totalorder %s9, 1
      %p38 = por %p36, %p37
      %p39 = scmp.ne.s32.totalorder %s31, %s34
      %p40 = scmp.eq.s32.totalorder %s9, 0
      %p41 = por %p39, %p40
      %p42 = scmp.ne.s32.totalorder %s31, %s34
      %p43 = scmp.eq.s32.totalorder %s14, 1
      %p44 = por %p42, %p43
      %p45 = scmp.ne.s32.totalorder %s34, %s35
      %p46 = scmp.eq.s32.totalorder %s14, 0
      %p47 = por %p45, %p46
      %p48 = scmp.ne.s32.totalorder %s34, %s35
      %p49 = scmp.eq.s32.totalorder %s15, 1
      %p50 = por %p48, %p49
      %p52 = scmp.ne.s32.totalorder %s35, %s51
      %p53 = scmp.eq.s32.totalorder %s15, 0
      %p54 = por %p52, %p53
      %s55 = ssub.s32 %s17, %s24
      %p56 = scmp.eq.s32.totalorder %s55, 0
      %s58 = sadd.s32 %s57, 1
      %s59 = scalar_select %p56, %s57, %s58
      %p62 = pneg %p56
      %p63 = scmp.eq.s32.totalorder %s9, 1
      %p64 = por %p62, %p63
      %p65 = scmp.ne.s32.totalorder %s57, %s60
      %p66 = scmp.eq.s32.totalorder %s9, 0
      %p67 = por %p65, %p66
      %p68 = scmp.ne.s32.totalorder %s57, %s60
      %p69 = scmp.eq.s32.totalorder %s14, 1
      %p70 = por %p68, %p69
      %p71 = scmp.ne.s32.totalorder %s60, %s61
      %p72 = scmp.eq.s32.totalorder %s14, 0
      %p73 = por %p71, %p72
      %p74 = scmp.ne.s32.totalorder %s60, %s61
      %p75 = scmp.eq.s32.totalorder %s15, 1
      %p76 = por %p74, %p75
      %p78 = scmp.ne.s32.totalorder %s61, %s77
      %p79 = scmp.eq.s32.totalorder %s15, 0
      %p80 = por %p78, %p79
      %s81 = ssub.s32 %s17, %s24
      %p82 = scmp.eq.s32.totalorder %s81, 0
      %s84 = sadd.s32 %s83, 1
      %s85 = scalar_select %p82, %s83, %s84
      %p88 = pneg %p82
      %p89 = scmp.eq.s32.totalorder %s9, 1
      %p90 = por %p88, %p89
      %p91 = scmp.ne.s32.totalorder %s83, %s86
      %p92 = scmp.eq.s32.totalorder %s9, 0
      %p93 = por %p91, %p92
      %p94 = scmp.ne.s32.totalorder %s83, %s86
      %p95 = scmp.eq.s32.totalorder %s14, 1
      %p96 = por %p94, %p95
      %p97 = scmp.ne.s32.totalorder %s86, %s87
      %p98 = scmp.eq.s32.totalorder %s14, 0
      %p99 = por %p97, %p98
      %p100 = scmp.ne.s32.totalorder %s86, %s87
      %p101 = scmp.eq.s32.totalorder %s15, 1
      %p102 = por %p100, %p101
      %p104 = scmp.ne.s32.totalorder %s87, %s103
      %p105 = scmp.eq.s32.totalorder %s15, 0
      %p106 = por %p104, %p105
      %s107 = ssub.s32 %s16, %s28
      %s108 = ssub.s32 %s17, %s24
      %s109 = sor.u32 %s107, %s108
      %p110 = scmp.eq.s32.totalorder %s109, 0
      %s112 = sadd.s32 %s111, 1
      %s113 = scalar_select %p110, %s111, %s112
      %p116 = pneg %p110
      %p117 = scmp.eq.s32.totalorder %s9, 1
      %p118 = por %p116, %p117
      %p119 = scmp.ne.s32.totalorder %s111, %s114
      %p120 = scmp.eq.s32.totalorder %s9, 0
      %p121 = por %p119, %p120
      %p122 = scmp.ne.s32.totalorder %s111, %s114
      %p123 = scmp.eq.s32.totalorder %s14, 1
      %p124 = por %p122, %p123
      %p125 = scmp.ne.s32.totalorder %s114, %s115
      %p126 = scmp.eq.s32.totalorder %s14, 0
      %p127 = por %p125, %p126
      %p128 = scmp.ne.s32.totalorder %s114, %s115
      %p129 = scmp.eq.s32.totalorder %s15, 1
      %p130 = por %p128, %p129
      %p132 = scmp.ne.s32.totalorder %s115, %s131
      %p133 = scmp.eq.s32.totalorder %s15, 0
      %p134 = por %p132, %p133
      %p135 = scmp.le.s32.totalorder 1, %s9
      %p136 = scmp.lt.s32.totalorder %s9, 3
      %p137 = pnand %p135, %p136
      %p138 = pneg %p137
      // Predicated region
      $region9: #{run_encoder.19} parent=5 // pred_check
        _
      $region10: #{run_encoder.19} parent=5 // pred_check_branch
        %140 = sbr.rel (%p137) target = $region12
      $region11: #{run_encoder.19} parent=5 // pred_region
        %s141 = ssub.s32 %s9, 1
        // Predicated region
        $region13: #{run_encoder.19} parent=11 // pred_check
          %p142 = pneg %p47
        $region14: #{run_encoder.19} parent=11 // pred_check_branch
          %144 = sbr.rel (%p142) target = $region16
        $region15: #{run_encoder.19} parent=11 // pred_region
          %p145 = scmp.lt.s32.totalorder %s18, 0
          %s146 = scalar_select %p145, %s18, 0
          %s147 = smul.addr %s146, 4
          %s148 = scalar_lea.vmem %s0, %s147
        $region16: #{run_encoder.19} parent=11 // pred_fallthru
          _
      $region12: #{run_encoder.19} parent=5 // pred_fallthru
        _
      %p149 = scmp.lt.s32.totalorder %s9, 2
      // Predicated region
      $region17: #{run_encoder.19} parent=5 // pred_check
        %p150 = pneg %p149
      $region18: #{run_encoder.19} parent=5 // pred_check_branch
        %152 = sbr.rel (%p150) target = $region20
      $region19: #{run_encoder.19} parent=5 // pred_region
        // Predicated region
        $region21: #{run_encoder.19} parent=19 // pred_check
          %p153 = pneg %p67
        $region22: #{run_encoder.19} parent=19 // pred_check_branch
          %155 = sbr.rel (%p153) target = $region24
        $region23: #{run_encoder.19} parent=19 // pred_region
          %s156 = sand.u32 %s57, 1
          %s157 = sand.u32 %s57, 1
          %s158 = smul.addr %s157, 512
          %s159 = scalar_lea.vmem [#allocation2], %s158
          %s160 = smul.u32 2, %s17
          %s161 = smul.addr %s160, 4
          %s162 = scalar_lea.vmem %s1, %s161
          // Predicated region
          $region25: #{run_encoder.19} parent=23 // pred_check
            _
          $region26: #{run_encoder.19} parent=23 // pred_check_branch
            %164 = sbr.rel (0) target = $region28
          $region27: #{run_encoder.19} parent=23 // pred_region
            // Predicated region
            $region29: #{run_encoder.19} parent=27 // pred_check
              _
            $region30: #{run_encoder.19} parent=27 // pred_check_branch
              %166 = sbr.rel (0) target = $region32
            $region31: #{run_encoder.19} parent=27 // pred_region
              // Predicated region
              $region44: #{run_encoder.19} parent=31 // pred_check
                _
              $region45: #{run_encoder.19} parent=31 // pred_check_branch
                %308 = sbr.rel (0) target = $region47
              $region46: #{run_encoder.19} parent=31 // pred_region
                loop: start=0, step=1, limit=1
                $region48: #{run_encoder.19} parent=46 // loop_pre_header
                  _
                $region49: #{run_encoder.19} parent=46 // loop_header
                  %s310 = sphi 0, %s314
                  %p311 = scmp.ge.s32.totalorder %s310, 1
                  %s315 = sphi %s162, %s162
                  %s316 = sphi %s159, %s159
                $region50: #{run_encoder.19} parent=46 // loop_header_branch
                  %313 = sbr.rel (%p311) target = $region54
                $region51: #{run_encoder.19} parent=46 // loop_body
                  %v317 = vld [vmem:[%s315] sm:$0xff]
                  %318 = vst [vmem:[%s316] sm:$0xff] %v317
                  %v319 = vld [vmem:[%s315 + $0x10] sm:$0xff]
                  %320 = vst [vmem:[%s316 + $0x8] sm:$0xff] %v319
                  %v321 = vld [vmem:[%s315 + $0x20] sm:$0xff]
                  %322 = vst [vmem:[%s316 + $0x10] sm:$0xff] %v321
                  %v323 = vld [vmem:[%s315 + $0x30] sm:$0xff]
                  %324 = vst [vmem:[%s316 + $0x18] sm:$0xff] %v323
                  %v325 = vld [vmem:[%s315 + $0x40] sm:$0xff]
                  %326 = vst [vmem:[%s316 + $0x20] sm:$0xff] %v325
                  %v327 = vld [vmem:[%s315 + $0x50] sm:$0xff]
                  %328 = vst [vmem:[%s316 + $0x28] sm:$0xff] %v327
                  %v329 = vld [vmem:[%s315 + $0x60] sm:$0xff]
                  %330 = vst [vmem:[%s316 + $0x30] sm:$0xff] %v329
                  %v331 = vld [vmem:[%s315 + $0x70] sm:$0xff]
                  %332 = vst [vmem:[%s316 + $0x38] sm:$0xff] %v331
                  %v333 = vld [vmem:[%s315 + $0x80] sm:$0xff]
                  %334 = vst [vmem:[%s316 + $0x40] sm:$0xff] %v333
                  %v335 = vld [vmem:[%s315 + $0x90] sm:$0xff]
                  %336 = vst [vmem:[%s316 + $0x48] sm:$0xff] %v335
                  %v337 = vld [vmem:[%s315 + $0xa0] sm:$0xff]
                  %338 = vst [vmem:[%s316 + $0x50] sm:$0xff] %v337
                  %v339 = vld [vmem:[%s315 + $0xb0] sm:$0xff]
                  %340 = vst [vmem:[%s316 + $0x58] sm:$0xff] %v339
                  %v341 = vld [vmem:[%s315 + $0xc0] sm:$0xff]
                  %342 = vst [vmem:[%s316 + $0x60] sm:$0xff] %v341
                  %v343 = vld [vmem:[%s315 + $0xd0] sm:$0xff]
                  %344 = vst [vmem:[%s316 + $0x68] sm:$0xff] %v343
                  %v345 = vld [vmem:[%s315 + $0xe0] sm:$0xff]
                  %346 = vst [vmem:[%s316 + $0x70] sm:$0xff] %v345
                  %v347 = vld [vmem:[%s315 + $0xf0] sm:$0xff]
                  %348 = vst [vmem:[%s316 + $0x78] sm:$0xff] %v347
                  %v349 = vld [vmem:[%s315 + $0x100] sm:$0xff]
                  %350 = vst [vmem:[%s316 + $0x80] sm:$0xff] %v349
                  %v351 = vld [vmem:[%s315 + $0x110] sm:$0xff]
                  %352 = vst [vmem:[%s316 + $0x88] sm:$0xff] %v351
                  %v353 = vld [vmem:[%s315 + $0x120] sm:$0xff]
                  %354 = vst [vmem:[%s316 + $0x90] sm:$0xff] %v353
                  %v355 = vld [vmem:[%s315 + $0x130] sm:$0xff]
                  %356 = vst [vmem:[%s316 + $0x98] sm:$0xff] %v355
                  %v357 = vld [vmem:[%s315 + $0x140] sm:$0xff]
                  %358 = vst [vmem:[%s316 + $0xa0] sm:$0xff] %v357
                  %v359 = vld [vmem:[%s315 + $0x150] sm:$0xff]
                  %360 = vst [vmem:[%s316 + $0xa8] sm:$0xff] %v359
                  %v361 = vld [vmem:[%s315 + $0x160] sm:$0xff]
                  %362 = vst [vmem:[%s316 + $0xb0] sm:$0xff] %v361
                  %v363 = vld [vmem:[%s315 + $0x170] sm:$0xff]
                  %364 = vst [vmem:[%s316 + $0xb8] sm:$0xff] %v363
                  %v365 = vld [vmem:[%s315 + $0x180] sm:$0xff]
                  %366 = vst [vmem:[%s316 + $0xc0] sm:$0xff] %v365
                  %v367 = vld [vmem:[%s315 + $0x190] sm:$0xff]
                  %368 = vst [vmem:[%s316 + $0xc8] sm:$0xff] %v367
                  %v369 = vld [vmem:[%s315 + $0x1a0] sm:$0xff]
                  %370 = vst [vmem:[%s316 + $0xd0] sm:$0xff] %v369
                  %v371 = vld [vmem:[%s315 + $0x1b0] sm:$0xff]
                  %372 = vst [vmem:[%s316 + $0xd8] sm:$0xff] %v371
                  %v373 = vld [vmem:[%s315 + $0x1c0] sm:$0xff]
                  %374 = vst [vmem:[%s316 + $0xe0] sm:$0xff] %v373
                  %v375 = vld [vmem:[%s315 + $0x1d0] sm:$0xff]
                  %376 = vst [vmem:[%s316 + $0xe8] sm:$0xff] %v375
                  %v377 = vld [vmem:[%s315 + $0x1e0] sm:$0xff]
                  %378 = vst [vmem:[%s316 + $0xf0] sm:$0xff] %v377
                  %v379 = vld [vmem:[%s315 + $0x1f0] sm:$0xff]
                  %380 = vst [vmem:[%s316 + $0xf8] sm:$0xff] %v379
                  %v381 = vld [vmem:[%s315 + $0x200] sm:$0xff]
                  %382 = vst [vmem:[%s316 + $0x100] sm:$0xff] %v381
                  %v383 = vld [vmem:[%s315 + $0x210] sm:$0xff]
                  %384 = vst [vmem:[%s316 + $0x108] sm:$0xff] %v383
                  %v385 = vld [vmem:[%s315 + $0x220] sm:$0xff]
                  %386 = vst [vmem:[%s316 + $0x110] sm:$0xff] %v385
                  %v387 = vld [vmem:[%s315 + $0x230] sm:$0xff]
                  %388 = vst [vmem:[%s316 + $0x118] sm:$0xff] %v387
                  %v389 = vld [vmem:[%s315 + $0x240] sm:$0xff]
                  %390 = vst [vmem:[%s316 + $0x120] sm:$0xff] %v389
                  %v391 = vld [vmem:[%s315 + $0x250] sm:$0xff]
                  %392 = vst [vmem:[%s316 + $0x128] sm:$0xff] %v391
                  %v393 = vld [vmem:[%s315 + $0x260] sm:$0xff]
                  %394 = vst [vmem:[%s316 + $0x130] sm:$0xff] %v393
                  %v395 = vld [vmem:[%s315 + $0x270] sm:$0xff]
                  %396 = vst [vmem:[%s316 + $0x138] sm:$0xff] %v395
                  %v397 = vld [vmem:[%s315 + $0x280] sm:$0xff]
                  %398 = vst [vmem:[%s316 + $0x140] sm:$0xff] %v397
                  %v399 = vld [vmem:[%s315 + $0x290] sm:$0xff]
                  %400 = vst [vmem:[%s316 + $0x148] sm:$0xff] %v399
                  %v401 = vld [vmem:[%s315 + $0x2a0] sm:$0xff]
                  %402 = vst [vmem:[%s316 + $0x150] sm:$0xff] %v401
                  %v403 = vld [vmem:[%s315 + $0x2b0] sm:$0xff]
                  %404 = vst [vmem:[%s316 + $0x158] sm:$0xff] %v403
                  %v405 = vld [vmem:[%s315 + $0x2c0] sm:$0xff]
                  %406 = vst [vmem:[%s316 + $0x160] sm:$0xff] %v405
                  %v407 = vld [vmem:[%s315 + $0x2d0] sm:$0xff]
                  %408 = vst [vmem:[%s316 + $0x168] sm:$0xff] %v407
                  %v409 = vld [vmem:[%s315 + $0x2e0] sm:$0xff]
                  %410 = vst [vmem:[%s316 + $0x170] sm:$0xff] %v409
                  %v411 = vld [vmem:[%s315 + $0x2f0] sm:$0xff]
                  %412 = vst [vmem:[%s316 + $0x178] sm:$0xff] %v411
                  %v413 = vld [vmem:[%s315 + $0x300] sm:$0xff]
                  %414 = vst [vmem:[%s316 + $0x180] sm:$0xff] %v413
                  %v415 = vld [vmem:[%s315 + $0x310] sm:$0xff]
                  %416 = vst [vmem:[%s316 + $0x188] sm:$0xff] %v415
                  %v417 = vld [vmem:[%s315 + $0x320] sm:$0xff]
                  %418 = vst [vmem:[%s316 + $0x190] sm:$0xff] %v417
                  %v419 = vld [vmem:[%s315 + $0x330] sm:$0xff]
                  %420 = vst [vmem:[%s316 + $0x198] sm:$0xff] %v419
                  %v421 = vld [vmem:[%s315 + $0x340] sm:$0xff]
                  %422 = vst [vmem:[%s316 + $0x1a0] sm:$0xff] %v421
                  %v423 = vld [vmem:[%s315 + $0x350] sm:$0xff]
                  %424 = vst [vmem:[%s316 + $0x1a8] sm:$0xff] %v423
                  %v425 = vld [vmem:[%s315 + $0x360] sm:$0xff]
                  %426 = vst [vmem:[%s316 + $0x1b0] sm:$0xff] %v425
                  %v427 = vld [vmem:[%s315 + $0x370] sm:$0xff]
                  %428 = vst [vmem:[%s316 + $0x1b8] sm:$0xff] %v427
                  %v429 = vld [vmem:[%s315 + $0x380] sm:$0xff]
                  %430 = vst [vmem:[%s316 + $0x1c0] sm:$0xff] %v429
                  %v431 = vld [vmem:[%s315 + $0x390] sm:$0xff]
                  %432 = vst [vmem:[%s316 + $0x1c8] sm:$0xff] %v431
                  %v433 = vld [vmem:[%s315 + $0x3a0] sm:$0xff]
                  %434 = vst [vmem:[%s316 + $0x1d0] sm:$0xff] %v433
                  %v435 = vld [vmem:[%s315 + $0x3b0] sm:$0xff]
                  %436 = vst [vmem:[%s316 + $0x1d8] sm:$0xff] %v435
                  %v437 = vld [vmem:[%s315 + $0x3c0] sm:$0xff]
                  %438 = vst [vmem:[%s316 + $0x1e0] sm:$0xff] %v437
                  %v439 = vld [vmem:[%s315 + $0x3d0] sm:$0xff]
                  %440 = vst [vmem:[%s316 + $0x1e8] sm:$0xff] %v439
                  %v441 = vld [vmem:[%s315 + $0x3e0] sm:$0xff]
                  %442 = vst [vmem:[%s316 + $0x1f0] sm:$0xff] %v441
                  %v443 = vld [vmem:[%s315 + $0x3f0] sm:$0xff]
                  %444 = vst [vmem:[%s316 + $0x1f8] sm:$0xff] %v443
                $region52: #{run_encoder.19} parent=46 // loop_footer
                  %s314 = sadd.s32 1, %s310
                $region53: #{run_encoder.19} parent=46 // loop_footer_branch
                  %309 = sbr.rel target = $region49
                $region54: #{run_encoder.19} parent=46 // loop_exit
                  _
              $region47: #{run_encoder.19} parent=31 // pred_fallthru
                _
              // Predicated region
              $region55: #{run_encoder.19} parent=31 // pred_check
                _
              $region56: #{run_encoder.19} parent=31 // pred_check_branch
                %446 = sbr.rel target = $region58
              $region57: #{run_encoder.19} parent=31 // pred_region
                _
              $region58: #{run_encoder.19} parent=31 // pred_fallthru
                _
            $region32: #{run_encoder.19} parent=27 // pred_fallthru
              _
            // Predicated region
            $region33: #{run_encoder.19} parent=27 // pred_check
              _
            $region34: #{run_encoder.19} parent=27 // pred_check_branch
              %168 = sbr.rel target = $region36
            $region35: #{run_encoder.19} parent=27 // pred_region
              %s170 = ssub.s32 256, 1
              loop: start=0, step=1, limit=1
              $region37: #{run_encoder.19} parent=35 // loop_pre_header
                _
              $region38: #{run_encoder.19} parent=35 // loop_header
                %s172 = sphi 0, %s176
                %p173 = scmp.ge.s32.totalorder %s172, 1
                %s177 = sphi %s162, %s162
                %s178 = sphi %s159, %s159
              $region39: #{run_encoder.19} parent=35 // loop_header_branch
                %175 = sbr.rel (%p173) target = $region43
              $region40: #{run_encoder.19} parent=35 // loop_body
                %v179 = vld [vmem:[%s177] sm:%s170]
                %180 = vst [vmem:[%s178] sm:%s170] %v179
                %v181 = vld [vmem:[%s177 + $0x10] sm:%s170]
                %182 = vst [vmem:[%s178 + $0x8] sm:%s170] %v181
                %v183 = vld [vmem:[%s177 + $0x20] sm:%s170]
                %184 = vst [vmem:[%s178 + $0x10] sm:%s170] %v183
                %v185 = vld [vmem:[%s177 + $0x30] sm:%s170]
                %186 = vst [vmem:[%s178 + $0x18] sm:%s170] %v185
                %v187 = vld [vmem:[%s177 + $0x40] sm:%s170]
                %188 = vst [vmem:[%s178 + $0x20] sm:%s170] %v187
                %v189 = vld [vmem:[%s177 + $0x50] sm:%s170]
                %190 = vst [vmem:[%s178 + $0x28] sm:%s170] %v189
                %v191 = vld [vmem:[%s177 + $0x60] sm:%s170]
                %192 = vst [vmem:[%s178 + $0x30] sm:%s170] %v191
                %v193 = vld [vmem:[%s177 + $0x70] sm:%s170]
                %194 = vst [vmem:[%s178 + $0x38] sm:%s170] %v193
                %v195 = vld [vmem:[%s177 + $0x80] sm:%s170]
                %196 = vst [vmem:[%s178 + $0x40] sm:%s170] %v195
                %v197 = vld [vmem:[%s177 + $0x90] sm:%s170]
                %198 = vst [vmem:[%s178 + $0x48] sm:%s170] %v197
                %v199 = vld [vmem:[%s177 + $0xa0] sm:%s170]
                %200 = vst [vmem:[%s178 + $0x50] sm:%s170] %v199
                %v201 = vld [vmem:[%s177 + $0xb0] sm:%s170]
                %202 = vst [vmem:[%s178 + $0x58] sm:%s170] %v201
                %v203 = vld [vmem:[%s177 + $0xc0] sm:%s170]
                %204 = vst [vmem:[%s178 + $0x60] sm:%s170] %v203
                %v205 = vld [vmem:[%s177 + $0xd0] sm:%s170]
                %206 = vst [vmem:[%s178 + $0x68] sm:%s170] %v205
                %v207 = vld [vmem:[%s177 + $0xe0] sm:%s170]
                %208 = vst [vmem:[%s178 + $0x70] sm:%s170] %v207
                %v209 = vld [vmem:[%s177 + $0xf0] sm:%s170]
                %210 = vst [vmem:[%s178 + $0x78] sm:%s170] %v209
                %v211 = vld [vmem:[%s177 + $0x100] sm:%s170]
                %212 = vst [vmem:[%s178 + $0x80] sm:%s170] %v211
                %v213 = vld [vmem:[%s177 + $0x110] sm:%s170]
                %214 = vst [vmem:[%s178 + $0x88] sm:%s170] %v213
                %v215 = vld [vmem:[%s177 + $0x120] sm:%s170]
                %216 = vst [vmem:[%s178 + $0x90] sm:%s170] %v215
                %v217 = vld [vmem:[%s177 + $0x130] sm:%s170]
                %218 = vst [vmem:[%s178 + $0x98] sm:%s170] %v217
                %v219 = vld [vmem:[%s177 + $0x140] sm:%s170]
                %220 = vst [vmem:[%s178 + $0xa0] sm:%s170] %v219
                %v221 = vld [vmem:[%s177 + $0x150] sm:%s170]
                %222 = vst [vmem:[%s178 + $0xa8] sm:%s170] %v221
                %v223 = vld [vmem:[%s177 + $0x160] sm:%s170]
                %224 = vst [vmem:[%s178 + $0xb0] sm:%s170] %v223
                %v225 = vld [vmem:[%s177 + $0x170] sm:%s170]
                %226 = vst [vmem:[%s178 + $0xb8] sm:%s170] %v225
                %v227 = vld [vmem:[%s177 + $0x180] sm:%s170]
                %228 = vst [vmem:[%s178 + $0xc0] sm:%s170] %v227
                %v229 = vld [vmem:[%s177 + $0x190] sm:%s170]
                %230 = vst [vmem:[%s178 + $0xc8] sm:%s170] %v229
                %v231 = vld [vmem:[%s177 + $0x1a0] sm:%s170]
                %232 = vst [vmem:[%s178 + $0xd0] sm:%s170] %v231
                %v233 = vld [vmem:[%s177 + $0x1b0] sm:%s170]
                %234 = vst [vmem:[%s178 + $0xd8] sm:%s170] %v233
                %v235 = vld [vmem:[%s177 + $0x1c0] sm:%s170]
                %236 = vst [vmem:[%s178 + $0xe0] sm:%s170] %v235
                %v237 = vld [vmem:[%s177 + $0x1d0] sm:%s170]
                %238 = vst [vmem:[%s178 + $0xe8] sm:%s170] %v237
                %v239 = vld [vmem:[%s177 + $0x1e0] sm:%s170]
                %240 = vst [vmem:[%s178 + $0xf0] sm:%s170] %v239
                %v241 = vld [vmem:[%s177 + $0x1f0] sm:%s170]
                %242 = vst [vmem:[%s178 + $0xf8] sm:%s170] %v241
                %v243 = vld [vmem:[%s177 + $0x200] sm:%s170]
                %244 = vst [vmem:[%s178 + $0x100] sm:%s170] %v243
                %v245 = vld [vmem:[%s177 + $0x210] sm:%s170]
                %246 = vst [vmem:[%s178 + $0x108] sm:%s170] %v245
                %v247 = vld [vmem:[%s177 + $0x220] sm:%s170]
                %248 = vst [vmem:[%s178 + $0x110] sm:%s170] %v247
                %v249 = vld [vmem:[%s177 + $0x230] sm:%s170]
                %250 = vst [vmem:[%s178 + $0x118] sm:%s170] %v249
                %v251 = vld [vmem:[%s177 + $0x240] sm:%s170]
                %252 = vst [vmem:[%s178 + $0x120] sm:%s170] %v251
                %v253 = vld [vmem:[%s177 + $0x250] sm:%s170]
                %254 = vst [vmem:[%s178 + $0x128] sm:%s170] %v253
                %v255 = vld [vmem:[%s177 + $0x260] sm:%s170]
                %256 = vst [vmem:[%s178 + $0x130] sm:%s170] %v255
                %v257 = vld [vmem:[%s177 + $0x270] sm:%s170]
                %258 = vst [vmem:[%s178 + $0x138] sm:%s170] %v257
                %v259 = vld [vmem:[%s177 + $0x280] sm:%s170]
                %260 = vst [vmem:[%s178 + $0x140] sm:%s170] %v259
                %v261 = vld [vmem:[%s177 + $0x290] sm:%s170]
                %262 = vst [vmem:[%s178 + $0x148] sm:%s170] %v261
                %v263 = vld [vmem:[%s177 + $0x2a0] sm:%s170]
                %264 = vst [vmem:[%s178 + $0x150] sm:%s170] %v263
                %v265 = vld [vmem:[%s177 + $0x2b0] sm:%s170]
                %266 = vst [vmem:[%s178 + $0x158] sm:%s170] %v265
                %v267 = vld [vmem:[%s177 + $0x2c0] sm:%s170]
                %268 = vst [vmem:[%s178 + $0x160] sm:%s170] %v267
                %v269 = vld [vmem:[%s177 + $0x2d0] sm:%s170]
                %270 = vst [vmem:[%s178 + $0x168] sm:%s170] %v269
                %v271 = vld [vmem:[%s177 + $0x2e0] sm:%s170]
                %272 = vst [vmem:[%s178 + $0x170] sm:%s170] %v271
                %v273 = vld [vmem:[%s177 + $0x2f0] sm:%s170]
                %274 = vst [vmem:[%s178 + $0x178] sm:%s170] %v273
                %v275 = vld [vmem:[%s177 + $0x300] sm:%s170]
                %276 = vst [vmem:[%s178 + $0x180] sm:%s170] %v275
                %v277 = vld [vmem:[%s177 + $0x310] sm:%s170]
                %278 = vst [vmem:[%s178 + $0x188] sm:%s170] %v277
                %v279 = vld [vmem:[%s177 + $0x320] sm:%s170]
                %280 = vst [vmem:[%s178 + $0x190] sm:%s170] %v279
                %v281 = vld [vmem:[%s177 + $0x330] sm:%s170]
                %282 = vst [vmem:[%s178 + $0x198] sm:%s170] %v281
                %v283 = vld [vmem:[%s177 + $0x340] sm:%s170]
                %284 = vst [vmem:[%s178 + $0x1a0] sm:%s170] %v283
                %v285 = vld [vmem:[%s177 + $0x350] sm:%s170]
                %286 = vst [vmem:[%s178 + $0x1a8] sm:%s170] %v285
                %v287 = vld [vmem:[%s177 + $0x360] sm:%s170]
                %288 = vst [vmem:[%s178 + $0x1b0] sm:%s170] %v287
                %v289 = vld [vmem:[%s177 + $0x370] sm:%s170]
                %290 = vst [vmem:[%s178 + $0x1b8] sm:%s170] %v289
                %v291 = vld [vmem:[%s177 + $0x380] sm:%s170]
                %292 = vst [vmem:[%s178 + $0x1c0] sm:%s170] %v291
                %v293 = vld [vmem:[%s177 + $0x390] sm:%s170]
                %294 = vst [vmem:[%s178 + $0x1c8] sm:%s170] %v293
                %v295 = vld [vmem:[%s177 + $0x3a0] sm:%s170]
                %296 = vst [vmem:[%s178 + $0x1d0] sm:%s170] %v295
                %v297 = vld [vmem:[%s177 + $0x3b0] sm:%s170]
                %298 = vst [vmem:[%s178 + $0x1d8] sm:%s170] %v297
                %v299 = vld [vmem:[%s177 + $0x3c0] sm:%s170]
                %300 = vst [vmem:[%s178 + $0x1e0] sm:%s170] %v299
                %v301 = vld [vmem:[%s177 + $0x3d0] sm:%s170]
                %302 = vst [vmem:[%s178 + $0x1e8] sm:%s170] %v301
                %v303 = vld [vmem:[%s177 + $0x3e0] sm:%s170]
                %304 = vst [vmem:[%s178 + $0x1f0] sm:%s170] %v303
                %v305 = vld [vmem:[%s177 + $0x3f0] sm:%s170]
                %306 = vst [vmem:[%s178 + $0x1f8] sm:%s170] %v305
              $region41: #{run_encoder.19} parent=35 // loop_footer
                %s176 = sadd.s32 1, %s172
              $region42: #{run_encoder.19} parent=35 // loop_footer_branch
                %171 = sbr.rel target = $region38
              $region43: #{run_encoder.19} parent=35 // loop_exit
                _
            $region36: #{run_encoder.19} parent=27 // pred_fallthru
              _
          $region28: #{run_encoder.19} parent=23 // pred_fallthru
            _
          %447 = vnop
        $region24: #{run_encoder.19} parent=19 // pred_fallthru
          _
        // Predicated region
        $region59: #{run_encoder.19} parent=19 // pred_check
          %p448 = pneg %p93
        $region60: #{run_encoder.19} parent=19 // pred_check_branch
          %450 = sbr.rel (%p448) target = $region62
        $region61: #{run_encoder.19} parent=19 // pred_region
          %s451 = smul.u32 2, %s17
          %p452 = scmp.lt.s32.totalorder %s451, 3
          %s453 = scalar_select %p452, %s451, 3
          %s454 = scalar_lea.vmem %s2, %s453
          %s455 = smul.u32 2, %s17
        $region62: #{run_encoder.19} parent=19 // pred_fallthru
          _
      $region20: #{run_encoder.19} parent=5 // pred_fallthru
        _
      %p456 = scmp.le.s32.totalorder 1, %s9
      %p457 = scmp.lt.s32.totalorder %s9, 3
      %p458 = pnand %p456, %p457
      %p459 = pneg %p458
      // Predicated region
      $region63: #{run_encoder.19} parent=5 // pred_check
        _
      $region64: #{run_encoder.19} parent=5 // pred_check_branch
        %461 = sbr.rel (%p458) target = $region66
      $region65: #{run_encoder.19} parent=5 // pred_region
        %s462 = ssub.s32 %s9, 1
        %s463 = sand.u32 %s60, 1
        %s464 = sand.u32 %s60, 1
        %s465 = smul.addr %s464, 512
        %s466 = scalar_lea.vmem [#allocation2], %s465
        // Predicated region
        $region67: #{run_encoder.19} parent=65 // pred_check
          %p467 = pneg %p73
        $region68: #{run_encoder.19} parent=65 // pred_check_branch
          %469 = sbr.rel (%p467) target = $region70
        $region69: #{run_encoder.19} parent=65 // pred_region
          _
        $region70: #{run_encoder.19} parent=65 // pred_fallthru
          _
        %p470 = scmp.lt.s32.totalorder %s18, 0
        %s471 = scalar_select %p470, %s18, 0
        %s472 = smul.addr %s471, 4
        %s473 = scalar_lea.vmem %s0, %s472
        %p474 = pneg %p47
        %p475 = pneg %p44
        %s476 = sand.u32 %s60, 1
        %s477 = sand.u32 %s60, 1
        %s478 = smul.addr %s477, 512
        %s479 = scalar_lea.vmem [#allocation2], %s478
        %p480 = pneg %p73
        %p481 = pneg %p70
        %s482 = smul.u32 2, %s19
        %p483 = scmp.lt.s32.totalorder %s482, 3
        %s484 = scalar_select %p483, %s482, 3
        %s485 = scalar_lea.vmem %s2, %s484
        %p486 = pneg %p99
        %p487 = pneg %p96
        %p488 = pneg %p127
        %p489 = pneg %p124
        %s490 = smul.u32 2, %s19
        %p491 = scmp.lt.s32.totalorder %s18, 0
        %s492 = scalar_select %p491, %s18, 0
        %p493 = scmp.lt.s32.totalorder %s490, 3
        %s494 = scalar_select %p493, %s490, 3
        %s495 = smul.addr %s492, 4
        %s496 = sadd.s32 %s494, %s495
        %s497 = smul.addr %s496, 2
        %s498 = scalar_lea.vmem %s3, %s497
        %p499 = scmp.lt.s32.totalorder %s18, 0
        %s500 = scalar_select %p499, %s18, 0
        %s501 = smul.addr %s500, 4
        %s502 = scalar_lea.vmem %s0, %s501
        %s503 = smul.u32 2, %s19
        %s504 = smul.u32 2, %s19
        %p505 = scmp.lt.s32.totalorder %s504, 3
        %s506 = scalar_select %p505, %s504, 3
        %s507 = scalar_lea.vmem %s2, %s506
        %s508 = smul.u32 2, %s19
        %s509 = smul.u32 2, %s19
        %p510 = scmp.lt.s32.totalorder %s18, 0
        %s511 = scalar_select %p510, %s18, 0
        %p512 = scmp.lt.s32.totalorder %s509, 3
        %s513 = scalar_select %p512, %s509, 3
        %s514 = smul.addr %s511, 4
        %s515 = sadd.s32 %s513, %s514
        %s516 = smul.addr %s515, 2
        %s517 = scalar_lea.vmem %s3, %s516
        %s518 = smul.u32 2, %s19
        %v519 = vld [vmem:[%s502] sm:$0xf]
        %v520 = vld [vmem:[%s466] sm:$0xff]
        %v521 = vld [vmem:[%s466 + $0x8] sm:$0xff]
        %v522 = vld [vmem:[%s466 + $0x10] sm:$0xff]
        %v523 = vld [vmem:[%s466 + $0x18] sm:$0xff]
        %v524 = vld [vmem:[%s466 + $0x20] sm:$0xff]
        %v525 = vld [vmem:[%s466 + $0x28] sm:$0xff]
        %v526 = vld [vmem:[%s466 + $0x30] sm:$0xff]
        %v527 = vld [vmem:[%s466 + $0x38] sm:$0xff]
        %v528 = vld [vmem:[%s466 + $0x40] sm:$0xff]
        %v529 = vld [vmem:[%s466 + $0x48] sm:$0xff]
        %v530 = vld [vmem:[%s466 + $0x50] sm:$0xff]
        %v531 = vld [vmem:[%s466 + $0x58] sm:$0xff]
        %v532 = vld [vmem:[%s466 + $0x60] sm:$0xff]
        %v533 = vld [vmem:[%s466 + $0x68] sm:$0xff]
        %v534 = vld [vmem:[%s466 + $0x70] sm:$0xff]
        %v535 = vld [vmem:[%s466 + $0x78] sm:$0xff]
        %v536 = vld [vmem:[%s466 + $0x80] sm:$0xff]
        %v537 = vld [vmem:[%s466 + $0x88] sm:$0xff]
        %v538 = vld [vmem:[%s466 + $0x90] sm:$0xff]
        %v539 = vld [vmem:[%s466 + $0x98] sm:$0xff]
        %v540 = vld [vmem:[%s466 + $0xa0] sm:$0xff]
        %v541 = vld [vmem:[%s466 + $0xa8] sm:$0xff]
        %v542 = vld [vmem:[%s466 + $0xb0] sm:$0xff]
        %v543 = vld [vmem:[%s466 + $0xb8] sm:$0xff]
        %v544 = vld [vmem:[%s466 + $0xc0] sm:$0xff]
        %v545 = vld [vmem:[%s466 + $0xc8] sm:$0xff]
        %v546 = vld [vmem:[%s466 + $0xd0] sm:$0xff]
        %v547 = vld [vmem:[%s466 + $0xd8] sm:$0xff]
        %v548 = vld [vmem:[%s466 + $0xe0] sm:$0xff]
        %v549 = vld [vmem:[%s466 + $0xe8] sm:$0xff]
        %v550 = vld [vmem:[%s466 + $0xf0] sm:$0xff]
        %v551 = vld [vmem:[%s466 + $0xf8] sm:$0xff]
        %v552 = vld [vmem:[%s466 + $0x100] sm:$0xff]
        %v553 = vld [vmem:[%s466 + $0x108] sm:$0xff]
        %v554 = vld [vmem:[%s466 + $0x110] sm:$0xff]
        %v555 = vld [vmem:[%s466 + $0x118] sm:$0xff]
        %v556 = vld [vmem:[%s466 + $0x120] sm:$0xff]
        %v557 = vld [vmem:[%s466 + $0x128] sm:$0xff]
        %v558 = vld [vmem:[%s466 + $0x130] sm:$0xff]
        %v559 = vld [vmem:[%s466 + $0x138] sm:$0xff]
        %v560 = vld [vmem:[%s466 + $0x140] sm:$0xff]
        %v561 = vld [vmem:[%s466 + $0x148] sm:$0xff]
        %v562 = vld [vmem:[%s466 + $0x150] sm:$0xff]
        %v563 = vld [vmem:[%s466 + $0x158] sm:$0xff]
        %v564 = vld [vmem:[%s466 + $0x160] sm:$0xff]
        %v565 = vld [vmem:[%s466 + $0x168] sm:$0xff]
        %v566 = vld [vmem:[%s466 + $0x170] sm:$0xff]
        %v567 = vld [vmem:[%s466 + $0x178] sm:$0xff]
        %v568 = vld [vmem:[%s466 + $0x180] sm:$0xff]
        %v569 = vld [vmem:[%s466 + $0x188] sm:$0xff]
        %v570 = vld [vmem:[%s466 + $0x190] sm:$0xff]
        %v571 = vld [vmem:[%s466 + $0x198] sm:$0xff]
        %v572 = vld [vmem:[%s466 + $0x1a0] sm:$0xff]
        %v573 = vld [vmem:[%s466 + $0x1a8] sm:$0xff]
        %v574 = vld [vmem:[%s466 + $0x1b0] sm:$0xff]
        %v575 = vld [vmem:[%s466 + $0x1b8] sm:$0xff]
        %v576 = vld [vmem:[%s466 + $0x1c0] sm:$0xff]
        %v577 = vld [vmem:[%s466 + $0x1c8] sm:$0xff]
        %v578 = vld [vmem:[%s466 + $0x1d0] sm:$0xff]
        %v579 = vld [vmem:[%s466 + $0x1d8] sm:$0xff]
        %v580 = vld [vmem:[%s466 + $0x1e0] sm:$0xff]
        %v581 = vld [vmem:[%s466 + $0x1e8] sm:$0xff]
        %v582 = vld [vmem:[%s466 + $0x1f0] sm:$0xff]
        %v583 = vld [vmem:[%s466 + $0x1f8] sm:$0xff]
        %v584 = vld [vmem:[%s507] sm:$0x3]
        %v586 = vperm.slane %v584, 0
        %v587 = vperm.slane %v584, 1
        %591 = vst [vmem:[#allocation1] ss:$9 sm:$0xff] %v519
        %v592 = vld [vmem:[#allocation1] sm:$0xff]
        %v593 = vld [vmem:[#allocation1 + $0x9] sm:$0xff]
        %v594 = vld [vmem:[#allocation1 + $0x12] sm:$0xff]
        %v595 = vld [vmem:[#allocation1 + $0x1b] sm:$0xff]
        %v664 = vunpack.c.l.b16 %v520
        %v665 = vunpack.c.h.b16 %v520
        %v666 = vunpack.c.l.b16 %v521
        %v667 = vunpack.c.h.b16 %v521
        %v668 = vunpack.c.l.b16 %v522
        %v669 = vunpack.c.h.b16 %v522
        %v670 = vunpack.c.l.b16 %v523
        %v671 = vunpack.c.h.b16 %v523
        %v672 = vunpack.c.l.b16 %v524
        %v673 = vunpack.c.h.b16 %v524
        %v674 = vunpack.c.l.b16 %v525
        %v675 = vunpack.c.h.b16 %v525
        %v676 = vunpack.c.l.b16 %v526
        %v677 = vunpack.c.h.b16 %v526
        %v678 = vunpack.c.l.b16 %v527
        %v679 = vunpack.c.h.b16 %v527
        %v680 = vunpack.c.l.b16 %v528
        %v681 = vunpack.c.h.b16 %v528
        %v682 = vunpack.c.l.b16 %v529
        %v683 = vunpack.c.h.b16 %v529
        %v684 = vunpack.c.l.b16 %v530
        %v685 = vunpack.c.h.b16 %v530
        %v686 = vunpack.c.l.b16 %v531
        %v687 = vunpack.c.h.b16 %v531
        %v688 = vunpack.c.l.b16 %v532
        %v689 = vunpack.c.h.b16 %v532
        %v690 = vunpack.c.l.b16 %v533
        %v691 = vunpack.c.h.b16 %v533
        %v692 = vunpack.c.l.b16 %v534
        %v693 = vunpack.c.h.b16 %v534
        %v694 = vunpack.c.l.b16 %v535
        %v695 = vunpack.c.h.b16 %v535
        %v696 = vunpack.c.l.b16 %v536
        %v697 = vunpack.c.h.b16 %v536
        %v698 = vunpack.c.l.b16 %v537
        %v699 = vunpack.c.h.b16 %v537
        %v700 = vunpack.c.l.b16 %v538
        %v701 = vunpack.c.h.b16 %v538
        %v702 = vunpack.c.l.b16 %v539
        %v703 = vunpack.c.h.b16 %v539
        %v704 = vunpack.c.l.b16 %v540
        %v705 = vunpack.c.h.b16 %v540
        %v706 = vunpack.c.l.b16 %v541
        %v707 = vunpack.c.h.b16 %v541
        %v708 = vunpack.c.l.b16 %v542
        %v709 = vunpack.c.h.b16 %v542
        %v710 = vunpack.c.l.b16 %v543
        %v711 = vunpack.c.h.b16 %v543
        %v712 = vunpack.c.l.b16 %v544
        %v713 = vunpack.c.h.b16 %v544
        %v714 = vunpack.c.l.b16 %v545
        %v715 = vunpack.c.h.b16 %v545
        %v716 = vunpack.c.l.b16 %v546
        %v717 = vunpack.c.h.b16 %v546
        %v718 = vunpack.c.l.b16 %v547
        %v719 = vunpack.c.h.b16 %v547
        %v720 = vunpack.c.l.b16 %v548
        %v721 = vunpack.c.h.b16 %v548
        %v722 = vunpack.c.l.b16 %v549
        %v723 = vunpack.c.h.b16 %v549
        %v724 = vunpack.c.l.b16 %v550
        %v725 = vunpack.c.h.b16 %v550
        %v726 = vunpack.c.l.b16 %v551
        %v727 = vunpack.c.h.b16 %v551
        %v728 = vunpack.c.l.b16 %v552
        %v729 = vunpack.c.h.b16 %v552
        %v730 = vunpack.c.l.b16 %v553
        %v731 = vunpack.c.h.b16 %v553
        %v732 = vunpack.c.l.b16 %v554
        %v733 = vunpack.c.h.b16 %v554
        %v734 = vunpack.c.l.b16 %v555
        %v735 = vunpack.c.h.b16 %v555
        %v736 = vunpack.c.l.b16 %v556
        %v737 = vunpack.c.h.b16 %v556
        %v738 = vunpack.c.l.b16 %v557
        %v739 = vunpack.c.h.b16 %v557
        %v740 = vunpack.c.l.b16 %v558
        %v741 = vunpack.c.h.b16 %v558
        %v742 = vunpack.c.l.b16 %v559
        %v743 = vunpack.c.h.b16 %v559
        %v744 = vunpack.c.l.b16 %v560
        %v745 = vunpack.c.h.b16 %v560
        %v746 = vunpack.c.l.b16 %v561
        %v747 = vunpack.c.h.b16 %v561
        %v748 = vunpack.c.l.b16 %v562
        %v749 = vunpack.c.h.b16 %v562
        %v750 = vunpack.c.l.b16 %v563
        %v751 = vunpack.c.h.b16 %v563
        %v752 = vunpack.c.l.b16 %v564
        %v753 = vunpack.c.h.b16 %v564
        %v754 = vunpack.c.l.b16 %v565
        %v755 = vunpack.c.h.b16 %v565
        %v756 = vunpack.c.l.b16 %v566
        %v757 = vunpack.c.h.b16 %v566
        %v758 = vunpack.c.l.b16 %v567
        %v759 = vunpack.c.h.b16 %v567
        %v760 = vunpack.c.l.b16 %v568
        %v761 = vunpack.c.h.b16 %v568
        %v762 = vunpack.c.l.b16 %v569
        %v763 = vunpack.c.h.b16 %v569
        %v764 = vunpack.c.l.b16 %v570
        %v765 = vunpack.c.h.b16 %v570
        %v766 = vunpack.c.l.b16 %v571
        %v767 = vunpack.c.h.b16 %v571
        %v768 = vunpack.c.l.b16 %v572
        %v769 = vunpack.c.h.b16 %v572
        %v770 = vunpack.c.l.b16 %v573
        %v771 = vunpack.c.h.b16 %v573
        %v772 = vunpack.c.l.b16 %v574
        %v773 = vunpack.c.h.b16 %v574
        %v774 = vunpack.c.l.b16 %v575
        %v775 = vunpack.c.h.b16 %v575
        %v776 = vunpack.c.l.b16 %v576
        %v777 = vunpack.c.h.b16 %v576
        %v778 = vunpack.c.l.b16 %v577
        %v779 = vunpack.c.h.b16 %v577
        %v780 = vunpack.c.l.b16 %v578
        %v781 = vunpack.c.h.b16 %v578
        %v782 = vunpack.c.l.b16 %v579
        %v783 = vunpack.c.h.b16 %v579
        %v784 = vunpack.c.l.b16 %v580
        %v785 = vunpack.c.h.b16 %v580
        %v786 = vunpack.c.l.b16 %v581
        %v787 = vunpack.c.h.b16 %v581
        %v788 = vunpack.c.l.b16 %v582
        %v789 = vunpack.c.h.b16 %v582
        %v790 = vunpack.c.l.b16 %v583
        %v791 = vunpack.c.h.b16 %v583
        %v792 = vpack.c.b16 %v666, %v664
        %v793 = vpack.c.b16 %v667, %v665
        %v794 = vpack.c.b16 %v670, %v668
        %v795 = vpack.c.b16 %v671, %v669
        %v796 = vpack.c.b16 %v674, %v672
        %v797 = vpack.c.b16 %v675, %v673
        %v798 = vpack.c.b16 %v678, %v676
        %v799 = vpack.c.b16 %v679, %v677
        %v800 = vpack.c.b16 %v682, %v680
        %v801 = vpack.c.b16 %v683, %v681
        %v802 = vpack.c.b16 %v686, %v684
        %v803 = vpack.c.b16 %v687, %v685
        %v804 = vpack.c.b16 %v690, %v688
        %v805 = vpack.c.b16 %v691, %v689
        %v806 = vpack.c.b16 %v694, %v692
        %v807 = vpack.c.b16 %v695, %v693
        %v808 = vpack.c.b16 %v698, %v696
        %v809 = vpack.c.b16 %v699, %v697
        %v810 = vpack.c.b16 %v702, %v700
        %v811 = vpack.c.b16 %v703, %v701
        %v812 = vpack.c.b16 %v706, %v704
        %v813 = vpack.c.b16 %v707, %v705
        %v814 = vpack.c.b16 %v710, %v708
        %v815 = vpack.c.b16 %v711, %v709
        %v816 = vpack.c.b16 %v714, %v712
        %v817 = vpack.c.b16 %v715, %v713
        %v818 = vpack.c.b16 %v718, %v716
        %v819 = vpack.c.b16 %v719, %v717
        %v820 = vpack.c.b16 %v722, %v720
        %v821 = vpack.c.b16 %v723, %v721
        %v822 = vpack.c.b16 %v726, %v724
        %v823 = vpack.c.b16 %v727, %v725
        %v824 = vpack.c.b16 %v730, %v728
        %v825 = vpack.c.b16 %v731, %v729
        %v826 = vpack.c.b16 %v734, %v732
        %v827 = vpack.c.b16 %v735, %v733
        %v828 = vpack.c.b16 %v738, %v736
        %v829 = vpack.c.b16 %v739, %v737
        %v830 = vpack.c.b16 %v742, %v740
        %v831 = vpack.c.b16 %v743, %v741
        %v832 = vpack.c.b16 %v746, %v744
        %v833 = vpack.c.b16 %v747, %v745
        %v834 = vpack.c.b16 %v750, %v748
        %v835 = vpack.c.b16 %v751, %v749
        %v836 = vpack.c.b16 %v754, %v752
        %v837 = vpack.c.b16 %v755, %v753
        %v838 = vpack.c.b16 %v758, %v756
        %v839 = vpack.c.b16 %v759, %v757
        %v840 = vpack.c.b16 %v762, %v760
        %v841 = vpack.c.b16 %v763, %v761
        %v842 = vpack.c.b16 %v766, %v764
        %v843 = vpack.c.b16 %v767, %v765
        %v844 = vpack.c.b16 %v770, %v768
        %v845 = vpack.c.b16 %v771, %v769
        %v846 = vpack.c.b16 %v774, %v772
        %v847 = vpack.c.b16 %v775, %v773
        %v848 = vpack.c.b16 %v778, %v776
        %v849 = vpack.c.b16 %v779, %v777
        %v850 = vpack.c.b16 %v782, %v780
        %v851 = vpack.c.b16 %v783, %v781
        %v852 = vpack.c.b16 %v786, %v784
        %v853 = vpack.c.b16 %v787, %v785
        %v854 = vpack.c.b16 %v790, %v788
        %v855 = vpack.c.b16 %v791, %v789
        %920 = vmatpush.bf16.msra.mxu0 %v806
        %921 = vmatpush.bf16.msra.mxu0 %v804
        %922 = vmatpush.bf16.msra.mxu0 %v802
        %923 = vmatpush.bf16.msra.mxu0 %v800
        %924 = vmatpush.bf16.msra.mxu0 %v798
        %925 = vmatpush.bf16.msra.mxu0 %v796
        %926 = vmatpush.bf16.msra.mxu0 %v794
        %927 = vmatpush.bf16.msra.mxu0 %v792
        %928 = vmatmul.bf16.gmra.mxu0 %v592
        %v929 = vpop.f32.mrf.mxu0
        %v930 = vadd.f32 %v586, %v929
        %v931 = vpop.f32.mrf.mxu0
        %932 = vdwg.mxu0
        %933 = vmatpush.bf16.msra.mxu0 %v822
        %934 = vmatpush.bf16.msra.mxu0 %v820
        %935 = vmatpush.bf16.msra.mxu0 %v818
        %936 = vmatpush.bf16.msra.mxu0 %v816
        %937 = vmatpush.bf16.msra.mxu0 %v814
        %938 = vmatpush.bf16.msra.mxu0 %v812
        %939 = vmatpush.bf16.msra.mxu0 %v810
        %940 = vmatpush.bf16.msra.mxu0 %v808
        %941 = vmatmul.bf16.gmra.mxu0 %v593
        %v942 = vpop.f32.mrf.mxu0
        %v943 = vadd.f32 %v930, %v942
        %v944 = vpop.f32.mrf.mxu0
        %945 = vdwg.mxu0
        %946 = vmatpush.bf16.msra.mxu0 %v838
        %947 = vmatpush.bf16.msra.mxu0 %v836
        %948 = vmatpush.bf16.msra.mxu0 %v834
        %949 = vmatpush.bf16.msra.mxu0 %v832
        %950 = vmatpush.bf16.msra.mxu0 %v830
        %951 = vmatpush.bf16.msra.mxu0 %v828
        %952 = vmatpush.bf16.msra.mxu0 %v826
        %953 = vmatpush.bf16.msra.mxu0 %v824
        %954 = vmatmul.bf16.gmra.mxu0 %v594
        %v955 = vpop.f32.mrf.mxu0
        %v956 = vadd.f32 %v943, %v955
        %v957 = vpop.f32.mrf.mxu0
        %958 = vdwg.mxu0
        %959 = vmatpush.bf16.msra.mxu0 %v854
        %960 = vmatpush.bf16.msra.mxu0 %v852
        %961 = vmatpush.bf16.msra.mxu0 %v850
        %962 = vmatpush.bf16.msra.mxu0 %v848
        %963 = vmatpush.bf16.msra.mxu0 %v846
        %964 = vmatpush.bf16.msra.mxu0 %v844
        %965 = vmatpush.bf16.msra.mxu0 %v842
        %966 = vmatpush.bf16.msra.mxu0 %v840
        %967 = vmatmul.bf16.gmra.mxu0 %v595
        %v968 = vpop.f32.mrf.mxu0
        %v969 = vadd.f32 %v956, %v968
        %v970 = vpop.f32.mrf.mxu0
        %971 = vdwg.mxu0
        %972 = vmatpush.bf16.msra.mxu0 %v807
        %973 = vmatpush.bf16.msra.mxu0 %v805
        %974 = vmatpush.bf16.msra.mxu0 %v803
        %975 = vmatpush.bf16.msra.mxu0 %v801
        %976 = vmatpush.bf16.msra.mxu0 %v799
        %977 = vmatpush.bf16.msra.mxu0 %v797
        %978 = vmatpush.bf16.msra.mxu0 %v795
        %979 = vmatpush.bf16.msra.mxu0 %v793
        %980 = vmatmul.bf16.gmra.mxu0 %v592
        %v981 = vpop.f32.mrf.mxu0
        %v982 = vadd.f32 %v587, %v981
        %v983 = vpop.f32.mrf.mxu0
        %984 = vdwg.mxu0
        %985 = vmatpush.bf16.msra.mxu0 %v823
        %986 = vmatpush.bf16.msra.mxu0 %v821
        %987 = vmatpush.bf16.msra.mxu0 %v819
        %988 = vmatpush.bf16.msra.mxu0 %v817
        %989 = vmatpush.bf16.msra.mxu0 %v815
        %990 = vmatpush.bf16.msra.mxu0 %v813
        %991 = vmatpush.bf16.msra.mxu0 %v811
        %992 = vmatpush.bf16.msra.mxu0 %v809
        %993 = vmatmul.bf16.gmra.mxu0 %v593
        %v994 = vpop.f32.mrf.mxu0
        %v995 = vadd.f32 %v982, %v994
        %v996 = vpop.f32.mrf.mxu0
        %997 = vdwg.mxu0
        %998 = vmatpush.bf16.msra.mxu0 %v839
        %999 = vmatpush.bf16.msra.mxu0 %v837
        %1000 = vmatpush.bf16.msra.mxu0 %v835
        %1001 = vmatpush.bf16.msra.mxu0 %v833
        %1002 = vmatpush.bf16.msra.mxu0 %v831
        %1003 = vmatpush.bf16.msra.mxu0 %v829
        %1004 = vmatpush.bf16.msra.mxu0 %v827
        %1005 = vmatpush.bf16.msra.mxu0 %v825
        %1006 = vmatmul.bf16.gmra.mxu0 %v594
        %v1007 = vpop.f32.mrf.mxu0
        %v1008 = vadd.f32 %v995, %v1007
        %v1009 = vpop.f32.mrf.mxu0
        %1010 = vdwg.mxu0
        %1011 = vmatpush.bf16.msra.mxu0 %v855
        %1012 = vmatpush.bf16.msra.mxu0 %v853
        %1013 = vmatpush.bf16.msra.mxu0 %v851
        %1014 = vmatpush.bf16.msra.mxu0 %v849
        %1015 = vmatpush.bf16.msra.mxu0 %v847
        %1016 = vmatpush.bf16.msra.mxu0 %v845
        %1017 = vmatpush.bf16.msra.mxu0 %v843
        %1018 = vmatpush.bf16.msra.mxu0 %v841
        %1019 = vmatmul.bf16.gmra.mxu0 %v595
        %v1020 = vpop.f32.mrf.mxu0
        %v1021 = vadd.f32 %v1008, %v1020
        %v1022 = vpop.f32.mrf.mxu0
        %1023 = vdwg.mxu0
        %vm1024 = vcmp.ge.f32.partialorder %v969, 0.0
        %vm1025 = vcmp.ge.f32.partialorder %v1021, 0.0
        %v1026 = vmul.f32 %v969, 0.1
        %v1027 = vmul.f32 %v1021, 0.1
        %v1028 = vsel %vm1024, %v969, %v1026
        %v1029 = vsel %vm1025, %v1021, %v1027
        %v1032 = vrot.slane %v1029, 6
        %vm1033 = vcmask 1041408
        %v1034 = vsel %vm1033, %v1028, %v1032
        %1036 = vst [vmem:[%s517] sm:$0xf] %v1034
        %s1037 = smul.u32 2, %s19
        %p1038 = scmp.lt.s32.totalorder %s18, 0
        %s1039 = scalar_select %p1038, %s18, 0
        %p1040 = scmp.lt.s32.totalorder %s1037, 3
        %s1041 = scalar_select %p1040, %s1037, 3
        %s1042 = smul.addr %s1039, 4
        %s1043 = sadd.s32 %s1041, %s1042
        %s1044 = smul.addr %s1043, 2
        %s1045 = scalar_lea.vmem %s3, %s1044
        // Predicated region
        $region71: #{run_encoder.19} parent=65 // pred_check
          %p1046 = pneg %p124
        $region72: #{run_encoder.19} parent=65 // pred_check_branch
          %1048 = sbr.rel (%p1046) target = $region74
        $region73: #{run_encoder.19} parent=65 // pred_region
          %s1049 = smul.u32 2, %s19
        $region74: #{run_encoder.19} parent=65 // pred_fallthru
          _
      $region66: #{run_encoder.19} parent=5 // pred_fallthru
        _
      %p1050 = scmp.le.s32.totalorder 2, %s9
      // Predicated region
      $region75: #{run_encoder.19} parent=5 // pred_check
        %p1051 = pneg %p1050
      $region76: #{run_encoder.19} parent=5 // pred_check_branch
        %1053 = sbr.rel (%p1051) target = $region78
      $region77: #{run_encoder.19} parent=5 // pred_region
        %s1054 = ssub.s32 %s9, 2
        // Predicated region
        $region79: #{run_encoder.19} parent=77 // pred_check
          %p1055 = pneg %p130
        $region80: #{run_encoder.19} parent=77 // pred_check_branch
          %1057 = sbr.rel (%p1055) target = $region82
        $region81: #{run_encoder.19} parent=77 // pred_region
          %s1058 = smul.u32 2, %s21
          %p1059 = scmp.lt.s32.totalorder %s20, 0
          %s1060 = scalar_select %p1059, %s20, 0
          %p1061 = scmp.lt.s32.totalorder %s1058, 3
          %s1062 = scalar_select %p1061, %s1058, 3
          %s1063 = smul.addr %s1060, 4
          %s1064 = sadd.s32 %s1062, %s1063
          %s1065 = smul.addr %s1064, 2
          %s1066 = scalar_lea.vmem %s3, %s1065
        $region82: #{run_encoder.19} parent=77 // pred_fallthru
          _
      $region78: #{run_encoder.19} parent=5 // pred_fallthru
        _
    $region6: #{run_encoder.19} parent=1 // loop_footer
      %s13 = sadd.s32 1, %s9
    $region7: #{run_encoder.19} parent=1 // loop_footer_branch
      %8 = sbr.rel target = $region3
    $region8: #{run_encoder.19} parent=1 // loop_exit
      _

</llo_original>
